<compile_context>
chip_gen: v7x
topology: tpu7x:2x2x1
jax: 0.10.0
libtpu: 0.0.40
codegen_flags: <defaults>
</compile_context>

<pallas_src>
import jax
import jax.numpy as jnp
from jax import lax
from jax.experimental import pallas as pl
from jax.experimental.pallas import tpu as pltpu
import numpy as np

# ---- model / problem sizes (small, consistent with the module's forward) ----
VOCAB = 32      # vocab_size
EMBED = 16      # embed_size
HIDDEN = 32     # num_hiddens
LAYERS = 2      # num_layers
BATCH = 2
T_DEC = 8       # decoder sequence length
T_ENC = 8       # encoder sequence length
GATES = 3 * HIDDEN          # 96, gate order [r, z, n]

# ---- packed weight slab row offsets (all 8-aligned, data starts at lane 0) ----
R_EMB, R_WQ, R_WK, R_WFC = 0, 32, 64, 96
R_WIH0C, R_WHH0, R_WIH1, R_WHH1 = 128, 160, 192, 224
R_WIH0E = 256
R_BIH0, R_BHH0, R_BIH1, R_BHH1, R_BFC, R_WV = 272, 280, 288, 296, 304, 312
SLAB_ROWS, SLAB_COLS = 320, 128

# ---- packed lane-dense output slab (one (40,128) buffer -> one output DMA) ----
R_LOGITS = 0                          # rows  0..15, lanes 0..31  (b-major: row = b*T_dec + t)
R_ATTN = BATCH * T_DEC                # rows 16..31, lanes 0..7   (time-major: row = t*B + b)
R_HN = R_ATTN + T_DEC * BATCH         # rows 32..35, lanes 0..31  (row = l*B + b)
OUT_ROWS, OUT_COLS = 40, 128          # unwritten rows/lanes are padding, ignored by the wrapper


def decoder_kernel(idv_ref, enc_ref, h0_ref, w_ref, out_ref, h_scr):
    H, E, V, G = HIDDEN, EMBED, VOCAB, GATES
    B, TD, TE = BATCH, T_DEC, T_ENC
    f32 = jnp.float32

    ids = idv_ref[:, :TD]                         # (B, T_dec) int32
    vlen = idv_ref[:, TD:TD + 1]                  # (B, 1)     int32
    enc = enc_ref[...]                            # (B, T_enc, H)

    # Zero-cost .at[] views into the packed weight slab; each one is loaded ([...]) at its
    # point of use so no weight vregs stay live across the unrolled time loop.
    wq_v    = w_ref.at[R_WQ:R_WQ + H, :H]
    wv_v    = w_ref.at[R_WV:R_WV + 1, :H]
    wih0c_v = w_ref.at[R_WIH0C:R_WIH0C + H, :G]
    whh0_v  = w_ref.at[R_WHH0:R_WHH0 + H, :G]
    bhh0_v  = w_ref.at[R_BHH0:R_BHH0 + 1, :G]
    wih1_v  = w_ref.at[R_WIH1:R_WIH1 + H, :G]
    whh1_v  = w_ref.at[R_WHH1:R_WHH1 + H, :G]
    bih1_v  = w_ref.at[R_BIH1:R_BIH1 + 1, :G]
    bhh1_v  = w_ref.at[R_BHH1:R_BHH1 + 1, :G]

    # ---------------- hoisted loop-invariant work (plain 2-D MXU dots) ----------------
    # W_k(enc_outputs), reused every step
    keys_proj = jnp.dot(enc.reshape(B * TE, H), w_ref[R_WK:R_WK + H, :H],
                        preferred_element_type=f32).reshape(B, TE, H)       # (B, T_enc, H)
    # additive attention mask (valid -> 0, invalid -> -1e6), hoisted
    key_iota = lax.broadcasted_iota(jnp.int32, (B, TE), 1)
    mask_add = jnp.where(key_iota < vlen, 0.0, -1e6).astype(f32)            # (B, T_enc)

    # embedding lookup + token half of the layer-0 GRU gates for ALL steps at once.
    # b_ih0 is folded in (one-hot rows sum to 1 so the bias passes through the matmul).
    tok_gates = jnp.dot(w_ref[R_EMB:R_EMB + V, :E], w_ref[R_WIH0E:R_WIH0E + E, :G],
                        preferred_element_type=f32) + w_ref[R_BIH0:R_BIH0 + 1, :G]   # (V, 3H)
    onehot = (ids[:, :, None] ==
              lax.broadcasted_iota(jnp.int32, (B, TD, V), 2)).astype(f32)
    gi0_tok = jnp.dot(onehot.reshape(B * TD, V), tok_gates,
                      preferred_element_type=f32).reshape(B, TD, G)          # (B, T_dec, 3H)

    h_prev = [h0_ref[0], h0_ref[1]]                                          # (B, H) each

    def gru_gates(gi, h, w_hh, b_hh):
        # gi already contains W_ih x + b_ih; add the hidden half and apply PyTorch gating.
        gh = jnp.dot(h, w_hh, preferred_element_type=f32) + b_hh
        r = jax.nn.sigmoid(gi[:, :H] + gh[:, :H])
        z = jax.nn.sigmoid(gi[:, H:2 * H] + gh[:, H:2 * H])
        n = jnp.tanh(gi[:, 2 * H:] + r * gh[:, 2 * H:])
        return (1.0 - z) * n + z * h

    # ---------------- sequential decode steps (statically unrolled) ----------------
    for t in range(TD):
        # --- additive attention: query = top-layer hidden state ---
        q_proj = jnp.dot(h_prev[1], wq_v[...], preferred_element_type=f32)   # (B, H)
        feat = jnp.tanh(q_proj[:, None, :] + keys_proj)                      # (B, T_enc, H)
        scores = jnp.sum(feat * wv_v[...], axis=-1) + mask_add               # (B, T_enc)
        # no max-subtraction: scores are bounded (feat in [-1,1]) and masked entries
        # underflow to exp(-1e6) == 0; normalize with the EUP approximate reciprocal.
        e = jnp.exp(scores)
        attn = e * pl.reciprocal(jnp.sum(e, axis=-1, keepdims=True), approx=True)
        out_ref[R_ATTN + t * B:R_ATTN + (t + 1) * B, :TE] = attn             # time-major rows

        # context vector: VPU multiply + sublane reduce (no tiny batched matmul)
        context = jnp.sum(attn[:, :, None] * enc, axis=1)                    # (B, H)

        # --- GRU layer 0: input = [context ; embedded token], without lane concats ---
        gi0 = jnp.dot(context, wih0c_v[...],
                      preferred_element_type=f32) + gi0_tok[:, t, :]
        h0_new = gru_gates(gi0, h_prev[0], whh0_v[...], bhh0_v[...])
        # --- GRU layer 1: input = layer-0 output ---
        gi1 = jnp.dot(h0_new, wih1_v[...], preferred_element_type=f32) + bih1_v[...]
        h1_new = gru_gates(gi1, h_prev[1], whh1_v[...], bhh1_v[...])
        h_prev = [h0_new, h1_new]

        # stash top-layer output in VMEM scratch at b-major rows (b*T_dec + t) so the
        # post-loop fc matmul directly yields logits needing no wrapper transpose.
        for b in range(B):
            h_scr[b * TD + t:b * TD + t + 1, :] = h1_new[b:b + 1, :]

    # ---------------- deferred fc projection + packed lane-dense output ----------------
    logits = jnp.dot(h_scr[...], w_ref[R_WFC:R_WFC + H, :V],
                     preferred_element_type=f32) + w_ref[R_BFC:R_BFC + 1, :V]
    out_ref[R_LOGITS:R_LOGITS + B * TD, :V] = logits                         # (16, 32)
    out_ref[R_HN:R_HN + B, :H] = h_prev[0]
    out_ref[R_HN + B:R_HN + 2 * B, :H] = h_prev[1]


def pack_weights(params):
    """Pack all weights/biases into one (320,128) f32 slab.

    Built ONCE with numpy on the host (outside any jitted / per-call path) and reused for
    every call -> no per-call dynamic-update-slice ops."""
    slab = np.zeros((SLAB_ROWS, SLAB_COLS), np.float32)

    def put(row, arr):
        arr = np.asarray(arr, np.float32)
        slab[row:row + arr.shape[0], :arr.shape[1]] = arr

    put(R_EMB, params['emb'])
    put(R_WQ, params['wq'])
    put(R_WK, params['wk'])
    put(R_WFC, params['wfc'])
    put(R_WIH0C, params['wih0'][:HIDDEN])      # context rows of layer-0 W_ih
    put(R_WIH0E, params['wih0'][HIDDEN:])      # embedding rows of layer-0 W_ih
    put(R_WHH0, params['whh0'])
    put(R_WIH1, params['wih1'])
    put(R_WHH1, params['whh1'])
    put(R_BIH0, params['bih0'])
    put(R_BHH0, params['bhh0'])
    put(R_BIH1, params['bih1'])
    put(R_BHH1, params['bhh1'])
    put(R_BFC, params['bfc'])
    put(R_WV, params['wv'])
    return jnp.asarray(slab)


@jax.jit
def seq2seq_attention_decoder(x_ids, enc_outputs, hidden_state, enc_valid_lens, wslab):
    """Returns (logits (B,T_dec,V), new_hidden (L,B,H), attn_weights (T_dec,B,T_enc))."""
    idv = jnp.concatenate(
        [x_ids.astype(jnp.int32),
         enc_valid_lens.reshape(BATCH, 1).astype(jnp.int32)], axis=1)         # (B, T_dec+1)

    vmem = lambda: pl.BlockSpec(memory_space=pltpu.MemorySpace.VMEM)
    out = pl.pallas_call(
        decoder_kernel,
        out_shape=jax.ShapeDtypeStruct((OUT_ROWS, OUT_COLS), jnp.float32),
        in_specs=[vmem(), vmem(), vmem(), vmem()],
        out_specs=vmem(),
        scratch_shapes=[pltpu.VMEM((BATCH * T_DEC, HIDDEN), jnp.float32)],
    )(idv, enc_outputs, hidden_state, wslab)

    # pure layout plumbing on the packed output slab (slices + reshapes only, no transpose)
    logits = out[R_LOGITS:R_LOGITS + BATCH * T_DEC, :VOCAB].reshape(BATCH, T_DEC, VOCAB)
    attn_w = out[R_ATTN:R_ATTN + T_DEC * BATCH, :T_ENC].reshape(T_DEC, BATCH, T_ENC)
    h_n = out[R_HN:R_HN + LAYERS * BATCH, :HIDDEN].reshape(LAYERS, BATCH, HIDDEN)
    return logits, h_n, attn_w


# ----------------------- pure-JAX reference (for checking) -----------------------
def reference(x_ids, enc, h0, vlen, p):
    H = HIDDEN
    keys_proj = jnp.einsum('bth,hk->btk', enc, p['wk'])
    key_mask = jnp.arange(T_ENC)[None, :] < vlen.reshape(BATCH, 1)
    h_prev = [h0[l] for l in range(LAYERS)]
    wih = (p['wih0'], p['wih1']); whh = (p['whh0'], p['whh1'])
    bih = (p['bih0'], p['bih1']); bhh = (p['bhh0'], p['bhh1'])

    def gru_cell(x, h, w_ih, w_hh, b_ih, b_hh):
        gi = x @ w_ih + b_ih
        gh = h @ w_hh + b_hh
        r = jax.nn.sigmoid(gi[:, :H] + gh[:, :H])
        z = jax.nn.sigmoid(gi[:, H:2 * H] + gh[:, H:2 * H])
        n = jnp.tanh(gi[:, 2 * H:] + r * gh[:, 2 * H:])
        return (1.0 - z) * n + z * h

    logits_all, attn_all = [], []
    for t in range(T_DEC):
        x_t = p['emb'][x_ids[:, t]]
        query = h_prev[LAYERS - 1]
        feat = jnp.tanh((query @ p['wq'])[:, None, :] + keys_proj)
        scores = jnp.sum(feat * p['wv'][0], axis=-1)
        scores = jnp.where(key_mask, scores, -1e6)
        scores = scores - jnp.max(scores, axis=-1, keepdims=True)
        e = jnp.exp(scores)
        attn = e / jnp.sum(e, axis=-1, keepdims=True)
        context = jnp.sum(attn[:, :, None] * enc, axis=1)
        x_in = jnp.concatenate([context, x_t], axis=-1)
        h0n = gru_cell(x_in, h_prev[0], wih[0], whh[0], bih[0], bhh[0])
        h1n = gru_cell(h0n, h_prev[1], wih[1], whh[1], bih[1], bhh[1])
        h_prev = [h0n, h1n]
        logits_all.append(h1n @ p['wfc'] + p['bfc'])
        attn_all.append(attn)
    logits = jnp.stack(logits_all, axis=0)             # (T, B, V)
    return jnp.transpose(logits, (1, 0, 2)), jnp.stack(h_prev, 0), jnp.stack(attn_all, 0)


# ----------------------- deterministic parameter init -----------------------
def make_params(key):
    def xavier(k, shape):
        fan_in, fan_out = shape[0], shape[-1]
        bound = float(np.sqrt(6.0 / (fan_in + fan_out)))
        return jax.random.uniform(k, shape, jnp.float32, -bound, bound)

    keys = jax.random.split(key, 16)
    return {
        'emb':  jax.random.normal(keys[0], (VOCAB, EMBED), jnp.float32) * 0.1,
        'wq':   xavier(keys[1], (HIDDEN, HIDDEN)),
        'wk':   xavier(keys[2], (HIDDEN, HIDDEN)),
        'wv':   xavier(keys[3], (1, HIDDEN)),                      # w_v: H -> 1 (stored as row)
        'wih0': xavier(keys[4], (HIDDEN + EMBED, 3 * HIDDEN)),     # GRU layer 0 input = H + E
        'whh0': xavier(keys[5], (HIDDEN, 3 * HIDDEN)),
        'bih0': jax.random.normal(keys[6], (1, 3 * HIDDEN), jnp.float32) * 0.01,
        'bhh0': jax.random.normal(keys[7], (1, 3 * HIDDEN), jnp.float32) * 0.01,
        'wih1': xavier(keys[8], (HIDDEN, 3 * HIDDEN)),             # GRU layer 1 input = H
        'whh1': xavier(keys[9], (HIDDEN, 3 * HIDDEN)),
        'bih1': jax.random.normal(keys[10], (1, 3 * HIDDEN), jnp.float32) * 0.01,
        'bhh1': jax.random.normal(keys[11], (1, 3 * HIDDEN), jnp.float32) * 0.01,
        'wfc':  xavier(keys[12], (HIDDEN, VOCAB)),
        'bfc':  jax.random.normal(keys[13], (1, VOCAB), jnp.float32) * 0.01,
    }


if __name__ == "__main__":
    key = jax.random.PRNGKey(0)
    k_par, k_ids, k_enc, k_h, k_len = jax.random.split(key, 5)

    params = make_params(k_par)
    wslab = pack_weights(params)            # packed ONCE on the host, reused every call

    # decoder token ids (B, T_dec)
    x_ids = jax.random.randint(k_ids, (BATCH, T_DEC), 0, VOCAB, dtype=jnp.int32)
    # encoder outputs, produced as (T_enc, B, H) then permuted as in init_state
    enc_seq = jax.random.normal(k_enc, (T_ENC, BATCH, HIDDEN), jnp.float32)
    enc_outputs = jnp.transpose(enc_seq, (1, 0, 2))                 # (B, T_enc, H)
    hidden_state = jax.random.normal(k_h, (LAYERS, BATCH, HIDDEN), jnp.float32)
    enc_valid_lens = jax.random.randint(k_len, (BATCH,), 1, T_ENC + 1, dtype=jnp.int32)

    logits, h_n, attn_w = seq2seq_attention_decoder(
        x_ids, enc_outputs, hidden_state, enc_valid_lens, wslab)
    jax.block_until_ready((logits, h_n, attn_w))

    # sanity check against a pure-JAX reference of the same math
    ref_logits, ref_h, ref_attn = reference(x_ids, enc_outputs, hidden_state,
                                            enc_valid_lens, params)
    assert logits.shape == (BATCH, T_DEC, VOCAB)
    assert h_n.shape == (LAYERS, BATCH, HIDDEN)
    assert attn_w.shape == (T_DEC, BATCH, T_ENC)
    # tolerance 2e-3 (was 1e-4): the kernel uses the EUP approximate reciprocal for the
    # softmax normalization (per perf guidance); any structural error would be orders of
    # magnitude larger than this.
    np.testing.assert_allclose(np.asarray(logits), np.asarray(ref_logits), rtol=2e-3, atol=2e-3)
    np.testing.assert_allclose(np.asarray(h_n), np.asarray(ref_h), rtol=2e-3, atol=2e-3)
    np.testing.assert_allclose(np.asarray(attn_w), np.asarray(ref_attn), rtol=2e-3, atol=2e-3)

    print("KERNEL_OK")
</pallas_src>

<mosaic_0001>
module attributes {stable_mosaic.version = 11 : i64} {
  func.func @decoder_kernel(%arg0: memref<2x9xi32, #tpu.memory_space<vmem>>, %arg1: memref<2x8x32xf32, #tpu.memory_space<vmem>>, %arg2: memref<2x2x32xf32, #tpu.memory_space<vmem>>, %arg3: memref<320x128xf32, #tpu.memory_space<vmem>>, %arg4: memref<40x128xf32, #tpu.memory_space<vmem>>, %arg5: memref<16x32xf32, #tpu.memory_space<vmem>>) attributes {dimension_semantics = [], scalar_prefetch = 0 : i64, scratch_operands = 1 : i64, tpu.core_type = #tpu.core_type<tc>} {
    %c0 = arith.constant 0 : index
    %c0_0 = arith.constant 0 : index
    %0 = vector.load %arg0[%c0, %c0_0] : memref<2x9xi32, #tpu.memory_space<vmem>>, vector<2x8xi32>
    %c0_1 = arith.constant 0 : index
    %c8 = arith.constant 8 : index
    %1 = vector.load %arg0[%c0_1, %c8] : memref<2x9xi32, #tpu.memory_space<vmem>>, vector<2x1xi32>
    %c0_2 = arith.constant 0 : index
    %c0_3 = arith.constant 0 : index
    %c0_4 = arith.constant 0 : index
    %2 = vector.load %arg1[%c0_2, %c0_3, %c0_4] : memref<2x8x32xf32, #tpu.memory_space<vmem>>, vector<2x8x32xf32>
    %3 = vector.shape_cast %2 : vector<2x8x32xf32> to vector<16x32xf32>
    %c64 = arith.constant 64 : index
    %c0_5 = arith.constant 0 : index
    %4 = vector.load %arg3[%c64, %c0_5] : memref<320x128xf32, #tpu.memory_space<vmem>>, vector<32x32xf32>
    %cst = arith.constant dense<0.000000e+00> : vector<16x32xf32>
    %5 = tpu.matmul %3, %4, %cst {dimension_numbers = #tpu.dot_dimension_numbers<[1], [0], [0], [1], [0, 0, 1, 1], [], []>} : vector<16x32xf32>, vector<32x32xf32>, vector<16x32xf32> -> vector<16x32xf32>
    %6 = vector.shape_cast %5 : vector<16x32xf32> to vector<2x8x32xf32>
    %7 = tpu.iota {dimensions = array<i32: 1>} : vector<2x8xi32>
    %8 = vector.broadcast %1 : vector<2x1xi32> to vector<2x8xi32>
    %9 = arith.cmpi slt, %7, %8 : vector<2x8xi32>
    %cst_6 = arith.constant 0.000000e+00 : f32
    %cst_7 = arith.constant -1.000000e+06 : f32
    %10 = vector.broadcast %cst_6 : f32 to vector<2x8xf32>
    %11 = vector.broadcast %cst_7 : f32 to vector<2x8xf32>
    %12 = arith.select %9, %10, %11 : vector<2x8xi1>, vector<2x8xf32>
    %c0_8 = arith.constant 0 : index
    %c0_9 = arith.constant 0 : index
    %13 = vector.load %arg3[%c0_8, %c0_9] : memref<320x128xf32, #tpu.memory_space<vmem>>, vector<32x16xf32>
    %c256 = arith.constant 256 : index
    %c0_10 = arith.constant 0 : index
    %14 = vector.load %arg3[%c256, %c0_10] : memref<320x128xf32, #tpu.memory_space<vmem>>, vector<16x96xf32>
    %cst_11 = arith.constant dense<0.000000e+00> : vector<32x96xf32>
    %15 = tpu.matmul %13, %14, %cst_11 {dimension_numbers = #tpu.dot_dimension_numbers<[1], [0], [0], [1], [0, 0, 1, 1], [], []>} : vector<32x16xf32>, vector<16x96xf32>, vector<32x96xf32> -> vector<32x96xf32>
    %c272 = arith.constant 272 : index
    %c0_12 = arith.constant 0 : index
    %16 = vector.load %arg3[%c272, %c0_12] : memref<320x128xf32, #tpu.memory_space<vmem>>, vector<1x96xf32>
    %17 = vector.broadcast %16 : vector<1x96xf32> to vector<32x96xf32>
    %18 = arith.addf %15, %17 : vector<32x96xf32>
    %19 = vector.shape_cast %0 : vector<2x8xi32> to vector<2x8x1xi32>
    %20 = tpu.iota {dimensions = array<i32: 2>} : vector<2x8x32xi32>
    %21 = vector.broadcast %19 : vector<2x8x1xi32> to vector<2x8x32xi32>
    %22 = arith.cmpi eq, %21, %20 : vector<2x8x32xi32>
    %23 = arith.extui %22 : vector<2x8x32xi1> to vector<2x8x32xi32>
    %24 = arith.sitofp %23 : vector<2x8x32xi32> to vector<2x8x32xf32>
    %25 = vector.shape_cast %24 : vector<2x8x32xf32> to vector<16x32xf32>
    %cst_13 = arith.constant dense<0.000000e+00> : vector<16x96xf32>
    %26 = tpu.matmul %25, %18, %cst_13 {dimension_numbers = #tpu.dot_dimension_numbers<[1], [0], [0], [1], [0, 0, 1, 1], [], []>} : vector<16x32xf32>, vector<32x96xf32>, vector<16x96xf32> -> vector<16x96xf32>
    %27 = vector.shape_cast %26 : vector<16x96xf32> to vector<2x8x96xf32>
    %c0_14 = arith.constant 0 : index
    %c0_15 = arith.constant 0 : index
    %c0_16 = arith.constant 0 : index
    %28 = vector.load %arg2[%c0_14, %c0_15, %c0_16] : memref<2x2x32xf32, #tpu.memory_space<vmem>>, vector<1x2x32xf32>
    %29 = vector.shape_cast %28 : vector<1x2x32xf32> to vector<2x32xf32>
    %c1 = arith.constant 1 : index
    %c0_17 = arith.constant 0 : index
    %c0_18 = arith.constant 0 : index
    %30 = vector.load %arg2[%c1, %c0_17, %c0_18] : memref<2x2x32xf32, #tpu.memory_space<vmem>>, vector<1x2x32xf32>
    %31 = vector.shape_cast %30 : vector<1x2x32xf32> to vector<2x32xf32>
    %c32 = arith.constant 32 : index
    %c0_19 = arith.constant 0 : index
    %32 = vector.load %arg3[%c32, %c0_19] : memref<320x128xf32, #tpu.memory_space<vmem>>, vector<32x32xf32>
    %cst_20 = arith.constant dense<0.000000e+00> : vector<2x32xf32>
    %33 = tpu.matmul %31, %32, %cst_20 {dimension_numbers = #tpu.dot_dimension_numbers<[1], [0], [0], [1], [0, 0, 1, 1], [], []>} : vector<2x32xf32>, vector<32x32xf32>, vector<2x32xf32> -> vector<2x32xf32>
    %34 = vector.shape_cast %33 : vector<2x32xf32> to vector<2x1x32xf32>
    %35 = vector.broadcast %34 : vector<2x1x32xf32> to vector<2x8x32xf32>
    %36 = arith.addf %35, %6 : vector<2x8x32xf32>
    %37 = math.tanh %36 : vector<2x8x32xf32>
    %c312 = arith.constant 312 : index
    %c0_21 = arith.constant 0 : index
    %38 = vector.load %arg3[%c312, %c0_21] : memref<320x128xf32, #tpu.memory_space<vmem>>, vector<1x32xf32>
    %39 = vector.shape_cast %38 : vector<1x32xf32> to vector<1x1x32xf32>
    %40 = vector.broadcast %39 : vector<1x1x32xf32> to vector<2x8x32xf32>
    %41 = arith.mulf %37, %40 : vector<2x8x32xf32>
    %cst_22 = arith.constant dense<0.000000e+00> : vector<2x8xf32>
    %42 = vector.multi_reduction <add>, %41, %cst_22 [2] : vector<2x8x32xf32> to vector<2x8xf32>
    %43 = arith.addf %42, %12 : vector<2x8xf32>
    %44 = math.exp %43 : vector<2x8xf32>
    %cst_23 = arith.constant dense<0.000000e+00> : vector<2xf32>
    %45 = vector.multi_reduction <add>, %44, %cst_23 [1] : vector<2x8xf32> to vector<2xf32>
    %46 = vector.shape_cast %45 : vector<2xf32> to vector<2x1xf32>
    %47 = tpu.reciprocal %46 {approx = true} : vector<2x1xf32> -> vector<2x1xf32>
    %48 = vector.broadcast %47 : vector<2x1xf32> to vector<2x8xf32>
    %49 = arith.mulf %44, %48 : vector<2x8xf32>
    %c16 = arith.constant 16 : index
    %c0_24 = arith.constant 0 : index
    %50 = vector.load %arg4[%c16, %c0_24] : memref<40x128xf32, #tpu.memory_space<vmem>>, vector<2x8xf32>
    tpu.vector_store %arg4[%c16, %c0_24], %49 {strides = array<i32>} : memref<40x128xf32, #tpu.memory_space<vmem>>, vector<2x8xf32>,
    %51 = vector.shape_cast %49 : vector<2x8xf32> to vector<2x8x1xf32>
    %52 = vector.broadcast %51 : vector<2x8x1xf32> to vector<2x8x32xf32>
    %53 = arith.mulf %52, %2 : vector<2x8x32xf32>
    %cst_25 = arith.constant dense<0.000000e+00> : vector<2x32xf32>
    %54 = vector.multi_reduction <add>, %53, %cst_25 [1] : vector<2x8x32xf32> to vector<2x32xf32>
    %c128 = arith.constant 128 : index
    %c0_26 = arith.constant 0 : index
    %55 = vector.load %arg3[%c128, %c0_26] : memref<320x128xf32, #tpu.memory_space<vmem>>, vector<32x96xf32>
    %cst_27 = arith.constant dense<0.000000e+00> : vector<2x96xf32>
    %56 = tpu.matmul %54, %55, %cst_27 {dimension_numbers = #tpu.dot_dimension_numbers<[1], [0], [0], [1], [0, 0, 1, 1], [], []>} : vector<2x32xf32>, vector<32x96xf32>, vector<2x96xf32> -> vector<2x96xf32>
    %57 = vector.extract_strided_slice %27 {offsets = [0, 0, 0], sizes = [2, 1, 96], strides = [1, 1, 1]} : vector<2x8x96xf32> to vector<2x1x96xf32>
    %58 = vector.shape_cast %57 : vector<2x1x96xf32> to vector<2x96xf32>
    %59 = arith.addf %56, %58 : vector<2x96xf32>
    %c160 = arith.constant 160 : index
    %c0_28 = arith.constant 0 : index
    %60 = vector.load %arg3[%c160, %c0_28] : memref<320x128xf32, #tpu.memory_space<vmem>>, vector<32x96xf32>
    %c280 = arith.constant 280 : index
    %c0_29 = arith.constant 0 : index
    %61 = vector.load %arg3[%c280, %c0_29] : memref<320x128xf32, #tpu.memory_space<vmem>>, vector<1x96xf32>
    %cst_30 = arith.constant dense<0.000000e+00> : vector<2x96xf32>
    %62 = tpu.matmul %29, %60, %cst_30 {dimension_numbers = #tpu.dot_dimension_numbers<[1], [0], [0], [1], [0, 0, 1, 1], [], []>} : vector<2x32xf32>, vector<32x96xf32>, vector<2x96xf32> -> vector<2x96xf32>
    %63 = vector.broadcast %61 : vector<1x96xf32> to vector<2x96xf32>
    %64 = arith.addf %62, %63 : vector<2x96xf32>
    %65 = vector.extract_strided_slice %59 {offsets = [0, 0], sizes = [2, 32], strides = [1, 1]} : vector<2x96xf32> to vector<2x32xf32>
    %66 = vector.extract_strided_slice %64 {offsets = [0, 0], sizes = [2, 32], strides = [1, 1]} : vector<2x96xf32> to vector<2x32xf32>
    %67 = arith.addf %65, %66 : vector<2x32xf32>
    %68 = arith.negf %67 : vector<2x32xf32>
    %69 = math.exp %68 : vector<2x32xf32>
    %cst_31 = arith.constant 1.000000e+00 : f32
    %70 = vector.broadcast %cst_31 : f32 to vector<2x32xf32>
    %71 = arith.addf %70, %69 : vector<2x32xf32>
    %72 = arith.divf %70, %71 : vector<2x32xf32>
    %73 = vector.extract_strided_slice %59 {offsets = [0, 32], sizes = [2, 32], strides = [1, 1]} : vector<2x96xf32> to vector<2x32xf32>
    %74 = vector.extract_strided_slice %64 {offsets = [0, 32], sizes = [2, 32], strides = [1, 1]} : vector<2x96xf32> to vector<2x32xf32>
    %75 = arith.addf %73, %74 : vector<2x32xf32>
    %76 = arith.negf %75 : vector<2x32xf32>
    %77 = math.exp %76 : vector<2x32xf32>
    %cst_32 = arith.constant 1.000000e+00 : f32
    %78 = vector.broadcast %cst_32 : f32 to vector<2x32xf32>
    %79 = arith.addf %78, %77 : vector<2x32xf32>
    %80 = arith.divf %78, %79 : vector<2x32xf32>
    %81 = vector.extract_strided_slice %59 {offsets = [0, 64], sizes = [2, 32], strides = [1, 1]} : vector<2x96xf32> to vector<2x32xf32>
    %82 = vector.extract_strided_slice %64 {offsets = [0, 64], sizes = [2, 32], strides = [1, 1]} : vector<2x96xf32> to vector<2x32xf32>
    %83 = arith.mulf %72, %82 : vector<2x32xf32>
    %84 = arith.addf %81, %83 : vector<2x32xf32>
    %85 = math.tanh %84 : vector<2x32xf32>
    %cst_33 = arith.constant 1.000000e+00 : f32
    %86 = vector.broadcast %cst_33 : f32 to vector<2x32xf32>
    %87 = arith.subf %86, %80 : vector<2x32xf32>
    %88 = arith.mulf %87, %85 : vector<2x32xf32>
    %89 = arith.mulf %80, %29 : vector<2x32xf32>
    %90 = arith.addf %88, %89 : vector<2x32xf32>
    %c192 = arith.constant 192 : index
    %c0_34 = arith.constant 0 : index
    %91 = vector.load %arg3[%c192, %c0_34] : memref<320x128xf32, #tpu.memory_space<vmem>>, vector<32x96xf32>
    %cst_35 = arith.constant dense<0.000000e+00> : vector<2x96xf32>
    %92 = tpu.matmul %90, %91, %cst_35 {dimension_numbers = #tpu.dot_dimension_numbers<[1], [0], [0], [1], [0, 0, 1, 1], [], []>} : vector<2x32xf32>, vector<32x96xf32>, vector<2x96xf32> -> vector<2x96xf32>
    %c288 = arith.constant 288 : index
    %c0_36 = arith.constant 0 : index
    %93 = vector.load %arg3[%c288, %c0_36] : memref<320x128xf32, #tpu.memory_space<vmem>>, vector<1x96xf32>
    %94 = vector.broadcast %93 : vector<1x96xf32> to vector<2x96xf32>
    %95 = arith.addf %92, %94 : vector<2x96xf32>
    %c224 = arith.constant 224 : index
    %c0_37 = arith.constant 0 : index
    %96 = vector.load %arg3[%c224, %c0_37] : memref<320x128xf32, #tpu.memory_space<vmem>>, vector<32x96xf32>
    %c296 = arith.constant 296 : index
    %c0_38 = arith.constant 0 : index
    %97 = vector.load %arg3[%c296, %c0_38] : memref<320x128xf32, #tpu.memory_space<vmem>>, vector<1x96xf32>
    %cst_39 = arith.constant dense<0.000000e+00> : vector<2x96xf32>
    %98 = tpu.matmul %31, %96, %cst_39 {dimension_numbers = #tpu.dot_dimension_numbers<[1], [0], [0], [1], [0, 0, 1, 1], [], []>} : vector<2x32xf32>, vector<32x96xf32>, vector<2x96xf32> -> vector<2x96xf32>
    %99 = vector.broadcast %97 : vector<1x96xf32> to vector<2x96xf32>
    %100 = arith.addf %98, %99 : vector<2x96xf32>
    %101 = vector.extract_strided_slice %95 {offsets = [0, 0], sizes = [2, 32], strides = [1, 1]} : vector<2x96xf32> to vector<2x32xf32>
    %102 = vector.extract_strided_slice %100 {offsets = [0, 0], sizes = [2, 32], strides = [1, 1]} : vector<2x96xf32> to vector<2x32xf32>
    %103 = arith.addf %101, %102 : vector<2x32xf32>
    %104 = arith.negf %103 : vector<2x32xf32>
    %105 = math.exp %104 : vector<2x32xf32>
    %cst_40 = arith.constant 1.000000e+00 : f32
    %106 = vector.broadcast %cst_40 : f32 to vector<2x32xf32>
    %107 = arith.addf %106, %105 : vector<2x32xf32>
    %108 = arith.divf %106, %107 : vector<2x32xf32>
    %109 = vector.extract_strided_slice %95 {offsets = [0, 32], sizes = [2, 32], strides = [1, 1]} : vector<2x96xf32> to vector<2x32xf32>
    %110 = vector.extract_strided_slice %100 {offsets = [0, 32], sizes = [2, 32], strides = [1, 1]} : vector<2x96xf32> to vector<2x32xf32>
    %111 = arith.addf %109, %110 : vector<2x32xf32>
    %112 = arith.negf %111 : vector<2x32xf32>
    %113 = math.exp %112 : vector<2x32xf32>
    %cst_41 = arith.constant 1.000000e+00 : f32
    %114 = vector.broadcast %cst_41 : f32 to vector<2x32xf32>
    %115 = arith.addf %114, %113 : vector<2x32xf32>
    %116 = arith.divf %114, %115 : vector<2x32xf32>
    %117 = vector.extract_strided_slice %95 {offsets = [0, 64], sizes = [2, 32], strides = [1, 1]} : vector<2x96xf32> to vector<2x32xf32>
    %118 = vector.extract_strided_slice %100 {offsets = [0, 64], sizes = [2, 32], strides = [1, 1]} : vector<2x96xf32> to vector<2x32xf32>
    %119 = arith.mulf %108, %118 : vector<2x32xf32>
    %120 = arith.addf %117, %119 : vector<2x32xf32>
    %121 = math.tanh %120 : vector<2x32xf32>
    %cst_42 = arith.constant 1.000000e+00 : f32
    %122 = vector.broadcast %cst_42 : f32 to vector<2x32xf32>
    %123 = arith.subf %122, %116 : vector<2x32xf32>
    %124 = arith.mulf %123, %121 : vector<2x32xf32>
    %125 = arith.mulf %116, %31 : vector<2x32xf32>
    %126 = arith.addf %124, %125 : vector<2x32xf32>
    %127 = vector.extract_strided_slice %126 {offsets = [0, 0], sizes = [1, 32], strides = [1, 1]} : vector<2x32xf32> to vector<1x32xf32>
    %c0_43 = arith.constant 0 : index
    %c0_44 = arith.constant 0 : index
    %128 = vector.load %arg5[%c0_43, %c0_44] : memref<16x32xf32, #tpu.memory_space<vmem>>, vector<1x32xf32>
    tpu.vector_store %arg5[%c0_43, %c0_44], %127 {strides = array<i32>} : memref<16x32xf32, #tpu.memory_space<vmem>>, vector<1x32xf32>,
    %129 = vector.extract_strided_slice %126 {offsets = [1, 0], sizes = [1, 32], strides = [1, 1]} : vector<2x32xf32> to vector<1x32xf32>
    %c8_45 = arith.constant 8 : index
    %c0_46 = arith.constant 0 : index
    %130 = vector.load %arg5[%c8_45, %c0_46] : memref<16x32xf32, #tpu.memory_space<vmem>>, vector<1x32xf32>
    tpu.vector_store %arg5[%c8_45, %c0_46], %129 {strides = array<i32>} : memref<16x32xf32, #tpu.memory_space<vmem>>, vector<1x32xf32>,
    %c32_47 = arith.constant 32 : index
    %c0_48 = arith.constant 0 : index
    %131 = vector.load %arg3[%c32_47, %c0_48] : memref<320x128xf32, #tpu.memory_space<vmem>>, vector<32x32xf32>
    %cst_49 = arith.constant dense<0.000000e+00> : vector<2x32xf32>
    %132 = tpu.matmul %126, %131, %cst_49 {dimension_numbers = #tpu.dot_dimension_numbers<[1], [0], [0], [1], [0, 0, 1, 1], [], []>} : vector<2x32xf32>, vector<32x32xf32>, vector<2x32xf32> -> vector<2x32xf32>
    %133 = vector.shape_cast %132 : vector<2x32xf32> to vector<2x1x32xf32>
    %134 = vector.broadcast %133 : vector<2x1x32xf32> to vector<2x8x32xf32>
    %135 = arith.addf %134, %6 : vector<2x8x32xf32>
    %136 = math.tanh %135 : vector<2x8x32xf32>
    %c312_50 = arith.constant 312 : index
    %c0_51 = arith.constant 0 : index
    %137 = vector.load %arg3[%c312_50, %c0_51] : memref<320x128xf32, #tpu.memory_space<vmem>>, vector<1x32xf32>
    %138 = vector.shape_cast %137 : vector<1x32xf32> to vector<1x1x32xf32>
    %139 = vector.broadcast %138 : vector<1x1x32xf32> to vector<2x8x32xf32>
    %140 = arith.mulf %136, %139 : vector<2x8x32xf32>
    %cst_52 = arith.constant dense<0.000000e+00> : vector<2x8xf32>
    %141 = vector.multi_reduction <add>, %140, %cst_52 [2] : vector<2x8x32xf32> to vector<2x8xf32>
    %142 = arith.addf %141, %12 : vector<2x8xf32>
    %143 = math.exp %142 : vector<2x8xf32>
    %cst_53 = arith.constant dense<0.000000e+00> : vector<2xf32>
    %144 = vector.multi_reduction <add>, %143, %cst_53 [1] : vector<2x8xf32> to vector<2xf32>
    %145 = vector.shape_cast %144 : vector<2xf32> to vector<2x1xf32>
    %146 = tpu.reciprocal %145 {approx = true} : vector<2x1xf32> -> vector<2x1xf32>
    %147 = vector.broadcast %146 : vector<2x1xf32> to vector<2x8xf32>
    %148 = arith.mulf %143, %147 : vector<2x8xf32>
    %c18 = arith.constant 18 : index
    %c0_54 = arith.constant 0 : index
    %149 = vector.load %arg4[%c18, %c0_54] : memref<40x128xf32, #tpu.memory_space<vmem>>, vector<2x8xf32>
    tpu.vector_store %arg4[%c18, %c0_54], %148 {strides = array<i32>} : memref<40x128xf32, #tpu.memory_space<vmem>>, vector<2x8xf32>,
    %150 = vector.shape_cast %148 : vector<2x8xf32> to vector<2x8x1xf32>
    %151 = vector.broadcast %150 : vector<2x8x1xf32> to vector<2x8x32xf32>
    %152 = arith.mulf %151, %2 : vector<2x8x32xf32>
    %cst_55 = arith.constant dense<0.000000e+00> : vector<2x32xf32>
    %153 = vector.multi_reduction <add>, %152, %cst_55 [1] : vector<2x8x32xf32> to vector<2x32xf32>
    %c128_56 = arith.constant 128 : index
    %c0_57 = arith.constant 0 : index
    %154 = vector.load %arg3[%c128_56, %c0_57] : memref<320x128xf32, #tpu.memory_space<vmem>>, vector<32x96xf32>
    %cst_58 = arith.constant dense<0.000000e+00> : vector<2x96xf32>
    %155 = tpu.matmul %153, %154, %cst_58 {dimension_numbers = #tpu.dot_dimension_numbers<[1], [0], [0], [1], [0, 0, 1, 1], [], []>} : vector<2x32xf32>, vector<32x96xf32>, vector<2x96xf32> -> vector<2x96xf32>
    %156 = vector.extract_strided_slice %27 {offsets = [0, 1, 0], sizes = [2, 1, 96], strides = [1, 1, 1]} : vector<2x8x96xf32> to vector<2x1x96xf32>
    %157 = vector.shape_cast %156 : vector<2x1x96xf32> to vector<2x96xf32>
    %158 = arith.addf %155, %157 : vector<2x96xf32>
    %c160_59 = arith.constant 160 : index
    %c0_60 = arith.constant 0 : index
    %159 = vector.load %arg3[%c160_59, %c0_60] : memref<320x128xf32, #tpu.memory_space<vmem>>, vector<32x96xf32>
    %c280_61 = arith.constant 280 : index
    %c0_62 = arith.constant 0 : index
    %160 = vector.load %arg3[%c280_61, %c0_62] : memref<320x128xf32, #tpu.memory_space<vmem>>, vector<1x96xf32>
    %cst_63 = arith.constant dense<0.000000e+00> : vector<2x96xf32>
    %161 = tpu.matmul %90, %159, %cst_63 {dimension_numbers = #tpu.dot_dimension_numbers<[1], [0], [0], [1], [0, 0, 1, 1], [], []>} : vector<2x32xf32>, vector<32x96xf32>, vector<2x96xf32> -> vector<2x96xf32>
    %162 = vector.broadcast %160 : vector<1x96xf32> to vector<2x96xf32>
    %163 = arith.addf %161, %162 : vector<2x96xf32>
    %164 = vector.extract_strided_slice %158 {offsets = [0, 0], sizes = [2, 32], strides = [1, 1]} : vector<2x96xf32> to vector<2x32xf32>
    %165 = vector.extract_strided_slice %163 {offsets = [0, 0], sizes = [2, 32], strides = [1, 1]} : vector<2x96xf32> to vector<2x32xf32>
    %166 = arith.addf %164, %165 : vector<2x32xf32>
    %167 = arith.negf %166 : vector<2x32xf32>
    %168 = math.exp %167 : vector<2x32xf32>
    %cst_64 = arith.constant 1.000000e+00 : f32
    %169 = vector.broadcast %cst_64 : f32 to vector<2x32xf32>
    %170 = arith.addf %169, %168 : vector<2x32xf32>
    %171 = arith.divf %169, %170 : vector<2x32xf32>
    %172 = vector.extract_strided_slice %158 {offsets = [0, 32], sizes = [2, 32], strides = [1, 1]} : vector<2x96xf32> to vector<2x32xf32>
    %173 = vector.extract_strided_slice %163 {offsets = [0, 32], sizes = [2, 32], strides = [1, 1]} : vector<2x96xf32> to vector<2x32xf32>
    %174 = arith.addf %172, %173 : vector<2x32xf32>
    %175 = arith.negf %174 : vector<2x32xf32>
    %176 = math.exp %175 : vector<2x32xf32>
    %cst_65 = arith.constant 1.000000e+00 : f32
    %177 = vector.broadcast %cst_65 : f32 to vector<2x32xf32>
    %178 = arith.addf %177, %176 : vector<2x32xf32>
    %179 = arith.divf %177, %178 : vector<2x32xf32>
    %180 = vector.extract_strided_slice %158 {offsets = [0, 64], sizes = [2, 32], strides = [1, 1]} : vector<2x96xf32> to vector<2x32xf32>
    %181 = vector.extract_strided_slice %163 {offsets = [0, 64], sizes = [2, 32], strides = [1, 1]} : vector<2x96xf32> to vector<2x32xf32>
    %182 = arith.mulf %171, %181 : vector<2x32xf32>
    %183 = arith.addf %180, %182 : vector<2x32xf32>
    %184 = math.tanh %183 : vector<2x32xf32>
    %cst_66 = arith.constant 1.000000e+00 : f32
    %185 = vector.broadcast %cst_66 : f32 to vector<2x32xf32>
    %186 = arith.subf %185, %179 : vector<2x32xf32>
    %187 = arith.mulf %186, %184 : vector<2x32xf32>
    %188 = arith.mulf %179, %90 : vector<2x32xf32>
    %189 = arith.addf %187, %188 : vector<2x32xf32>
    %c192_67 = arith.constant 192 : index
    %c0_68 = arith.constant 0 : index
    %190 = vector.load %arg3[%c192_67, %c0_68] : memref<320x128xf32, #tpu.memory_space<vmem>>, vector<32x96xf32>
    %cst_69 = arith.constant dense<0.000000e+00> : vector<2x96xf32>
    %191 = tpu.matmul %189, %190, %cst_69 {dimension_numbers = #tpu.dot_dimension_numbers<[1], [0], [0], [1], [0, 0, 1, 1], [], []>} : vector<2x32xf32>, vector<32x96xf32>, vector<2x96xf32> -> vector<2x96xf32>
    %c288_70 = arith.constant 288 : index
    %c0_71 = arith.constant 0 : index
    %192 = vector.load %arg3[%c288_70, %c0_71] : memref<320x128xf32, #tpu.memory_space<vmem>>, vector<1x96xf32>
    %193 = vector.broadcast %192 : vector<1x96xf32> to vector<2x96xf32>
    %194 = arith.addf %191, %193 : vector<2x96xf32>
    %c224_72 = arith.constant 224 : index
    %c0_73 = arith.constant 0 : index
    %195 = vector.load %arg3[%c224_72, %c0_73] : memref<320x128xf32, #tpu.memory_space<vmem>>, vector<32x96xf32>
    %c296_74 = arith.constant 296 : index
    %c0_75 = arith.constant 0 : index
    %196 = vector.load %arg3[%c296_74, %c0_75] : memref<320x128xf32, #tpu.memory_space<vmem>>, vector<1x96xf32>
    %cst_76 = arith.constant dense<0.000000e+00> : vector<2x96xf32>
    %197 = tpu.matmul %126, %195, %cst_76 {dimension_numbers = #tpu.dot_dimension_numbers<[1], [0], [0], [1], [0, 0, 1, 1], [], []>} : vector<2x32xf32>, vector<32x96xf32>, vector<2x96xf32> -> vector<2x96xf32>
    %198 = vector.broadcast %196 : vector<1x96xf32> to vector<2x96xf32>
    %199 = arith.addf %197, %198 : vector<2x96xf32>
    %200 = vector.extract_strided_slice %194 {offsets = [0, 0], sizes = [2, 32], strides = [1, 1]} : vector<2x96xf32> to vector<2x32xf32>
    %201 = vector.extract_strided_slice %199 {offsets = [0, 0], sizes = [2, 32], strides = [1, 1]} : vector<2x96xf32> to vector<2x32xf32>
    %202 = arith.addf %200, %201 : vector<2x32xf32>
    %203 = arith.negf %202 : vector<2x32xf32>
    %204 = math.exp %203 : vector<2x32xf32>
    %cst_77 = arith.constant 1.000000e+00 : f32
    %205 = vector.broadcast %cst_77 : f32 to vector<2x32xf32>
    %206 = arith.addf %205, %204 : vector<2x32xf32>
    %207 = arith.divf %205, %206 : vector<2x32xf32>
    %208 = vector.extract_strided_slice %194 {offsets = [0, 32], sizes = [2, 32], strides = [1, 1]} : vector<2x96xf32> to vector<2x32xf32>
    %209 = vector.extract_strided_slice %199 {offsets = [0, 32], sizes = [2, 32], strides = [1, 1]} : vector<2x96xf32> to vector<2x32xf32>
    %210 = arith.addf %208, %209 : vector<2x32xf32>
    %211 = arith.negf %210 : vector<2x32xf32>
    %212 = math.exp %211 : vector<2x32xf32>
    %cst_78 = arith.constant 1.000000e+00 : f32
    %213 = vector.broadcast %cst_78 : f32 to vector<2x32xf32>
    %214 = arith.addf %213, %212 : vector<2x32xf32>
    %215 = arith.divf %213, %214 : vector<2x32xf32>
    %216 = vector.extract_strided_slice %194 {offsets = [0, 64], sizes = [2, 32], strides = [1, 1]} : vector<2x96xf32> to vector<2x32xf32>
    %217 = vector.extract_strided_slice %199 {offsets = [0, 64], sizes = [2, 32], strides = [1, 1]} : vector<2x96xf32> to vector<2x32xf32>
    %218 = arith.mulf %207, %217 : vector<2x32xf32>
    %219 = arith.addf %216, %218 : vector<2x32xf32>
    %220 = math.tanh %219 : vector<2x32xf32>
    %cst_79 = arith.constant 1.000000e+00 : f32
    %221 = vector.broadcast %cst_79 : f32 to vector<2x32xf32>
    %222 = arith.subf %221, %215 : vector<2x32xf32>
    %223 = arith.mulf %222, %220 : vector<2x32xf32>
    %224 = arith.mulf %215, %126 : vector<2x32xf32>
    %225 = arith.addf %223, %224 : vector<2x32xf32>
    %226 = vector.extract_strided_slice %225 {offsets = [0, 0], sizes = [1, 32], strides = [1, 1]} : vector<2x32xf32> to vector<1x32xf32>
    %c1_80 = arith.constant 1 : index
    %c0_81 = arith.constant 0 : index
    %227 = vector.load %arg5[%c1_80, %c0_81] : memref<16x32xf32, #tpu.memory_space<vmem>>, vector<1x32xf32>
    tpu.vector_store %arg5[%c1_80, %c0_81], %226 {strides = array<i32>} : memref<16x32xf32, #tpu.memory_space<vmem>>, vector<1x32xf32>,
    %228 = vector.extract_strided_slice %225 {offsets = [1, 0], sizes = [1, 32], strides = [1, 1]} : vector<2x32xf32> to vector<1x32xf32>
    %c9 = arith.constant 9 : index
    %c0_82 = arith.constant 0 : index
    %229 = vector.load %arg5[%c9, %c0_82] : memref<16x32xf32, #tpu.memory_space<vmem>>, vector<1x32xf32>
    tpu.vector_store %arg5[%c9, %c0_82], %228 {strides = array<i32>} : memref<16x32xf32, #tpu.memory_space<vmem>>, vector<1x32xf32>,
    %c32_83 = arith.constant 32 : index
    %c0_84 = arith.constant 0 : index
    %230 = vector.load %arg3[%c32_83, %c0_84] : memref<320x128xf32, #tpu.memory_space<vmem>>, vector<32x32xf32>
    %cst_85 = arith.constant dense<0.000000e+00> : vector<2x32xf32>
    %231 = tpu.matmul %225, %230, %cst_85 {dimension_numbers = #tpu.dot_dimension_numbers<[1], [0], [0], [1], [0, 0, 1, 1], [], []>} : vector<2x32xf32>, vector<32x32xf32>, vector<2x32xf32> -> vector<2x32xf32>
    %232 = vector.shape_cast %231 : vector<2x32xf32> to vector<2x1x32xf32>
    %233 = vector.broadcast %232 : vector<2x1x32xf32> to vector<2x8x32xf32>
    %234 = arith.addf %233, %6 : vector<2x8x32xf32>
    %235 = math.tanh %234 : vector<2x8x32xf32>
    %c312_86 = arith.constant 312 : index
    %c0_87 = arith.constant 0 : index
    %236 = vector.load %arg3[%c312_86, %c0_87] : memref<320x128xf32, #tpu.memory_space<vmem>>, vector<1x32xf32>
    %237 = vector.shape_cast %236 : vector<1x32xf32> to vector<1x1x32xf32>
    %238 = vector.broadcast %237 : vector<1x1x32xf32> to vector<2x8x32xf32>
    %239 = arith.mulf %235, %238 : vector<2x8x32xf32>
    %cst_88 = arith.constant dense<0.000000e+00> : vector<2x8xf32>
    %240 = vector.multi_reduction <add>, %239, %cst_88 [2] : vector<2x8x32xf32> to vector<2x8xf32>
    %241 = arith.addf %240, %12 : vector<2x8xf32>
    %242 = math.exp %241 : vector<2x8xf32>
    %cst_89 = arith.constant dense<0.000000e+00> : vector<2xf32>
    %243 = vector.multi_reduction <add>, %242, %cst_89 [1] : vector<2x8xf32> to vector<2xf32>
    %244 = vector.shape_cast %243 : vector<2xf32> to vector<2x1xf32>
    %245 = tpu.reciprocal %244 {approx = true} : vector<2x1xf32> -> vector<2x1xf32>
    %246 = vector.broadcast %245 : vector<2x1xf32> to vector<2x8xf32>
    %247 = arith.mulf %242, %246 : vector<2x8xf32>
    %c20 = arith.constant 20 : index
    %c0_90 = arith.constant 0 : index
    %248 = vector.load %arg4[%c20, %c0_90] : memref<40x128xf32, #tpu.memory_space<vmem>>, vector<2x8xf32>
    tpu.vector_store %arg4[%c20, %c0_90], %247 {strides = array<i32>} : memref<40x128xf32, #tpu.memory_space<vmem>>, vector<2x8xf32>,
    %249 = vector.shape_cast %247 : vector<2x8xf32> to vector<2x8x1xf32>
    %250 = vector.broadcast %249 : vector<2x8x1xf32> to vector<2x8x32xf32>
    %251 = arith.mulf %250, %2 : vector<2x8x32xf32>
    %cst_91 = arith.constant dense<0.000000e+00> : vector<2x32xf32>
    %252 = vector.multi_reduction <add>, %251, %cst_91 [1] : vector<2x8x32xf32> to vector<2x32xf32>
    %c128_92 = arith.constant 128 : index
    %c0_93 = arith.constant 0 : index
    %253 = vector.load %arg3[%c128_92, %c0_93] : memref<320x128xf32, #tpu.memory_space<vmem>>, vector<32x96xf32>
    %cst_94 = arith.constant dense<0.000000e+00> : vector<2x96xf32>
    %254 = tpu.matmul %252, %253, %cst_94 {dimension_numbers = #tpu.dot_dimension_numbers<[1], [0], [0], [1], [0, 0, 1, 1], [], []>} : vector<2x32xf32>, vector<32x96xf32>, vector<2x96xf32> -> vector<2x96xf32>
    %255 = vector.extract_strided_slice %27 {offsets = [0, 2, 0], sizes = [2, 1, 96], strides = [1, 1, 1]} : vector<2x8x96xf32> to vector<2x1x96xf32>
    %256 = vector.shape_cast %255 : vector<2x1x96xf32> to vector<2x96xf32>
    %257 = arith.addf %254, %256 : vector<2x96xf32>
    %c160_95 = arith.constant 160 : index
    %c0_96 = arith.constant 0 : index
    %258 = vector.load %arg3[%c160_95, %c0_96] : memref<320x128xf32, #tpu.memory_space<vmem>>, vector<32x96xf32>
    %c280_97 = arith.constant 280 : index
    %c0_98 = arith.constant 0 : index
    %259 = vector.load %arg3[%c280_97, %c0_98] : memref<320x128xf32, #tpu.memory_space<vmem>>, vector<1x96xf32>
    %cst_99 = arith.constant dense<0.000000e+00> : vector<2x96xf32>
    %260 = tpu.matmul %189, %258, %cst_99 {dimension_numbers = #tpu.dot_dimension_numbers<[1], [0], [0], [1], [0, 0, 1, 1], [], []>} : vector<2x32xf32>, vector<32x96xf32>, vector<2x96xf32> -> vector<2x96xf32>
    %261 = vector.broadcast %259 : vector<1x96xf32> to vector<2x96xf32>
    %262 = arith.addf %260, %261 : vector<2x96xf32>
    %263 = vector.extract_strided_slice %257 {offsets = [0, 0], sizes = [2, 32], strides = [1, 1]} : vector<2x96xf32> to vector<2x32xf32>
    %264 = vector.extract_strided_slice %262 {offsets = [0, 0], sizes = [2, 32], strides = [1, 1]} : vector<2x96xf32> to vector<2x32xf32>
    %265 = arith.addf %263, %264 : vector<2x32xf32>
    %266 = arith.negf %265 : vector<2x32xf32>
    %267 = math.exp %266 : vector<2x32xf32>
    %cst_100 = arith.constant 1.000000e+00 : f32
    %268 = vector.broadcast %cst_100 : f32 to vector<2x32xf32>
    %269 = arith.addf %268, %267 : vector<2x32xf32>
    %270 = arith.divf %268, %269 : vector<2x32xf32>
    %271 = vector.extract_strided_slice %257 {offsets = [0, 32], sizes = [2, 32], strides = [1, 1]} : vector<2x96xf32> to vector<2x32xf32>
    %272 = vector.extract_strided_slice %262 {offsets = [0, 32], sizes = [2, 32], strides = [1, 1]} : vector<2x96xf32> to vector<2x32xf32>
    %273 = arith.addf %271, %272 : vector<2x32xf32>
    %274 = arith.negf %273 : vector<2x32xf32>
    %275 = math.exp %274 : vector<2x32xf32>
    %cst_101 = arith.constant 1.000000e+00 : f32
    %276 = vector.broadcast %cst_101 : f32 to vector<2x32xf32>
    %277 = arith.addf %276, %275 : vector<2x32xf32>
    %278 = arith.divf %276, %277 : vector<2x32xf32>
    %279 = vector.extract_strided_slice %257 {offsets = [0, 64], sizes = [2, 32], strides = [1, 1]} : vector<2x96xf32> to vector<2x32xf32>
    %280 = vector.extract_strided_slice %262 {offsets = [0, 64], sizes = [2, 32], strides = [1, 1]} : vector<2x96xf32> to vector<2x32xf32>
    %281 = arith.mulf %270, %280 : vector<2x32xf32>
    %282 = arith.addf %279, %281 : vector<2x32xf32>
    %283 = math.tanh %282 : vector<2x32xf32>
    %cst_102 = arith.constant 1.000000e+00 : f32
    %284 = vector.broadcast %cst_102 : f32 to vector<2x32xf32>
    %285 = arith.subf %284, %278 : vector<2x32xf32>
    %286 = arith.mulf %285, %283 : vector<2x32xf32>
    %287 = arith.mulf %278, %189 : vector<2x32xf32>
    %288 = arith.addf %286, %287 : vector<2x32xf32>
    %c192_103 = arith.constant 192 : index
    %c0_104 = arith.constant 0 : index
    %289 = vector.load %arg3[%c192_103, %c0_104] : memref<320x128xf32, #tpu.memory_space<vmem>>, vector<32x96xf32>
    %cst_105 = arith.constant dense<0.000000e+00> : vector<2x96xf32>
    %290 = tpu.matmul %288, %289, %cst_105 {dimension_numbers = #tpu.dot_dimension_numbers<[1], [0], [0], [1], [0, 0, 1, 1], [], []>} : vector<2x32xf32>, vector<32x96xf32>, vector<2x96xf32> -> vector<2x96xf32>
    %c288_106 = arith.constant 288 : index
    %c0_107 = arith.constant 0 : index
    %291 = vector.load %arg3[%c288_106, %c0_107] : memref<320x128xf32, #tpu.memory_space<vmem>>, vector<1x96xf32>
    %292 = vector.broadcast %291 : vector<1x96xf32> to vector<2x96xf32>
    %293 = arith.addf %290, %292 : vector<2x96xf32>
    %c224_108 = arith.constant 224 : index
    %c0_109 = arith.constant 0 : index
    %294 = vector.load %arg3[%c224_108, %c0_109] : memref<320x128xf32, #tpu.memory_space<vmem>>, vector<32x96xf32>
    %c296_110 = arith.constant 296 : index
    %c0_111 = arith.constant 0 : index
    %295 = vector.load %arg3[%c296_110, %c0_111] : memref<320x128xf32, #tpu.memory_space<vmem>>, vector<1x96xf32>
    %cst_112 = arith.constant dense<0.000000e+00> : vector<2x96xf32>
    %296 = tpu.matmul %225, %294, %cst_112 {dimension_numbers = #tpu.dot_dimension_numbers<[1], [0], [0], [1], [0, 0, 1, 1], [], []>} : vector<2x32xf32>, vector<32x96xf32>, vector<2x96xf32> -> vector<2x96xf32>
    %297 = vector.broadcast %295 : vector<1x96xf32> to vector<2x96xf32>
    %298 = arith.addf %296, %297 : vector<2x96xf32>
    %299 = vector.extract_strided_slice %293 {offsets = [0, 0], sizes = [2, 32], strides = [1, 1]} : vector<2x96xf32> to vector<2x32xf32>
    %300 = vector.extract_strided_slice %298 {offsets = [0, 0], sizes = [2, 32], strides = [1, 1]} : vector<2x96xf32> to vector<2x32xf32>
    %301 = arith.addf %299, %300 : vector<2x32xf32>
    %302 = arith.negf %301 : vector<2x32xf32>
    %303 = math.exp %302 : vector<2x32xf32>
    %cst_113 = arith.constant 1.000000e+00 : f32
    %304 = vector.broadcast %cst_113 : f32 to vector<2x32xf32>
    %305 = arith.addf %304, %303 : vector<2x32xf32>
    %306 = arith.divf %304, %305 : vector<2x32xf32>
    %307 = vector.extract_strided_slice %293 {offsets = [0, 32], sizes = [2, 32], strides = [1, 1]} : vector<2x96xf32> to vector<2x32xf32>
    %308 = vector.extract_strided_slice %298 {offsets = [0, 32], sizes = [2, 32], strides = [1, 1]} : vector<2x96xf32> to vector<2x32xf32>
    %309 = arith.addf %307, %308 : vector<2x32xf32>
    %310 = arith.negf %309 : vector<2x32xf32>
    %311 = math.exp %310 : vector<2x32xf32>
    %cst_114 = arith.constant 1.000000e+00 : f32
    %312 = vector.broadcast %cst_114 : f32 to vector<2x32xf32>
    %313 = arith.addf %312, %311 : vector<2x32xf32>
    %314 = arith.divf %312, %313 : vector<2x32xf32>
    %315 = vector.extract_strided_slice %293 {offsets = [0, 64], sizes = [2, 32], strides = [1, 1]} : vector<2x96xf32> to vector<2x32xf32>
    %316 = vector.extract_strided_slice %298 {offsets = [0, 64], sizes = [2, 32], strides = [1, 1]} : vector<2x96xf32> to vector<2x32xf32>
    %317 = arith.mulf %306, %316 : vector<2x32xf32>
    %318 = arith.addf %315, %317 : vector<2x32xf32>
    %319 = math.tanh %318 : vector<2x32xf32>
    %cst_115 = arith.constant 1.000000e+00 : f32
    %320 = vector.broadcast %cst_115 : f32 to vector<2x32xf32>
    %321 = arith.subf %320, %314 : vector<2x32xf32>
    %322 = arith.mulf %321, %319 : vector<2x32xf32>
    %323 = arith.mulf %314, %225 : vector<2x32xf32>
    %324 = arith.addf %322, %323 : vector<2x32xf32>
    %325 = vector.extract_strided_slice %324 {offsets = [0, 0], sizes = [1, 32], strides = [1, 1]} : vector<2x32xf32> to vector<1x32xf32>
    %c2 = arith.constant 2 : index
    %c0_116 = arith.constant 0 : index
    %326 = vector.load %arg5[%c2, %c0_116] : memref<16x32xf32, #tpu.memory_space<vmem>>, vector<1x32xf32>
    tpu.vector_store %arg5[%c2, %c0_116], %325 {strides = array<i32>} : memref<16x32xf32, #tpu.memory_space<vmem>>, vector<1x32xf32>,
    %327 = vector.extract_strided_slice %324 {offsets = [1, 0], sizes = [1, 32], strides = [1, 1]} : vector<2x32xf32> to vector<1x32xf32>
    %c10 = arith.constant 10 : index
    %c0_117 = arith.constant 0 : index
    %328 = vector.load %arg5[%c10, %c0_117] : memref<16x32xf32, #tpu.memory_space<vmem>>, vector<1x32xf32>
    tpu.vector_store %arg5[%c10, %c0_117], %327 {strides = array<i32>} : memref<16x32xf32, #tpu.memory_space<vmem>>, vector<1x32xf32>,
    %c32_118 = arith.constant 32 : index
    %c0_119 = arith.constant 0 : index
    %329 = vector.load %arg3[%c32_118, %c0_119] : memref<320x128xf32, #tpu.memory_space<vmem>>, vector<32x32xf32>
    %cst_120 = arith.constant dense<0.000000e+00> : vector<2x32xf32>
    %330 = tpu.matmul %324, %329, %cst_120 {dimension_numbers = #tpu.dot_dimension_numbers<[1], [0], [0], [1], [0, 0, 1, 1], [], []>} : vector<2x32xf32>, vector<32x32xf32>, vector<2x32xf32> -> vector<2x32xf32>
    %331 = vector.shape_cast %330 : vector<2x32xf32> to vector<2x1x32xf32>
    %332 = vector.broadcast %331 : vector<2x1x32xf32> to vector<2x8x32xf32>
    %333 = arith.addf %332, %6 : vector<2x8x32xf32>
    %334 = math.tanh %333 : vector<2x8x32xf32>
    %c312_121 = arith.constant 312 : index
    %c0_122 = arith.constant 0 : index
    %335 = vector.load %arg3[%c312_121, %c0_122] : memref<320x128xf32, #tpu.memory_space<vmem>>, vector<1x32xf32>
    %336 = vector.shape_cast %335 : vector<1x32xf32> to vector<1x1x32xf32>
    %337 = vector.broadcast %336 : vector<1x1x32xf32> to vector<2x8x32xf32>
    %338 = arith.mulf %334, %337 : vector<2x8x32xf32>
    %cst_123 = arith.constant dense<0.000000e+00> : vector<2x8xf32>
    %339 = vector.multi_reduction <add>, %338, %cst_123 [2] : vector<2x8x32xf32> to vector<2x8xf32>
    %340 = arith.addf %339, %12 : vector<2x8xf32>
    %341 = math.exp %340 : vector<2x8xf32>
    %cst_124 = arith.constant dense<0.000000e+00> : vector<2xf32>
    %342 = vector.multi_reduction <add>, %341, %cst_124 [1] : vector<2x8xf32> to vector<2xf32>
    %343 = vector.shape_cast %342 : vector<2xf32> to vector<2x1xf32>
    %344 = tpu.reciprocal %343 {approx = true} : vector<2x1xf32> -> vector<2x1xf32>
    %345 = vector.broadcast %344 : vector<2x1xf32> to vector<2x8xf32>
    %346 = arith.mulf %341, %345 : vector<2x8xf32>
    %c22 = arith.constant 22 : index
    %c0_125 = arith.constant 0 : index
    %347 = vector.load %arg4[%c22, %c0_125] : memref<40x128xf32, #tpu.memory_space<vmem>>, vector<2x8xf32>
    tpu.vector_store %arg4[%c22, %c0_125], %346 {strides = array<i32>} : memref<40x128xf32, #tpu.memory_space<vmem>>, vector<2x8xf32>,
    %348 = vector.shape_cast %346 : vector<2x8xf32> to vector<2x8x1xf32>
    %349 = vector.broadcast %348 : vector<2x8x1xf32> to vector<2x8x32xf32>
    %350 = arith.mulf %349, %2 : vector<2x8x32xf32>
    %cst_126 = arith.constant dense<0.000000e+00> : vector<2x32xf32>
    %351 = vector.multi_reduction <add>, %350, %cst_126 [1] : vector<2x8x32xf32> to vector<2x32xf32>
    %c128_127 = arith.constant 128 : index
    %c0_128 = arith.constant 0 : index
    %352 = vector.load %arg3[%c128_127, %c0_128] : memref<320x128xf32, #tpu.memory_space<vmem>>, vector<32x96xf32>
    %cst_129 = arith.constant dense<0.000000e+00> : vector<2x96xf32>
    %353 = tpu.matmul %351, %352, %cst_129 {dimension_numbers = #tpu.dot_dimension_numbers<[1], [0], [0], [1], [0, 0, 1, 1], [], []>} : vector<2x32xf32>, vector<32x96xf32>, vector<2x96xf32> -> vector<2x96xf32>
    %354 = vector.extract_strided_slice %27 {offsets = [0, 3, 0], sizes = [2, 1, 96], strides = [1, 1, 1]} : vector<2x8x96xf32> to vector<2x1x96xf32>
    %355 = vector.shape_cast %354 : vector<2x1x96xf32> to vector<2x96xf32>
    %356 = arith.addf %353, %355 : vector<2x96xf32>
    %c160_130 = arith.constant 160 : index
    %c0_131 = arith.constant 0 : index
    %357 = vector.load %arg3[%c160_130, %c0_131] : memref<320x128xf32, #tpu.memory_space<vmem>>, vector<32x96xf32>
    %c280_132 = arith.constant 280 : index
    %c0_133 = arith.constant 0 : index
    %358 = vector.load %arg3[%c280_132, %c0_133] : memref<320x128xf32, #tpu.memory_space<vmem>>, vector<1x96xf32>
    %cst_134 = arith.constant dense<0.000000e+00> : vector<2x96xf32>
    %359 = tpu.matmul %288, %357, %cst_134 {dimension_numbers = #tpu.dot_dimension_numbers<[1], [0], [0], [1], [0, 0, 1, 1], [], []>} : vector<2x32xf32>, vector<32x96xf32>, vector<2x96xf32> -> vector<2x96xf32>
    %360 = vector.broadcast %358 : vector<1x96xf32> to vector<2x96xf32>
    %361 = arith.addf %359, %360 : vector<2x96xf32>
    %362 = vector.extract_strided_slice %356 {offsets = [0, 0], sizes = [2, 32], strides = [1, 1]} : vector<2x96xf32> to vector<2x32xf32>
    %363 = vector.extract_strided_slice %361 {offsets = [0, 0], sizes = [2, 32], strides = [1, 1]} : vector<2x96xf32> to vector<2x32xf32>
    %364 = arith.addf %362, %363 : vector<2x32xf32>
    %365 = arith.negf %364 : vector<2x32xf32>
    %366 = math.exp %365 : vector<2x32xf32>
    %cst_135 = arith.constant 1.000000e+00 : f32
    %367 = vector.broadcast %cst_135 : f32 to vector<2x32xf32>
    %368 = arith.addf %367, %366 : vector<2x32xf32>
    %369 = arith.divf %367, %368 : vector<2x32xf32>
    %370 = vector.extract_strided_slice %356 {offsets = [0, 32], sizes = [2, 32], strides = [1, 1]} : vector<2x96xf32> to vector<2x32xf32>
    %371 = vector.extract_strided_slice %361 {offsets = [0, 32], sizes = [2, 32], strides = [1, 1]} : vector<2x96xf32> to vector<2x32xf32>
    %372 = arith.addf %370, %371 : vector<2x32xf32>
    %373 = arith.negf %372 : vector<2x32xf32>
    %374 = math.exp %373 : vector<2x32xf32>
    %cst_136 = arith.constant 1.000000e+00 : f32
    %375 = vector.broadcast %cst_136 : f32 to vector<2x32xf32>
    %376 = arith.addf %375, %374 : vector<2x32xf32>
    %377 = arith.divf %375, %376 : vector<2x32xf32>
    %378 = vector.extract_strided_slice %356 {offsets = [0, 64], sizes = [2, 32], strides = [1, 1]} : vector<2x96xf32> to vector<2x32xf32>
    %379 = vector.extract_strided_slice %361 {offsets = [0, 64], sizes = [2, 32], strides = [1, 1]} : vector<2x96xf32> to vector<2x32xf32>
    %380 = arith.mulf %369, %379 : vector<2x32xf32>
    %381 = arith.addf %378, %380 : vector<2x32xf32>
    %382 = math.tanh %381 : vector<2x32xf32>
    %cst_137 = arith.constant 1.000000e+00 : f32
    %383 = vector.broadcast %cst_137 : f32 to vector<2x32xf32>
    %384 = arith.subf %383, %377 : vector<2x32xf32>
    %385 = arith.mulf %384, %382 : vector<2x32xf32>
    %386 = arith.mulf %377, %288 : vector<2x32xf32>
    %387 = arith.addf %385, %386 : vector<2x32xf32>
    %c192_138 = arith.constant 192 : index
    %c0_139 = arith.constant 0 : index
    %388 = vector.load %arg3[%c192_138, %c0_139] : memref<320x128xf32, #tpu.memory_space<vmem>>, vector<32x96xf32>
    %cst_140 = arith.constant dense<0.000000e+00> : vector<2x96xf32>
    %389 = tpu.matmul %387, %388, %cst_140 {dimension_numbers = #tpu.dot_dimension_numbers<[1], [0], [0], [1], [0, 0, 1, 1], [], []>} : vector<2x32xf32>, vector<32x96xf32>, vector<2x96xf32> -> vector<2x96xf32>
    %c288_141 = arith.constant 288 : index
    %c0_142 = arith.constant 0 : index
    %390 = vector.load %arg3[%c288_141, %c0_142] : memref<320x128xf32, #tpu.memory_space<vmem>>, vector<1x96xf32>
    %391 = vector.broadcast %390 : vector<1x96xf32> to vector<2x96xf32>
    %392 = arith.addf %389, %391 : vector<2x96xf32>
    %c224_143 = arith.constant 224 : index
    %c0_144 = arith.constant 0 : index
    %393 = vector.load %arg3[%c224_143, %c0_144] : memref<320x128xf32, #tpu.memory_space<vmem>>, vector<32x96xf32>
    %c296_145 = arith.constant 296 : index
    %c0_146 = arith.constant 0 : index
    %394 = vector.load %arg3[%c296_145, %c0_146] : memref<320x128xf32, #tpu.memory_space<vmem>>, vector<1x96xf32>
    %cst_147 = arith.constant dense<0.000000e+00> : vector<2x96xf32>
    %395 = tpu.matmul %324, %393, %cst_147 {dimension_numbers = #tpu.dot_dimension_numbers<[1], [0], [0], [1], [0, 0, 1, 1], [], []>} : vector<2x32xf32>, vector<32x96xf32>, vector<2x96xf32> -> vector<2x96xf32>
    %396 = vector.broadcast %394 : vector<1x96xf32> to vector<2x96xf32>
    %397 = arith.addf %395, %396 : vector<2x96xf32>
    %398 = vector.extract_strided_slice %392 {offsets = [0, 0], sizes = [2, 32], strides = [1, 1]} : vector<2x96xf32> to vector<2x32xf32>
    %399 = vector.extract_strided_slice %397 {offsets = [0, 0], sizes = [2, 32], strides = [1, 1]} : vector<2x96xf32> to vector<2x32xf32>
    %400 = arith.addf %398, %399 : vector<2x32xf32>
    %401 = arith.negf %400 : vector<2x32xf32>
    %402 = math.exp %401 : vector<2x32xf32>
    %cst_148 = arith.constant 1.000000e+00 : f32
    %403 = vector.broadcast %cst_148 : f32 to vector<2x32xf32>
    %404 = arith.addf %403, %402 : vector<2x32xf32>
    %405 = arith.divf %403, %404 : vector<2x32xf32>
    %406 = vector.extract_strided_slice %392 {offsets = [0, 32], sizes = [2, 32], strides = [1, 1]} : vector<2x96xf32> to vector<2x32xf32>
    %407 = vector.extract_strided_slice %397 {offsets = [0, 32], sizes = [2, 32], strides = [1, 1]} : vector<2x96xf32> to vector<2x32xf32>
    %408 = arith.addf %406, %407 : vector<2x32xf32>
    %409 = arith.negf %408 : vector<2x32xf32>
    %410 = math.exp %409 : vector<2x32xf32>
    %cst_149 = arith.constant 1.000000e+00 : f32
    %411 = vector.broadcast %cst_149 : f32 to vector<2x32xf32>
    %412 = arith.addf %411, %410 : vector<2x32xf32>
    %413 = arith.divf %411, %412 : vector<2x32xf32>
    %414 = vector.extract_strided_slice %392 {offsets = [0, 64], sizes = [2, 32], strides = [1, 1]} : vector<2x96xf32> to vector<2x32xf32>
    %415 = vector.extract_strided_slice %397 {offsets = [0, 64], sizes = [2, 32], strides = [1, 1]} : vector<2x96xf32> to vector<2x32xf32>
    %416 = arith.mulf %405, %415 : vector<2x32xf32>
    %417 = arith.addf %414, %416 : vector<2x32xf32>
    %418 = math.tanh %417 : vector<2x32xf32>
    %cst_150 = arith.constant 1.000000e+00 : f32
    %419 = vector.broadcast %cst_150 : f32 to vector<2x32xf32>
    %420 = arith.subf %419, %413 : vector<2x32xf32>
    %421 = arith.mulf %420, %418 : vector<2x32xf32>
    %422 = arith.mulf %413, %324 : vector<2x32xf32>
    %423 = arith.addf %421, %422 : vector<2x32xf32>
    %424 = vector.extract_strided_slice %423 {offsets = [0, 0], sizes = [1, 32], strides = [1, 1]} : vector<2x32xf32> to vector<1x32xf32>
    %c3 = arith.constant 3 : index
    %c0_151 = arith.constant 0 : index
    %425 = vector.load %arg5[%c3, %c0_151] : memref<16x32xf32, #tpu.memory_space<vmem>>, vector<1x32xf32>
    tpu.vector_store %arg5[%c3, %c0_151], %424 {strides = array<i32>} : memref<16x32xf32, #tpu.memory_space<vmem>>, vector<1x32xf32>,
    %426 = vector.extract_strided_slice %423 {offsets = [1, 0], sizes = [1, 32], strides = [1, 1]} : vector<2x32xf32> to vector<1x32xf32>
    %c11 = arith.constant 11 : index
    %c0_152 = arith.constant 0 : index
    %427 = vector.load %arg5[%c11, %c0_152] : memref<16x32xf32, #tpu.memory_space<vmem>>, vector<1x32xf32>
    tpu.vector_store %arg5[%c11, %c0_152], %426 {strides = array<i32>} : memref<16x32xf32, #tpu.memory_space<vmem>>, vector<1x32xf32>,
    %c32_153 = arith.constant 32 : index
    %c0_154 = arith.constant 0 : index
    %428 = vector.load %arg3[%c32_153, %c0_154] : memref<320x128xf32, #tpu.memory_space<vmem>>, vector<32x32xf32>
    %cst_155 = arith.constant dense<0.000000e+00> : vector<2x32xf32>
    %429 = tpu.matmul %423, %428, %cst_155 {dimension_numbers = #tpu.dot_dimension_numbers<[1], [0], [0], [1], [0, 0, 1, 1], [], []>} : vector<2x32xf32>, vector<32x32xf32>, vector<2x32xf32> -> vector<2x32xf32>
    %430 = vector.shape_cast %429 : vector<2x32xf32> to vector<2x1x32xf32>
    %431 = vector.broadcast %430 : vector<2x1x32xf32> to vector<2x8x32xf32>
    %432 = arith.addf %431, %6 : vector<2x8x32xf32>
    %433 = math.tanh %432 : vector<2x8x32xf32>
    %c312_156 = arith.constant 312 : index
    %c0_157 = arith.constant 0 : index
    %434 = vector.load %arg3[%c312_156, %c0_157] : memref<320x128xf32, #tpu.memory_space<vmem>>, vector<1x32xf32>
    %435 = vector.shape_cast %434 : vector<1x32xf32> to vector<1x1x32xf32>
    %436 = vector.broadcast %435 : vector<1x1x32xf32> to vector<2x8x32xf32>
    %437 = arith.mulf %433, %436 : vector<2x8x32xf32>
    %cst_158 = arith.constant dense<0.000000e+00> : vector<2x8xf32>
    %438 = vector.multi_reduction <add>, %437, %cst_158 [2] : vector<2x8x32xf32> to vector<2x8xf32>
    %439 = arith.addf %438, %12 : vector<2x8xf32>
    %440 = math.exp %439 : vector<2x8xf32>
    %cst_159 = arith.constant dense<0.000000e+00> : vector<2xf32>
    %441 = vector.multi_reduction <add>, %440, %cst_159 [1] : vector<2x8xf32> to vector<2xf32>
    %442 = vector.shape_cast %441 : vector<2xf32> to vector<2x1xf32>
    %443 = tpu.reciprocal %442 {approx = true} : vector<2x1xf32> -> vector<2x1xf32>
    %444 = vector.broadcast %443 : vector<2x1xf32> to vector<2x8xf32>
    %445 = arith.mulf %440, %444 : vector<2x8xf32>
    %c24 = arith.constant 24 : index
    %c0_160 = arith.constant 0 : index
    %446 = vector.load %arg4[%c24, %c0_160] : memref<40x128xf32, #tpu.memory_space<vmem>>, vector<2x8xf32>
    tpu.vector_store %arg4[%c24, %c0_160], %445 {strides = array<i32>} : memref<40x128xf32, #tpu.memory_space<vmem>>, vector<2x8xf32>,
    %447 = vector.shape_cast %445 : vector<2x8xf32> to vector<2x8x1xf32>
    %448 = vector.broadcast %447 : vector<2x8x1xf32> to vector<2x8x32xf32>
    %449 = arith.mulf %448, %2 : vector<2x8x32xf32>
    %cst_161 = arith.constant dense<0.000000e+00> : vector<2x32xf32>
    %450 = vector.multi_reduction <add>, %449, %cst_161 [1] : vector<2x8x32xf32> to vector<2x32xf32>
    %c128_162 = arith.constant 128 : index
    %c0_163 = arith.constant 0 : index
    %451 = vector.load %arg3[%c128_162, %c0_163] : memref<320x128xf32, #tpu.memory_space<vmem>>, vector<32x96xf32>
    %cst_164 = arith.constant dense<0.000000e+00> : vector<2x96xf32>
    %452 = tpu.matmul %450, %451, %cst_164 {dimension_numbers = #tpu.dot_dimension_numbers<[1], [0], [0], [1], [0, 0, 1, 1], [], []>} : vector<2x32xf32>, vector<32x96xf32>, vector<2x96xf32> -> vector<2x96xf32>
    %453 = vector.extract_strided_slice %27 {offsets = [0, 4, 0], sizes = [2, 1, 96], strides = [1, 1, 1]} : vector<2x8x96xf32> to vector<2x1x96xf32>
    %454 = vector.shape_cast %453 : vector<2x1x96xf32> to vector<2x96xf32>
    %455 = arith.addf %452, %454 : vector<2x96xf32>
    %c160_165 = arith.constant 160 : index
    %c0_166 = arith.constant 0 : index
    %456 = vector.load %arg3[%c160_165, %c0_166] : memref<320x128xf32, #tpu.memory_space<vmem>>, vector<32x96xf32>
    %c280_167 = arith.constant 280 : index
    %c0_168 = arith.constant 0 : index
    %457 = vector.load %arg3[%c280_167, %c0_168] : memref<320x128xf32, #tpu.memory_space<vmem>>, vector<1x96xf32>
    %cst_169 = arith.constant dense<0.000000e+00> : vector<2x96xf32>
    %458 = tpu.matmul %387, %456, %cst_169 {dimension_numbers = #tpu.dot_dimension_numbers<[1], [0], [0], [1], [0, 0, 1, 1], [], []>} : vector<2x32xf32>, vector<32x96xf32>, vector<2x96xf32> -> vector<2x96xf32>
    %459 = vector.broadcast %457 : vector<1x96xf32> to vector<2x96xf32>
    %460 = arith.addf %458, %459 : vector<2x96xf32>
    %461 = vector.extract_strided_slice %455 {offsets = [0, 0], sizes = [2, 32], strides = [1, 1]} : vector<2x96xf32> to vector<2x32xf32>
    %462 = vector.extract_strided_slice %460 {offsets = [0, 0], sizes = [2, 32], strides = [1, 1]} : vector<2x96xf32> to vector<2x32xf32>
    %463 = arith.addf %461, %462 : vector<2x32xf32>
    %464 = arith.negf %463 : vector<2x32xf32>
    %465 = math.exp %464 : vector<2x32xf32>
    %cst_170 = arith.constant 1.000000e+00 : f32
    %466 = vector.broadcast %cst_170 : f32 to vector<2x32xf32>
    %467 = arith.addf %466, %465 : vector<2x32xf32>
    %468 = arith.divf %466, %467 : vector<2x32xf32>
    %469 = vector.extract_strided_slice %455 {offsets = [0, 32], sizes = [2, 32], strides = [1, 1]} : vector<2x96xf32> to vector<2x32xf32>
    %470 = vector.extract_strided_slice %460 {offsets = [0, 32], sizes = [2, 32], strides = [1, 1]} : vector<2x96xf32> to vector<2x32xf32>
    %471 = arith.addf %469, %470 : vector<2x32xf32>
    %472 = arith.negf %471 : vector<2x32xf32>
    %473 = math.exp %472 : vector<2x32xf32>
    %cst_171 = arith.constant 1.000000e+00 : f32
    %474 = vector.broadcast %cst_171 : f32 to vector<2x32xf32>
    %475 = arith.addf %474, %473 : vector<2x32xf32>
    %476 = arith.divf %474, %475 : vector<2x32xf32>
    %477 = vector.extract_strided_slice %455 {offsets = [0, 64], sizes = [2, 32], strides = [1, 1]} : vector<2x96xf32> to vector<2x32xf32>
    %478 = vector.extract_strided_slice %460 {offsets = [0, 64], sizes = [2, 32], strides = [1, 1]} : vector<2x96xf32> to vector<2x32xf32>
    %479 = arith.mulf %468, %478 : vector<2x32xf32>
    %480 = arith.addf %477, %479 : vector<2x32xf32>
    %481 = math.tanh %480 : vector<2x32xf32>
    %cst_172 = arith.constant 1.000000e+00 : f32
    %482 = vector.broadcast %cst_172 : f32 to vector<2x32xf32>
    %483 = arith.subf %482, %476 : vector<2x32xf32>
    %484 = arith.mulf %483, %481 : vector<2x32xf32>
    %485 = arith.mulf %476, %387 : vector<2x32xf32>
    %486 = arith.addf %484, %485 : vector<2x32xf32>
    %c192_173 = arith.constant 192 : index
    %c0_174 = arith.constant 0 : index
    %487 = vector.load %arg3[%c192_173, %c0_174] : memref<320x128xf32, #tpu.memory_space<vmem>>, vector<32x96xf32>
    %cst_175 = arith.constant dense<0.000000e+00> : vector<2x96xf32>
    %488 = tpu.matmul %486, %487, %cst_175 {dimension_numbers = #tpu.dot_dimension_numbers<[1], [0], [0], [1], [0, 0, 1, 1], [], []>} : vector<2x32xf32>, vector<32x96xf32>, vector<2x96xf32> -> vector<2x96xf32>
    %c288_176 = arith.constant 288 : index
    %c0_177 = arith.constant 0 : index
    %489 = vector.load %arg3[%c288_176, %c0_177] : memref<320x128xf32, #tpu.memory_space<vmem>>, vector<1x96xf32>
    %490 = vector.broadcast %489 : vector<1x96xf32> to vector<2x96xf32>
    %491 = arith.addf %488, %490 : vector<2x96xf32>
    %c224_178 = arith.constant 224 : index
    %c0_179 = arith.constant 0 : index
    %492 = vector.load %arg3[%c224_178, %c0_179] : memref<320x128xf32, #tpu.memory_space<vmem>>, vector<32x96xf32>
    %c296_180 = arith.constant 296 : index
    %c0_181 = arith.constant 0 : index
    %493 = vector.load %arg3[%c296_180, %c0_181] : memref<320x128xf32, #tpu.memory_space<vmem>>, vector<1x96xf32>
    %cst_182 = arith.constant dense<0.000000e+00> : vector<2x96xf32>
    %494 = tpu.matmul %423, %492, %cst_182 {dimension_numbers = #tpu.dot_dimension_numbers<[1], [0], [0], [1], [0, 0, 1, 1], [], []>} : vector<2x32xf32>, vector<32x96xf32>, vector<2x96xf32> -> vector<2x96xf32>
    %495 = vector.broadcast %493 : vector<1x96xf32> to vector<2x96xf32>
    %496 = arith.addf %494, %495 : vector<2x96xf32>
    %497 = vector.extract_strided_slice %491 {offsets = [0, 0], sizes = [2, 32], strides = [1, 1]} : vector<2x96xf32> to vector<2x32xf32>
    %498 = vector.extract_strided_slice %496 {offsets = [0, 0], sizes = [2, 32], strides = [1, 1]} : vector<2x96xf32> to vector<2x32xf32>
    %499 = arith.addf %497, %498 : vector<2x32xf32>
    %500 = arith.negf %499 : vector<2x32xf32>
    %501 = math.exp %500 : vector<2x32xf32>
    %cst_183 = arith.constant 1.000000e+00 : f32
    %502 = vector.broadcast %cst_183 : f32 to vector<2x32xf32>
    %503 = arith.addf %502, %501 : vector<2x32xf32>
    %504 = arith.divf %502, %503 : vector<2x32xf32>
    %505 = vector.extract_strided_slice %491 {offsets = [0, 32], sizes = [2, 32], strides = [1, 1]} : vector<2x96xf32> to vector<2x32xf32>
    %506 = vector.extract_strided_slice %496 {offsets = [0, 32], sizes = [2, 32], strides = [1, 1]} : vector<2x96xf32> to vector<2x32xf32>
    %507 = arith.addf %505, %506 : vector<2x32xf32>
    %508 = arith.negf %507 : vector<2x32xf32>
    %509 = math.exp %508 : vector<2x32xf32>
    %cst_184 = arith.constant 1.000000e+00 : f32
    %510 = vector.broadcast %cst_184 : f32 to vector<2x32xf32>
    %511 = arith.addf %510, %509 : vector<2x32xf32>
    %512 = arith.divf %510, %511 : vector<2x32xf32>
    %513 = vector.extract_strided_slice %491 {offsets = [0, 64], sizes = [2, 32], strides = [1, 1]} : vector<2x96xf32> to vector<2x32xf32>
    %514 = vector.extract_strided_slice %496 {offsets = [0, 64], sizes = [2, 32], strides = [1, 1]} : vector<2x96xf32> to vector<2x32xf32>
    %515 = arith.mulf %504, %514 : vector<2x32xf32>
    %516 = arith.addf %513, %515 : vector<2x32xf32>
    %517 = math.tanh %516 : vector<2x32xf32>
    %cst_185 = arith.constant 1.000000e+00 : f32
    %518 = vector.broadcast %cst_185 : f32 to vector<2x32xf32>
    %519 = arith.subf %518, %512 : vector<2x32xf32>
    %520 = arith.mulf %519, %517 : vector<2x32xf32>
    %521 = arith.mulf %512, %423 : vector<2x32xf32>
    %522 = arith.addf %520, %521 : vector<2x32xf32>
    %523 = vector.extract_strided_slice %522 {offsets = [0, 0], sizes = [1, 32], strides = [1, 1]} : vector<2x32xf32> to vector<1x32xf32>
    %c4 = arith.constant 4 : index
    %c0_186 = arith.constant 0 : index
    %524 = vector.load %arg5[%c4, %c0_186] : memref<16x32xf32, #tpu.memory_space<vmem>>, vector<1x32xf32>
    tpu.vector_store %arg5[%c4, %c0_186], %523 {strides = array<i32>} : memref<16x32xf32, #tpu.memory_space<vmem>>, vector<1x32xf32>,
    %525 = vector.extract_strided_slice %522 {offsets = [1, 0], sizes = [1, 32], strides = [1, 1]} : vector<2x32xf32> to vector<1x32xf32>
    %c12 = arith.constant 12 : index
    %c0_187 = arith.constant 0 : index
    %526 = vector.load %arg5[%c12, %c0_187] : memref<16x32xf32, #tpu.memory_space<vmem>>, vector<1x32xf32>
    tpu.vector_store %arg5[%c12, %c0_187], %525 {strides = array<i32>} : memref<16x32xf32, #tpu.memory_space<vmem>>, vector<1x32xf32>,
    %c32_188 = arith.constant 32 : index
    %c0_189 = arith.constant 0 : index
    %527 = vector.load %arg3[%c32_188, %c0_189] : memref<320x128xf32, #tpu.memory_space<vmem>>, vector<32x32xf32>
    %cst_190 = arith.constant dense<0.000000e+00> : vector<2x32xf32>
    %528 = tpu.matmul %522, %527, %cst_190 {dimension_numbers = #tpu.dot_dimension_numbers<[1], [0], [0], [1], [0, 0, 1, 1], [], []>} : vector<2x32xf32>, vector<32x32xf32>, vector<2x32xf32> -> vector<2x32xf32>
    %529 = vector.shape_cast %528 : vector<2x32xf32> to vector<2x1x32xf32>
    %530 = vector.broadcast %529 : vector<2x1x32xf32> to vector<2x8x32xf32>
    %531 = arith.addf %530, %6 : vector<2x8x32xf32>
    %532 = math.tanh %531 : vector<2x8x32xf32>
    %c312_191 = arith.constant 312 : index
    %c0_192 = arith.constant 0 : index
    %533 = vector.load %arg3[%c312_191, %c0_192] : memref<320x128xf32, #tpu.memory_space<vmem>>, vector<1x32xf32>
    %534 = vector.shape_cast %533 : vector<1x32xf32> to vector<1x1x32xf32>
    %535 = vector.broadcast %534 : vector<1x1x32xf32> to vector<2x8x32xf32>
    %536 = arith.mulf %532, %535 : vector<2x8x32xf32>
    %cst_193 = arith.constant dense<0.000000e+00> : vector<2x8xf32>
    %537 = vector.multi_reduction <add>, %536, %cst_193 [2] : vector<2x8x32xf32> to vector<2x8xf32>
    %538 = arith.addf %537, %12 : vector<2x8xf32>
    %539 = math.exp %538 : vector<2x8xf32>
    %cst_194 = arith.constant dense<0.000000e+00> : vector<2xf32>
    %540 = vector.multi_reduction <add>, %539, %cst_194 [1] : vector<2x8xf32> to vector<2xf32>
    %541 = vector.shape_cast %540 : vector<2xf32> to vector<2x1xf32>
    %542 = tpu.reciprocal %541 {approx = true} : vector<2x1xf32> -> vector<2x1xf32>
    %543 = vector.broadcast %542 : vector<2x1xf32> to vector<2x8xf32>
    %544 = arith.mulf %539, %543 : vector<2x8xf32>
    %c26 = arith.constant 26 : index
    %c0_195 = arith.constant 0 : index
    %545 = vector.load %arg4[%c26, %c0_195] : memref<40x128xf32, #tpu.memory_space<vmem>>, vector<2x8xf32>
    tpu.vector_store %arg4[%c26, %c0_195], %544 {strides = array<i32>} : memref<40x128xf32, #tpu.memory_space<vmem>>, vector<2x8xf32>,
    %546 = vector.shape_cast %544 : vector<2x8xf32> to vector<2x8x1xf32>
    %547 = vector.broadcast %546 : vector<2x8x1xf32> to vector<2x8x32xf32>
    %548 = arith.mulf %547, %2 : vector<2x8x32xf32>
    %cst_196 = arith.constant dense<0.000000e+00> : vector<2x32xf32>
    %549 = vector.multi_reduction <add>, %548, %cst_196 [1] : vector<2x8x32xf32> to vector<2x32xf32>
    %c128_197 = arith.constant 128 : index
    %c0_198 = arith.constant 0 : index
    %550 = vector.load %arg3[%c128_197, %c0_198] : memref<320x128xf32, #tpu.memory_space<vmem>>, vector<32x96xf32>
    %cst_199 = arith.constant dense<0.000000e+00> : vector<2x96xf32>
    %551 = tpu.matmul %549, %550, %cst_199 {dimension_numbers = #tpu.dot_dimension_numbers<[1], [0], [0], [1], [0, 0, 1, 1], [], []>} : vector<2x32xf32>, vector<32x96xf32>, vector<2x96xf32> -> vector<2x96xf32>
    %552 = vector.extract_strided_slice %27 {offsets = [0, 5, 0], sizes = [2, 1, 96], strides = [1, 1, 1]} : vector<2x8x96xf32> to vector<2x1x96xf32>
    %553 = vector.shape_cast %552 : vector<2x1x96xf32> to vector<2x96xf32>
    %554 = arith.addf %551, %553 : vector<2x96xf32>
    %c160_200 = arith.constant 160 : index
    %c0_201 = arith.constant 0 : index
    %555 = vector.load %arg3[%c160_200, %c0_201] : memref<320x128xf32, #tpu.memory_space<vmem>>, vector<32x96xf32>
    %c280_202 = arith.constant 280 : index
    %c0_203 = arith.constant 0 : index
    %556 = vector.load %arg3[%c280_202, %c0_203] : memref<320x128xf32, #tpu.memory_space<vmem>>, vector<1x96xf32>
    %cst_204 = arith.constant dense<0.000000e+00> : vector<2x96xf32>
    %557 = tpu.matmul %486, %555, %cst_204 {dimension_numbers = #tpu.dot_dimension_numbers<[1], [0], [0], [1], [0, 0, 1, 1], [], []>} : vector<2x32xf32>, vector<32x96xf32>, vector<2x96xf32> -> vector<2x96xf32>
    %558 = vector.broadcast %556 : vector<1x96xf32> to vector<2x96xf32>
    %559 = arith.addf %557, %558 : vector<2x96xf32>
    %560 = vector.extract_strided_slice %554 {offsets = [0, 0], sizes = [2, 32], strides = [1, 1]} : vector<2x96xf32> to vector<2x32xf32>
    %561 = vector.extract_strided_slice %559 {offsets = [0, 0], sizes = [2, 32], strides = [1, 1]} : vector<2x96xf32> to vector<2x32xf32>
    %562 = arith.addf %560, %561 : vector<2x32xf32>
    %563 = arith.negf %562 : vector<2x32xf32>
    %564 = math.exp %563 : vector<2x32xf32>
    %cst_205 = arith.constant 1.000000e+00 : f32
    %565 = vector.broadcast %cst_205 : f32 to vector<2x32xf32>
    %566 = arith.addf %565, %564 : vector<2x32xf32>
    %567 = arith.divf %565, %566 : vector<2x32xf32>
    %568 = vector.extract_strided_slice %554 {offsets = [0, 32], sizes = [2, 32], strides = [1, 1]} : vector<2x96xf32> to vector<2x32xf32>
    %569 = vector.extract_strided_slice %559 {offsets = [0, 32], sizes = [2, 32], strides = [1, 1]} : vector<2x96xf32> to vector<2x32xf32>
    %570 = arith.addf %568, %569 : vector<2x32xf32>
    %571 = arith.negf %570 : vector<2x32xf32>
    %572 = math.exp %571 : vector<2x32xf32>
    %cst_206 = arith.constant 1.000000e+00 : f32
    %573 = vector.broadcast %cst_206 : f32 to vector<2x32xf32>
    %574 = arith.addf %573, %572 : vector<2x32xf32>
    %575 = arith.divf %573, %574 : vector<2x32xf32>
    %576 = vector.extract_strided_slice %554 {offsets = [0, 64], sizes = [2, 32], strides = [1, 1]} : vector<2x96xf32> to vector<2x32xf32>
    %577 = vector.extract_strided_slice %559 {offsets = [0, 64], sizes = [2, 32], strides = [1, 1]} : vector<2x96xf32> to vector<2x32xf32>
    %578 = arith.mulf %567, %577 : vector<2x32xf32>
    %579 = arith.addf %576, %578 : vector<2x32xf32>
    %580 = math.tanh %579 : vector<2x32xf32>
    %cst_207 = arith.constant 1.000000e+00 : f32
    %581 = vector.broadcast %cst_207 : f32 to vector<2x32xf32>
    %582 = arith.subf %581, %575 : vector<2x32xf32>
    %583 = arith.mulf %582, %580 : vector<2x32xf32>
    %584 = arith.mulf %575, %486 : vector<2x32xf32>
    %585 = arith.addf %583, %584 : vector<2x32xf32>
    %c192_208 = arith.constant 192 : index
    %c0_209 = arith.constant 0 : index
    %586 = vector.load %arg3[%c192_208, %c0_209] : memref<320x128xf32, #tpu.memory_space<vmem>>, vector<32x96xf32>
    %cst_210 = arith.constant dense<0.000000e+00> : vector<2x96xf32>
    %587 = tpu.matmul %585, %586, %cst_210 {dimension_numbers = #tpu.dot_dimension_numbers<[1], [0], [0], [1], [0, 0, 1, 1], [], []>} : vector<2x32xf32>, vector<32x96xf32>, vector<2x96xf32> -> vector<2x96xf32>
    %c288_211 = arith.constant 288 : index
    %c0_212 = arith.constant 0 : index
    %588 = vector.load %arg3[%c288_211, %c0_212] : memref<320x128xf32, #tpu.memory_space<vmem>>, vector<1x96xf32>
    %589 = vector.broadcast %588 : vector<1x96xf32> to vector<2x96xf32>
    %590 = arith.addf %587, %589 : vector<2x96xf32>
    %c224_213 = arith.constant 224 : index
    %c0_214 = arith.constant 0 : index
    %591 = vector.load %arg3[%c224_213, %c0_214] : memref<320x128xf32, #tpu.memory_space<vmem>>, vector<32x96xf32>
    %c296_215 = arith.constant 296 : index
    %c0_216 = arith.constant 0 : index
    %592 = vector.load %arg3[%c296_215, %c0_216] : memref<320x128xf32, #tpu.memory_space<vmem>>, vector<1x96xf32>
    %cst_217 = arith.constant dense<0.000000e+00> : vector<2x96xf32>
    %593 = tpu.matmul %522, %591, %cst_217 {dimension_numbers = #tpu.dot_dimension_numbers<[1], [0], [0], [1], [0, 0, 1, 1], [], []>} : vector<2x32xf32>, vector<32x96xf32>, vector<2x96xf32> -> vector<2x96xf32>
    %594 = vector.broadcast %592 : vector<1x96xf32> to vector<2x96xf32>
    %595 = arith.addf %593, %594 : vector<2x96xf32>
    %596 = vector.extract_strided_slice %590 {offsets = [0, 0], sizes = [2, 32], strides = [1, 1]} : vector<2x96xf32> to vector<2x32xf32>
    %597 = vector.extract_strided_slice %595 {offsets = [0, 0], sizes = [2, 32], strides = [1, 1]} : vector<2x96xf32> to vector<2x32xf32>
    %598 = arith.addf %596, %597 : vector<2x32xf32>
    %599 = arith.negf %598 : vector<2x32xf32>
    %600 = math.exp %599 : vector<2x32xf32>
    %cst_218 = arith.constant 1.000000e+00 : f32
    %601 = vector.broadcast %cst_218 : f32 to vector<2x32xf32>
    %602 = arith.addf %601, %600 : vector<2x32xf32>
    %603 = arith.divf %601, %602 : vector<2x32xf32>
    %604 = vector.extract_strided_slice %590 {offsets = [0, 32], sizes = [2, 32], strides = [1, 1]} : vector<2x96xf32> to vector<2x32xf32>
    %605 = vector.extract_strided_slice %595 {offsets = [0, 32], sizes = [2, 32], strides = [1, 1]} : vector<2x96xf32> to vector<2x32xf32>
    %606 = arith.addf %604, %605 : vector<2x32xf32>
    %607 = arith.negf %606 : vector<2x32xf32>
    %608 = math.exp %607 : vector<2x32xf32>
    %cst_219 = arith.constant 1.000000e+00 : f32
    %609 = vector.broadcast %cst_219 : f32 to vector<2x32xf32>
    %610 = arith.addf %609, %608 : vector<2x32xf32>
    %611 = arith.divf %609, %610 : vector<2x32xf32>
    %612 = vector.extract_strided_slice %590 {offsets = [0, 64], sizes = [2, 32], strides = [1, 1]} : vector<2x96xf32> to vector<2x32xf32>
    %613 = vector.extract_strided_slice %595 {offsets = [0, 64], sizes = [2, 32], strides = [1, 1]} : vector<2x96xf32> to vector<2x32xf32>
    %614 = arith.mulf %603, %613 : vector<2x32xf32>
    %615 = arith.addf %612, %614 : vector<2x32xf32>
    %616 = math.tanh %615 : vector<2x32xf32>
    %cst_220 = arith.constant 1.000000e+00 : f32
    %617 = vector.broadcast %cst_220 : f32 to vector<2x32xf32>
    %618 = arith.subf %617, %611 : vector<2x32xf32>
    %619 = arith.mulf %618, %616 : vector<2x32xf32>
    %620 = arith.mulf %611, %522 : vector<2x32xf32>
    %621 = arith.addf %619, %620 : vector<2x32xf32>
    %622 = vector.extract_strided_slice %621 {offsets = [0, 0], sizes = [1, 32], strides = [1, 1]} : vector<2x32xf32> to vector<1x32xf32>
    %c5 = arith.constant 5 : index
    %c0_221 = arith.constant 0 : index
    %623 = vector.load %arg5[%c5, %c0_221] : memref<16x32xf32, #tpu.memory_space<vmem>>, vector<1x32xf32>
    tpu.vector_store %arg5[%c5, %c0_221], %622 {strides = array<i32>} : memref<16x32xf32, #tpu.memory_space<vmem>>, vector<1x32xf32>,
    %624 = vector.extract_strided_slice %621 {offsets = [1, 0], sizes = [1, 32], strides = [1, 1]} : vector<2x32xf32> to vector<1x32xf32>
    %c13 = arith.constant 13 : index
    %c0_222 = arith.constant 0 : index
    %625 = vector.load %arg5[%c13, %c0_222] : memref<16x32xf32, #tpu.memory_space<vmem>>, vector<1x32xf32>
    tpu.vector_store %arg5[%c13, %c0_222], %624 {strides = array<i32>} : memref<16x32xf32, #tpu.memory_space<vmem>>, vector<1x32xf32>,
    %c32_223 = arith.constant 32 : index
    %c0_224 = arith.constant 0 : index
    %626 = vector.load %arg3[%c32_223, %c0_224] : memref<320x128xf32, #tpu.memory_space<vmem>>, vector<32x32xf32>
    %cst_225 = arith.constant dense<0.000000e+00> : vector<2x32xf32>
    %627 = tpu.matmul %621, %626, %cst_225 {dimension_numbers = #tpu.dot_dimension_numbers<[1], [0], [0], [1], [0, 0, 1, 1], [], []>} : vector<2x32xf32>, vector<32x32xf32>, vector<2x32xf32> -> vector<2x32xf32>
    %628 = vector.shape_cast %627 : vector<2x32xf32> to vector<2x1x32xf32>
    %629 = vector.broadcast %628 : vector<2x1x32xf32> to vector<2x8x32xf32>
    %630 = arith.addf %629, %6 : vector<2x8x32xf32>
    %631 = math.tanh %630 : vector<2x8x32xf32>
    %c312_226 = arith.constant 312 : index
    %c0_227 = arith.constant 0 : index
    %632 = vector.load %arg3[%c312_226, %c0_227] : memref<320x128xf32, #tpu.memory_space<vmem>>, vector<1x32xf32>
    %633 = vector.shape_cast %632 : vector<1x32xf32> to vector<1x1x32xf32>
    %634 = vector.broadcast %633 : vector<1x1x32xf32> to vector<2x8x32xf32>
    %635 = arith.mulf %631, %634 : vector<2x8x32xf32>
    %cst_228 = arith.constant dense<0.000000e+00> : vector<2x8xf32>
    %636 = vector.multi_reduction <add>, %635, %cst_228 [2] : vector<2x8x32xf32> to vector<2x8xf32>
    %637 = arith.addf %636, %12 : vector<2x8xf32>
    %638 = math.exp %637 : vector<2x8xf32>
    %cst_229 = arith.constant dense<0.000000e+00> : vector<2xf32>
    %639 = vector.multi_reduction <add>, %638, %cst_229 [1] : vector<2x8xf32> to vector<2xf32>
    %640 = vector.shape_cast %639 : vector<2xf32> to vector<2x1xf32>
    %641 = tpu.reciprocal %640 {approx = true} : vector<2x1xf32> -> vector<2x1xf32>
    %642 = vector.broadcast %641 : vector<2x1xf32> to vector<2x8xf32>
    %643 = arith.mulf %638, %642 : vector<2x8xf32>
    %c28 = arith.constant 28 : index
    %c0_230 = arith.constant 0 : index
    %644 = vector.load %arg4[%c28, %c0_230] : memref<40x128xf32, #tpu.memory_space<vmem>>, vector<2x8xf32>
    tpu.vector_store %arg4[%c28, %c0_230], %643 {strides = array<i32>} : memref<40x128xf32, #tpu.memory_space<vmem>>, vector<2x8xf32>,
    %645 = vector.shape_cast %643 : vector<2x8xf32> to vector<2x8x1xf32>
    %646 = vector.broadcast %645 : vector<2x8x1xf32> to vector<2x8x32xf32>
    %647 = arith.mulf %646, %2 : vector<2x8x32xf32>
    %cst_231 = arith.constant dense<0.000000e+00> : vector<2x32xf32>
    %648 = vector.multi_reduction <add>, %647, %cst_231 [1] : vector<2x8x32xf32> to vector<2x32xf32>
    %c128_232 = arith.constant 128 : index
    %c0_233 = arith.constant 0 : index
    %649 = vector.load %arg3[%c128_232, %c0_233] : memref<320x128xf32, #tpu.memory_space<vmem>>, vector<32x96xf32>
    %cst_234 = arith.constant dense<0.000000e+00> : vector<2x96xf32>
    %650 = tpu.matmul %648, %649, %cst_234 {dimension_numbers = #tpu.dot_dimension_numbers<[1], [0], [0], [1], [0, 0, 1, 1], [], []>} : vector<2x32xf32>, vector<32x96xf32>, vector<2x96xf32> -> vector<2x96xf32>
    %651 = vector.extract_strided_slice %27 {offsets = [0, 6, 0], sizes = [2, 1, 96], strides = [1, 1, 1]} : vector<2x8x96xf32> to vector<2x1x96xf32>
    %652 = vector.shape_cast %651 : vector<2x1x96xf32> to vector<2x96xf32>
    %653 = arith.addf %650, %652 : vector<2x96xf32>
    %c160_235 = arith.constant 160 : index
    %c0_236 = arith.constant 0 : index
    %654 = vector.load %arg3[%c160_235, %c0_236] : memref<320x128xf32, #tpu.memory_space<vmem>>, vector<32x96xf32>
    %c280_237 = arith.constant 280 : index
    %c0_238 = arith.constant 0 : index
    %655 = vector.load %arg3[%c280_237, %c0_238] : memref<320x128xf32, #tpu.memory_space<vmem>>, vector<1x96xf32>
    %cst_239 = arith.constant dense<0.000000e+00> : vector<2x96xf32>
    %656 = tpu.matmul %585, %654, %cst_239 {dimension_numbers = #tpu.dot_dimension_numbers<[1], [0], [0], [1], [0, 0, 1, 1], [], []>} : vector<2x32xf32>, vector<32x96xf32>, vector<2x96xf32> -> vector<2x96xf32>
    %657 = vector.broadcast %655 : vector<1x96xf32> to vector<2x96xf32>
    %658 = arith.addf %656, %657 : vector<2x96xf32>
    %659 = vector.extract_strided_slice %653 {offsets = [0, 0], sizes = [2, 32], strides = [1, 1]} : vector<2x96xf32> to vector<2x32xf32>
    %660 = vector.extract_strided_slice %658 {offsets = [0, 0], sizes = [2, 32], strides = [1, 1]} : vector<2x96xf32> to vector<2x32xf32>
    %661 = arith.addf %659, %660 : vector<2x32xf32>
    %662 = arith.negf %661 : vector<2x32xf32>
    %663 = math.exp %662 : vector<2x32xf32>
    %cst_240 = arith.constant 1.000000e+00 : f32
    %664 = vector.broadcast %cst_240 : f32 to vector<2x32xf32>
    %665 = arith.addf %664, %663 : vector<2x32xf32>
    %666 = arith.divf %664, %665 : vector<2x32xf32>
    %667 = vector.extract_strided_slice %653 {offsets = [0, 32], sizes = [2, 32], strides = [1, 1]} : vector<2x96xf32> to vector<2x32xf32>
    %668 = vector.extract_strided_slice %658 {offsets = [0, 32], sizes = [2, 32], strides = [1, 1]} : vector<2x96xf32> to vector<2x32xf32>
    %669 = arith.addf %667, %668 : vector<2x32xf32>
    %670 = arith.negf %669 : vector<2x32xf32>
    %671 = math.exp %670 : vector<2x32xf32>
    %cst_241 = arith.constant 1.000000e+00 : f32
    %672 = vector.broadcast %cst_241 : f32 to vector<2x32xf32>
    %673 = arith.addf %672, %671 : vector<2x32xf32>
    %674 = arith.divf %672, %673 : vector<2x32xf32>
    %675 = vector.extract_strided_slice %653 {offsets = [0, 64], sizes = [2, 32], strides = [1, 1]} : vector<2x96xf32> to vector<2x32xf32>
    %676 = vector.extract_strided_slice %658 {offsets = [0, 64], sizes = [2, 32], strides = [1, 1]} : vector<2x96xf32> to vector<2x32xf32>
    %677 = arith.mulf %666, %676 : vector<2x32xf32>
    %678 = arith.addf %675, %677 : vector<2x32xf32>
    %679 = math.tanh %678 : vector<2x32xf32>
    %cst_242 = arith.constant 1.000000e+00 : f32
    %680 = vector.broadcast %cst_242 : f32 to vector<2x32xf32>
    %681 = arith.subf %680, %674 : vector<2x32xf32>
    %682 = arith.mulf %681, %679 : vector<2x32xf32>
    %683 = arith.mulf %674, %585 : vector<2x32xf32>
    %684 = arith.addf %682, %683 : vector<2x32xf32>
    %c192_243 = arith.constant 192 : index
    %c0_244 = arith.constant 0 : index
    %685 = vector.load %arg3[%c192_243, %c0_244] : memref<320x128xf32, #tpu.memory_space<vmem>>, vector<32x96xf32>
    %cst_245 = arith.constant dense<0.000000e+00> : vector<2x96xf32>
    %686 = tpu.matmul %684, %685, %cst_245 {dimension_numbers = #tpu.dot_dimension_numbers<[1], [0], [0], [1], [0, 0, 1, 1], [], []>} : vector<2x32xf32>, vector<32x96xf32>, vector<2x96xf32> -> vector<2x96xf32>
    %c288_246 = arith.constant 288 : index
    %c0_247 = arith.constant 0 : index
    %687 = vector.load %arg3[%c288_246, %c0_247] : memref<320x128xf32, #tpu.memory_space<vmem>>, vector<1x96xf32>
    %688 = vector.broadcast %687 : vector<1x96xf32> to vector<2x96xf32>
    %689 = arith.addf %686, %688 : vector<2x96xf32>
    %c224_248 = arith.constant 224 : index
    %c0_249 = arith.constant 0 : index
    %690 = vector.load %arg3[%c224_248, %c0_249] : memref<320x128xf32, #tpu.memory_space<vmem>>, vector<32x96xf32>
    %c296_250 = arith.constant 296 : index
    %c0_251 = arith.constant 0 : index
    %691 = vector.load %arg3[%c296_250, %c0_251] : memref<320x128xf32, #tpu.memory_space<vmem>>, vector<1x96xf32>
    %cst_252 = arith.constant dense<0.000000e+00> : vector<2x96xf32>
    %692 = tpu.matmul %621, %690, %cst_252 {dimension_numbers = #tpu.dot_dimension_numbers<[1], [0], [0], [1], [0, 0, 1, 1], [], []>} : vector<2x32xf32>, vector<32x96xf32>, vector<2x96xf32> -> vector<2x96xf32>
    %693 = vector.broadcast %691 : vector<1x96xf32> to vector<2x96xf32>
    %694 = arith.addf %692, %693 : vector<2x96xf32>
    %695 = vector.extract_strided_slice %689 {offsets = [0, 0], sizes = [2, 32], strides = [1, 1]} : vector<2x96xf32> to vector<2x32xf32>
    %696 = vector.extract_strided_slice %694 {offsets = [0, 0], sizes = [2, 32], strides = [1, 1]} : vector<2x96xf32> to vector<2x32xf32>
    %697 = arith.addf %695, %696 : vector<2x32xf32>
    %698 = arith.negf %697 : vector<2x32xf32>
    %699 = math.exp %698 : vector<2x32xf32>
    %cst_253 = arith.constant 1.000000e+00 : f32
    %700 = vector.broadcast %cst_253 : f32 to vector<2x32xf32>
    %701 = arith.addf %700, %699 : vector<2x32xf32>
    %702 = arith.divf %700, %701 : vector<2x32xf32>
    %703 = vector.extract_strided_slice %689 {offsets = [0, 32], sizes = [2, 32], strides = [1, 1]} : vector<2x96xf32> to vector<2x32xf32>
    %704 = vector.extract_strided_slice %694 {offsets = [0, 32], sizes = [2, 32], strides = [1, 1]} : vector<2x96xf32> to vector<2x32xf32>
    %705 = arith.addf %703, %704 : vector<2x32xf32>
    %706 = arith.negf %705 : vector<2x32xf32>
    %707 = math.exp %706 : vector<2x32xf32>
    %cst_254 = arith.constant 1.000000e+00 : f32
    %708 = vector.broadcast %cst_254 : f32 to vector<2x32xf32>
    %709 = arith.addf %708, %707 : vector<2x32xf32>
    %710 = arith.divf %708, %709 : vector<2x32xf32>
    %711 = vector.extract_strided_slice %689 {offsets = [0, 64], sizes = [2, 32], strides = [1, 1]} : vector<2x96xf32> to vector<2x32xf32>
    %712 = vector.extract_strided_slice %694 {offsets = [0, 64], sizes = [2, 32], strides = [1, 1]} : vector<2x96xf32> to vector<2x32xf32>
    %713 = arith.mulf %702, %712 : vector<2x32xf32>
    %714 = arith.addf %711, %713 : vector<2x32xf32>
    %715 = math.tanh %714 : vector<2x32xf32>
    %cst_255 = arith.constant 1.000000e+00 : f32
    %716 = vector.broadcast %cst_255 : f32 to vector<2x32xf32>
    %717 = arith.subf %716, %710 : vector<2x32xf32>
    %718 = arith.mulf %717, %715 : vector<2x32xf32>
    %719 = arith.mulf %710, %621 : vector<2x32xf32>
    %720 = arith.addf %718, %719 : vector<2x32xf32>
    %721 = vector.extract_strided_slice %720 {offsets = [0, 0], sizes = [1, 32], strides = [1, 1]} : vector<2x32xf32> to vector<1x32xf32>
    %c6 = arith.constant 6 : index
    %c0_256 = arith.constant 0 : index
    %722 = vector.load %arg5[%c6, %c0_256] : memref<16x32xf32, #tpu.memory_space<vmem>>, vector<1x32xf32>
    tpu.vector_store %arg5[%c6, %c0_256], %721 {strides = array<i32>} : memref<16x32xf32, #tpu.memory_space<vmem>>, vector<1x32xf32>,
    %723 = vector.extract_strided_slice %720 {offsets = [1, 0], sizes = [1, 32], strides = [1, 1]} : vector<2x32xf32> to vector<1x32xf32>
    %c14 = arith.constant 14 : index
    %c0_257 = arith.constant 0 : index
    %724 = vector.load %arg5[%c14, %c0_257] : memref<16x32xf32, #tpu.memory_space<vmem>>, vector<1x32xf32>
    tpu.vector_store %arg5[%c14, %c0_257], %723 {strides = array<i32>} : memref<16x32xf32, #tpu.memory_space<vmem>>, vector<1x32xf32>,
    %c32_258 = arith.constant 32 : index
    %c0_259 = arith.constant 0 : index
    %725 = vector.load %arg3[%c32_258, %c0_259] : memref<320x128xf32, #tpu.memory_space<vmem>>, vector<32x32xf32>
    %cst_260 = arith.constant dense<0.000000e+00> : vector<2x32xf32>
    %726 = tpu.matmul %720, %725, %cst_260 {dimension_numbers = #tpu.dot_dimension_numbers<[1], [0], [0], [1], [0, 0, 1, 1], [], []>} : vector<2x32xf32>, vector<32x32xf32>, vector<2x32xf32> -> vector<2x32xf32>
    %727 = vector.shape_cast %726 : vector<2x32xf32> to vector<2x1x32xf32>
    %728 = vector.broadcast %727 : vector<2x1x32xf32> to vector<2x8x32xf32>
    %729 = arith.addf %728, %6 : vector<2x8x32xf32>
    %730 = math.tanh %729 : vector<2x8x32xf32>
    %c312_261 = arith.constant 312 : index
    %c0_262 = arith.constant 0 : index
    %731 = vector.load %arg3[%c312_261, %c0_262] : memref<320x128xf32, #tpu.memory_space<vmem>>, vector<1x32xf32>
    %732 = vector.shape_cast %731 : vector<1x32xf32> to vector<1x1x32xf32>
    %733 = vector.broadcast %732 : vector<1x1x32xf32> to vector<2x8x32xf32>
    %734 = arith.mulf %730, %733 : vector<2x8x32xf32>
    %cst_263 = arith.constant dense<0.000000e+00> : vector<2x8xf32>
    %735 = vector.multi_reduction <add>, %734, %cst_263 [2] : vector<2x8x32xf32> to vector<2x8xf32>
    %736 = arith.addf %735, %12 : vector<2x8xf32>
    %737 = math.exp %736 : vector<2x8xf32>
    %cst_264 = arith.constant dense<0.000000e+00> : vector<2xf32>
    %738 = vector.multi_reduction <add>, %737, %cst_264 [1] : vector<2x8xf32> to vector<2xf32>
    %739 = vector.shape_cast %738 : vector<2xf32> to vector<2x1xf32>
    %740 = tpu.reciprocal %739 {approx = true} : vector<2x1xf32> -> vector<2x1xf32>
    %741 = vector.broadcast %740 : vector<2x1xf32> to vector<2x8xf32>
    %742 = arith.mulf %737, %741 : vector<2x8xf32>
    %c30 = arith.constant 30 : index
    %c0_265 = arith.constant 0 : index
    %743 = vector.load %arg4[%c30, %c0_265] : memref<40x128xf32, #tpu.memory_space<vmem>>, vector<2x8xf32>
    tpu.vector_store %arg4[%c30, %c0_265], %742 {strides = array<i32>} : memref<40x128xf32, #tpu.memory_space<vmem>>, vector<2x8xf32>,
    %744 = vector.shape_cast %742 : vector<2x8xf32> to vector<2x8x1xf32>
    %745 = vector.broadcast %744 : vector<2x8x1xf32> to vector<2x8x32xf32>
    %746 = arith.mulf %745, %2 : vector<2x8x32xf32>
    %cst_266 = arith.constant dense<0.000000e+00> : vector<2x32xf32>
    %747 = vector.multi_reduction <add>, %746, %cst_266 [1] : vector<2x8x32xf32> to vector<2x32xf32>
    %c128_267 = arith.constant 128 : index
    %c0_268 = arith.constant 0 : index
    %748 = vector.load %arg3[%c128_267, %c0_268] : memref<320x128xf32, #tpu.memory_space<vmem>>, vector<32x96xf32>
    %cst_269 = arith.constant dense<0.000000e+00> : vector<2x96xf32>
    %749 = tpu.matmul %747, %748, %cst_269 {dimension_numbers = #tpu.dot_dimension_numbers<[1], [0], [0], [1], [0, 0, 1, 1], [], []>} : vector<2x32xf32>, vector<32x96xf32>, vector<2x96xf32> -> vector<2x96xf32>
    %750 = vector.extract_strided_slice %27 {offsets = [0, 7, 0], sizes = [2, 1, 96], strides = [1, 1, 1]} : vector<2x8x96xf32> to vector<2x1x96xf32>
    %751 = vector.shape_cast %750 : vector<2x1x96xf32> to vector<2x96xf32>
    %752 = arith.addf %749, %751 : vector<2x96xf32>
    %c160_270 = arith.constant 160 : index
    %c0_271 = arith.constant 0 : index
    %753 = vector.load %arg3[%c160_270, %c0_271] : memref<320x128xf32, #tpu.memory_space<vmem>>, vector<32x96xf32>
    %c280_272 = arith.constant 280 : index
    %c0_273 = arith.constant 0 : index
    %754 = vector.load %arg3[%c280_272, %c0_273] : memref<320x128xf32, #tpu.memory_space<vmem>>, vector<1x96xf32>
    %cst_274 = arith.constant dense<0.000000e+00> : vector<2x96xf32>
    %755 = tpu.matmul %684, %753, %cst_274 {dimension_numbers = #tpu.dot_dimension_numbers<[1], [0], [0], [1], [0, 0, 1, 1], [], []>} : vector<2x32xf32>, vector<32x96xf32>, vector<2x96xf32> -> vector<2x96xf32>
    %756 = vector.broadcast %754 : vector<1x96xf32> to vector<2x96xf32>
    %757 = arith.addf %755, %756 : vector<2x96xf32>
    %758 = vector.extract_strided_slice %752 {offsets = [0, 0], sizes = [2, 32], strides = [1, 1]} : vector<2x96xf32> to vector<2x32xf32>
    %759 = vector.extract_strided_slice %757 {offsets = [0, 0], sizes = [2, 32], strides = [1, 1]} : vector<2x96xf32> to vector<2x32xf32>
    %760 = arith.addf %758, %759 : vector<2x32xf32>
    %761 = arith.negf %760 : vector<2x32xf32>
    %762 = math.exp %761 : vector<2x32xf32>
    %cst_275 = arith.constant 1.000000e+00 : f32
    %763 = vector.broadcast %cst_275 : f32 to vector<2x32xf32>
    %764 = arith.addf %763, %762 : vector<2x32xf32>
    %765 = arith.divf %763, %764 : vector<2x32xf32>
    %766 = vector.extract_strided_slice %752 {offsets = [0, 32], sizes = [2, 32], strides = [1, 1]} : vector<2x96xf32> to vector<2x32xf32>
    %767 = vector.extract_strided_slice %757 {offsets = [0, 32], sizes = [2, 32], strides = [1, 1]} : vector<2x96xf32> to vector<2x32xf32>
    %768 = arith.addf %766, %767 : vector<2x32xf32>
    %769 = arith.negf %768 : vector<2x32xf32>
    %770 = math.exp %769 : vector<2x32xf32>
    %cst_276 = arith.constant 1.000000e+00 : f32
    %771 = vector.broadcast %cst_276 : f32 to vector<2x32xf32>
    %772 = arith.addf %771, %770 : vector<2x32xf32>
    %773 = arith.divf %771, %772 : vector<2x32xf32>
    %774 = vector.extract_strided_slice %752 {offsets = [0, 64], sizes = [2, 32], strides = [1, 1]} : vector<2x96xf32> to vector<2x32xf32>
    %775 = vector.extract_strided_slice %757 {offsets = [0, 64], sizes = [2, 32], strides = [1, 1]} : vector<2x96xf32> to vector<2x32xf32>
    %776 = arith.mulf %765, %775 : vector<2x32xf32>
    %777 = arith.addf %774, %776 : vector<2x32xf32>
    %778 = math.tanh %777 : vector<2x32xf32>
    %cst_277 = arith.constant 1.000000e+00 : f32
    %779 = vector.broadcast %cst_277 : f32 to vector<2x32xf32>
    %780 = arith.subf %779, %773 : vector<2x32xf32>
    %781 = arith.mulf %780, %778 : vector<2x32xf32>
    %782 = arith.mulf %773, %684 : vector<2x32xf32>
    %783 = arith.addf %781, %782 : vector<2x32xf32>
    %c192_278 = arith.constant 192 : index
    %c0_279 = arith.constant 0 : index
    %784 = vector.load %arg3[%c192_278, %c0_279] : memref<320x128xf32, #tpu.memory_space<vmem>>, vector<32x96xf32>
    %cst_280 = arith.constant dense<0.000000e+00> : vector<2x96xf32>
    %785 = tpu.matmul %783, %784, %cst_280 {dimension_numbers = #tpu.dot_dimension_numbers<[1], [0], [0], [1], [0, 0, 1, 1], [], []>} : vector<2x32xf32>, vector<32x96xf32>, vector<2x96xf32> -> vector<2x96xf32>
    %c288_281 = arith.constant 288 : index
    %c0_282 = arith.constant 0 : index
    %786 = vector.load %arg3[%c288_281, %c0_282] : memref<320x128xf32, #tpu.memory_space<vmem>>, vector<1x96xf32>
    %787 = vector.broadcast %786 : vector<1x96xf32> to vector<2x96xf32>
    %788 = arith.addf %785, %787 : vector<2x96xf32>
    %c224_283 = arith.constant 224 : index
    %c0_284 = arith.constant 0 : index
    %789 = vector.load %arg3[%c224_283, %c0_284] : memref<320x128xf32, #tpu.memory_space<vmem>>, vector<32x96xf32>
    %c296_285 = arith.constant 296 : index
    %c0_286 = arith.constant 0 : index
    %790 = vector.load %arg3[%c296_285, %c0_286] : memref<320x128xf32, #tpu.memory_space<vmem>>, vector<1x96xf32>
    %cst_287 = arith.constant dense<0.000000e+00> : vector<2x96xf32>
    %791 = tpu.matmul %720, %789, %cst_287 {dimension_numbers = #tpu.dot_dimension_numbers<[1], [0], [0], [1], [0, 0, 1, 1], [], []>} : vector<2x32xf32>, vector<32x96xf32>, vector<2x96xf32> -> vector<2x96xf32>
    %792 = vector.broadcast %790 : vector<1x96xf32> to vector<2x96xf32>
    %793 = arith.addf %791, %792 : vector<2x96xf32>
    %794 = vector.extract_strided_slice %788 {offsets = [0, 0], sizes = [2, 32], strides = [1, 1]} : vector<2x96xf32> to vector<2x32xf32>
    %795 = vector.extract_strided_slice %793 {offsets = [0, 0], sizes = [2, 32], strides = [1, 1]} : vector<2x96xf32> to vector<2x32xf32>
    %796 = arith.addf %794, %795 : vector<2x32xf32>
    %797 = arith.negf %796 : vector<2x32xf32>
    %798 = math.exp %797 : vector<2x32xf32>
    %cst_288 = arith.constant 1.000000e+00 : f32
    %799 = vector.broadcast %cst_288 : f32 to vector<2x32xf32>
    %800 = arith.addf %799, %798 : vector<2x32xf32>
    %801 = arith.divf %799, %800 : vector<2x32xf32>
    %802 = vector.extract_strided_slice %788 {offsets = [0, 32], sizes = [2, 32], strides = [1, 1]} : vector<2x96xf32> to vector<2x32xf32>
    %803 = vector.extract_strided_slice %793 {offsets = [0, 32], sizes = [2, 32], strides = [1, 1]} : vector<2x96xf32> to vector<2x32xf32>
    %804 = arith.addf %802, %803 : vector<2x32xf32>
    %805 = arith.negf %804 : vector<2x32xf32>
    %806 = math.exp %805 : vector<2x32xf32>
    %cst_289 = arith.constant 1.000000e+00 : f32
    %807 = vector.broadcast %cst_289 : f32 to vector<2x32xf32>
    %808 = arith.addf %807, %806 : vector<2x32xf32>
    %809 = arith.divf %807, %808 : vector<2x32xf32>
    %810 = vector.extract_strided_slice %788 {offsets = [0, 64], sizes = [2, 32], strides = [1, 1]} : vector<2x96xf32> to vector<2x32xf32>
    %811 = vector.extract_strided_slice %793 {offsets = [0, 64], sizes = [2, 32], strides = [1, 1]} : vector<2x96xf32> to vector<2x32xf32>
    %812 = arith.mulf %801, %811 : vector<2x32xf32>
    %813 = arith.addf %810, %812 : vector<2x32xf32>
    %814 = math.tanh %813 : vector<2x32xf32>
    %cst_290 = arith.constant 1.000000e+00 : f32
    %815 = vector.broadcast %cst_290 : f32 to vector<2x32xf32>
    %816 = arith.subf %815, %809 : vector<2x32xf32>
    %817 = arith.mulf %816, %814 : vector<2x32xf32>
    %818 = arith.mulf %809, %720 : vector<2x32xf32>
    %819 = arith.addf %817, %818 : vector<2x32xf32>
    %820 = vector.extract_strided_slice %819 {offsets = [0, 0], sizes = [1, 32], strides = [1, 1]} : vector<2x32xf32> to vector<1x32xf32>
    %c7 = arith.constant 7 : index
    %c0_291 = arith.constant 0 : index
    %821 = vector.load %arg5[%c7, %c0_291] : memref<16x32xf32, #tpu.memory_space<vmem>>, vector<1x32xf32>
    tpu.vector_store %arg5[%c7, %c0_291], %820 {strides = array<i32>} : memref<16x32xf32, #tpu.memory_space<vmem>>, vector<1x32xf32>,
    %822 = vector.extract_strided_slice %819 {offsets = [1, 0], sizes = [1, 32], strides = [1, 1]} : vector<2x32xf32> to vector<1x32xf32>
    %c15 = arith.constant 15 : index
    %c0_292 = arith.constant 0 : index
    %823 = vector.load %arg5[%c15, %c0_292] : memref<16x32xf32, #tpu.memory_space<vmem>>, vector<1x32xf32>
    tpu.vector_store %arg5[%c15, %c0_292], %822 {strides = array<i32>} : memref<16x32xf32, #tpu.memory_space<vmem>>, vector<1x32xf32>,
    %c0_293 = arith.constant 0 : index
    %c0_294 = arith.constant 0 : index
    %824 = vector.load %arg5[%c0_293, %c0_294] : memref<16x32xf32, #tpu.memory_space<vmem>>, vector<16x32xf32>
    %c96 = arith.constant 96 : index
    %c0_295 = arith.constant 0 : index
    %825 = vector.load %arg3[%c96, %c0_295] : memref<320x128xf32, #tpu.memory_space<vmem>>, vector<32x32xf32>
    %cst_296 = arith.constant dense<0.000000e+00> : vector<16x32xf32>
    %826 = tpu.matmul %824, %825, %cst_296 {dimension_numbers = #tpu.dot_dimension_numbers<[1], [0], [0], [1], [0, 0, 1, 1], [], []>} : vector<16x32xf32>, vector<32x32xf32>, vector<16x32xf32> -> vector<16x32xf32>
    %c304 = arith.constant 304 : index
    %c0_297 = arith.constant 0 : index
    %827 = vector.load %arg3[%c304, %c0_297] : memref<320x128xf32, #tpu.memory_space<vmem>>, vector<1x32xf32>
    %828 = vector.broadcast %827 : vector<1x32xf32> to vector<16x32xf32>
    %829 = arith.addf %826, %828 : vector<16x32xf32>
    %c0_298 = arith.constant 0 : index
    %c0_299 = arith.constant 0 : index
    %830 = vector.load %arg4[%c0_298, %c0_299] : memref<40x128xf32, #tpu.memory_space<vmem>>, vector<16x32xf32>
    tpu.vector_store %arg4[%c0_298, %c0_299], %829 {strides = array<i32>} : memref<40x128xf32, #tpu.memory_space<vmem>>, vector<16x32xf32>,
    %c32_300 = arith.constant 32 : index
    %c0_301 = arith.constant 0 : index
    %831 = vector.load %arg4[%c32_300, %c0_301] : memref<40x128xf32, #tpu.memory_space<vmem>>, vector<2x32xf32>
    tpu.vector_store %arg4[%c32_300, %c0_301], %783 {strides = array<i32>} : memref<40x128xf32, #tpu.memory_space<vmem>>, vector<2x32xf32>,
    %c34 = arith.constant 34 : index
    %c0_302 = arith.constant 0 : index
    %832 = vector.load %arg4[%c34, %c0_302] : memref<40x128xf32, #tpu.memory_space<vmem>>, vector<2x32xf32>
    tpu.vector_store %arg4[%c34, %c0_302], %819 {strides = array<i32>} : memref<40x128xf32, #tpu.memory_space<vmem>>, vector<2x32xf32>,
    return
  }
}

</mosaic_0001>

<llo_original>
// kernel: seq2seq_attention_decoder.1
$region0: #{seq2seq_attention_decoder.1}
  #allocation0 [shape = 'u32[]', space=smem, size = 0x4, offset = 0x4, fixed_abs, tag = 'smem constant byte address 0x4 - core index']
  #allocation1 [shape = 'u32[144,128]{1,0:T(1,128)}', space=vmem, size = 0x12000, scoped, tag = 'internal scratch']
  #allocation2 [shape = 'f32[16,32]{1,0:T(8,128)}', space=vmem, size = 0x2000, scoped, tag = 'scratch operand']
  %s0 = inlined_call_operand.vmem [shape: s32[2,9], index: 0, kind: input, shape index: {}]
  %s1 = inlined_call_operand.vmem [shape: f32[2,8,32], index: 1, kind: input, shape index: {}]
  %s2 = inlined_call_operand.vmem [shape: f32[2,2,32], index: 2, kind: input, shape index: {}]
  %s3 = inlined_call_operand.hbm [shape: f32[320,128], index: 3, kind: input, shape index: {}]
  %s4 = inlined_call_operand.vmem [shape: f32[40,128], index: 4, kind: output, shape index: {}]
  %s5 = sld [smem:[#allocation0]]
  $region30: #{seq2seq_attention_decoder.1} parent=0
    _
  %s7 = ssub.s32 1, %s5
  %s8 = scalar_select 0, %s7, %s5
  $region1: #{seq2seq_attention_decoder.1} parent=0
    #allocation3 [shape = 'u8[163840]{0}', space=vmem, size = 0x28000, scoped, tag = 'input window, operand 3, single buffered']
    #allocation4 [shape = 's32[1]{0}', space=sflag, size = 0x4, scoped, tag = 'scoped memory for seq2seq_attention_decoder.1']
    %9 = vsyncpa [#allocation4], 0
    // Predicated region
    $region2: #{seq2seq_attention_decoder.1} parent=1 // pred_check
      _
    $region3: #{seq2seq_attention_decoder.1} parent=1 // pred_check_branch
      %11 = sbr.rel (0) target = $region5
    $region4: #{seq2seq_attention_decoder.1} parent=1 // pred_region
      _
    $region5: #{seq2seq_attention_decoder.1} parent=1 // pred_fallthru
      _
    // Predicated region
    $region6: #{seq2seq_attention_decoder.1} parent=1 // pred_check
      _
    $region7: #{seq2seq_attention_decoder.1} parent=1 // pred_check_branch
      %13 = sbr.rel (0) target = $region9
    $region8: #{seq2seq_attention_decoder.1} parent=1 // pred_region
      _
    $region9: #{seq2seq_attention_decoder.1} parent=1 // pred_fallthru
      _
    // Predicated region
    $region10: #{seq2seq_attention_decoder.1} parent=1 // pred_check
      _
    $region11: #{seq2seq_attention_decoder.1} parent=1 // pred_check_branch
      %15 = sbr.rel (0) target = $region13
    $region12: #{seq2seq_attention_decoder.1} parent=1 // pred_region
      _
    $region13: #{seq2seq_attention_decoder.1} parent=1 // pred_fallthru
      _
    // Predicated region
    $region14: #{seq2seq_attention_decoder.1} parent=1 // pred_check
      _
    $region15: #{seq2seq_attention_decoder.1} parent=1 // pred_check_branch
      %17 = sbr.rel (0) target = $region17
    $region16: #{seq2seq_attention_decoder.1} parent=1 // pred_region
      %s19 = ssub.s32 5120, 5120
      %20 = vsyncadd [#allocation4], %s19
      %s21 = sshll.u32 [#allocation3], 4
      %s22 = int_to_ptr.vmem [resolvable:$true] %s21
      %27 = dma.hbm_to_vmem [thread:$0]  %s3, 5120, %s22, [#allocation4], 128, 128, 8
    $region17: #{seq2seq_attention_decoder.1} parent=1 // pred_fallthru
      _
    // Predicated region
    $region18: #{seq2seq_attention_decoder.1} parent=1 // pred_check
      _
    $region19: #{seq2seq_attention_decoder.1} parent=1 // pred_check_branch
      %29 = sbr.rel (0) target = $region21
    $region20: #{seq2seq_attention_decoder.1} parent=1 // pred_region
      %30 = dma.done [#allocation4], 5120
    $region21: #{seq2seq_attention_decoder.1} parent=1 // pred_fallthru
      _
    %v31 = vld [vmem:[%s0] sm:$0x3]
    %v32 = vld [vmem:[%s1] sm:$0xff]
    %v33 = vld [vmem:[%s1 + $0x8] sm:$0xff]
    %v34 = vld [vmem:[#allocation3 + $0x40] sm:$0xff]
    %v35 = vld [vmem:[#allocation3 + $0x48] sm:$0xff]
    %v36 = vld [vmem:[#allocation3 + $0x50] sm:$0xff]
    %v37 = vld [vmem:[#allocation3 + $0x58] sm:$0xff]
    %vm38 = vcmask 261120
    %v40 = vsel %vm38, %v32, 0
    %v43 = vsel %vm38, %v33, 0
    %45 = vmatprep.subr.mxu0 0.0
    %46 = vmatpush1.msra.mxu0 %v34
    %47 = vmatprep.subr.mxu0 0.0
    %48 = vmatpush1.msra.mxu0 %v35
    %49 = vmatprep.subr.mxu0 0.0
    %50 = vmatpush1.msra.mxu0 %v36
    %51 = vmatprep.subr.mxu0 0.0
    %52 = vmatpush1.msra.mxu0 %v37
    %53 = vmatprep.subr.mxu0 0.0
    %54 = vmatpush1.msra.mxu0 0.0
    %55 = vmatprep.subr.mxu0 0.0
    %56 = vmatpush1.msra.mxu0 0.0
    %57 = vmatprep.subr.mxu0 0.0
    %58 = vmatpush1.msra.mxu0 0.0
    %59 = vmatprep.subr.mxu0 0.0
    %60 = vmatpush1.msra.mxu0 0.0
    %61 = vmatprep.subr.mxu0 0.0
    %62 = vmatpush1.msra.mxu0 0.0
    %63 = vmatprep.subr.mxu0 0.0
    %64 = vmatpush1.msra.mxu0 0.0
    %65 = vmatprep.subr.mxu0 0.0
    %66 = vmatpush1.msra.mxu0 0.0
    %67 = vmatprep.subr.mxu0 0.0
    %68 = vmatpush1.msra.mxu0 0.0
    %69 = vmatprep.subr.mxu0 0.0
    %70 = vmatpush1.msra.mxu0 0.0
    %71 = vmatprep.subr.mxu0 0.0
    %72 = vmatpush1.msra.mxu0 0.0
    %73 = vmatprep.subr.mxu0 0.0
    %74 = vmatpush1.msra.mxu0 0.0
    %75 = vmatprep.subr.mxu0 0.0
    %76 = vmatpush1.msra.mxu0 0.0
    %77 = vmatprep.subr.mxu0 0.0
    %78 = vmatpush1.msra.mxu0 0.0
    %79 = vmatprep.subr.mxu0 0.0
    %80 = vmatpush1.msra.mxu0 0.0
    %81 = vmatprep.subr.mxu0 0.0
    %82 = vmatpush1.msra.mxu0 0.0
    %83 = vmatprep.subr.mxu0 0.0
    %84 = vmatpush1.msra.mxu0 0.0
    %85 = vmatprep.subr.mxu0 0.0
    %86 = vmatpush1.msra.mxu0 0.0
    %87 = vmatprep.subr.mxu0 0.0
    %88 = vmatpush1.msra.mxu0 0.0
    %89 = vmatprep.subr.mxu0 0.0
    %90 = vmatpush1.msra.mxu0 0.0
    %91 = vmatprep.subr.mxu0 0.0
    %92 = vmatpush1.msra.mxu0 0.0
    %93 = vmatprep.subr.mxu0 0.0
    %94 = vmatpush1.msra.mxu0 0.0
    %95 = vmatprep.subr.mxu0 0.0
    %96 = vmatpush1.msra.mxu0 0.0
    %97 = vmatprep.subr.mxu0 0.0
    %98 = vmatpush1.msra.mxu0 0.0
    %99 = vmatprep.subr.mxu0 0.0
    %100 = vmatpush1.msra.mxu0 0.0
    %101 = vmatprep.subr.mxu0 0.0
    %102 = vmatpush1.msra.mxu0 0.0
    %103 = vmatprep.subr.mxu0 0.0
    %104 = vmatpush1.msra.mxu0 0.0
    %105 = vmatprep.subr.mxu0 0.0
    %106 = vmatpush1.msra.mxu0 0.0
    %107 = vmatprep.subr.mxu0 0.0
    %108 = vmatpush1.msra.mxu0 0.0
    %109 = vmatprep.mubr.f32.mxu0 0.0
    %110 = vmatmul.mubr.f32.gmra.mrb[0].mxu0 %v40
    %v111 = vpop.f32.mrb[0].mxu0
    %v112 = vadd.f32 0.0, %v111
    %v113 = vpop.f32.mrb[0].mxu0
    %114 = vmatprep.mubr.f32.mxu0 0.0
    %115 = vmatmul.mubr.f32.gmra.mrb[0].mxu0 %v43
    %v116 = vpop.f32.mrb[0].mxu0
    %v117 = vadd.f32 0.0, %v116
    %v118 = vpop.f32.mrb[0].mxu0
    %119 = vdwg.mxu0
    %v120 = vlaneseq
    %v121 = vand.u32 %v120, 127
    %122 = vset.pattern.permute.xlu0 8
    %123 = vperm.xlu0 %122, %v31
    %v124 = vpop.permute.xlu0 %123
    %vm125 = vcmp.lt.s32.totalorder %v121, %v124
    %v126 = vsel %vm125, 0.0, -1000000.0
    %v127 = vld [vmem:[#allocation3] sm:$0xff]
    %v128 = vld [vmem:[#allocation3 + $0x8] sm:$0xff]
    %v129 = vld [vmem:[#allocation3 + $0x10] sm:$0xff]
    %v130 = vld [vmem:[#allocation3 + $0x18] sm:$0xff]
    %v131 = vld [vmem:[#allocation3 + $0x100] sm:$0xff]
    %v132 = vld [vmem:[#allocation3 + $0x108] sm:$0xff]
    %v133 = vld [vmem:[#allocation3 + $0x110] sm:$0x1]
    %v134 = vlaneseq
    %v135 = vshrl.u32 %v134, 7
    %v136 = vsub.s32 0, %v135
    %v137 = vrot.slane %v133, %v136
    %vm138 = vcmask 130048
    %v140 = vsel %vm138, %v127, 0
    %v143 = vsel %vm138, %v128, 0
    %v146 = vsel %vm138, %v129, 0
    %v149 = vsel %vm138, %v130, 0
    %151 = vmatprep.subr.mxu0 0.0
    %152 = vmatpush1.msra.mxu0 %v131
    %153 = vmatprep.subr.mxu0 0.0
    %154 = vmatpush1.msra.mxu0 %v132
    %155 = vmatprep.subr.mxu0 0.0
    %156 = vmatpush1.msra.mxu0 0.0
    %157 = vmatprep.subr.mxu0 0.0
    %158 = vmatpush1.msra.mxu0 0.0
    %159 = vmatprep.subr.mxu0 0.0
    %160 = vmatpush1.msra.mxu0 0.0
    %161 = vmatprep.subr.mxu0 0.0
    %162 = vmatpush1.msra.mxu0 0.0
    %163 = vmatprep.subr.mxu0 0.0
    %164 = vmatpush1.msra.mxu0 0.0
    %165 = vmatprep.subr.mxu0 0.0
    %166 = vmatpush1.msra.mxu0 0.0
    %167 = vmatprep.subr.mxu0 0.0
    %168 = vmatpush1.msra.mxu0 0.0
    %169 = vmatprep.subr.mxu0 0.0
    %170 = vmatpush1.msra.mxu0 0.0
    %171 = vmatprep.subr.mxu0 0.0
    %172 = vmatpush1.msra.mxu0 0.0
    %173 = vmatprep.subr.mxu0 0.0
    %174 = vmatpush1.msra.mxu0 0.0
    %175 = vmatprep.subr.mxu0 0.0
    %176 = vmatpush1.msra.mxu0 0.0
    %177 = vmatprep.subr.mxu0 0.0
    %178 = vmatpush1.msra.mxu0 0.0
    %179 = vmatprep.subr.mxu0 0.0
    %180 = vmatpush1.msra.mxu0 0.0
    %181 = vmatprep.subr.mxu0 0.0
    %182 = vmatpush1.msra.mxu0 0.0
    %183 = vmatprep.subr.mxu0 0.0
    %184 = vmatpush1.msra.mxu0 0.0
    %185 = vmatprep.subr.mxu0 0.0
    %186 = vmatpush1.msra.mxu0 0.0
    %187 = vmatprep.subr.mxu0 0.0
    %188 = vmatpush1.msra.mxu0 0.0
    %189 = vmatprep.subr.mxu0 0.0
    %190 = vmatpush1.msra.mxu0 0.0
    %191 = vmatprep.subr.mxu0 0.0
    %192 = vmatpush1.msra.mxu0 0.0
    %193 = vmatprep.subr.mxu0 0.0
    %194 = vmatpush1.msra.mxu0 0.0
    %195 = vmatprep.subr.mxu0 0.0
    %196 = vmatpush1.msra.mxu0 0.0
    %197 = vmatprep.subr.mxu0 0.0
    %198 = vmatpush1.msra.mxu0 0.0
    %199 = vmatprep.subr.mxu0 0.0
    %200 = vmatpush1.msra.mxu0 0.0
    %201 = vmatprep.subr.mxu0 0.0
    %202 = vmatpush1.msra.mxu0 0.0
    %203 = vmatprep.subr.mxu0 0.0
    %204 = vmatpush1.msra.mxu0 0.0
    %205 = vmatprep.subr.mxu0 0.0
    %206 = vmatpush1.msra.mxu0 0.0
    %207 = vmatprep.subr.mxu0 0.0
    %208 = vmatpush1.msra.mxu0 0.0
    %209 = vmatprep.subr.mxu0 0.0
    %210 = vmatpush1.msra.mxu0 0.0
    %211 = vmatprep.subr.mxu0 0.0
    %212 = vmatpush1.msra.mxu0 0.0
    %213 = vmatprep.subr.mxu0 0.0
    %214 = vmatpush1.msra.mxu0 0.0
    %215 = vmatprep.mubr.f32.mxu0 0.0
    %216 = vmatmul.mubr.f32.gmra.mrb[0].mxu0 %v140
    %v217 = vpop.f32.mrb[0].mxu0
    %v218 = vadd.f32 %v137, %v217
    %v219 = vpop.f32.mrb[0].mxu0
    %220 = vmatprep.mubr.f32.mxu0 0.0
    %221 = vmatmul.mubr.f32.gmra.mrb[0].mxu0 %v143
    %v222 = vpop.f32.mrb[0].mxu0
    %v223 = vadd.f32 %v137, %v222
    %v224 = vpop.f32.mrb[0].mxu0
    %225 = vmatprep.mubr.f32.mxu0 0.0
    %226 = vmatmul.mubr.f32.gmra.mrb[0].mxu0 %v146
    %v227 = vpop.f32.mrb[0].mxu0
    %v228 = vadd.f32 %v137, %v227
    %v229 = vpop.f32.mrb[0].mxu0
    %230 = vmatprep.mubr.f32.mxu0 0.0
    %231 = vmatmul.mubr.f32.gmra.mrb[0].mxu0 %v149
    %v232 = vpop.f32.mrb[0].mxu0
    %v233 = vadd.f32 %v137, %v232
    %v234 = vpop.f32.mrb[0].mxu0
    %235 = vdwg.mxu0
    %v236 = vlaneseq
    %v237 = vshrl.u32 %v236, 7
    %v238 = vsub.s32 0, %v237
    %v239 = vrot.slane %v31, %v238
    %241 = vbcast.lane.b32.xlu0 %v239, 256
    %v242 = vpop.permute.xlu0 %241
    %v243 = vlaneseq
    %v244 = vshrl.u32 %v243, 7
    %v245 = vsub.s32 1, %v244
    %v246 = vrot.slane %v31, %v245
    %248 = vbcast.lane.b32.xlu0 %v246, 256
    %v249 = vpop.permute.xlu0 %248
    %vm250 = vcmp.eq.s32.totalorder %v242, %v121
    %vm251 = vcmp.eq.s32.totalorder %v249, %v121
    %v252 = vsel %vm250, 1, 0
    %v253 = vsel %vm251, 1, 0
    %v254 = vcvt.s32.f32 %v252
    %v255 = vcvt.s32.f32 %v253
    %v257 = vsel %vm38, %v254, 0
    %v260 = vsel %vm38, %v255, 0
    %262 = vmatprep.subr.mxu0 0.0
    %263 = vmatpush1.msra.mxu0 %v218
    %264 = vmatprep.subr.mxu0 0.0
    %265 = vmatpush1.msra.mxu0 %v223
    %266 = vmatprep.subr.mxu0 0.0
    %267 = vmatpush1.msra.mxu0 %v228
    %268 = vmatprep.subr.mxu0 0.0
    %269 = vmatpush1.msra.mxu0 %v233
    %270 = vmatprep.subr.mxu0 0.0
    %271 = vmatpush1.msra.mxu0 0.0
    %272 = vmatprep.subr.mxu0 0.0
    %273 = vmatpush1.msra.mxu0 0.0
    %274 = vmatprep.subr.mxu0 0.0
    %275 = vmatpush1.msra.mxu0 0.0
    %276 = vmatprep.subr.mxu0 0.0
    %277 = vmatpush1.msra.mxu0 0.0
    %278 = vmatprep.subr.mxu0 0.0
    %279 = vmatpush1.msra.mxu0 0.0
    %280 = vmatprep.subr.mxu0 0.0
    %281 = vmatpush1.msra.mxu0 0.0
    %282 = vmatprep.subr.mxu0 0.0
    %283 = vmatpush1.msra.mxu0 0.0
    %284 = vmatprep.subr.mxu0 0.0
    %285 = vmatpush1.msra.mxu0 0.0
    %286 = vmatprep.subr.mxu0 0.0
    %287 = vmatpush1.msra.mxu0 0.0
    %288 = vmatprep.subr.mxu0 0.0
    %289 = vmatpush1.msra.mxu0 0.0
    %290 = vmatprep.subr.mxu0 0.0
    %291 = vmatpush1.msra.mxu0 0.0
    %292 = vmatprep.subr.mxu0 0.0
    %293 = vmatpush1.msra.mxu0 0.0
    %294 = vmatprep.subr.mxu0 0.0
    %295 = vmatpush1.msra.mxu0 0.0
    %296 = vmatprep.subr.mxu0 0.0
    %297 = vmatpush1.msra.mxu0 0.0
    %298 = vmatprep.subr.mxu0 0.0
    %299 = vmatpush1.msra.mxu0 0.0
    %300 = vmatprep.subr.mxu0 0.0
    %301 = vmatpush1.msra.mxu0 0.0
    %302 = vmatprep.subr.mxu0 0.0
    %303 = vmatpush1.msra.mxu0 0.0
    %304 = vmatprep.subr.mxu0 0.0
    %305 = vmatpush1.msra.mxu0 0.0
    %306 = vmatprep.subr.mxu0 0.0
    %307 = vmatpush1.msra.mxu0 0.0
    %308 = vmatprep.subr.mxu0 0.0
    %309 = vmatpush1.msra.mxu0 0.0
    %310 = vmatprep.subr.mxu0 0.0
    %311 = vmatpush1.msra.mxu0 0.0
    %312 = vmatprep.subr.mxu0 0.0
    %313 = vmatpush1.msra.mxu0 0.0
    %314 = vmatprep.subr.mxu0 0.0
    %315 = vmatpush1.msra.mxu0 0.0
    %316 = vmatprep.subr.mxu0 0.0
    %317 = vmatpush1.msra.mxu0 0.0
    %318 = vmatprep.subr.mxu0 0.0
    %319 = vmatpush1.msra.mxu0 0.0
    %320 = vmatprep.subr.mxu0 0.0
    %321 = vmatpush1.msra.mxu0 0.0
    %322 = vmatprep.subr.mxu0 0.0
    %323 = vmatpush1.msra.mxu0 0.0
    %324 = vmatprep.subr.mxu0 0.0
    %325 = vmatpush1.msra.mxu0 0.0
    %326 = vmatprep.mubr.f32.mxu0 0.0
    %327 = vmatmul.mubr.f32.gmra.mrb[0].mxu0 %v257
    %v328 = vpop.f32.mrb[0].mxu0
    %v329 = vadd.f32 0.0, %v328
    %v330 = vpop.f32.mrb[0].mxu0
    %331 = vmatprep.mubr.f32.mxu0 0.0
    %332 = vmatmul.mubr.f32.gmra.mrb[0].mxu0 %v260
    %v333 = vpop.f32.mrb[0].mxu0
    %v334 = vadd.f32 0.0, %v333
    %v335 = vpop.f32.mrb[0].mxu0
    %336 = vdwg.mxu0
    %v337 = vld [vmem:[%s2] sm:$0x3]
    %s338 = scalar_lea.vmem %s2, 2
    %v339 = vld [vmem:[%s338] sm:$0x3]
    %v340 = vld [vmem:[#allocation3 + $0x20] sm:$0xff]
    %v341 = vld [vmem:[#allocation3 + $0x28] sm:$0xff]
    %v342 = vld [vmem:[#allocation3 + $0x30] sm:$0xff]
    %v343 = vld [vmem:[#allocation3 + $0x38] sm:$0xff]
    %v345 = vsel %vm38, %v339, 0
    %347 = vmatprep.subr.mxu0 0.0
    %348 = vmatpush1.msra.mxu0 %v340
    %349 = vmatprep.subr.mxu0 0.0
    %350 = vmatpush1.msra.mxu0 %v341
    %351 = vmatprep.subr.mxu0 0.0
    %352 = vmatpush1.msra.mxu0 %v342
    %353 = vmatprep.subr.mxu0 0.0
    %354 = vmatpush1.msra.mxu0 %v343
    %355 = vmatprep.subr.mxu0 0.0
    %356 = vmatpush1.msra.mxu0 0.0
    %357 = vmatprep.subr.mxu0 0.0
    %358 = vmatpush1.msra.mxu0 0.0
    %359 = vmatprep.subr.mxu0 0.0
    %360 = vmatpush1.msra.mxu0 0.0
    %361 = vmatprep.subr.mxu0 0.0
    %362 = vmatpush1.msra.mxu0 0.0
    %363 = vmatprep.subr.mxu0 0.0
    %364 = vmatpush1.msra.mxu0 0.0
    %365 = vmatprep.subr.mxu0 0.0
    %366 = vmatpush1.msra.mxu0 0.0
    %367 = vmatprep.subr.mxu0 0.0
    %368 = vmatpush1.msra.mxu0 0.0
    %369 = vmatprep.subr.mxu0 0.0
    %370 = vmatpush1.msra.mxu0 0.0
    %371 = vmatprep.subr.mxu0 0.0
    %372 = vmatpush1.msra.mxu0 0.0
    %373 = vmatprep.subr.mxu0 0.0
    %374 = vmatpush1.msra.mxu0 0.0
    %375 = vmatprep.subr.mxu0 0.0
    %376 = vmatpush1.msra.mxu0 0.0
    %377 = vmatprep.subr.mxu0 0.0
    %378 = vmatpush1.msra.mxu0 0.0
    %379 = vmatprep.subr.mxu0 0.0
    %380 = vmatpush1.msra.mxu0 0.0
    %381 = vmatprep.subr.mxu0 0.0
    %382 = vmatpush1.msra.mxu0 0.0
    %383 = vmatprep.subr.mxu0 0.0
    %384 = vmatpush1.msra.mxu0 0.0
    %385 = vmatprep.subr.mxu0 0.0
    %386 = vmatpush1.msra.mxu0 0.0
    %387 = vmatprep.subr.mxu0 0.0
    %388 = vmatpush1.msra.mxu0 0.0
    %389 = vmatprep.subr.mxu0 0.0
    %390 = vmatpush1.msra.mxu0 0.0
    %391 = vmatprep.subr.mxu0 0.0
    %392 = vmatpush1.msra.mxu0 0.0
    %393 = vmatprep.subr.mxu0 0.0
    %394 = vmatpush1.msra.mxu0 0.0
    %395 = vmatprep.subr.mxu0 0.0
    %396 = vmatpush1.msra.mxu0 0.0
    %397 = vmatprep.subr.mxu0 0.0
    %398 = vmatpush1.msra.mxu0 0.0
    %399 = vmatprep.subr.mxu0 0.0
    %400 = vmatpush1.msra.mxu0 0.0
    %401 = vmatprep.subr.mxu0 0.0
    %402 = vmatpush1.msra.mxu0 0.0
    %403 = vmatprep.subr.mxu0 0.0
    %404 = vmatpush1.msra.mxu0 0.0
    %405 = vmatprep.subr.mxu0 0.0
    %406 = vmatpush1.msra.mxu0 0.0
    %407 = vmatprep.subr.mxu0 0.0
    %408 = vmatpush1.msra.mxu0 0.0
    %409 = vmatprep.subr.mxu0 0.0
    %410 = vmatpush1.msra.mxu0 0.0
    %411 = vmatprep.mubr.f32.mxu0 0.0
    %412 = vmatmul.mubr.f32.gmra.mrb[0].mxu0 %v345
    %v413 = vpop.f32.mrb[0].mxu0
    %v414 = vadd.f32 0.0, %v413
    %v415 = vpop.f32.mrb[0].mxu0
    %416 = vdwg.mxu0
    %v419 = vunpack.c.l.s4 1966171168
    %v420 = vunpack.c.0.s8 %v419
    %v421 = vlaneseq
    %v422 = vshrl.u32 %v421, 7
    %v423 = vsub.s32 %v420, %v422
    %v424 = vrot.slane %v414, %v423
    %v425 = vcombine.high %v424, %v424
    %v427 = vunpack.c.l.s4 1966171168
    %v428 = vunpack.c.0.s8 %v427
    %v429 = vlaneseq
    %v430 = vshrl.u32 %v429, 7
    %v431 = vsub.s32 %v428, %v430
    %v432 = vrot.slane %v424, %v431
    %v434 = vunpack.c.l.s4 1966171168
    %v435 = vunpack.c.0.s8 %v434
    %v436 = vlaneseq
    %v437 = vshrl.u32 %v436, 7
    %v438 = vsub.s32 %v435, %v437
    %v439 = vrot.slane %v425, %v438
    %v440 = vlaneseq
    %v441 = vshrl.u32 %v440, 7
    %v442 = vsub.s32 0, %v441
    %v443 = vrot.slane %v432, %v442
    %v444 = vlaneseq
    %v445 = vshrl.u32 %v444, 7
    %v446 = vsub.s32 0, %v445
    %v447 = vrot.slane %v439, %v446
    %v450 = vadd.f32 %v443, %v112
    %v451 = vadd.f32 %v447, %v117
    %v452 = vtanh.pop %v450
    %v453 = vtanh.pop %v451
    %v454 = vld [vmem:[#allocation3 + $0x138] sm:$0x1]
    %v455 = vlaneseq
    %v456 = vshrl.u32 %v455, 7
    %v457 = vsub.s32 0, %v456
    %v458 = vrot.slane %v454, %v457
    %v459 = vmul.f32 %v452, %v458
    %v460 = vmul.f32 %v453, %v458
    %v461 = vsel %vm38, %v459, 0.0
    %462 = vadd.xlane.f32.xlu0 %v461
    %v463 = vpop.xlane.xlu0 %462
    %v464 = vsel %vm38, %v460, 0.0
    %465 = vadd.xlane.f32.xlu0 %v464
    %v466 = vpop.xlane.xlu0 %465
    %v468 = vlaneseq
    %v469 = vshrl.u32 %v468, 7
    %v470 = vsub.s32 0, %v469
    %v471 = vrot.slane %v126, %v470
    %473 = vbcast.lane.b32.xlu0 %v471, 256
    %v474 = vpop.permute.xlu0 %473
    %v475 = vlaneseq
    %v476 = vshrl.u32 %v475, 7
    %v477 = vsub.s32 1, %v476
    %v478 = vrot.slane %v126, %v477
    %480 = vbcast.lane.b32.xlu0 %v478, 256
    %v481 = vpop.permute.xlu0 %480
    %v484 = vadd.f32 %v463, %v474
    %v485 = vadd.f32 %v466, %v481
    %v486 = vmul.f32 %v484, 1.442695
    %v487 = vpow.pop %v486
    %v488 = vmul.f32 %v485, 1.442695
    %v489 = vpow.pop %v488
    %492 = vset.pattern.permute.xlu0 0
    %493 = vperm.xlu0 %492, %v487
    %v494 = vpop.permute.xlu0 %493
    %495 = vset.pattern.permute.xlu0 0
    %496 = vperm.xlu0 %495, %v489
    %v497 = vpop.permute.xlu0 %496
    %v498 = vlaneseq
    %v499 = vshrl.u32 %v498, 7
    %v500 = vsub.s32 %v121, %v499
    %v501 = vrot.slane %v494, %v500
    %v502 = vlaneseq
    %v503 = vshrl.u32 %v502, 7
    %v504 = vsub.s32 %v121, %v503
    %v505 = vrot.slane %v497, %v504
    %vm506 = vcmask 1041409
    %v507 = vsel %vm506, %v505, %v501
    %vm509 = vcmask 58368
    %v510 = vsel %vm509, %v507, 0.0
    %511 = vadd.xlane.f32.xlu0 %v510
    %v512 = vpop.xlane.xlu0 %511
    %v513 = vrcp.pop %v512
    %v515 = vlaneseq
    %v516 = vshrl.u32 %v515, 7
    %v517 = vsub.s32 0, %v516
    %v518 = vrot.slane %v513, %v517
    %v519 = vlaneseq
    %v520 = vshrl.u32 %v519, 7
    %v521 = vsub.s32 1, %v520
    %v522 = vrot.slane %v513, %v521
    %v525 = vmul.f32 %v487, %v518
    %v526 = vmul.f32 %v489, %v522
    %529 = vset.pattern.permute.xlu0 0
    %530 = vperm.xlu0 %529, %v525
    %v531 = vpop.permute.xlu0 %530
    %532 = vset.pattern.permute.xlu0 0
    %533 = vperm.xlu0 %532, %v526
    %v534 = vpop.permute.xlu0 %533
    %v535 = vlaneseq
    %v536 = vshrl.u32 %v535, 7
    %v537 = vsub.s32 %v121, %v536
    %v538 = vrot.slane %v531, %v537
    %v539 = vlaneseq
    %v540 = vshrl.u32 %v539, 7
    %v541 = vsub.s32 %v121, %v540
    %v542 = vrot.slane %v534, %v541
    %v543 = vsel %vm506, %v542, %v538
    %545 = vst.msk [vmem:[%s4 + $0x10] sm:$0x3] %vm509, %v543
    %v548 = vmul.f32 %v531, %v32
    %v549 = vmul.f32 %v534, %v33
    %v550 = vsel %vm38, %v548, 0.0
    %v551 = vrot.slane %v550, 4
    %v552 = vadd.f32 %v550, %v551
    %v553 = vrot.slane %v552, 2
    %v554 = vadd.f32 %v552, %v553
    %v555 = vrot.slane %v554, 1
    %v556 = vadd.f32 %v554, %v555
    %v557 = vsel %vm38, %v549, 0.0
    %v558 = vrot.slane %v557, 4
    %v559 = vadd.f32 %v557, %v558
    %v560 = vrot.slane %v559, 2
    %v561 = vadd.f32 %v559, %v560
    %v562 = vrot.slane %v561, 1
    %v563 = vadd.f32 %v561, %v562
    %v564 = vld [vmem:[#allocation3 + $0x80] sm:$0xff]
    %v565 = vld [vmem:[#allocation3 + $0x88] sm:$0xff]
    %v566 = vld [vmem:[#allocation3 + $0x90] sm:$0xff]
    %v567 = vld [vmem:[#allocation3 + $0x98] sm:$0xff]
    %v570 = vsel %vm506, %v563, %v556
    %v573 = vrot.slane %v334, 7
    %v574 = vsel %vm506, %v573, %v329
    %v576 = vsel %vm38, %v570, 0
    %578 = vmatprep.subr.mxu0 0.0
    %579 = vmatpush1.msra.mxu0 %v564
    %580 = vmatprep.subr.mxu0 0.0
    %581 = vmatpush1.msra.mxu0 %v565
    %582 = vmatprep.subr.mxu0 0.0
    %583 = vmatpush1.msra.mxu0 %v566
    %584 = vmatprep.subr.mxu0 0.0
    %585 = vmatpush1.msra.mxu0 %v567
    %586 = vmatprep.subr.mxu0 0.0
    %587 = vmatpush1.msra.mxu0 0.0
    %588 = vmatprep.subr.mxu0 0.0
    %589 = vmatpush1.msra.mxu0 0.0
    %590 = vmatprep.subr.mxu0 0.0
    %591 = vmatpush1.msra.mxu0 0.0
    %592 = vmatprep.subr.mxu0 0.0
    %593 = vmatpush1.msra.mxu0 0.0
    %594 = vmatprep.subr.mxu0 0.0
    %595 = vmatpush1.msra.mxu0 0.0
    %596 = vmatprep.subr.mxu0 0.0
    %597 = vmatpush1.msra.mxu0 0.0
    %598 = vmatprep.subr.mxu0 0.0
    %599 = vmatpush1.msra.mxu0 0.0
    %600 = vmatprep.subr.mxu0 0.0
    %601 = vmatpush1.msra.mxu0 0.0
    %602 = vmatprep.subr.mxu0 0.0
    %603 = vmatpush1.msra.mxu0 0.0
    %604 = vmatprep.subr.mxu0 0.0
    %605 = vmatpush1.msra.mxu0 0.0
    %606 = vmatprep.subr.mxu0 0.0
    %607 = vmatpush1.msra.mxu0 0.0
    %608 = vmatprep.subr.mxu0 0.0
    %609 = vmatpush1.msra.mxu0 0.0
    %610 = vmatprep.subr.mxu0 0.0
    %611 = vmatpush1.msra.mxu0 0.0
    %612 = vmatprep.subr.mxu0 0.0
    %613 = vmatpush1.msra.mxu0 0.0
    %614 = vmatprep.subr.mxu0 0.0
    %615 = vmatpush1.msra.mxu0 0.0
    %616 = vmatprep.subr.mxu0 0.0
    %617 = vmatpush1.msra.mxu0 0.0
    %618 = vmatprep.subr.mxu0 0.0
    %619 = vmatpush1.msra.mxu0 0.0
    %620 = vmatprep.subr.mxu0 0.0
    %621 = vmatpush1.msra.mxu0 0.0
    %622 = vmatprep.subr.mxu0 0.0
    %623 = vmatpush1.msra.mxu0 0.0
    %624 = vmatprep.subr.mxu0 0.0
    %625 = vmatpush1.msra.mxu0 0.0
    %626 = vmatprep.subr.mxu0 0.0
    %627 = vmatpush1.msra.mxu0 0.0
    %628 = vmatprep.subr.mxu0 0.0
    %629 = vmatpush1.msra.mxu0 0.0
    %630 = vmatprep.subr.mxu0 0.0
    %631 = vmatpush1.msra.mxu0 0.0
    %632 = vmatprep.subr.mxu0 0.0
    %633 = vmatpush1.msra.mxu0 0.0
    %634 = vmatprep.subr.mxu0 0.0
    %635 = vmatpush1.msra.mxu0 0.0
    %636 = vmatprep.subr.mxu0 0.0
    %637 = vmatpush1.msra.mxu0 0.0
    %638 = vmatprep.subr.mxu0 0.0
    %639 = vmatpush1.msra.mxu0 0.0
    %640 = vmatprep.subr.mxu0 0.0
    %641 = vmatpush1.msra.mxu0 0.0
    %642 = vmatprep.mubr.f32.mxu0 0.0
    %643 = vmatmul.mubr.f32.gmra.mrb[0].mxu0 %v576
    %v644 = vpop.f32.mrb[0].mxu0
    %v645 = vadd.f32 %v574, %v644
    %v646 = vpop.f32.mrb[0].mxu0
    %647 = vdwg.mxu0
    %v648 = vld [vmem:[#allocation3 + $0xa0] sm:$0xff]
    %v649 = vld [vmem:[#allocation3 + $0xa8] sm:$0xff]
    %v650 = vld [vmem:[#allocation3 + $0xb0] sm:$0xff]
    %v651 = vld [vmem:[#allocation3 + $0xb8] sm:$0xff]
    %v652 = vld [vmem:[#allocation3 + $0x118] sm:$0x1]
    %v653 = vlaneseq
    %v654 = vshrl.u32 %v653, 7
    %v655 = vsub.s32 0, %v654
    %v656 = vrot.slane %v652, %v655
    %v658 = vsel %vm38, %v337, 0
    %660 = vmatprep.subr.mxu0 0.0
    %661 = vmatpush1.msra.mxu0 %v648
    %662 = vmatprep.subr.mxu0 0.0
    %663 = vmatpush1.msra.mxu0 %v649
    %664 = vmatprep.subr.mxu0 0.0
    %665 = vmatpush1.msra.mxu0 %v650
    %666 = vmatprep.subr.mxu0 0.0
    %667 = vmatpush1.msra.mxu0 %v651
    %668 = vmatprep.subr.mxu0 0.0
    %669 = vmatpush1.msra.mxu0 0.0
    %670 = vmatprep.subr.mxu0 0.0
    %671 = vmatpush1.msra.mxu0 0.0
    %672 = vmatprep.subr.mxu0 0.0
    %673 = vmatpush1.msra.mxu0 0.0
    %674 = vmatprep.subr.mxu0 0.0
    %675 = vmatpush1.msra.mxu0 0.0
    %676 = vmatprep.subr.mxu0 0.0
    %677 = vmatpush1.msra.mxu0 0.0
    %678 = vmatprep.subr.mxu0 0.0
    %679 = vmatpush1.msra.mxu0 0.0
    %680 = vmatprep.subr.mxu0 0.0
    %681 = vmatpush1.msra.mxu0 0.0
    %682 = vmatprep.subr.mxu0 0.0
    %683 = vmatpush1.msra.mxu0 0.0
    %684 = vmatprep.subr.mxu0 0.0
    %685 = vmatpush1.msra.mxu0 0.0
    %686 = vmatprep.subr.mxu0 0.0
    %687 = vmatpush1.msra.mxu0 0.0
    %688 = vmatprep.subr.mxu0 0.0
    %689 = vmatpush1.msra.mxu0 0.0
    %690 = vmatprep.subr.mxu0 0.0
    %691 = vmatpush1.msra.mxu0 0.0
    %692 = vmatprep.subr.mxu0 0.0
    %693 = vmatpush1.msra.mxu0 0.0
    %694 = vmatprep.subr.mxu0 0.0
    %695 = vmatpush1.msra.mxu0 0.0
    %696 = vmatprep.subr.mxu0 0.0
    %697 = vmatpush1.msra.mxu0 0.0
    %698 = vmatprep.subr.mxu0 0.0
    %699 = vmatpush1.msra.mxu0 0.0
    %700 = vmatprep.subr.mxu0 0.0
    %701 = vmatpush1.msra.mxu0 0.0
    %702 = vmatprep.subr.mxu0 0.0
    %703 = vmatpush1.msra.mxu0 0.0
    %704 = vmatprep.subr.mxu0 0.0
    %705 = vmatpush1.msra.mxu0 0.0
    %706 = vmatprep.subr.mxu0 0.0
    %707 = vmatpush1.msra.mxu0 0.0
    %708 = vmatprep.subr.mxu0 0.0
    %709 = vmatpush1.msra.mxu0 0.0
    %710 = vmatprep.subr.mxu0 0.0
    %711 = vmatpush1.msra.mxu0 0.0
    %712 = vmatprep.subr.mxu0 0.0
    %713 = vmatpush1.msra.mxu0 0.0
    %714 = vmatprep.subr.mxu0 0.0
    %715 = vmatpush1.msra.mxu0 0.0
    %716 = vmatprep.subr.mxu0 0.0
    %717 = vmatpush1.msra.mxu0 0.0
    %718 = vmatprep.subr.mxu0 0.0
    %719 = vmatpush1.msra.mxu0 0.0
    %720 = vmatprep.subr.mxu0 0.0
    %721 = vmatpush1.msra.mxu0 0.0
    %722 = vmatprep.subr.mxu0 0.0
    %723 = vmatpush1.msra.mxu0 0.0
    %724 = vmatprep.mubr.f32.mxu0 0.0
    %725 = vmatmul.mubr.f32.gmra.mrb[0].mxu0 %v658
    %v726 = vpop.f32.mrb[0].mxu0
    %v727 = vadd.f32 %v656, %v726
    %v728 = vpop.f32.mrb[0].mxu0
    %729 = vdwg.mxu0
    %v730 = vadd.f32 %v645, %v727
    %v731 = vxor.u32 %v730, 2147483648
    %v732 = vmul.f32 %v731, 1.442695
    %v733 = vpow.pop %v732
    %v734 = vadd.f32 %v733, 1.0
    %v735 = vrcp.pop %v734
    %v736 = vmul.f32 1.0, %v735
    %738 = vrot.lane.b32.xlu0 %v727, 64
    %v739 = vpop.permute.xlu0 %738
    %v741 = vmul.f32 %v736, %v739
    %743 = vrot.lane.b32.xlu0 %v741, 64
    %v744 = vpop.permute.xlu0 %743
    %v746 = vadd.f32 %v645, %v744
    %v747 = vtanh.pop %v746
    %v748 = vsub.f32 1.0, %v736
    %750 = vrot.lane.b32.xlu0 %v747, 96
    %v751 = vpop.permute.xlu0 %750
    %v753 = vmul.f32 %v748, %v751
    %754 = vrot.lane.b32.xlu0 %v337, 32
    %v755 = vpop.permute.xlu0 %754
    %v757 = vmul.f32 %v736, %v755
    %v758 = vadd.f32 %v753, %v757
    %v759 = vld [vmem:[#allocation3 + $0xc0] sm:$0xff]
    %v760 = vld [vmem:[#allocation3 + $0xc8] sm:$0xff]
    %v761 = vld [vmem:[#allocation3 + $0xd0] sm:$0xff]
    %v762 = vld [vmem:[#allocation3 + $0xd8] sm:$0xff]
    %v763 = vld [vmem:[#allocation3 + $0x120] sm:$0x1]
    %v764 = vlaneseq
    %v765 = vshrl.u32 %v764, 7
    %v766 = vsub.s32 0, %v765
    %v767 = vrot.slane %v763, %v766
    %769 = vrot.lane.b32.xlu0 %v758, 96
    %v770 = vpop.permute.xlu0 %769
    %v771 = vsel %vm38, %v770, 0
    %773 = vmatprep.subr.mxu0 0.0
    %774 = vmatpush1.msra.mxu0 %v759
    %775 = vmatprep.subr.mxu0 0.0
    %776 = vmatpush1.msra.mxu0 %v760
    %777 = vmatprep.subr.mxu0 0.0
    %778 = vmatpush1.msra.mxu0 %v761
    %779 = vmatprep.subr.mxu0 0.0
    %780 = vmatpush1.msra.mxu0 %v762
    %781 = vmatprep.subr.mxu0 0.0
    %782 = vmatpush1.msra.mxu0 0.0
    %783 = vmatprep.subr.mxu0 0.0
    %784 = vmatpush1.msra.mxu0 0.0
    %785 = vmatprep.subr.mxu0 0.0
    %786 = vmatpush1.msra.mxu0 0.0
    %787 = vmatprep.subr.mxu0 0.0
    %788 = vmatpush1.msra.mxu0 0.0
    %789 = vmatprep.subr.mxu0 0.0
    %790 = vmatpush1.msra.mxu0 0.0
    %791 = vmatprep.subr.mxu0 0.0
    %792 = vmatpush1.msra.mxu0 0.0
    %793 = vmatprep.subr.mxu0 0.0
    %794 = vmatpush1.msra.mxu0 0.0
    %795 = vmatprep.subr.mxu0 0.0
    %796 = vmatpush1.msra.mxu0 0.0
    %797 = vmatprep.subr.mxu0 0.0
    %798 = vmatpush1.msra.mxu0 0.0
    %799 = vmatprep.subr.mxu0 0.0
    %800 = vmatpush1.msra.mxu0 0.0
    %801 = vmatprep.subr.mxu0 0.0
    %802 = vmatpush1.msra.mxu0 0.0
    %803 = vmatprep.subr.mxu0 0.0
    %804 = vmatpush1.msra.mxu0 0.0
    %805 = vmatprep.subr.mxu0 0.0
    %806 = vmatpush1.msra.mxu0 0.0
    %807 = vmatprep.subr.mxu0 0.0
    %808 = vmatpush1.msra.mxu0 0.0
    %809 = vmatprep.subr.mxu0 0.0
    %810 = vmatpush1.msra.mxu0 0.0
    %811 = vmatprep.subr.mxu0 0.0
    %812 = vmatpush1.msra.mxu0 0.0
    %813 = vmatprep.subr.mxu0 0.0
    %814 = vmatpush1.msra.mxu0 0.0
    %815 = vmatprep.subr.mxu0 0.0
    %816 = vmatpush1.msra.mxu0 0.0
    %817 = vmatprep.subr.mxu0 0.0
    %818 = vmatpush1.msra.mxu0 0.0
    %819 = vmatprep.subr.mxu0 0.0
    %820 = vmatpush1.msra.mxu0 0.0
    %821 = vmatprep.subr.mxu0 0.0
    %822 = vmatpush1.msra.mxu0 0.0
    %823 = vmatprep.subr.mxu0 0.0
    %824 = vmatpush1.msra.mxu0 0.0
    %825 = vmatprep.subr.mxu0 0.0
    %826 = vmatpush1.msra.mxu0 0.0
    %827 = vmatprep.subr.mxu0 0.0
    %828 = vmatpush1.msra.mxu0 0.0
    %829 = vmatprep.subr.mxu0 0.0
    %830 = vmatpush1.msra.mxu0 0.0
    %831 = vmatprep.subr.mxu0 0.0
    %832 = vmatpush1.msra.mxu0 0.0
    %833 = vmatprep.subr.mxu0 0.0
    %834 = vmatpush1.msra.mxu0 0.0
    %835 = vmatprep.subr.mxu0 0.0
    %836 = vmatpush1.msra.mxu0 0.0
    %837 = vmatprep.mubr.f32.mxu0 0.0
    %838 = vmatmul.mubr.f32.gmra.mrb[0].mxu0 %v771
    %v839 = vpop.f32.mrb[0].mxu0
    %v840 = vadd.f32 %v767, %v839
    %v841 = vpop.f32.mrb[0].mxu0
    %842 = vdwg.mxu0
    %v843 = vld [vmem:[#allocation3 + $0xe0] sm:$0xff]
    %v844 = vld [vmem:[#allocation3 + $0xe8] sm:$0xff]
    %v845 = vld [vmem:[#allocation3 + $0xf0] sm:$0xff]
    %v846 = vld [vmem:[#allocation3 + $0xf8] sm:$0xff]
    %v847 = vld [vmem:[#allocation3 + $0x128] sm:$0x1]
    %v848 = vlaneseq
    %v849 = vshrl.u32 %v848, 7
    %v850 = vsub.s32 0, %v849
    %v851 = vrot.slane %v847, %v850
    %852 = vmatprep.subr.mxu0 0.0
    %853 = vmatpush1.msra.mxu0 %v843
    %854 = vmatprep.subr.mxu0 0.0
    %855 = vmatpush1.msra.mxu0 %v844
    %856 = vmatprep.subr.mxu0 0.0
    %857 = vmatpush1.msra.mxu0 %v845
    %858 = vmatprep.subr.mxu0 0.0
    %859 = vmatpush1.msra.mxu0 %v846
    %860 = vmatprep.subr.mxu0 0.0
    %861 = vmatpush1.msra.mxu0 0.0
    %862 = vmatprep.subr.mxu0 0.0
    %863 = vmatpush1.msra.mxu0 0.0
    %864 = vmatprep.subr.mxu0 0.0
    %865 = vmatpush1.msra.mxu0 0.0
    %866 = vmatprep.subr.mxu0 0.0
    %867 = vmatpush1.msra.mxu0 0.0
    %868 = vmatprep.subr.mxu0 0.0
    %869 = vmatpush1.msra.mxu0 0.0
    %870 = vmatprep.subr.mxu0 0.0
    %871 = vmatpush1.msra.mxu0 0.0
    %872 = vmatprep.subr.mxu0 0.0
    %873 = vmatpush1.msra.mxu0 0.0
    %874 = vmatprep.subr.mxu0 0.0
    %875 = vmatpush1.msra.mxu0 0.0
    %876 = vmatprep.subr.mxu0 0.0
    %877 = vmatpush1.msra.mxu0 0.0
    %878 = vmatprep.subr.mxu0 0.0
    %879 = vmatpush1.msra.mxu0 0.0
    %880 = vmatprep.subr.mxu0 0.0
    %881 = vmatpush1.msra.mxu0 0.0
    %882 = vmatprep.subr.mxu0 0.0
    %883 = vmatpush1.msra.mxu0 0.0
    %884 = vmatprep.subr.mxu0 0.0
    %885 = vmatpush1.msra.mxu0 0.0
    %886 = vmatprep.subr.mxu0 0.0
    %887 = vmatpush1.msra.mxu0 0.0
    %888 = vmatprep.subr.mxu0 0.0
    %889 = vmatpush1.msra.mxu0 0.0
    %890 = vmatprep.subr.mxu0 0.0
    %891 = vmatpush1.msra.mxu0 0.0
    %892 = vmatprep.subr.mxu0 0.0
    %893 = vmatpush1.msra.mxu0 0.0
    %894 = vmatprep.subr.mxu0 0.0
    %895 = vmatpush1.msra.mxu0 0.0
    %896 = vmatprep.subr.mxu0 0.0
    %897 = vmatpush1.msra.mxu0 0.0
    %898 = vmatprep.subr.mxu0 0.0
    %899 = vmatpush1.msra.mxu0 0.0
    %900 = vmatprep.subr.mxu0 0.0
    %901 = vmatpush1.msra.mxu0 0.0
    %902 = vmatprep.subr.mxu0 0.0
    %903 = vmatpush1.msra.mxu0 0.0
    %904 = vmatprep.subr.mxu0 0.0
    %905 = vmatpush1.msra.mxu0 0.0
    %906 = vmatprep.subr.mxu0 0.0
    %907 = vmatpush1.msra.mxu0 0.0
    %908 = vmatprep.subr.mxu0 0.0
    %909 = vmatpush1.msra.mxu0 0.0
    %910 = vmatprep.subr.mxu0 0.0
    %911 = vmatpush1.msra.mxu0 0.0
    %912 = vmatprep.subr.mxu0 0.0
    %913 = vmatpush1.msra.mxu0 0.0
    %914 = vmatprep.subr.mxu0 0.0
    %915 = vmatpush1.msra.mxu0 0.0
    %916 = vmatprep.mubr.f32.mxu0 0.0
    %917 = vmatmul.mubr.f32.gmra.mrb[0].mxu0 %v345
    %v918 = vpop.f32.mrb[0].mxu0
    %v919 = vadd.f32 %v851, %v918
    %v920 = vpop.f32.mrb[0].mxu0
    %921 = vdwg.mxu0
    %v922 = vadd.f32 %v840, %v919
    %v923 = vxor.u32 %v922, 2147483648
    %v924 = vmul.f32 %v923, 1.442695
    %v925 = vpow.pop %v924
    %v926 = vadd.f32 %v925, 1.0
    %v927 = vrcp.pop %v926
    %v928 = vmul.f32 1.0, %v927
    %930 = vrot.lane.b32.xlu0 %v919, 64
    %v931 = vpop.permute.xlu0 %930
    %v933 = vmul.f32 %v928, %v931
    %935 = vrot.lane.b32.xlu0 %v933, 64
    %v936 = vpop.permute.xlu0 %935
    %v938 = vadd.f32 %v840, %v936
    %v939 = vtanh.pop %v938
    %v940 = vsub.f32 1.0, %v928
    %942 = vrot.lane.b32.xlu0 %v939, 96
    %v943 = vpop.permute.xlu0 %942
    %v945 = vmul.f32 %v940, %v943
    %946 = vrot.lane.b32.xlu0 %v339, 32
    %v947 = vpop.permute.xlu0 %946
    %v949 = vmul.f32 %v928, %v947
    %v950 = vadd.f32 %v945, %v949
    %952 = vrot.lane.b32.xlu0 %v950, 96
    %v953 = vpop.permute.xlu0 %952
    %vm955 = vcmask 253952
    %956 = vst.msk [vmem:[#allocation2] sm:$0x1] %vm955, %v953
    %vm957 = vcmask 254977
    %958 = vst.msk [vmem:[#allocation2 + $0x7] sm:$0x2] %vm957, %v953
    %v959 = vld [vmem:[#allocation3 + $0x20] sm:$0xff]
    %v960 = vld [vmem:[#allocation3 + $0x28] sm:$0xff]
    %v961 = vld [vmem:[#allocation3 + $0x30] sm:$0xff]
    %v962 = vld [vmem:[#allocation3 + $0x38] sm:$0xff]
    %v963 = vsel %vm38, %v953, 0
    %965 = vmatprep.subr.mxu0 0.0
    %966 = vmatpush1.msra.mxu0 %v959
    %967 = vmatprep.subr.mxu0 0.0
    %968 = vmatpush1.msra.mxu0 %v960
    %969 = vmatprep.subr.mxu0 0.0
    %970 = vmatpush1.msra.mxu0 %v961
    %971 = vmatprep.subr.mxu0 0.0
    %972 = vmatpush1.msra.mxu0 %v962
    %973 = vmatprep.subr.mxu0 0.0
    %974 = vmatpush1.msra.mxu0 0.0
    %975 = vmatprep.subr.mxu0 0.0
    %976 = vmatpush1.msra.mxu0 0.0
    %977 = vmatprep.subr.mxu0 0.0
    %978 = vmatpush1.msra.mxu0 0.0
    %979 = vmatprep.subr.mxu0 0.0
    %980 = vmatpush1.msra.mxu0 0.0
    %981 = vmatprep.subr.mxu0 0.0
    %982 = vmatpush1.msra.mxu0 0.0
    %983 = vmatprep.subr.mxu0 0.0
    %984 = vmatpush1.msra.mxu0 0.0
    %985 = vmatprep.subr.mxu0 0.0
    %986 = vmatpush1.msra.mxu0 0.0
    %987 = vmatprep.subr.mxu0 0.0
    %988 = vmatpush1.msra.mxu0 0.0
    %989 = vmatprep.subr.mxu0 0.0
    %990 = vmatpush1.msra.mxu0 0.0
    %991 = vmatprep.subr.mxu0 0.0
    %992 = vmatpush1.msra.mxu0 0.0
    %993 = vmatprep.subr.mxu0 0.0
    %994 = vmatpush1.msra.mxu0 0.0
    %995 = vmatprep.subr.mxu0 0.0
    %996 = vmatpush1.msra.mxu0 0.0
    %997 = vmatprep.subr.mxu0 0.0
    %998 = vmatpush1.msra.mxu0 0.0
    %999 = vmatprep.subr.mxu0 0.0
    %1000 = vmatpush1.msra.mxu0 0.0
    %1001 = vmatprep.subr.mxu0 0.0
    %1002 = vmatpush1.msra.mxu0 0.0
    %1003 = vmatprep.subr.mxu0 0.0
    %1004 = vmatpush1.msra.mxu0 0.0
    %1005 = vmatprep.subr.mxu0 0.0
    %1006 = vmatpush1.msra.mxu0 0.0
    %1007 = vmatprep.subr.mxu0 0.0
    %1008 = vmatpush1.msra.mxu0 0.0
    %1009 = vmatprep.subr.mxu0 0.0
    %1010 = vmatpush1.msra.mxu0 0.0
    %1011 = vmatprep.subr.mxu0 0.0
    %1012 = vmatpush1.msra.mxu0 0.0
    %1013 = vmatprep.subr.mxu0 0.0
    %1014 = vmatpush1.msra.mxu0 0.0
    %1015 = vmatprep.subr.mxu0 0.0
    %1016 = vmatpush1.msra.mxu0 0.0
    %1017 = vmatprep.subr.mxu0 0.0
    %1018 = vmatpush1.msra.mxu0 0.0
    %1019 = vmatprep.subr.mxu0 0.0
    %1020 = vmatpush1.msra.mxu0 0.0
    %1021 = vmatprep.subr.mxu0 0.0
    %1022 = vmatpush1.msra.mxu0 0.0
    %1023 = vmatprep.subr.mxu0 0.0
    %1024 = vmatpush1.msra.mxu0 0.0
    %1025 = vmatprep.subr.mxu0 0.0
    %1026 = vmatpush1.msra.mxu0 0.0
    %1027 = vmatprep.subr.mxu0 0.0
    %1028 = vmatpush1.msra.mxu0 0.0
    %1029 = vmatprep.mubr.f32.mxu0 0.0
    %1030 = vmatmul.mubr.f32.gmra.mrb[0].mxu0 %v963
    %v1031 = vpop.f32.mrb[0].mxu0
    %v1032 = vadd.f32 0.0, %v1031
    %v1033 = vpop.f32.mrb[0].mxu0
    %1034 = vdwg.mxu0
    %v1037 = vunpack.c.l.s4 1966171168
    %v1038 = vunpack.c.0.s8 %v1037
    %v1039 = vlaneseq
    %v1040 = vshrl.u32 %v1039, 7
    %v1041 = vsub.s32 %v1038, %v1040
    %v1042 = vrot.slane %v1032, %v1041
    %v1043 = vcombine.high %v1042, %v1042
    %v1045 = vunpack.c.l.s4 1966171168
    %v1046 = vunpack.c.0.s8 %v1045
    %v1047 = vlaneseq
    %v1048 = vshrl.u32 %v1047, 7
    %v1049 = vsub.s32 %v1046, %v1048
    %v1050 = vrot.slane %v1042, %v1049
    %v1052 = vunpack.c.l.s4 1966171168
    %v1053 = vunpack.c.0.s8 %v1052
    %v1054 = vlaneseq
    %v1055 = vshrl.u32 %v1054, 7
    %v1056 = vsub.s32 %v1053, %v1055
    %v1057 = vrot.slane %v1043, %v1056
    %v1058 = vlaneseq
    %v1059 = vshrl.u32 %v1058, 7
    %v1060 = vsub.s32 0, %v1059
    %v1061 = vrot.slane %v1050, %v1060
    %v1062 = vlaneseq
    %v1063 = vshrl.u32 %v1062, 7
    %v1064 = vsub.s32 0, %v1063
    %v1065 = vrot.slane %v1057, %v1064
    %v1068 = vadd.f32 %v1061, %v112
    %v1069 = vadd.f32 %v1065, %v117
    %v1070 = vtanh.pop %v1068
    %v1071 = vtanh.pop %v1069
    %v1072 = vld [vmem:[#allocation3 + $0x138] sm:$0x1]
    %v1073 = vlaneseq
    %v1074 = vshrl.u32 %v1073, 7
    %v1075 = vsub.s32 0, %v1074
    %v1076 = vrot.slane %v1072, %v1075
    %v1077 = vmul.f32 %v1070, %v1076
    %v1078 = vmul.f32 %v1071, %v1076
    %v1079 = vsel %vm38, %v1077, 0.0
    %1080 = vadd.xlane.f32.xlu0 %v1079
    %v1081 = vpop.xlane.xlu0 %1080
    %v1082 = vsel %vm38, %v1078, 0.0
    %1083 = vadd.xlane.f32.xlu0 %v1082
    %v1084 = vpop.xlane.xlu0 %1083
    %v1085 = vadd.f32 %v1081, %v474
    %v1086 = vadd.f32 %v1084, %v481
    %v1087 = vmul.f32 %v1085, 1.442695
    %v1088 = vpow.pop %v1087
    %v1089 = vmul.f32 %v1086, 1.442695
    %v1090 = vpow.pop %v1089
    %1093 = vset.pattern.permute.xlu0 0
    %1094 = vperm.xlu0 %1093, %v1088
    %v1095 = vpop.permute.xlu0 %1094
    %1096 = vset.pattern.permute.xlu0 0
    %1097 = vperm.xlu0 %1096, %v1090
    %v1098 = vpop.permute.xlu0 %1097
    %v1099 = vlaneseq
    %v1100 = vshrl.u32 %v1099, 7
    %v1101 = vsub.s32 %v121, %v1100
    %v1102 = vrot.slane %v1095, %v1101
    %v1103 = vlaneseq
    %v1104 = vshrl.u32 %v1103, 7
    %v1105 = vsub.s32 %v121, %v1104
    %v1106 = vrot.slane %v1098, %v1105
    %v1107 = vsel %vm506, %v1106, %v1102
    %v1109 = vsel %vm509, %v1107, 0.0
    %1110 = vadd.xlane.f32.xlu0 %v1109
    %v1111 = vpop.xlane.xlu0 %1110
    %v1112 = vrcp.pop %v1111
    %v1114 = vlaneseq
    %v1115 = vshrl.u32 %v1114, 7
    %v1116 = vsub.s32 0, %v1115
    %v1117 = vrot.slane %v1112, %v1116
    %v1118 = vlaneseq
    %v1119 = vshrl.u32 %v1118, 7
    %v1120 = vsub.s32 1, %v1119
    %v1121 = vrot.slane %v1112, %v1120
    %v1124 = vmul.f32 %v1088, %v1117
    %v1125 = vmul.f32 %v1090, %v1121
    %1128 = vset.pattern.permute.xlu0 0
    %1129 = vperm.xlu0 %1128, %v1124
    %v1130 = vpop.permute.xlu0 %1129
    %1131 = vset.pattern.permute.xlu0 0
    %1132 = vperm.xlu0 %1131, %v1125
    %v1133 = vpop.permute.xlu0 %1132
    %v1134 = vlaneseq
    %v1135 = vshrl.u32 %v1134, 7
    %v1136 = vsub.s32 %v121, %v1135
    %v1137 = vrot.slane %v1130, %v1136
    %v1138 = vlaneseq
    %v1139 = vshrl.u32 %v1138, 7
    %v1140 = vsub.s32 %v121, %v1139
    %v1141 = vrot.slane %v1133, %v1140
    %v1142 = vsel %vm506, %v1141, %v1137
    %1144 = vst.msk [vmem:[%s4 + $0x12] sm:$0x3] %vm509, %v1142
    %v1147 = vmul.f32 %v1130, %v32
    %v1148 = vmul.f32 %v1133, %v33
    %v1149 = vsel %vm38, %v1147, 0.0
    %v1150 = vrot.slane %v1149, 4
    %v1151 = vadd.f32 %v1149, %v1150
    %v1152 = vrot.slane %v1151, 2
    %v1153 = vadd.f32 %v1151, %v1152
    %v1154 = vrot.slane %v1153, 1
    %v1155 = vadd.f32 %v1153, %v1154
    %v1156 = vsel %vm38, %v1148, 0.0
    %v1157 = vrot.slane %v1156, 4
    %v1158 = vadd.f32 %v1156, %v1157
    %v1159 = vrot.slane %v1158, 2
    %v1160 = vadd.f32 %v1158, %v1159
    %v1161 = vrot.slane %v1160, 1
    %v1162 = vadd.f32 %v1160, %v1161
    %v1163 = vld [vmem:[#allocation3 + $0x80] sm:$0xff]
    %v1164 = vld [vmem:[#allocation3 + $0x88] sm:$0xff]
    %v1165 = vld [vmem:[#allocation3 + $0x90] sm:$0xff]
    %v1166 = vld [vmem:[#allocation3 + $0x98] sm:$0xff]
    %v1169 = vsel %vm506, %v1162, %v1155
    %v1170 = vrot.slane %v329, 1
    %v1171 = vsel %vm506, %v334, %v1170
    %v1173 = vsel %vm38, %v1169, 0
    %1175 = vmatprep.subr.mxu0 0.0
    %1176 = vmatpush1.msra.mxu0 %v1163
    %1177 = vmatprep.subr.mxu0 0.0
    %1178 = vmatpush1.msra.mxu0 %v1164
    %1179 = vmatprep.subr.mxu0 0.0
    %1180 = vmatpush1.msra.mxu0 %v1165
    %1181 = vmatprep.subr.mxu0 0.0
    %1182 = vmatpush1.msra.mxu0 %v1166
    %1183 = vmatprep.subr.mxu0 0.0
    %1184 = vmatpush1.msra.mxu0 0.0
    %1185 = vmatprep.subr.mxu0 0.0
    %1186 = vmatpush1.msra.mxu0 0.0
    %1187 = vmatprep.subr.mxu0 0.0
    %1188 = vmatpush1.msra.mxu0 0.0
    %1189 = vmatprep.subr.mxu0 0.0
    %1190 = vmatpush1.msra.mxu0 0.0
    %1191 = vmatprep.subr.mxu0 0.0
    %1192 = vmatpush1.msra.mxu0 0.0
    %1193 = vmatprep.subr.mxu0 0.0
    %1194 = vmatpush1.msra.mxu0 0.0
    %1195 = vmatprep.subr.mxu0 0.0
    %1196 = vmatpush1.msra.mxu0 0.0
    %1197 = vmatprep.subr.mxu0 0.0
    %1198 = vmatpush1.msra.mxu0 0.0
    %1199 = vmatprep.subr.mxu0 0.0
    %1200 = vmatpush1.msra.mxu0 0.0
    %1201 = vmatprep.subr.mxu0 0.0
    %1202 = vmatpush1.msra.mxu0 0.0
    %1203 = vmatprep.subr.mxu0 0.0
    %1204 = vmatpush1.msra.mxu0 0.0
    %1205 = vmatprep.subr.mxu0 0.0
    %1206 = vmatpush1.msra.mxu0 0.0
    %1207 = vmatprep.subr.mxu0 0.0
    %1208 = vmatpush1.msra.mxu0 0.0
    %1209 = vmatprep.subr.mxu0 0.0
    %1210 = vmatpush1.msra.mxu0 0.0
    %1211 = vmatprep.subr.mxu0 0.0
    %1212 = vmatpush1.msra.mxu0 0.0
    %1213 = vmatprep.subr.mxu0 0.0
    %1214 = vmatpush1.msra.mxu0 0.0
    %1215 = vmatprep.subr.mxu0 0.0
    %1216 = vmatpush1.msra.mxu0 0.0
    %1217 = vmatprep.subr.mxu0 0.0
    %1218 = vmatpush1.msra.mxu0 0.0
    %1219 = vmatprep.subr.mxu0 0.0
    %1220 = vmatpush1.msra.mxu0 0.0
    %1221 = vmatprep.subr.mxu0 0.0
    %1222 = vmatpush1.msra.mxu0 0.0
    %1223 = vmatprep.subr.mxu0 0.0
    %1224 = vmatpush1.msra.mxu0 0.0
    %1225 = vmatprep.subr.mxu0 0.0
    %1226 = vmatpush1.msra.mxu0 0.0
    %1227 = vmatprep.subr.mxu0 0.0
    %1228 = vmatpush1.msra.mxu0 0.0
    %1229 = vmatprep.subr.mxu0 0.0
    %1230 = vmatpush1.msra.mxu0 0.0
    %1231 = vmatprep.subr.mxu0 0.0
    %1232 = vmatpush1.msra.mxu0 0.0
    %1233 = vmatprep.subr.mxu0 0.0
    %1234 = vmatpush1.msra.mxu0 0.0
    %1235 = vmatprep.subr.mxu0 0.0
    %1236 = vmatpush1.msra.mxu0 0.0
    %1237 = vmatprep.subr.mxu0 0.0
    %1238 = vmatpush1.msra.mxu0 0.0
    %1239 = vmatprep.mubr.f32.mxu0 0.0
    %1240 = vmatmul.mubr.f32.gmra.mrb[0].mxu0 %v1173
    %v1241 = vpop.f32.mrb[0].mxu0
    %v1242 = vadd.f32 %v1171, %v1241
    %v1243 = vpop.f32.mrb[0].mxu0
    %1244 = vdwg.mxu0
    %v1245 = vld [vmem:[#allocation3 + $0xa0] sm:$0xff]
    %v1246 = vld [vmem:[#allocation3 + $0xa8] sm:$0xff]
    %v1247 = vld [vmem:[#allocation3 + $0xb0] sm:$0xff]
    %v1248 = vld [vmem:[#allocation3 + $0xb8] sm:$0xff]
    %v1249 = vld [vmem:[#allocation3 + $0x118] sm:$0x1]
    %v1250 = vlaneseq
    %v1251 = vshrl.u32 %v1250, 7
    %v1252 = vsub.s32 0, %v1251
    %v1253 = vrot.slane %v1249, %v1252
    %1254 = vmatprep.subr.mxu0 0.0
    %1255 = vmatpush1.msra.mxu0 %v1245
    %1256 = vmatprep.subr.mxu0 0.0
    %1257 = vmatpush1.msra.mxu0 %v1246
    %1258 = vmatprep.subr.mxu0 0.0
    %1259 = vmatpush1.msra.mxu0 %v1247
    %1260 = vmatprep.subr.mxu0 0.0
    %1261 = vmatpush1.msra.mxu0 %v1248
    %1262 = vmatprep.subr.mxu0 0.0
    %1263 = vmatpush1.msra.mxu0 0.0
    %1264 = vmatprep.subr.mxu0 0.0
    %1265 = vmatpush1.msra.mxu0 0.0
    %1266 = vmatprep.subr.mxu0 0.0
    %1267 = vmatpush1.msra.mxu0 0.0
    %1268 = vmatprep.subr.mxu0 0.0
    %1269 = vmatpush1.msra.mxu0 0.0
    %1270 = vmatprep.subr.mxu0 0.0
    %1271 = vmatpush1.msra.mxu0 0.0
    %1272 = vmatprep.subr.mxu0 0.0
    %1273 = vmatpush1.msra.mxu0 0.0
    %1274 = vmatprep.subr.mxu0 0.0
    %1275 = vmatpush1.msra.mxu0 0.0
    %1276 = vmatprep.subr.mxu0 0.0
    %1277 = vmatpush1.msra.mxu0 0.0
    %1278 = vmatprep.subr.mxu0 0.0
    %1279 = vmatpush1.msra.mxu0 0.0
    %1280 = vmatprep.subr.mxu0 0.0
    %1281 = vmatpush1.msra.mxu0 0.0
    %1282 = vmatprep.subr.mxu0 0.0
    %1283 = vmatpush1.msra.mxu0 0.0
    %1284 = vmatprep.subr.mxu0 0.0
    %1285 = vmatpush1.msra.mxu0 0.0
    %1286 = vmatprep.subr.mxu0 0.0
    %1287 = vmatpush1.msra.mxu0 0.0
    %1288 = vmatprep.subr.mxu0 0.0
    %1289 = vmatpush1.msra.mxu0 0.0
    %1290 = vmatprep.subr.mxu0 0.0
    %1291 = vmatpush1.msra.mxu0 0.0
    %1292 = vmatprep.subr.mxu0 0.0
    %1293 = vmatpush1.msra.mxu0 0.0
    %1294 = vmatprep.subr.mxu0 0.0
    %1295 = vmatpush1.msra.mxu0 0.0
    %1296 = vmatprep.subr.mxu0 0.0
    %1297 = vmatpush1.msra.mxu0 0.0
    %1298 = vmatprep.subr.mxu0 0.0
    %1299 = vmatpush1.msra.mxu0 0.0
    %1300 = vmatprep.subr.mxu0 0.0
    %1301 = vmatpush1.msra.mxu0 0.0
    %1302 = vmatprep.subr.mxu0 0.0
    %1303 = vmatpush1.msra.mxu0 0.0
    %1304 = vmatprep.subr.mxu0 0.0
    %1305 = vmatpush1.msra.mxu0 0.0
    %1306 = vmatprep.subr.mxu0 0.0
    %1307 = vmatpush1.msra.mxu0 0.0
    %1308 = vmatprep.subr.mxu0 0.0
    %1309 = vmatpush1.msra.mxu0 0.0
    %1310 = vmatprep.subr.mxu0 0.0
    %1311 = vmatpush1.msra.mxu0 0.0
    %1312 = vmatprep.subr.mxu0 0.0
    %1313 = vmatpush1.msra.mxu0 0.0
    %1314 = vmatprep.subr.mxu0 0.0
    %1315 = vmatpush1.msra.mxu0 0.0
    %1316 = vmatprep.subr.mxu0 0.0
    %1317 = vmatpush1.msra.mxu0 0.0
    %1318 = vmatprep.mubr.f32.mxu0 0.0
    %1319 = vmatmul.mubr.f32.gmra.mrb[0].mxu0 %v771
    %v1320 = vpop.f32.mrb[0].mxu0
    %v1321 = vadd.f32 %v1253, %v1320
    %v1322 = vpop.f32.mrb[0].mxu0
    %1323 = vdwg.mxu0
    %v1324 = vadd.f32 %v1242, %v1321
    %v1325 = vxor.u32 %v1324, 2147483648
    %v1326 = vmul.f32 %v1325, 1.442695
    %v1327 = vpow.pop %v1326
    %v1328 = vadd.f32 %v1327, 1.0
    %v1329 = vrcp.pop %v1328
    %v1330 = vmul.f32 1.0, %v1329
    %1332 = vrot.lane.b32.xlu0 %v1321, 64
    %v1333 = vpop.permute.xlu0 %1332
    %v1335 = vmul.f32 %v1330, %v1333
    %1337 = vrot.lane.b32.xlu0 %v1335, 64
    %v1338 = vpop.permute.xlu0 %1337
    %v1340 = vadd.f32 %v1242, %v1338
    %v1341 = vtanh.pop %v1340
    %v1342 = vsub.f32 1.0, %v1330
    %1344 = vrot.lane.b32.xlu0 %v1341, 96
    %v1345 = vpop.permute.xlu0 %1344
    %v1347 = vmul.f32 %v1342, %v1345
    %v1348 = vmul.f32 %v1330, %v758
    %v1349 = vadd.f32 %v1347, %v1348
    %v1350 = vld [vmem:[#allocation3 + $0xc0] sm:$0xff]
    %v1351 = vld [vmem:[#allocation3 + $0xc8] sm:$0xff]
    %v1352 = vld [vmem:[#allocation3 + $0xd0] sm:$0xff]
    %v1353 = vld [vmem:[#allocation3 + $0xd8] sm:$0xff]
    %v1354 = vld [vmem:[#allocation3 + $0x120] sm:$0x1]
    %v1355 = vlaneseq
    %v1356 = vshrl.u32 %v1355, 7
    %v1357 = vsub.s32 0, %v1356
    %v1358 = vrot.slane %v1354, %v1357
    %1360 = vrot.lane.b32.xlu0 %v1349, 96
    %v1361 = vpop.permute.xlu0 %1360
    %v1362 = vsel %vm38, %v1361, 0
    %1364 = vmatprep.subr.mxu0 0.0
    %1365 = vmatpush1.msra.mxu0 %v1350
    %1366 = vmatprep.subr.mxu0 0.0
    %1367 = vmatpush1.msra.mxu0 %v1351
    %1368 = vmatprep.subr.mxu0 0.0
    %1369 = vmatpush1.msra.mxu0 %v1352
    %1370 = vmatprep.subr.mxu0 0.0
    %1371 = vmatpush1.msra.mxu0 %v1353
    %1372 = vmatprep.subr.mxu0 0.0
    %1373 = vmatpush1.msra.mxu0 0.0
    %1374 = vmatprep.subr.mxu0 0.0
    %1375 = vmatpush1.msra.mxu0 0.0
    %1376 = vmatprep.subr.mxu0 0.0
    %1377 = vmatpush1.msra.mxu0 0.0
    %1378 = vmatprep.subr.mxu0 0.0
    %1379 = vmatpush1.msra.mxu0 0.0
    %1380 = vmatprep.subr.mxu0 0.0
    %1381 = vmatpush1.msra.mxu0 0.0
    %1382 = vmatprep.subr.mxu0 0.0
    %1383 = vmatpush1.msra.mxu0 0.0
    %1384 = vmatprep.subr.mxu0 0.0
    %1385 = vmatpush1.msra.mxu0 0.0
    %1386 = vmatprep.subr.mxu0 0.0
    %1387 = vmatpush1.msra.mxu0 0.0
    %1388 = vmatprep.subr.mxu0 0.0
    %1389 = vmatpush1.msra.mxu0 0.0
    %1390 = vmatprep.subr.mxu0 0.0
    %1391 = vmatpush1.msra.mxu0 0.0
    %1392 = vmatprep.subr.mxu0 0.0
    %1393 = vmatpush1.msra.mxu0 0.0
    %1394 = vmatprep.subr.mxu0 0.0
    %1395 = vmatpush1.msra.mxu0 0.0
    %1396 = vmatprep.subr.mxu0 0.0
    %1397 = vmatpush1.msra.mxu0 0.0
    %1398 = vmatprep.subr.mxu0 0.0
    %1399 = vmatpush1.msra.mxu0 0.0
    %1400 = vmatprep.subr.mxu0 0.0
    %1401 = vmatpush1.msra.mxu0 0.0
    %1402 = vmatprep.subr.mxu0 0.0
    %1403 = vmatpush1.msra.mxu0 0.0
    %1404 = vmatprep.subr.mxu0 0.0
    %1405 = vmatpush1.msra.mxu0 0.0
    %1406 = vmatprep.subr.mxu0 0.0
    %1407 = vmatpush1.msra.mxu0 0.0
    %1408 = vmatprep.subr.mxu0 0.0
    %1409 = vmatpush1.msra.mxu0 0.0
    %1410 = vmatprep.subr.mxu0 0.0
    %1411 = vmatpush1.msra.mxu0 0.0
    %1412 = vmatprep.subr.mxu0 0.0
    %1413 = vmatpush1.msra.mxu0 0.0
    %1414 = vmatprep.subr.mxu0 0.0
    %1415 = vmatpush1.msra.mxu0 0.0
    %1416 = vmatprep.subr.mxu0 0.0
    %1417 = vmatpush1.msra.mxu0 0.0
    %1418 = vmatprep.subr.mxu0 0.0
    %1419 = vmatpush1.msra.mxu0 0.0
    %1420 = vmatprep.subr.mxu0 0.0
    %1421 = vmatpush1.msra.mxu0 0.0
    %1422 = vmatprep.subr.mxu0 0.0
    %1423 = vmatpush1.msra.mxu0 0.0
    %1424 = vmatprep.subr.mxu0 0.0
    %1425 = vmatpush1.msra.mxu0 0.0
    %1426 = vmatprep.subr.mxu0 0.0
    %1427 = vmatpush1.msra.mxu0 0.0
    %1428 = vmatprep.mubr.f32.mxu0 0.0
    %1429 = vmatmul.mubr.f32.gmra.mrb[0].mxu0 %v1362
    %v1430 = vpop.f32.mrb[0].mxu0
    %v1431 = vadd.f32 %v1358, %v1430
    %v1432 = vpop.f32.mrb[0].mxu0
    %1433 = vdwg.mxu0
    %v1434 = vld [vmem:[#allocation3 + $0xe0] sm:$0xff]
    %v1435 = vld [vmem:[#allocation3 + $0xe8] sm:$0xff]
    %v1436 = vld [vmem:[#allocation3 + $0xf0] sm:$0xff]
    %v1437 = vld [vmem:[#allocation3 + $0xf8] sm:$0xff]
    %v1438 = vld [vmem:[#allocation3 + $0x128] sm:$0x1]
    %v1439 = vlaneseq
    %v1440 = vshrl.u32 %v1439, 7
    %v1441 = vsub.s32 0, %v1440
    %v1442 = vrot.slane %v1438, %v1441
    %1443 = vmatprep.subr.mxu0 0.0
    %1444 = vmatpush1.msra.mxu0 %v1434
    %1445 = vmatprep.subr.mxu0 0.0
    %1446 = vmatpush1.msra.mxu0 %v1435
    %1447 = vmatprep.subr.mxu0 0.0
    %1448 = vmatpush1.msra.mxu0 %v1436
    %1449 = vmatprep.subr.mxu0 0.0
    %1450 = vmatpush1.msra.mxu0 %v1437
    %1451 = vmatprep.subr.mxu0 0.0
    %1452 = vmatpush1.msra.mxu0 0.0
    %1453 = vmatprep.subr.mxu0 0.0
    %1454 = vmatpush1.msra.mxu0 0.0
    %1455 = vmatprep.subr.mxu0 0.0
    %1456 = vmatpush1.msra.mxu0 0.0
    %1457 = vmatprep.subr.mxu0 0.0
    %1458 = vmatpush1.msra.mxu0 0.0
    %1459 = vmatprep.subr.mxu0 0.0
    %1460 = vmatpush1.msra.mxu0 0.0
    %1461 = vmatprep.subr.mxu0 0.0
    %1462 = vmatpush1.msra.mxu0 0.0
    %1463 = vmatprep.subr.mxu0 0.0
    %1464 = vmatpush1.msra.mxu0 0.0
    %1465 = vmatprep.subr.mxu0 0.0
    %1466 = vmatpush1.msra.mxu0 0.0
    %1467 = vmatprep.subr.mxu0 0.0
    %1468 = vmatpush1.msra.mxu0 0.0
    %1469 = vmatprep.subr.mxu0 0.0
    %1470 = vmatpush1.msra.mxu0 0.0
    %1471 = vmatprep.subr.mxu0 0.0
    %1472 = vmatpush1.msra.mxu0 0.0
    %1473 = vmatprep.subr.mxu0 0.0
    %1474 = vmatpush1.msra.mxu0 0.0
    %1475 = vmatprep.subr.mxu0 0.0
    %1476 = vmatpush1.msra.mxu0 0.0
    %1477 = vmatprep.subr.mxu0 0.0
    %1478 = vmatpush1.msra.mxu0 0.0
    %1479 = vmatprep.subr.mxu0 0.0
    %1480 = vmatpush1.msra.mxu0 0.0
    %1481 = vmatprep.subr.mxu0 0.0
    %1482 = vmatpush1.msra.mxu0 0.0
    %1483 = vmatprep.subr.mxu0 0.0
    %1484 = vmatpush1.msra.mxu0 0.0
    %1485 = vmatprep.subr.mxu0 0.0
    %1486 = vmatpush1.msra.mxu0 0.0
    %1487 = vmatprep.subr.mxu0 0.0
    %1488 = vmatpush1.msra.mxu0 0.0
    %1489 = vmatprep.subr.mxu0 0.0
    %1490 = vmatpush1.msra.mxu0 0.0
    %1491 = vmatprep.subr.mxu0 0.0
    %1492 = vmatpush1.msra.mxu0 0.0
    %1493 = vmatprep.subr.mxu0 0.0
    %1494 = vmatpush1.msra.mxu0 0.0
    %1495 = vmatprep.subr.mxu0 0.0
    %1496 = vmatpush1.msra.mxu0 0.0
    %1497 = vmatprep.subr.mxu0 0.0
    %1498 = vmatpush1.msra.mxu0 0.0
    %1499 = vmatprep.subr.mxu0 0.0
    %1500 = vmatpush1.msra.mxu0 0.0
    %1501 = vmatprep.subr.mxu0 0.0
    %1502 = vmatpush1.msra.mxu0 0.0
    %1503 = vmatprep.subr.mxu0 0.0
    %1504 = vmatpush1.msra.mxu0 0.0
    %1505 = vmatprep.subr.mxu0 0.0
    %1506 = vmatpush1.msra.mxu0 0.0
    %1507 = vmatprep.mubr.f32.mxu0 0.0
    %1508 = vmatmul.mubr.f32.gmra.mrb[0].mxu0 %v963
    %v1509 = vpop.f32.mrb[0].mxu0
    %v1510 = vadd.f32 %v1442, %v1509
    %v1511 = vpop.f32.mrb[0].mxu0
    %1512 = vdwg.mxu0
    %v1513 = vadd.f32 %v1431, %v1510
    %v1514 = vxor.u32 %v1513, 2147483648
    %v1515 = vmul.f32 %v1514, 1.442695
    %v1516 = vpow.pop %v1515
    %v1517 = vadd.f32 %v1516, 1.0
    %v1518 = vrcp.pop %v1517
    %v1519 = vmul.f32 1.0, %v1518
    %1521 = vrot.lane.b32.xlu0 %v1510, 64
    %v1522 = vpop.permute.xlu0 %1521
    %v1524 = vmul.f32 %v1519, %v1522
    %1526 = vrot.lane.b32.xlu0 %v1524, 64
    %v1527 = vpop.permute.xlu0 %1526
    %v1529 = vadd.f32 %v1431, %v1527
    %v1530 = vtanh.pop %v1529
    %v1531 = vsub.f32 1.0, %v1519
    %1533 = vrot.lane.b32.xlu0 %v1530, 96
    %v1534 = vpop.permute.xlu0 %1533
    %v1536 = vmul.f32 %v1531, %v1534
    %v1537 = vmul.f32 %v1519, %v950
    %v1538 = vadd.f32 %v1536, %v1537
    %1540 = vrot.lane.b32.xlu0 %v1538, 96
    %v1541 = vpop.permute.xlu0 %1540
    %1543 = vst.msk [vmem:[#allocation2 + $0x1] sm:$0x1] %vm955, %v1541
    %1544 = vst.msk [vmem:[#allocation2 + $0x8] sm:$0x2] %vm957, %v1541
    %v1545 = vld [vmem:[#allocation3 + $0x20] sm:$0xff]
    %v1546 = vld [vmem:[#allocation3 + $0x28] sm:$0xff]
    %v1547 = vld [vmem:[#allocation3 + $0x30] sm:$0xff]
    %v1548 = vld [vmem:[#allocation3 + $0x38] sm:$0xff]
    %v1549 = vsel %vm38, %v1541, 0
    %1551 = vmatprep.subr.mxu0 0.0
    %1552 = vmatpush1.msra.mxu0 %v1545
    %1553 = vmatprep.subr.mxu0 0.0
    %1554 = vmatpush1.msra.mxu0 %v1546
    %1555 = vmatprep.subr.mxu0 0.0
    %1556 = vmatpush1.msra.mxu0 %v1547
    %1557 = vmatprep.subr.mxu0 0.0
    %1558 = vmatpush1.msra.mxu0 %v1548
    %1559 = vmatprep.subr.mxu0 0.0
    %1560 = vmatpush1.msra.mxu0 0.0
    %1561 = vmatprep.subr.mxu0 0.0
    %1562 = vmatpush1.msra.mxu0 0.0
    %1563 = vmatprep.subr.mxu0 0.0
    %1564 = vmatpush1.msra.mxu0 0.0
    %1565 = vmatprep.subr.mxu0 0.0
    %1566 = vmatpush1.msra.mxu0 0.0
    %1567 = vmatprep.subr.mxu0 0.0
    %1568 = vmatpush1.msra.mxu0 0.0
    %1569 = vmatprep.subr.mxu0 0.0
    %1570 = vmatpush1.msra.mxu0 0.0
    %1571 = vmatprep.subr.mxu0 0.0
    %1572 = vmatpush1.msra.mxu0 0.0
    %1573 = vmatprep.subr.mxu0 0.0
    %1574 = vmatpush1.msra.mxu0 0.0
    %1575 = vmatprep.subr.mxu0 0.0
    %1576 = vmatpush1.msra.mxu0 0.0
    %1577 = vmatprep.subr.mxu0 0.0
    %1578 = vmatpush1.msra.mxu0 0.0
    %1579 = vmatprep.subr.mxu0 0.0
    %1580 = vmatpush1.msra.mxu0 0.0
    %1581 = vmatprep.subr.mxu0 0.0
    %1582 = vmatpush1.msra.mxu0 0.0
    %1583 = vmatprep.subr.mxu0 0.0
    %1584 = vmatpush1.msra.mxu0 0.0
    %1585 = vmatprep.subr.mxu0 0.0
    %1586 = vmatpush1.msra.mxu0 0.0
    %1587 = vmatprep.subr.mxu0 0.0
    %1588 = vmatpush1.msra.mxu0 0.0
    %1589 = vmatprep.subr.mxu0 0.0
    %1590 = vmatpush1.msra.mxu0 0.0
    %1591 = vmatprep.subr.mxu0 0.0
    %1592 = vmatpush1.msra.mxu0 0.0
    %1593 = vmatprep.subr.mxu0 0.0
    %1594 = vmatpush1.msra.mxu0 0.0
    %1595 = vmatprep.subr.mxu0 0.0
    %1596 = vmatpush1.msra.mxu0 0.0
    %1597 = vmatprep.subr.mxu0 0.0
    %1598 = vmatpush1.msra.mxu0 0.0
    %1599 = vmatprep.subr.mxu0 0.0
    %1600 = vmatpush1.msra.mxu0 0.0
    %1601 = vmatprep.subr.mxu0 0.0
    %1602 = vmatpush1.msra.mxu0 0.0
    %1603 = vmatprep.subr.mxu0 0.0
    %1604 = vmatpush1.msra.mxu0 0.0
    %1605 = vmatprep.subr.mxu0 0.0
    %1606 = vmatpush1.msra.mxu0 0.0
    %1607 = vmatprep.subr.mxu0 0.0
    %1608 = vmatpush1.msra.mxu0 0.0
    %1609 = vmatprep.subr.mxu0 0.0
    %1610 = vmatpush1.msra.mxu0 0.0
    %1611 = vmatprep.subr.mxu0 0.0
    %1612 = vmatpush1.msra.mxu0 0.0
    %1613 = vmatprep.subr.mxu0 0.0
    %1614 = vmatpush1.msra.mxu0 0.0
    %1615 = vmatprep.mubr.f32.mxu0 0.0
    %1616 = vmatmul.mubr.f32.gmra.mrb[0].mxu0 %v1549
    %v1617 = vpop.f32.mrb[0].mxu0
    %v1618 = vadd.f32 0.0, %v1617
    %v1619 = vpop.f32.mrb[0].mxu0
    %1620 = vdwg.mxu0
    %v1623 = vunpack.c.l.s4 1966171168
    %v1624 = vunpack.c.0.s8 %v1623
    %v1625 = vlaneseq
    %v1626 = vshrl.u32 %v1625, 7
    %v1627 = vsub.s32 %v1624, %v1626
    %v1628 = vrot.slane %v1618, %v1627
    %v1629 = vcombine.high %v1628, %v1628
    %v1631 = vunpack.c.l.s4 1966171168
    %v1632 = vunpack.c.0.s8 %v1631
    %v1633 = vlaneseq
    %v1634 = vshrl.u32 %v1633, 7
    %v1635 = vsub.s32 %v1632, %v1634
    %v1636 = vrot.slane %v1628, %v1635
    %v1638 = vunpack.c.l.s4 1966171168
    %v1639 = vunpack.c.0.s8 %v1638
    %v1640 = vlaneseq
    %v1641 = vshrl.u32 %v1640, 7
    %v1642 = vsub.s32 %v1639, %v1641
    %v1643 = vrot.slane %v1629, %v1642
    %v1644 = vlaneseq
    %v1645 = vshrl.u32 %v1644, 7
    %v1646 = vsub.s32 0, %v1645
    %v1647 = vrot.slane %v1636, %v1646
    %v1648 = vlaneseq
    %v1649 = vshrl.u32 %v1648, 7
    %v1650 = vsub.s32 0, %v1649
    %v1651 = vrot.slane %v1643, %v1650
    %v1654 = vadd.f32 %v1647, %v112
    %v1655 = vadd.f32 %v1651, %v117
    %v1656 = vtanh.pop %v1654
    %v1657 = vtanh.pop %v1655
    %v1658 = vld [vmem:[#allocation3 + $0x138] sm:$0x1]
    %v1659 = vlaneseq
    %v1660 = vshrl.u32 %v1659, 7
    %v1661 = vsub.s32 0, %v1660
    %v1662 = vrot.slane %v1658, %v1661
    %v1663 = vmul.f32 %v1656, %v1662
    %v1664 = vmul.f32 %v1657, %v1662
    %v1665 = vsel %vm38, %v1663, 0.0
    %1666 = vadd.xlane.f32.xlu0 %v1665
    %v1667 = vpop.xlane.xlu0 %1666
    %v1668 = vsel %vm38, %v1664, 0.0
    %1669 = vadd.xlane.f32.xlu0 %v1668
    %v1670 = vpop.xlane.xlu0 %1669
    %v1671 = vadd.f32 %v1667, %v474
    %v1672 = vadd.f32 %v1670, %v481
    %v1673 = vmul.f32 %v1671, 1.442695
    %v1674 = vpow.pop %v1673
    %v1675 = vmul.f32 %v1672, 1.442695
    %v1676 = vpow.pop %v1675
    %1679 = vset.pattern.permute.xlu0 0
    %1680 = vperm.xlu0 %1679, %v1674
    %v1681 = vpop.permute.xlu0 %1680
    %1682 = vset.pattern.permute.xlu0 0
    %1683 = vperm.xlu0 %1682, %v1676
    %v1684 = vpop.permute.xlu0 %1683
    %v1685 = vlaneseq
    %v1686 = vshrl.u32 %v1685, 7
    %v1687 = vsub.s32 %v121, %v1686
    %v1688 = vrot.slane %v1681, %v1687
    %v1689 = vlaneseq
    %v1690 = vshrl.u32 %v1689, 7
    %v1691 = vsub.s32 %v121, %v1690
    %v1692 = vrot.slane %v1684, %v1691
    %v1693 = vsel %vm506, %v1692, %v1688
    %v1695 = vsel %vm509, %v1693, 0.0
    %1696 = vadd.xlane.f32.xlu0 %v1695
    %v1697 = vpop.xlane.xlu0 %1696
    %v1698 = vrcp.pop %v1697
    %v1700 = vlaneseq
    %v1701 = vshrl.u32 %v1700, 7
    %v1702 = vsub.s32 0, %v1701
    %v1703 = vrot.slane %v1698, %v1702
    %v1704 = vlaneseq
    %v1705 = vshrl.u32 %v1704, 7
    %v1706 = vsub.s32 1, %v1705
    %v1707 = vrot.slane %v1698, %v1706
    %v1710 = vmul.f32 %v1674, %v1703
    %v1711 = vmul.f32 %v1676, %v1707
    %1714 = vset.pattern.permute.xlu0 0
    %1715 = vperm.xlu0 %1714, %v1710
    %v1716 = vpop.permute.xlu0 %1715
    %1717 = vset.pattern.permute.xlu0 0
    %1718 = vperm.xlu0 %1717, %v1711
    %v1719 = vpop.permute.xlu0 %1718
    %v1720 = vlaneseq
    %v1721 = vshrl.u32 %v1720, 7
    %v1722 = vsub.s32 %v121, %v1721
    %v1723 = vrot.slane %v1716, %v1722
    %v1724 = vlaneseq
    %v1725 = vshrl.u32 %v1724, 7
    %v1726 = vsub.s32 %v121, %v1725
    %v1727 = vrot.slane %v1719, %v1726
    %v1728 = vsel %vm506, %v1727, %v1723
    %1730 = vst.msk [vmem:[%s4 + $0x14] sm:$0x3] %vm509, %v1728
    %v1733 = vmul.f32 %v1716, %v32
    %v1734 = vmul.f32 %v1719, %v33
    %v1735 = vsel %vm38, %v1733, 0.0
    %v1736 = vrot.slane %v1735, 4
    %v1737 = vadd.f32 %v1735, %v1736
    %v1738 = vrot.slane %v1737, 2
    %v1739 = vadd.f32 %v1737, %v1738
    %v1740 = vrot.slane %v1739, 1
    %v1741 = vadd.f32 %v1739, %v1740
    %v1742 = vsel %vm38, %v1734, 0.0
    %v1743 = vrot.slane %v1742, 4
    %v1744 = vadd.f32 %v1742, %v1743
    %v1745 = vrot.slane %v1744, 2
    %v1746 = vadd.f32 %v1744, %v1745
    %v1747 = vrot.slane %v1746, 1
    %v1748 = vadd.f32 %v1746, %v1747
    %v1749 = vld [vmem:[#allocation3 + $0x80] sm:$0xff]
    %v1750 = vld [vmem:[#allocation3 + $0x88] sm:$0xff]
    %v1751 = vld [vmem:[#allocation3 + $0x90] sm:$0xff]
    %v1752 = vld [vmem:[#allocation3 + $0x98] sm:$0xff]
    %v1755 = vsel %vm506, %v1748, %v1741
    %v1756 = vrot.slane %v329, 2
    %v1757 = vrot.slane %v334, 1
    %v1758 = vsel %vm506, %v1757, %v1756
    %v1760 = vsel %vm38, %v1755, 0
    %1762 = vmatprep.subr.mxu0 0.0
    %1763 = vmatpush1.msra.mxu0 %v1749
    %1764 = vmatprep.subr.mxu0 0.0
    %1765 = vmatpush1.msra.mxu0 %v1750
    %1766 = vmatprep.subr.mxu0 0.0
    %1767 = vmatpush1.msra.mxu0 %v1751
    %1768 = vmatprep.subr.mxu0 0.0
    %1769 = vmatpush1.msra.mxu0 %v1752
    %1770 = vmatprep.subr.mxu0 0.0
    %1771 = vmatpush1.msra.mxu0 0.0
    %1772 = vmatprep.subr.mxu0 0.0
    %1773 = vmatpush1.msra.mxu0 0.0
    %1774 = vmatprep.subr.mxu0 0.0
    %1775 = vmatpush1.msra.mxu0 0.0
    %1776 = vmatprep.subr.mxu0 0.0
    %1777 = vmatpush1.msra.mxu0 0.0
    %1778 = vmatprep.subr.mxu0 0.0
    %1779 = vmatpush1.msra.mxu0 0.0
    %1780 = vmatprep.subr.mxu0 0.0
    %1781 = vmatpush1.msra.mxu0 0.0
    %1782 = vmatprep.subr.mxu0 0.0
    %1783 = vmatpush1.msra.mxu0 0.0
    %1784 = vmatprep.subr.mxu0 0.0
    %1785 = vmatpush1.msra.mxu0 0.0
    %1786 = vmatprep.subr.mxu0 0.0
    %1787 = vmatpush1.msra.mxu0 0.0
    %1788 = vmatprep.subr.mxu0 0.0
    %1789 = vmatpush1.msra.mxu0 0.0
    %1790 = vmatprep.subr.mxu0 0.0
    %1791 = vmatpush1.msra.mxu0 0.0
    %1792 = vmatprep.subr.mxu0 0.0
    %1793 = vmatpush1.msra.mxu0 0.0
    %1794 = vmatprep.subr.mxu0 0.0
    %1795 = vmatpush1.msra.mxu0 0.0
    %1796 = vmatprep.subr.mxu0 0.0
    %1797 = vmatpush1.msra.mxu0 0.0
    %1798 = vmatprep.subr.mxu0 0.0
    %1799 = vmatpush1.msra.mxu0 0.0
    %1800 = vmatprep.subr.mxu0 0.0
    %1801 = vmatpush1.msra.mxu0 0.0
    %1802 = vmatprep.subr.mxu0 0.0
    %1803 = vmatpush1.msra.mxu0 0.0
    %1804 = vmatprep.subr.mxu0 0.0
    %1805 = vmatpush1.msra.mxu0 0.0
    %1806 = vmatprep.subr.mxu0 0.0
    %1807 = vmatpush1.msra.mxu0 0.0
    %1808 = vmatprep.subr.mxu0 0.0
    %1809 = vmatpush1.msra.mxu0 0.0
    %1810 = vmatprep.subr.mxu0 0.0
    %1811 = vmatpush1.msra.mxu0 0.0
    %1812 = vmatprep.subr.mxu0 0.0
    %1813 = vmatpush1.msra.mxu0 0.0
    %1814 = vmatprep.subr.mxu0 0.0
    %1815 = vmatpush1.msra.mxu0 0.0
    %1816 = vmatprep.subr.mxu0 0.0
    %1817 = vmatpush1.msra.mxu0 0.0
    %1818 = vmatprep.subr.mxu0 0.0
    %1819 = vmatpush1.msra.mxu0 0.0
    %1820 = vmatprep.subr.mxu0 0.0
    %1821 = vmatpush1.msra.mxu0 0.0
    %1822 = vmatprep.subr.mxu0 0.0
    %1823 = vmatpush1.msra.mxu0 0.0
    %1824 = vmatprep.subr.mxu0 0.0
    %1825 = vmatpush1.msra.mxu0 0.0
    %1826 = vmatprep.mubr.f32.mxu0 0.0
    %1827 = vmatmul.mubr.f32.gmra.mrb[0].mxu0 %v1760
    %v1828 = vpop.f32.mrb[0].mxu0
    %v1829 = vadd.f32 %v1758, %v1828
    %v1830 = vpop.f32.mrb[0].mxu0
    %1831 = vdwg.mxu0
    %v1832 = vld [vmem:[#allocation3 + $0xa0] sm:$0xff]
    %v1833 = vld [vmem:[#allocation3 + $0xa8] sm:$0xff]
    %v1834 = vld [vmem:[#allocation3 + $0xb0] sm:$0xff]
    %v1835 = vld [vmem:[#allocation3 + $0xb8] sm:$0xff]
    %v1836 = vld [vmem:[#allocation3 + $0x118] sm:$0x1]
    %v1837 = vlaneseq
    %v1838 = vshrl.u32 %v1837, 7
    %v1839 = vsub.s32 0, %v1838
    %v1840 = vrot.slane %v1836, %v1839
    %1841 = vmatprep.subr.mxu0 0.0
    %1842 = vmatpush1.msra.mxu0 %v1832
    %1843 = vmatprep.subr.mxu0 0.0
    %1844 = vmatpush1.msra.mxu0 %v1833
    %1845 = vmatprep.subr.mxu0 0.0
    %1846 = vmatpush1.msra.mxu0 %v1834
    %1847 = vmatprep.subr.mxu0 0.0
    %1848 = vmatpush1.msra.mxu0 %v1835
    %1849 = vmatprep.subr.mxu0 0.0
    %1850 = vmatpush1.msra.mxu0 0.0
    %1851 = vmatprep.subr.mxu0 0.0
    %1852 = vmatpush1.msra.mxu0 0.0
    %1853 = vmatprep.subr.mxu0 0.0
    %1854 = vmatpush1.msra.mxu0 0.0
    %1855 = vmatprep.subr.mxu0 0.0
    %1856 = vmatpush1.msra.mxu0 0.0
    %1857 = vmatprep.subr.mxu0 0.0
    %1858 = vmatpush1.msra.mxu0 0.0
    %1859 = vmatprep.subr.mxu0 0.0
    %1860 = vmatpush1.msra.mxu0 0.0
    %1861 = vmatprep.subr.mxu0 0.0
    %1862 = vmatpush1.msra.mxu0 0.0
    %1863 = vmatprep.subr.mxu0 0.0
    %1864 = vmatpush1.msra.mxu0 0.0
    %1865 = vmatprep.subr.mxu0 0.0
    %1866 = vmatpush1.msra.mxu0 0.0
    %1867 = vmatprep.subr.mxu0 0.0
    %1868 = vmatpush1.msra.mxu0 0.0
    %1869 = vmatprep.subr.mxu0 0.0
    %1870 = vmatpush1.msra.mxu0 0.0
    %1871 = vmatprep.subr.mxu0 0.0
    %1872 = vmatpush1.msra.mxu0 0.0
    %1873 = vmatprep.subr.mxu0 0.0
    %1874 = vmatpush1.msra.mxu0 0.0
    %1875 = vmatprep.subr.mxu0 0.0
    %1876 = vmatpush1.msra.mxu0 0.0
    %1877 = vmatprep.subr.mxu0 0.0
    %1878 = vmatpush1.msra.mxu0 0.0
    %1879 = vmatprep.subr.mxu0 0.0
    %1880 = vmatpush1.msra.mxu0 0.0
    %1881 = vmatprep.subr.mxu0 0.0
    %1882 = vmatpush1.msra.mxu0 0.0
    %1883 = vmatprep.subr.mxu0 0.0
    %1884 = vmatpush1.msra.mxu0 0.0
    %1885 = vmatprep.subr.mxu0 0.0
    %1886 = vmatpush1.msra.mxu0 0.0
    %1887 = vmatprep.subr.mxu0 0.0
    %1888 = vmatpush1.msra.mxu0 0.0
    %1889 = vmatprep.subr.mxu0 0.0
    %1890 = vmatpush1.msra.mxu0 0.0
    %1891 = vmatprep.subr.mxu0 0.0
    %1892 = vmatpush1.msra.mxu0 0.0
    %1893 = vmatprep.subr.mxu0 0.0
    %1894 = vmatpush1.msra.mxu0 0.0
    %1895 = vmatprep.subr.mxu0 0.0
    %1896 = vmatpush1.msra.mxu0 0.0
    %1897 = vmatprep.subr.mxu0 0.0
    %1898 = vmatpush1.msra.mxu0 0.0
    %1899 = vmatprep.subr.mxu0 0.0
    %1900 = vmatpush1.msra.mxu0 0.0
    %1901 = vmatprep.subr.mxu0 0.0
    %1902 = vmatpush1.msra.mxu0 0.0
    %1903 = vmatprep.subr.mxu0 0.0
    %1904 = vmatpush1.msra.mxu0 0.0
    %1905 = vmatprep.mubr.f32.mxu0 0.0
    %1906 = vmatmul.mubr.f32.gmra.mrb[0].mxu0 %v1362
    %v1907 = vpop.f32.mrb[0].mxu0
    %v1908 = vadd.f32 %v1840, %v1907
    %v1909 = vpop.f32.mrb[0].mxu0
    %1910 = vdwg.mxu0
    %v1911 = vadd.f32 %v1829, %v1908
    %v1912 = vxor.u32 %v1911, 2147483648
    %v1913 = vmul.f32 %v1912, 1.442695
    %v1914 = vpow.pop %v1913
    %v1915 = vadd.f32 %v1914, 1.0
    %v1916 = vrcp.pop %v1915
    %v1917 = vmul.f32 1.0, %v1916
    %1919 = vrot.lane.b32.xlu0 %v1908, 64
    %v1920 = vpop.permute.xlu0 %1919
    %v1922 = vmul.f32 %v1917, %v1920
    %1924 = vrot.lane.b32.xlu0 %v1922, 64
    %v1925 = vpop.permute.xlu0 %1924
    %v1927 = vadd.f32 %v1829, %v1925
    %v1928 = vtanh.pop %v1927
    %v1929 = vsub.f32 1.0, %v1917
    %1931 = vrot.lane.b32.xlu0 %v1928, 96
    %v1932 = vpop.permute.xlu0 %1931
    %v1934 = vmul.f32 %v1929, %v1932
    %v1935 = vmul.f32 %v1917, %v1349
    %v1936 = vadd.f32 %v1934, %v1935
    %v1937 = vld [vmem:[#allocation3 + $0xc0] sm:$0xff]
    %v1938 = vld [vmem:[#allocation3 + $0xc8] sm:$0xff]
    %v1939 = vld [vmem:[#allocation3 + $0xd0] sm:$0xff]
    %v1940 = vld [vmem:[#allocation3 + $0xd8] sm:$0xff]
    %v1941 = vld [vmem:[#allocation3 + $0x120] sm:$0x1]
    %v1942 = vlaneseq
    %v1943 = vshrl.u32 %v1942, 7
    %v1944 = vsub.s32 0, %v1943
    %v1945 = vrot.slane %v1941, %v1944
    %1947 = vrot.lane.b32.xlu0 %v1936, 96
    %v1948 = vpop.permute.xlu0 %1947
    %v1949 = vsel %vm38, %v1948, 0
    %1951 = vmatprep.subr.mxu0 0.0
    %1952 = vmatpush1.msra.mxu0 %v1937
    %1953 = vmatprep.subr.mxu0 0.0
    %1954 = vmatpush1.msra.mxu0 %v1938
    %1955 = vmatprep.subr.mxu0 0.0
    %1956 = vmatpush1.msra.mxu0 %v1939
    %1957 = vmatprep.subr.mxu0 0.0
    %1958 = vmatpush1.msra.mxu0 %v1940
    %1959 = vmatprep.subr.mxu0 0.0
    %1960 = vmatpush1.msra.mxu0 0.0
    %1961 = vmatprep.subr.mxu0 0.0
    %1962 = vmatpush1.msra.mxu0 0.0
    %1963 = vmatprep.subr.mxu0 0.0
    %1964 = vmatpush1.msra.mxu0 0.0
    %1965 = vmatprep.subr.mxu0 0.0
    %1966 = vmatpush1.msra.mxu0 0.0
    %1967 = vmatprep.subr.mxu0 0.0
    %1968 = vmatpush1.msra.mxu0 0.0
    %1969 = vmatprep.subr.mxu0 0.0
    %1970 = vmatpush1.msra.mxu0 0.0
    %1971 = vmatprep.subr.mxu0 0.0
    %1972 = vmatpush1.msra.mxu0 0.0
    %1973 = vmatprep.subr.mxu0 0.0
    %1974 = vmatpush1.msra.mxu0 0.0
    %1975 = vmatprep.subr.mxu0 0.0
    %1976 = vmatpush1.msra.mxu0 0.0
    %1977 = vmatprep.subr.mxu0 0.0
    %1978 = vmatpush1.msra.mxu0 0.0
    %1979 = vmatprep.subr.mxu0 0.0
    %1980 = vmatpush1.msra.mxu0 0.0
    %1981 = vmatprep.subr.mxu0 0.0
    %1982 = vmatpush1.msra.mxu0 0.0
    %1983 = vmatprep.subr.mxu0 0.0
    %1984 = vmatpush1.msra.mxu0 0.0
    %1985 = vmatprep.subr.mxu0 0.0
    %1986 = vmatpush1.msra.mxu0 0.0
    %1987 = vmatprep.subr.mxu0 0.0
    %1988 = vmatpush1.msra.mxu0 0.0
    %1989 = vmatprep.subr.mxu0 0.0
    %1990 = vmatpush1.msra.mxu0 0.0
    %1991 = vmatprep.subr.mxu0 0.0
    %1992 = vmatpush1.msra.mxu0 0.0
    %1993 = vmatprep.subr.mxu0 0.0
    %1994 = vmatpush1.msra.mxu0 0.0
    %1995 = vmatprep.subr.mxu0 0.0
    %1996 = vmatpush1.msra.mxu0 0.0
    %1997 = vmatprep.subr.mxu0 0.0
    %1998 = vmatpush1.msra.mxu0 0.0
    %1999 = vmatprep.subr.mxu0 0.0
    %2000 = vmatpush1.msra.mxu0 0.0
    %2001 = vmatprep.subr.mxu0 0.0
    %2002 = vmatpush1.msra.mxu0 0.0
    %2003 = vmatprep.subr.mxu0 0.0
    %2004 = vmatpush1.msra.mxu0 0.0
    %2005 = vmatprep.subr.mxu0 0.0
    %2006 = vmatpush1.msra.mxu0 0.0
    %2007 = vmatprep.subr.mxu0 0.0
    %2008 = vmatpush1.msra.mxu0 0.0
    %2009 = vmatprep.subr.mxu0 0.0
    %2010 = vmatpush1.msra.mxu0 0.0
    %2011 = vmatprep.subr.mxu0 0.0
    %2012 = vmatpush1.msra.mxu0 0.0
    %2013 = vmatprep.subr.mxu0 0.0
    %2014 = vmatpush1.msra.mxu0 0.0
    %2015 = vmatprep.mubr.f32.mxu0 0.0
    %2016 = vmatmul.mubr.f32.gmra.mrb[0].mxu0 %v1949
    %v2017 = vpop.f32.mrb[0].mxu0
    %v2018 = vadd.f32 %v1945, %v2017
    %v2019 = vpop.f32.mrb[0].mxu0
    %2020 = vdwg.mxu0
    %v2021 = vld [vmem:[#allocation3 + $0xe0] sm:$0xff]
    %v2022 = vld [vmem:[#allocation3 + $0xe8] sm:$0xff]
    %v2023 = vld [vmem:[#allocation3 + $0xf0] sm:$0xff]
    %v2024 = vld [vmem:[#allocation3 + $0xf8] sm:$0xff]
    %v2025 = vld [vmem:[#allocation3 + $0x128] sm:$0x1]
    %v2026 = vlaneseq
    %v2027 = vshrl.u32 %v2026, 7
    %v2028 = vsub.s32 0, %v2027
    %v2029 = vrot.slane %v2025, %v2028
    %2030 = vmatprep.subr.mxu0 0.0
    %2031 = vmatpush1.msra.mxu0 %v2021
    %2032 = vmatprep.subr.mxu0 0.0
    %2033 = vmatpush1.msra.mxu0 %v2022
    %2034 = vmatprep.subr.mxu0 0.0
    %2035 = vmatpush1.msra.mxu0 %v2023
    %2036 = vmatprep.subr.mxu0 0.0
    %2037 = vmatpush1.msra.mxu0 %v2024
    %2038 = vmatprep.subr.mxu0 0.0
    %2039 = vmatpush1.msra.mxu0 0.0
    %2040 = vmatprep.subr.mxu0 0.0
    %2041 = vmatpush1.msra.mxu0 0.0
    %2042 = vmatprep.subr.mxu0 0.0
    %2043 = vmatpush1.msra.mxu0 0.0
    %2044 = vmatprep.subr.mxu0 0.0
    %2045 = vmatpush1.msra.mxu0 0.0
    %2046 = vmatprep.subr.mxu0 0.0
    %2047 = vmatpush1.msra.mxu0 0.0
    %2048 = vmatprep.subr.mxu0 0.0
    %2049 = vmatpush1.msra.mxu0 0.0
    %2050 = vmatprep.subr.mxu0 0.0
    %2051 = vmatpush1.msra.mxu0 0.0
    %2052 = vmatprep.subr.mxu0 0.0
    %2053 = vmatpush1.msra.mxu0 0.0
    %2054 = vmatprep.subr.mxu0 0.0
    %2055 = vmatpush1.msra.mxu0 0.0
    %2056 = vmatprep.subr.mxu0 0.0
    %2057 = vmatpush1.msra.mxu0 0.0
    %2058 = vmatprep.subr.mxu0 0.0
    %2059 = vmatpush1.msra.mxu0 0.0
    %2060 = vmatprep.subr.mxu0 0.0
    %2061 = vmatpush1.msra.mxu0 0.0
    %2062 = vmatprep.subr.mxu0 0.0
    %2063 = vmatpush1.msra.mxu0 0.0
    %2064 = vmatprep.subr.mxu0 0.0
    %2065 = vmatpush1.msra.mxu0 0.0
    %2066 = vmatprep.subr.mxu0 0.0
    %2067 = vmatpush1.msra.mxu0 0.0
    %2068 = vmatprep.subr.mxu0 0.0
    %2069 = vmatpush1.msra.mxu0 0.0
    %2070 = vmatprep.subr.mxu0 0.0
    %2071 = vmatpush1.msra.mxu0 0.0
    %2072 = vmatprep.subr.mxu0 0.0
    %2073 = vmatpush1.msra.mxu0 0.0
    %2074 = vmatprep.subr.mxu0 0.0
    %2075 = vmatpush1.msra.mxu0 0.0
    %2076 = vmatprep.subr.mxu0 0.0
    %2077 = vmatpush1.msra.mxu0 0.0
    %2078 = vmatprep.subr.mxu0 0.0
    %2079 = vmatpush1.msra.mxu0 0.0
    %2080 = vmatprep.subr.mxu0 0.0
    %2081 = vmatpush1.msra.mxu0 0.0
    %2082 = vmatprep.subr.mxu0 0.0
    %2083 = vmatpush1.msra.mxu0 0.0
    %2084 = vmatprep.subr.mxu0 0.0
    %2085 = vmatpush1.msra.mxu0 0.0
    %2086 = vmatprep.subr.mxu0 0.0
    %2087 = vmatpush1.msra.mxu0 0.0
    %2088 = vmatprep.subr.mxu0 0.0
    %2089 = vmatpush1.msra.mxu0 0.0
    %2090 = vmatprep.subr.mxu0 0.0
    %2091 = vmatpush1.msra.mxu0 0.0
    %2092 = vmatprep.subr.mxu0 0.0
    %2093 = vmatpush1.msra.mxu0 0.0
    %2094 = vmatprep.mubr.f32.mxu0 0.0
    %2095 = vmatmul.mubr.f32.gmra.mrb[0].mxu0 %v1549
    %v2096 = vpop.f32.mrb[0].mxu0
    %v2097 = vadd.f32 %v2029, %v2096
    %v2098 = vpop.f32.mrb[0].mxu0
    %2099 = vdwg.mxu0
    %v2100 = vadd.f32 %v2018, %v2097
    %v2101 = vxor.u32 %v2100, 2147483648
    %v2102 = vmul.f32 %v2101, 1.442695
    %v2103 = vpow.pop %v2102
    %v2104 = vadd.f32 %v2103, 1.0
    %v2105 = vrcp.pop %v2104
    %v2106 = vmul.f32 1.0, %v2105
    %2108 = vrot.lane.b32.xlu0 %v2097, 64
    %v2109 = vpop.permute.xlu0 %2108
    %v2111 = vmul.f32 %v2106, %v2109
    %2113 = vrot.lane.b32.xlu0 %v2111, 64
    %v2114 = vpop.permute.xlu0 %2113
    %v2116 = vadd.f32 %v2018, %v2114
    %v2117 = vtanh.pop %v2116
    %v2118 = vsub.f32 1.0, %v2106
    %2120 = vrot.lane.b32.xlu0 %v2117, 96
    %v2121 = vpop.permute.xlu0 %2120
    %v2123 = vmul.f32 %v2118, %v2121
    %v2124 = vmul.f32 %v2106, %v1538
    %v2125 = vadd.f32 %v2123, %v2124
    %2127 = vrot.lane.b32.xlu0 %v2125, 96
    %v2128 = vpop.permute.xlu0 %2127
    %2130 = vst.msk [vmem:[#allocation2 + $0x2] sm:$0x1] %vm955, %v2128
    %2131 = vst.msk [vmem:[#allocation2 + $0x9] sm:$0x2] %vm957, %v2128
    %v2132 = vld [vmem:[#allocation3 + $0x20] sm:$0xff]
    %v2133 = vld [vmem:[#allocation3 + $0x28] sm:$0xff]
    %v2134 = vld [vmem:[#allocation3 + $0x30] sm:$0xff]
    %v2135 = vld [vmem:[#allocation3 + $0x38] sm:$0xff]
    %v2136 = vsel %vm38, %v2128, 0
    %2138 = vmatprep.subr.mxu0 0.0
    %2139 = vmatpush1.msra.mxu0 %v2132
    %2140 = vmatprep.subr.mxu0 0.0
    %2141 = vmatpush1.msra.mxu0 %v2133
    %2142 = vmatprep.subr.mxu0 0.0
    %2143 = vmatpush1.msra.mxu0 %v2134
    %2144 = vmatprep.subr.mxu0 0.0
    %2145 = vmatpush1.msra.mxu0 %v2135
    %2146 = vmatprep.subr.mxu0 0.0
    %2147 = vmatpush1.msra.mxu0 0.0
    %2148 = vmatprep.subr.mxu0 0.0
    %2149 = vmatpush1.msra.mxu0 0.0
    %2150 = vmatprep.subr.mxu0 0.0
    %2151 = vmatpush1.msra.mxu0 0.0
    %2152 = vmatprep.subr.mxu0 0.0
    %2153 = vmatpush1.msra.mxu0 0.0
    %2154 = vmatprep.subr.mxu0 0.0
    %2155 = vmatpush1.msra.mxu0 0.0
    %2156 = vmatprep.subr.mxu0 0.0
    %2157 = vmatpush1.msra.mxu0 0.0
    %2158 = vmatprep.subr.mxu0 0.0
    %2159 = vmatpush1.msra.mxu0 0.0
    %2160 = vmatprep.subr.mxu0 0.0
    %2161 = vmatpush1.msra.mxu0 0.0
    %2162 = vmatprep.subr.mxu0 0.0
    %2163 = vmatpush1.msra.mxu0 0.0
    %2164 = vmatprep.subr.mxu0 0.0
    %2165 = vmatpush1.msra.mxu0 0.0
    %2166 = vmatprep.subr.mxu0 0.0
    %2167 = vmatpush1.msra.mxu0 0.0
    %2168 = vmatprep.subr.mxu0 0.0
    %2169 = vmatpush1.msra.mxu0 0.0
    %2170 = vmatprep.subr.mxu0 0.0
    %2171 = vmatpush1.msra.mxu0 0.0
    %2172 = vmatprep.subr.mxu0 0.0
    %2173 = vmatpush1.msra.mxu0 0.0
    %2174 = vmatprep.subr.mxu0 0.0
    %2175 = vmatpush1.msra.mxu0 0.0
    %2176 = vmatprep.subr.mxu0 0.0
    %2177 = vmatpush1.msra.mxu0 0.0
    %2178 = vmatprep.subr.mxu0 0.0
    %2179 = vmatpush1.msra.mxu0 0.0
    %2180 = vmatprep.subr.mxu0 0.0
    %2181 = vmatpush1.msra.mxu0 0.0
    %2182 = vmatprep.subr.mxu0 0.0
    %2183 = vmatpush1.msra.mxu0 0.0
    %2184 = vmatprep.subr.mxu0 0.0
    %2185 = vmatpush1.msra.mxu0 0.0
    %2186 = vmatprep.subr.mxu0 0.0
    %2187 = vmatpush1.msra.mxu0 0.0
    %2188 = vmatprep.subr.mxu0 0.0
    %2189 = vmatpush1.msra.mxu0 0.0
    %2190 = vmatprep.subr.mxu0 0.0
    %2191 = vmatpush1.msra.mxu0 0.0
    %2192 = vmatprep.subr.mxu0 0.0
    %2193 = vmatpush1.msra.mxu0 0.0
    %2194 = vmatprep.subr.mxu0 0.0
    %2195 = vmatpush1.msra.mxu0 0.0
    %2196 = vmatprep.subr.mxu0 0.0
    %2197 = vmatpush1.msra.mxu0 0.0
    %2198 = vmatprep.subr.mxu0 0.0
    %2199 = vmatpush1.msra.mxu0 0.0
    %2200 = vmatprep.subr.mxu0 0.0
    %2201 = vmatpush1.msra.mxu0 0.0
    %2202 = vmatprep.mubr.f32.mxu0 0.0
    %2203 = vmatmul.mubr.f32.gmra.mrb[0].mxu0 %v2136
    %v2204 = vpop.f32.mrb[0].mxu0
    %v2205 = vadd.f32 0.0, %v2204
    %v2206 = vpop.f32.mrb[0].mxu0
    %2207 = vdwg.mxu0
    %v2210 = vunpack.c.l.s4 1966171168
    %v2211 = vunpack.c.0.s8 %v2210
    %v2212 = vlaneseq
    %v2213 = vshrl.u32 %v2212, 7
    %v2214 = vsub.s32 %v2211, %v2213
    %v2215 = vrot.slane %v2205, %v2214
    %v2216 = vcombine.high %v2215, %v2215
    %v2218 = vunpack.c.l.s4 1966171168
    %v2219 = vunpack.c.0.s8 %v2218
    %v2220 = vlaneseq
    %v2221 = vshrl.u32 %v2220, 7
    %v2222 = vsub.s32 %v2219, %v2221
    %v2223 = vrot.slane %v2215, %v2222
    %v2225 = vunpack.c.l.s4 1966171168
    %v2226 = vunpack.c.0.s8 %v2225
    %v2227 = vlaneseq
    %v2228 = vshrl.u32 %v2227, 7
    %v2229 = vsub.s32 %v2226, %v2228
    %v2230 = vrot.slane %v2216, %v2229
    %v2231 = vlaneseq
    %v2232 = vshrl.u32 %v2231, 7
    %v2233 = vsub.s32 0, %v2232
    %v2234 = vrot.slane %v2223, %v2233
    %v2235 = vlaneseq
    %v2236 = vshrl.u32 %v2235, 7
    %v2237 = vsub.s32 0, %v2236
    %v2238 = vrot.slane %v2230, %v2237
    %v2241 = vadd.f32 %v2234, %v112
    %v2242 = vadd.f32 %v2238, %v117
    %v2243 = vtanh.pop %v2241
    %v2244 = vtanh.pop %v2242
    %v2245 = vld [vmem:[#allocation3 + $0x138] sm:$0x1]
    %v2246 = vlaneseq
    %v2247 = vshrl.u32 %v2246, 7
    %v2248 = vsub.s32 0, %v2247
    %v2249 = vrot.slane %v2245, %v2248
    %v2250 = vmul.f32 %v2243, %v2249
    %v2251 = vmul.f32 %v2244, %v2249
    %v2252 = vsel %vm38, %v2250, 0.0
    %2253 = vadd.xlane.f32.xlu0 %v2252
    %v2254 = vpop.xlane.xlu0 %2253
    %v2255 = vsel %vm38, %v2251, 0.0
    %2256 = vadd.xlane.f32.xlu0 %v2255
    %v2257 = vpop.xlane.xlu0 %2256
    %v2258 = vadd.f32 %v2254, %v474
    %v2259 = vadd.f32 %v2257, %v481
    %v2260 = vmul.f32 %v2258, 1.442695
    %v2261 = vpow.pop %v2260
    %v2262 = vmul.f32 %v2259, 1.442695
    %v2263 = vpow.pop %v2262
    %2266 = vset.pattern.permute.xlu0 0
    %2267 = vperm.xlu0 %2266, %v2261
    %v2268 = vpop.permute.xlu0 %2267
    %2269 = vset.pattern.permute.xlu0 0
    %2270 = vperm.xlu0 %2269, %v2263
    %v2271 = vpop.permute.xlu0 %2270
    %v2272 = vlaneseq
    %v2273 = vshrl.u32 %v2272, 7
    %v2274 = vsub.s32 %v121, %v2273
    %v2275 = vrot.slane %v2268, %v2274
    %v2276 = vlaneseq
    %v2277 = vshrl.u32 %v2276, 7
    %v2278 = vsub.s32 %v121, %v2277
    %v2279 = vrot.slane %v2271, %v2278
    %v2280 = vsel %vm506, %v2279, %v2275
    %v2282 = vsel %vm509, %v2280, 0.0
    %2283 = vadd.xlane.f32.xlu0 %v2282
    %v2284 = vpop.xlane.xlu0 %2283
    %v2285 = vrcp.pop %v2284
    %v2287 = vlaneseq
    %v2288 = vshrl.u32 %v2287, 7
    %v2289 = vsub.s32 0, %v2288
    %v2290 = vrot.slane %v2285, %v2289
    %v2291 = vlaneseq
    %v2292 = vshrl.u32 %v2291, 7
    %v2293 = vsub.s32 1, %v2292
    %v2294 = vrot.slane %v2285, %v2293
    %v2297 = vmul.f32 %v2261, %v2290
    %v2298 = vmul.f32 %v2263, %v2294
    %2301 = vset.pattern.permute.xlu0 0
    %2302 = vperm.xlu0 %2301, %v2297
    %v2303 = vpop.permute.xlu0 %2302
    %2304 = vset.pattern.permute.xlu0 0
    %2305 = vperm.xlu0 %2304, %v2298
    %v2306 = vpop.permute.xlu0 %2305
    %v2307 = vlaneseq
    %v2308 = vshrl.u32 %v2307, 7
    %v2309 = vsub.s32 %v121, %v2308
    %v2310 = vrot.slane %v2303, %v2309
    %v2311 = vlaneseq
    %v2312 = vshrl.u32 %v2311, 7
    %v2313 = vsub.s32 %v121, %v2312
    %v2314 = vrot.slane %v2306, %v2313
    %v2315 = vsel %vm506, %v2314, %v2310
    %2317 = vst.msk [vmem:[%s4 + $0x16] sm:$0x3] %vm509, %v2315
    %v2320 = vmul.f32 %v2303, %v32
    %v2321 = vmul.f32 %v2306, %v33
    %v2322 = vsel %vm38, %v2320, 0.0
    %v2323 = vrot.slane %v2322, 4
    %v2324 = vadd.f32 %v2322, %v2323
    %v2325 = vrot.slane %v2324, 2
    %v2326 = vadd.f32 %v2324, %v2325
    %v2327 = vrot.slane %v2326, 1
    %v2328 = vadd.f32 %v2326, %v2327
    %v2329 = vsel %vm38, %v2321, 0.0
    %v2330 = vrot.slane %v2329, 4
    %v2331 = vadd.f32 %v2329, %v2330
    %v2332 = vrot.slane %v2331, 2
    %v2333 = vadd.f32 %v2331, %v2332
    %v2334 = vrot.slane %v2333, 1
    %v2335 = vadd.f32 %v2333, %v2334
    %v2336 = vld [vmem:[#allocation3 + $0x80] sm:$0xff]
    %v2337 = vld [vmem:[#allocation3 + $0x88] sm:$0xff]
    %v2338 = vld [vmem:[#allocation3 + $0x90] sm:$0xff]
    %v2339 = vld [vmem:[#allocation3 + $0x98] sm:$0xff]
    %v2342 = vsel %vm506, %v2335, %v2328
    %v2343 = vrot.slane %v329, 3
    %v2344 = vrot.slane %v334, 2
    %v2345 = vsel %vm506, %v2344, %v2343
    %v2347 = vsel %vm38, %v2342, 0
    %2349 = vmatprep.subr.mxu0 0.0
    %2350 = vmatpush1.msra.mxu0 %v2336
    %2351 = vmatprep.subr.mxu0 0.0
    %2352 = vmatpush1.msra.mxu0 %v2337
    %2353 = vmatprep.subr.mxu0 0.0
    %2354 = vmatpush1.msra.mxu0 %v2338
    %2355 = vmatprep.subr.mxu0 0.0
    %2356 = vmatpush1.msra.mxu0 %v2339
    %2357 = vmatprep.subr.mxu0 0.0
    %2358 = vmatpush1.msra.mxu0 0.0
    %2359 = vmatprep.subr.mxu0 0.0
    %2360 = vmatpush1.msra.mxu0 0.0
    %2361 = vmatprep.subr.mxu0 0.0
    %2362 = vmatpush1.msra.mxu0 0.0
    %2363 = vmatprep.subr.mxu0 0.0
    %2364 = vmatpush1.msra.mxu0 0.0
    %2365 = vmatprep.subr.mxu0 0.0
    %2366 = vmatpush1.msra.mxu0 0.0
    %2367 = vmatprep.subr.mxu0 0.0
    %2368 = vmatpush1.msra.mxu0 0.0
    %2369 = vmatprep.subr.mxu0 0.0
    %2370 = vmatpush1.msra.mxu0 0.0
    %2371 = vmatprep.subr.mxu0 0.0
    %2372 = vmatpush1.msra.mxu0 0.0
    %2373 = vmatprep.subr.mxu0 0.0
    %2374 = vmatpush1.msra.mxu0 0.0
    %2375 = vmatprep.subr.mxu0 0.0
    %2376 = vmatpush1.msra.mxu0 0.0
    %2377 = vmatprep.subr.mxu0 0.0
    %2378 = vmatpush1.msra.mxu0 0.0
    %2379 = vmatprep.subr.mxu0 0.0
    %2380 = vmatpush1.msra.mxu0 0.0
    %2381 = vmatprep.subr.mxu0 0.0
    %2382 = vmatpush1.msra.mxu0 0.0
    %2383 = vmatprep.subr.mxu0 0.0
    %2384 = vmatpush1.msra.mxu0 0.0
    %2385 = vmatprep.subr.mxu0 0.0
    %2386 = vmatpush1.msra.mxu0 0.0
    %2387 = vmatprep.subr.mxu0 0.0
    %2388 = vmatpush1.msra.mxu0 0.0
    %2389 = vmatprep.subr.mxu0 0.0
    %2390 = vmatpush1.msra.mxu0 0.0
    %2391 = vmatprep.subr.mxu0 0.0
    %2392 = vmatpush1.msra.mxu0 0.0
    %2393 = vmatprep.subr.mxu0 0.0
    %2394 = vmatpush1.msra.mxu0 0.0
    %2395 = vmatprep.subr.mxu0 0.0
    %2396 = vmatpush1.msra.mxu0 0.0
    %2397 = vmatprep.subr.mxu0 0.0
    %2398 = vmatpush1.msra.mxu0 0.0
    %2399 = vmatprep.subr.mxu0 0.0
    %2400 = vmatpush1.msra.mxu0 0.0
    %2401 = vmatprep.subr.mxu0 0.0
    %2402 = vmatpush1.msra.mxu0 0.0
    %2403 = vmatprep.subr.mxu0 0.0
    %2404 = vmatpush1.msra.mxu0 0.0
    %2405 = vmatprep.subr.mxu0 0.0
    %2406 = vmatpush1.msra.mxu0 0.0
    %2407 = vmatprep.subr.mxu0 0.0
    %2408 = vmatpush1.msra.mxu0 0.0
    %2409 = vmatprep.subr.mxu0 0.0
    %2410 = vmatpush1.msra.mxu0 0.0
    %2411 = vmatprep.subr.mxu0 0.0
    %2412 = vmatpush1.msra.mxu0 0.0
    %2413 = vmatprep.mubr.f32.mxu0 0.0
    %2414 = vmatmul.mubr.f32.gmra.mrb[0].mxu0 %v2347
    %v2415 = vpop.f32.mrb[0].mxu0
    %v2416 = vadd.f32 %v2345, %v2415
    %v2417 = vpop.f32.mrb[0].mxu0
    %2418 = vdwg.mxu0
    %v2419 = vld [vmem:[#allocation3 + $0xa0] sm:$0xff]
    %v2420 = vld [vmem:[#allocation3 + $0xa8] sm:$0xff]
    %v2421 = vld [vmem:[#allocation3 + $0xb0] sm:$0xff]
    %v2422 = vld [vmem:[#allocation3 + $0xb8] sm:$0xff]
    %v2423 = vld [vmem:[#allocation3 + $0x118] sm:$0x1]
    %v2424 = vlaneseq
    %v2425 = vshrl.u32 %v2424, 7
    %v2426 = vsub.s32 0, %v2425
    %v2427 = vrot.slane %v2423, %v2426
    %2428 = vmatprep.subr.mxu0 0.0
    %2429 = vmatpush1.msra.mxu0 %v2419
    %2430 = vmatprep.subr.mxu0 0.0
    %2431 = vmatpush1.msra.mxu0 %v2420
    %2432 = vmatprep.subr.mxu0 0.0
    %2433 = vmatpush1.msra.mxu0 %v2421
    %2434 = vmatprep.subr.mxu0 0.0
    %2435 = vmatpush1.msra.mxu0 %v2422
    %2436 = vmatprep.subr.mxu0 0.0
    %2437 = vmatpush1.msra.mxu0 0.0
    %2438 = vmatprep.subr.mxu0 0.0
    %2439 = vmatpush1.msra.mxu0 0.0
    %2440 = vmatprep.subr.mxu0 0.0
    %2441 = vmatpush1.msra.mxu0 0.0
    %2442 = vmatprep.subr.mxu0 0.0
    %2443 = vmatpush1.msra.mxu0 0.0
    %2444 = vmatprep.subr.mxu0 0.0
    %2445 = vmatpush1.msra.mxu0 0.0
    %2446 = vmatprep.subr.mxu0 0.0
    %2447 = vmatpush1.msra.mxu0 0.0
    %2448 = vmatprep.subr.mxu0 0.0
    %2449 = vmatpush1.msra.mxu0 0.0
    %2450 = vmatprep.subr.mxu0 0.0
    %2451 = vmatpush1.msra.mxu0 0.0
    %2452 = vmatprep.subr.mxu0 0.0
    %2453 = vmatpush1.msra.mxu0 0.0
    %2454 = vmatprep.subr.mxu0 0.0
    %2455 = vmatpush1.msra.mxu0 0.0
    %2456 = vmatprep.subr.mxu0 0.0
    %2457 = vmatpush1.msra.mxu0 0.0
    %2458 = vmatprep.subr.mxu0 0.0
    %2459 = vmatpush1.msra.mxu0 0.0
    %2460 = vmatprep.subr.mxu0 0.0
    %2461 = vmatpush1.msra.mxu0 0.0
    %2462 = vmatprep.subr.mxu0 0.0
    %2463 = vmatpush1.msra.mxu0 0.0
    %2464 = vmatprep.subr.mxu0 0.0
    %2465 = vmatpush1.msra.mxu0 0.0
    %2466 = vmatprep.subr.mxu0 0.0
    %2467 = vmatpush1.msra.mxu0 0.0
    %2468 = vmatprep.subr.mxu0 0.0
    %2469 = vmatpush1.msra.mxu0 0.0
    %2470 = vmatprep.subr.mxu0 0.0
    %2471 = vmatpush1.msra.mxu0 0.0
    %2472 = vmatprep.subr.mxu0 0.0
    %2473 = vmatpush1.msra.mxu0 0.0
    %2474 = vmatprep.subr.mxu0 0.0
    %2475 = vmatpush1.msra.mxu0 0.0
    %2476 = vmatprep.subr.mxu0 0.0
    %2477 = vmatpush1.msra.mxu0 0.0
    %2478 = vmatprep.subr.mxu0 0.0
    %2479 = vmatpush1.msra.mxu0 0.0
    %2480 = vmatprep.subr.mxu0 0.0
    %2481 = vmatpush1.msra.mxu0 0.0
    %2482 = vmatprep.subr.mxu0 0.0
    %2483 = vmatpush1.msra.mxu0 0.0
    %2484 = vmatprep.subr.mxu0 0.0
    %2485 = vmatpush1.msra.mxu0 0.0
    %2486 = vmatprep.subr.mxu0 0.0
    %2487 = vmatpush1.msra.mxu0 0.0
    %2488 = vmatprep.subr.mxu0 0.0
    %2489 = vmatpush1.msra.mxu0 0.0
    %2490 = vmatprep.subr.mxu0 0.0
    %2491 = vmatpush1.msra.mxu0 0.0
    %2492 = vmatprep.mubr.f32.mxu0 0.0
    %2493 = vmatmul.mubr.f32.gmra.mrb[0].mxu0 %v1949
    %v2494 = vpop.f32.mrb[0].mxu0
    %v2495 = vadd.f32 %v2427, %v2494
    %v2496 = vpop.f32.mrb[0].mxu0
    %2497 = vdwg.mxu0
    %v2498 = vadd.f32 %v2416, %v2495
    %v2499 = vxor.u32 %v2498, 2147483648
    %v2500 = vmul.f32 %v2499, 1.442695
    %v2501 = vpow.pop %v2500
    %v2502 = vadd.f32 %v2501, 1.0
    %v2503 = vrcp.pop %v2502
    %v2504 = vmul.f32 1.0, %v2503
    %2506 = vrot.lane.b32.xlu0 %v2495, 64
    %v2507 = vpop.permute.xlu0 %2506
    %v2509 = vmul.f32 %v2504, %v2507
    %2511 = vrot.lane.b32.xlu0 %v2509, 64
    %v2512 = vpop.permute.xlu0 %2511
    %v2514 = vadd.f32 %v2416, %v2512
    %v2515 = vtanh.pop %v2514
    %v2516 = vsub.f32 1.0, %v2504
    %2518 = vrot.lane.b32.xlu0 %v2515, 96
    %v2519 = vpop.permute.xlu0 %2518
    %v2521 = vmul.f32 %v2516, %v2519
    %v2522 = vmul.f32 %v2504, %v1936
    %v2523 = vadd.f32 %v2521, %v2522
    %v2524 = vld [vmem:[#allocation3 + $0xc0] sm:$0xff]
    %v2525 = vld [vmem:[#allocation3 + $0xc8] sm:$0xff]
    %v2526 = vld [vmem:[#allocation3 + $0xd0] sm:$0xff]
    %v2527 = vld [vmem:[#allocation3 + $0xd8] sm:$0xff]
    %v2528 = vld [vmem:[#allocation3 + $0x120] sm:$0x1]
    %v2529 = vlaneseq
    %v2530 = vshrl.u32 %v2529, 7
    %v2531 = vsub.s32 0, %v2530
    %v2532 = vrot.slane %v2528, %v2531
    %2534 = vrot.lane.b32.xlu0 %v2523, 96
    %v2535 = vpop.permute.xlu0 %2534
    %v2536 = vsel %vm38, %v2535, 0
    %2538 = vmatprep.subr.mxu0 0.0
    %2539 = vmatpush1.msra.mxu0 %v2524
    %2540 = vmatprep.subr.mxu0 0.0
    %2541 = vmatpush1.msra.mxu0 %v2525
    %2542 = vmatprep.subr.mxu0 0.0
    %2543 = vmatpush1.msra.mxu0 %v2526
    %2544 = vmatprep.subr.mxu0 0.0
    %2545 = vmatpush1.msra.mxu0 %v2527
    %2546 = vmatprep.subr.mxu0 0.0
    %2547 = vmatpush1.msra.mxu0 0.0
    %2548 = vmatprep.subr.mxu0 0.0
    %2549 = vmatpush1.msra.mxu0 0.0
    %2550 = vmatprep.subr.mxu0 0.0
    %2551 = vmatpush1.msra.mxu0 0.0
    %2552 = vmatprep.subr.mxu0 0.0
    %2553 = vmatpush1.msra.mxu0 0.0
    %2554 = vmatprep.subr.mxu0 0.0
    %2555 = vmatpush1.msra.mxu0 0.0
    %2556 = vmatprep.subr.mxu0 0.0
    %2557 = vmatpush1.msra.mxu0 0.0
    %2558 = vmatprep.subr.mxu0 0.0
    %2559 = vmatpush1.msra.mxu0 0.0
    %2560 = vmatprep.subr.mxu0 0.0
    %2561 = vmatpush1.msra.mxu0 0.0
    %2562 = vmatprep.subr.mxu0 0.0
    %2563 = vmatpush1.msra.mxu0 0.0
    %2564 = vmatprep.subr.mxu0 0.0
    %2565 = vmatpush1.msra.mxu0 0.0
    %2566 = vmatprep.subr.mxu0 0.0
    %2567 = vmatpush1.msra.mxu0 0.0
    %2568 = vmatprep.subr.mxu0 0.0
    %2569 = vmatpush1.msra.mxu0 0.0
    %2570 = vmatprep.subr.mxu0 0.0
    %2571 = vmatpush1.msra.mxu0 0.0
    %2572 = vmatprep.subr.mxu0 0.0
    %2573 = vmatpush1.msra.mxu0 0.0
    %2574 = vmatprep.subr.mxu0 0.0
    %2575 = vmatpush1.msra.mxu0 0.0
    %2576 = vmatprep.subr.mxu0 0.0
    %2577 = vmatpush1.msra.mxu0 0.0
    %2578 = vmatprep.subr.mxu0 0.0
    %2579 = vmatpush1.msra.mxu0 0.0
    %2580 = vmatprep.subr.mxu0 0.0
    %2581 = vmatpush1.msra.mxu0 0.0
    %2582 = vmatprep.subr.mxu0 0.0
    %2583 = vmatpush1.msra.mxu0 0.0
    %2584 = vmatprep.subr.mxu0 0.0
    %2585 = vmatpush1.msra.mxu0 0.0
    %2586 = vmatprep.subr.mxu0 0.0
    %2587 = vmatpush1.msra.mxu0 0.0
    %2588 = vmatprep.subr.mxu0 0.0
    %2589 = vmatpush1.msra.mxu0 0.0
    %2590 = vmatprep.subr.mxu0 0.0
    %2591 = vmatpush1.msra.mxu0 0.0
    %2592 = vmatprep.subr.mxu0 0.0
    %2593 = vmatpush1.msra.mxu0 0.0
    %2594 = vmatprep.subr.mxu0 0.0
    %2595 = vmatpush1.msra.mxu0 0.0
    %2596 = vmatprep.subr.mxu0 0.0
    %2597 = vmatpush1.msra.mxu0 0.0
    %2598 = vmatprep.subr.mxu0 0.0
    %2599 = vmatpush1.msra.mxu0 0.0
    %2600 = vmatprep.subr.mxu0 0.0
    %2601 = vmatpush1.msra.mxu0 0.0
    %2602 = vmatprep.mubr.f32.mxu0 0.0
    %2603 = vmatmul.mubr.f32.gmra.mrb[0].mxu0 %v2536
    %v2604 = vpop.f32.mrb[0].mxu0
    %v2605 = vadd.f32 %v2532, %v2604
    %v2606 = vpop.f32.mrb[0].mxu0
    %2607 = vdwg.mxu0
    %v2608 = vld [vmem:[#allocation3 + $0xe0] sm:$0xff]
    %v2609 = vld [vmem:[#allocation3 + $0xe8] sm:$0xff]
    %v2610 = vld [vmem:[#allocation3 + $0xf0] sm:$0xff]
    %v2611 = vld [vmem:[#allocation3 + $0xf8] sm:$0xff]
    %v2612 = vld [vmem:[#allocation3 + $0x128] sm:$0x1]
    %v2613 = vlaneseq
    %v2614 = vshrl.u32 %v2613, 7
    %v2615 = vsub.s32 0, %v2614
    %v2616 = vrot.slane %v2612, %v2615
    %2617 = vmatprep.subr.mxu0 0.0
    %2618 = vmatpush1.msra.mxu0 %v2608
    %2619 = vmatprep.subr.mxu0 0.0
    %2620 = vmatpush1.msra.mxu0 %v2609
    %2621 = vmatprep.subr.mxu0 0.0
    %2622 = vmatpush1.msra.mxu0 %v2610
    %2623 = vmatprep.subr.mxu0 0.0
    %2624 = vmatpush1.msra.mxu0 %v2611
    %2625 = vmatprep.subr.mxu0 0.0
    %2626 = vmatpush1.msra.mxu0 0.0
    %2627 = vmatprep.subr.mxu0 0.0
    %2628 = vmatpush1.msra.mxu0 0.0
    %2629 = vmatprep.subr.mxu0 0.0
    %2630 = vmatpush1.msra.mxu0 0.0
    %2631 = vmatprep.subr.mxu0 0.0
    %2632 = vmatpush1.msra.mxu0 0.0
    %2633 = vmatprep.subr.mxu0 0.0
    %2634 = vmatpush1.msra.mxu0 0.0
    %2635 = vmatprep.subr.mxu0 0.0
    %2636 = vmatpush1.msra.mxu0 0.0
    %2637 = vmatprep.subr.mxu0 0.0
    %2638 = vmatpush1.msra.mxu0 0.0
    %2639 = vmatprep.subr.mxu0 0.0
    %2640 = vmatpush1.msra.mxu0 0.0
    %2641 = vmatprep.subr.mxu0 0.0
    %2642 = vmatpush1.msra.mxu0 0.0
    %2643 = vmatprep.subr.mxu0 0.0
    %2644 = vmatpush1.msra.mxu0 0.0
    %2645 = vmatprep.subr.mxu0 0.0
    %2646 = vmatpush1.msra.mxu0 0.0
    %2647 = vmatprep.subr.mxu0 0.0
    %2648 = vmatpush1.msra.mxu0 0.0
    %2649 = vmatprep.subr.mxu0 0.0
    %2650 = vmatpush1.msra.mxu0 0.0
    %2651 = vmatprep.subr.mxu0 0.0
    %2652 = vmatpush1.msra.mxu0 0.0
    %2653 = vmatprep.subr.mxu0 0.0
    %2654 = vmatpush1.msra.mxu0 0.0
    %2655 = vmatprep.subr.mxu0 0.0
    %2656 = vmatpush1.msra.mxu0 0.0
    %2657 = vmatprep.subr.mxu0 0.0
    %2658 = vmatpush1.msra.mxu0 0.0
    %2659 = vmatprep.subr.mxu0 0.0
    %2660 = vmatpush1.msra.mxu0 0.0
    %2661 = vmatprep.subr.mxu0 0.0
    %2662 = vmatpush1.msra.mxu0 0.0
    %2663 = vmatprep.subr.mxu0 0.0
    %2664 = vmatpush1.msra.mxu0 0.0
    %2665 = vmatprep.subr.mxu0 0.0
    %2666 = vmatpush1.msra.mxu0 0.0
    %2667 = vmatprep.subr.mxu0 0.0
    %2668 = vmatpush1.msra.mxu0 0.0
    %2669 = vmatprep.subr.mxu0 0.0
    %2670 = vmatpush1.msra.mxu0 0.0
    %2671 = vmatprep.subr.mxu0 0.0
    %2672 = vmatpush1.msra.mxu0 0.0
    %2673 = vmatprep.subr.mxu0 0.0
    %2674 = vmatpush1.msra.mxu0 0.0
    %2675 = vmatprep.subr.mxu0 0.0
    %2676 = vmatpush1.msra.mxu0 0.0
    %2677 = vmatprep.subr.mxu0 0.0
    %2678 = vmatpush1.msra.mxu0 0.0
    %2679 = vmatprep.subr.mxu0 0.0
    %2680 = vmatpush1.msra.mxu0 0.0
    %2681 = vmatprep.mubr.f32.mxu0 0.0
    %2682 = vmatmul.mubr.f32.gmra.mrb[0].mxu0 %v2136
    %v2683 = vpop.f32.mrb[0].mxu0
    %v2684 = vadd.f32 %v2616, %v2683
    %v2685 = vpop.f32.mrb[0].mxu0
    %2686 = vdwg.mxu0
    %v2687 = vadd.f32 %v2605, %v2684
    %v2688 = vxor.u32 %v2687, 2147483648
    %v2689 = vmul.f32 %v2688, 1.442695
    %v2690 = vpow.pop %v2689
    %v2691 = vadd.f32 %v2690, 1.0
    %v2692 = vrcp.pop %v2691
    %v2693 = vmul.f32 1.0, %v2692
    %2695 = vrot.lane.b32.xlu0 %v2684, 64
    %v2696 = vpop.permute.xlu0 %2695
    %v2698 = vmul.f32 %v2693, %v2696
    %2700 = vrot.lane.b32.xlu0 %v2698, 64
    %v2701 = vpop.permute.xlu0 %2700
    %v2703 = vadd.f32 %v2605, %v2701
    %v2704 = vtanh.pop %v2703
    %v2705 = vsub.f32 1.0, %v2693
    %2707 = vrot.lane.b32.xlu0 %v2704, 96
    %v2708 = vpop.permute.xlu0 %2707
    %v2710 = vmul.f32 %v2705, %v2708
    %v2711 = vmul.f32 %v2693, %v2125
    %v2712 = vadd.f32 %v2710, %v2711
    %2714 = vrot.lane.b32.xlu0 %v2712, 96
    %v2715 = vpop.permute.xlu0 %2714
    %2717 = vst.msk [vmem:[#allocation2 + $0x3] sm:$0x1] %vm955, %v2715
    %2718 = vst.msk [vmem:[#allocation2 + $0xa] sm:$0x2] %vm957, %v2715
    %v2719 = vld [vmem:[#allocation3 + $0x20] sm:$0xff]
    %v2720 = vld [vmem:[#allocation3 + $0x28] sm:$0xff]
    %v2721 = vld [vmem:[#allocation3 + $0x30] sm:$0xff]
    %v2722 = vld [vmem:[#allocation3 + $0x38] sm:$0xff]
    %v2723 = vsel %vm38, %v2715, 0
    %2725 = vmatprep.subr.mxu0 0.0
    %2726 = vmatpush1.msra.mxu0 %v2719
    %2727 = vmatprep.subr.mxu0 0.0
    %2728 = vmatpush1.msra.mxu0 %v2720
    %2729 = vmatprep.subr.mxu0 0.0
    %2730 = vmatpush1.msra.mxu0 %v2721
    %2731 = vmatprep.subr.mxu0 0.0
    %2732 = vmatpush1.msra.mxu0 %v2722
    %2733 = vmatprep.subr.mxu0 0.0
    %2734 = vmatpush1.msra.mxu0 0.0
    %2735 = vmatprep.subr.mxu0 0.0
    %2736 = vmatpush1.msra.mxu0 0.0
    %2737 = vmatprep.subr.mxu0 0.0
    %2738 = vmatpush1.msra.mxu0 0.0
    %2739 = vmatprep.subr.mxu0 0.0
    %2740 = vmatpush1.msra.mxu0 0.0
    %2741 = vmatprep.subr.mxu0 0.0
    %2742 = vmatpush1.msra.mxu0 0.0
    %2743 = vmatprep.subr.mxu0 0.0
    %2744 = vmatpush1.msra.mxu0 0.0
    %2745 = vmatprep.subr.mxu0 0.0
    %2746 = vmatpush1.msra.mxu0 0.0
    %2747 = vmatprep.subr.mxu0 0.0
    %2748 = vmatpush1.msra.mxu0 0.0
    %2749 = vmatprep.subr.mxu0 0.0
    %2750 = vmatpush1.msra.mxu0 0.0
    %2751 = vmatprep.subr.mxu0 0.0
    %2752 = vmatpush1.msra.mxu0 0.0
    %2753 = vmatprep.subr.mxu0 0.0
    %2754 = vmatpush1.msra.mxu0 0.0
    %2755 = vmatprep.subr.mxu0 0.0
    %2756 = vmatpush1.msra.mxu0 0.0
    %2757 = vmatprep.subr.mxu0 0.0
    %2758 = vmatpush1.msra.mxu0 0.0
    %2759 = vmatprep.subr.mxu0 0.0
    %2760 = vmatpush1.msra.mxu0 0.0
    %2761 = vmatprep.subr.mxu0 0.0
    %2762 = vmatpush1.msra.mxu0 0.0
    %2763 = vmatprep.subr.mxu0 0.0
    %2764 = vmatpush1.msra.mxu0 0.0
    %2765 = vmatprep.subr.mxu0 0.0
    %2766 = vmatpush1.msra.mxu0 0.0
    %2767 = vmatprep.subr.mxu0 0.0
    %2768 = vmatpush1.msra.mxu0 0.0
    %2769 = vmatprep.subr.mxu0 0.0
    %2770 = vmatpush1.msra.mxu0 0.0
    %2771 = vmatprep.subr.mxu0 0.0
    %2772 = vmatpush1.msra.mxu0 0.0
    %2773 = vmatprep.subr.mxu0 0.0
    %2774 = vmatpush1.msra.mxu0 0.0
    %2775 = vmatprep.subr.mxu0 0.0
    %2776 = vmatpush1.msra.mxu0 0.0
    %2777 = vmatprep.subr.mxu0 0.0
    %2778 = vmatpush1.msra.mxu0 0.0
    %2779 = vmatprep.subr.mxu0 0.0
    %2780 = vmatpush1.msra.mxu0 0.0
    %2781 = vmatprep.subr.mxu0 0.0
    %2782 = vmatpush1.msra.mxu0 0.0
    %2783 = vmatprep.subr.mxu0 0.0
    %2784 = vmatpush1.msra.mxu0 0.0
    %2785 = vmatprep.subr.mxu0 0.0
    %2786 = vmatpush1.msra.mxu0 0.0
    %2787 = vmatprep.subr.mxu0 0.0
    %2788 = vmatpush1.msra.mxu0 0.0
    %2789 = vmatprep.mubr.f32.mxu0 0.0
    %2790 = vmatmul.mubr.f32.gmra.mrb[0].mxu0 %v2723
    %v2791 = vpop.f32.mrb[0].mxu0
    %v2792 = vadd.f32 0.0, %v2791
    %v2793 = vpop.f32.mrb[0].mxu0
    %2794 = vdwg.mxu0
    %v2797 = vunpack.c.l.s4 1966171168
    %v2798 = vunpack.c.0.s8 %v2797
    %v2799 = vlaneseq
    %v2800 = vshrl.u32 %v2799, 7
    %v2801 = vsub.s32 %v2798, %v2800
    %v2802 = vrot.slane %v2792, %v2801
    %v2803 = vcombine.high %v2802, %v2802
    %v2805 = vunpack.c.l.s4 1966171168
    %v2806 = vunpack.c.0.s8 %v2805
    %v2807 = vlaneseq
    %v2808 = vshrl.u32 %v2807, 7
    %v2809 = vsub.s32 %v2806, %v2808
    %v2810 = vrot.slane %v2802, %v2809
    %v2812 = vunpack.c.l.s4 1966171168
    %v2813 = vunpack.c.0.s8 %v2812
    %v2814 = vlaneseq
    %v2815 = vshrl.u32 %v2814, 7
    %v2816 = vsub.s32 %v2813, %v2815
    %v2817 = vrot.slane %v2803, %v2816
    %v2818 = vlaneseq
    %v2819 = vshrl.u32 %v2818, 7
    %v2820 = vsub.s32 0, %v2819
    %v2821 = vrot.slane %v2810, %v2820
    %v2822 = vlaneseq
    %v2823 = vshrl.u32 %v2822, 7
    %v2824 = vsub.s32 0, %v2823
    %v2825 = vrot.slane %v2817, %v2824
    %v2828 = vadd.f32 %v2821, %v112
    %v2829 = vadd.f32 %v2825, %v117
    %v2830 = vtanh.pop %v2828
    %v2831 = vtanh.pop %v2829
    %v2832 = vld [vmem:[#allocation3 + $0x138] sm:$0x1]
    %v2833 = vlaneseq
    %v2834 = vshrl.u32 %v2833, 7
    %v2835 = vsub.s32 0, %v2834
    %v2836 = vrot.slane %v2832, %v2835
    %v2837 = vmul.f32 %v2830, %v2836
    %v2838 = vmul.f32 %v2831, %v2836
    %v2839 = vsel %vm38, %v2837, 0.0
    %2840 = vadd.xlane.f32.xlu0 %v2839
    %v2841 = vpop.xlane.xlu0 %2840
    %v2842 = vsel %vm38, %v2838, 0.0
    %2843 = vadd.xlane.f32.xlu0 %v2842
    %v2844 = vpop.xlane.xlu0 %2843
    %v2845 = vadd.f32 %v2841, %v474
    %v2846 = vadd.f32 %v2844, %v481
    %v2847 = vmul.f32 %v2845, 1.442695
    %v2848 = vpow.pop %v2847
    %v2849 = vmul.f32 %v2846, 1.442695
    %v2850 = vpow.pop %v2849
    %2853 = vset.pattern.permute.xlu0 0
    %2854 = vperm.xlu0 %2853, %v2848
    %v2855 = vpop.permute.xlu0 %2854
    %2856 = vset.pattern.permute.xlu0 0
    %2857 = vperm.xlu0 %2856, %v2850
    %v2858 = vpop.permute.xlu0 %2857
    %v2859 = vlaneseq
    %v2860 = vshrl.u32 %v2859, 7
    %v2861 = vsub.s32 %v121, %v2860
    %v2862 = vrot.slane %v2855, %v2861
    %v2863 = vlaneseq
    %v2864 = vshrl.u32 %v2863, 7
    %v2865 = vsub.s32 %v121, %v2864
    %v2866 = vrot.slane %v2858, %v2865
    %v2867 = vsel %vm506, %v2866, %v2862
    %v2869 = vsel %vm509, %v2867, 0.0
    %2870 = vadd.xlane.f32.xlu0 %v2869
    %v2871 = vpop.xlane.xlu0 %2870
    %v2872 = vrcp.pop %v2871
    %v2874 = vlaneseq
    %v2875 = vshrl.u32 %v2874, 7
    %v2876 = vsub.s32 0, %v2875
    %v2877 = vrot.slane %v2872, %v2876
    %v2878 = vlaneseq
    %v2879 = vshrl.u32 %v2878, 7
    %v2880 = vsub.s32 1, %v2879
    %v2881 = vrot.slane %v2872, %v2880
    %v2884 = vmul.f32 %v2848, %v2877
    %v2885 = vmul.f32 %v2850, %v2881
    %2888 = vset.pattern.permute.xlu0 0
    %2889 = vperm.xlu0 %2888, %v2884
    %v2890 = vpop.permute.xlu0 %2889
    %2891 = vset.pattern.permute.xlu0 0
    %2892 = vperm.xlu0 %2891, %v2885
    %v2893 = vpop.permute.xlu0 %2892
    %v2894 = vlaneseq
    %v2895 = vshrl.u32 %v2894, 7
    %v2896 = vsub.s32 %v121, %v2895
    %v2897 = vrot.slane %v2890, %v2896
    %v2898 = vlaneseq
    %v2899 = vshrl.u32 %v2898, 7
    %v2900 = vsub.s32 %v121, %v2899
    %v2901 = vrot.slane %v2893, %v2900
    %v2902 = vsel %vm506, %v2901, %v2897
    %2904 = vst.msk [vmem:[%s4 + $0x18] sm:$0x3] %vm509, %v2902
    %v2907 = vmul.f32 %v2890, %v32
    %v2908 = vmul.f32 %v2893, %v33
    %v2909 = vsel %vm38, %v2907, 0.0
    %v2910 = vrot.slane %v2909, 4
    %v2911 = vadd.f32 %v2909, %v2910
    %v2912 = vrot.slane %v2911, 2
    %v2913 = vadd.f32 %v2911, %v2912
    %v2914 = vrot.slane %v2913, 1
    %v2915 = vadd.f32 %v2913, %v2914
    %v2916 = vsel %vm38, %v2908, 0.0
    %v2917 = vrot.slane %v2916, 4
    %v2918 = vadd.f32 %v2916, %v2917
    %v2919 = vrot.slane %v2918, 2
    %v2920 = vadd.f32 %v2918, %v2919
    %v2921 = vrot.slane %v2920, 1
    %v2922 = vadd.f32 %v2920, %v2921
    %v2923 = vld [vmem:[#allocation3 + $0x80] sm:$0xff]
    %v2924 = vld [vmem:[#allocation3 + $0x88] sm:$0xff]
    %v2925 = vld [vmem:[#allocation3 + $0x90] sm:$0xff]
    %v2926 = vld [vmem:[#allocation3 + $0x98] sm:$0xff]
    %v2929 = vsel %vm506, %v2922, %v2915
    %v2930 = vrot.slane %v329, 4
    %v2931 = vrot.slane %v334, 3
    %v2932 = vsel %vm506, %v2931, %v2930
    %v2934 = vsel %vm38, %v2929, 0
    %2936 = vmatprep.subr.mxu0 0.0
    %2937 = vmatpush1.msra.mxu0 %v2923
    %2938 = vmatprep.subr.mxu0 0.0
    %2939 = vmatpush1.msra.mxu0 %v2924
    %2940 = vmatprep.subr.mxu0 0.0
    %2941 = vmatpush1.msra.mxu0 %v2925
    %2942 = vmatprep.subr.mxu0 0.0
    %2943 = vmatpush1.msra.mxu0 %v2926
    %2944 = vmatprep.subr.mxu0 0.0
    %2945 = vmatpush1.msra.mxu0 0.0
    %2946 = vmatprep.subr.mxu0 0.0
    %2947 = vmatpush1.msra.mxu0 0.0
    %2948 = vmatprep.subr.mxu0 0.0
    %2949 = vmatpush1.msra.mxu0 0.0
    %2950 = vmatprep.subr.mxu0 0.0
    %2951 = vmatpush1.msra.mxu0 0.0
    %2952 = vmatprep.subr.mxu0 0.0
    %2953 = vmatpush1.msra.mxu0 0.0
    %2954 = vmatprep.subr.mxu0 0.0
    %2955 = vmatpush1.msra.mxu0 0.0
    %2956 = vmatprep.subr.mxu0 0.0
    %2957 = vmatpush1.msra.mxu0 0.0
    %2958 = vmatprep.subr.mxu0 0.0
    %2959 = vmatpush1.msra.mxu0 0.0
    %2960 = vmatprep.subr.mxu0 0.0
    %2961 = vmatpush1.msra.mxu0 0.0
    %2962 = vmatprep.subr.mxu0 0.0
    %2963 = vmatpush1.msra.mxu0 0.0
    %2964 = vmatprep.subr.mxu0 0.0
    %2965 = vmatpush1.msra.mxu0 0.0
    %2966 = vmatprep.subr.mxu0 0.0
    %2967 = vmatpush1.msra.mxu0 0.0
    %2968 = vmatprep.subr.mxu0 0.0
    %2969 = vmatpush1.msra.mxu0 0.0
    %2970 = vmatprep.subr.mxu0 0.0
    %2971 = vmatpush1.msra.mxu0 0.0
    %2972 = vmatprep.subr.mxu0 0.0
    %2973 = vmatpush1.msra.mxu0 0.0
    %2974 = vmatprep.subr.mxu0 0.0
    %2975 = vmatpush1.msra.mxu0 0.0
    %2976 = vmatprep.subr.mxu0 0.0
    %2977 = vmatpush1.msra.mxu0 0.0
    %2978 = vmatprep.subr.mxu0 0.0
    %2979 = vmatpush1.msra.mxu0 0.0
    %2980 = vmatprep.subr.mxu0 0.0
    %2981 = vmatpush1.msra.mxu0 0.0
    %2982 = vmatprep.subr.mxu0 0.0
    %2983 = vmatpush1.msra.mxu0 0.0
    %2984 = vmatprep.subr.mxu0 0.0
    %2985 = vmatpush1.msra.mxu0 0.0
    %2986 = vmatprep.subr.mxu0 0.0
    %2987 = vmatpush1.msra.mxu0 0.0
    %2988 = vmatprep.subr.mxu0 0.0
    %2989 = vmatpush1.msra.mxu0 0.0
    %2990 = vmatprep.subr.mxu0 0.0
    %2991 = vmatpush1.msra.mxu0 0.0
    %2992 = vmatprep.subr.mxu0 0.0
    %2993 = vmatpush1.msra.mxu0 0.0
    %2994 = vmatprep.subr.mxu0 0.0
    %2995 = vmatpush1.msra.mxu0 0.0
    %2996 = vmatprep.subr.mxu0 0.0
    %2997 = vmatpush1.msra.mxu0 0.0
    %2998 = vmatprep.subr.mxu0 0.0
    %2999 = vmatpush1.msra.mxu0 0.0
    %3000 = vmatprep.mubr.f32.mxu0 0.0
    %3001 = vmatmul.mubr.f32.gmra.mrb[0].mxu0 %v2934
    %v3002 = vpop.f32.mrb[0].mxu0
    %v3003 = vadd.f32 %v2932, %v3002
    %v3004 = vpop.f32.mrb[0].mxu0
    %3005 = vdwg.mxu0
    %v3006 = vld [vmem:[#allocation3 + $0xa0] sm:$0xff]
    %v3007 = vld [vmem:[#allocation3 + $0xa8] sm:$0xff]
    %v3008 = vld [vmem:[#allocation3 + $0xb0] sm:$0xff]
    %v3009 = vld [vmem:[#allocation3 + $0xb8] sm:$0xff]
    %v3010 = vld [vmem:[#allocation3 + $0x118] sm:$0x1]
    %v3011 = vlaneseq
    %v3012 = vshrl.u32 %v3011, 7
    %v3013 = vsub.s32 0, %v3012
    %v3014 = vrot.slane %v3010, %v3013
    %3015 = vmatprep.subr.mxu0 0.0
    %3016 = vmatpush1.msra.mxu0 %v3006
    %3017 = vmatprep.subr.mxu0 0.0
    %3018 = vmatpush1.msra.mxu0 %v3007
    %3019 = vmatprep.subr.mxu0 0.0
    %3020 = vmatpush1.msra.mxu0 %v3008
    %3021 = vmatprep.subr.mxu0 0.0
    %3022 = vmatpush1.msra.mxu0 %v3009
    %3023 = vmatprep.subr.mxu0 0.0
    %3024 = vmatpush1.msra.mxu0 0.0
    %3025 = vmatprep.subr.mxu0 0.0
    %3026 = vmatpush1.msra.mxu0 0.0
    %3027 = vmatprep.subr.mxu0 0.0
    %3028 = vmatpush1.msra.mxu0 0.0
    %3029 = vmatprep.subr.mxu0 0.0
    %3030 = vmatpush1.msra.mxu0 0.0
    %3031 = vmatprep.subr.mxu0 0.0
    %3032 = vmatpush1.msra.mxu0 0.0
    %3033 = vmatprep.subr.mxu0 0.0
    %3034 = vmatpush1.msra.mxu0 0.0
    %3035 = vmatprep.subr.mxu0 0.0
    %3036 = vmatpush1.msra.mxu0 0.0
    %3037 = vmatprep.subr.mxu0 0.0
    %3038 = vmatpush1.msra.mxu0 0.0
    %3039 = vmatprep.subr.mxu0 0.0
    %3040 = vmatpush1.msra.mxu0 0.0
    %3041 = vmatprep.subr.mxu0 0.0
    %3042 = vmatpush1.msra.mxu0 0.0
    %3043 = vmatprep.subr.mxu0 0.0
    %3044 = vmatpush1.msra.mxu0 0.0
    %3045 = vmatprep.subr.mxu0 0.0
    %3046 = vmatpush1.msra.mxu0 0.0
    %3047 = vmatprep.subr.mxu0 0.0
    %3048 = vmatpush1.msra.mxu0 0.0
    %3049 = vmatprep.subr.mxu0 0.0
    %3050 = vmatpush1.msra.mxu0 0.0
    %3051 = vmatprep.subr.mxu0 0.0
    %3052 = vmatpush1.msra.mxu0 0.0
    %3053 = vmatprep.subr.mxu0 0.0
    %3054 = vmatpush1.msra.mxu0 0.0
    %3055 = vmatprep.subr.mxu0 0.0
    %3056 = vmatpush1.msra.mxu0 0.0
    %3057 = vmatprep.subr.mxu0 0.0
    %3058 = vmatpush1.msra.mxu0 0.0
    %3059 = vmatprep.subr.mxu0 0.0
    %3060 = vmatpush1.msra.mxu0 0.0
    %3061 = vmatprep.subr.mxu0 0.0
    %3062 = vmatpush1.msra.mxu0 0.0
    %3063 = vmatprep.subr.mxu0 0.0
    %3064 = vmatpush1.msra.mxu0 0.0
    %3065 = vmatprep.subr.mxu0 0.0
    %3066 = vmatpush1.msra.mxu0 0.0
    %3067 = vmatprep.subr.mxu0 0.0
    %3068 = vmatpush1.msra.mxu0 0.0
    %3069 = vmatprep.subr.mxu0 0.0
    %3070 = vmatpush1.msra.mxu0 0.0
    %3071 = vmatprep.subr.mxu0 0.0
    %3072 = vmatpush1.msra.mxu0 0.0
    %3073 = vmatprep.subr.mxu0 0.0
    %3074 = vmatpush1.msra.mxu0 0.0
    %3075 = vmatprep.subr.mxu0 0.0
    %3076 = vmatpush1.msra.mxu0 0.0
    %3077 = vmatprep.subr.mxu0 0.0
    %3078 = vmatpush1.msra.mxu0 0.0
    %3079 = vmatprep.mubr.f32.mxu0 0.0
    %3080 = vmatmul.mubr.f32.gmra.mrb[0].mxu0 %v2536
    %v3081 = vpop.f32.mrb[0].mxu0
    %v3082 = vadd.f32 %v3014, %v3081
    %v3083 = vpop.f32.mrb[0].mxu0
    %3084 = vdwg.mxu0
    %v3085 = vadd.f32 %v3003, %v3082
    %v3086 = vxor.u32 %v3085, 2147483648
    %v3087 = vmul.f32 %v3086, 1.442695
    %v3088 = vpow.pop %v3087
    %v3089 = vadd.f32 %v3088, 1.0
    %v3090 = vrcp.pop %v3089
    %v3091 = vmul.f32 1.0, %v3090
    %3093 = vrot.lane.b32.xlu0 %v3082, 64
    %v3094 = vpop.permute.xlu0 %3093
    %v3096 = vmul.f32 %v3091, %v3094
    %3098 = vrot.lane.b32.xlu0 %v3096, 64
    %v3099 = vpop.permute.xlu0 %3098
    %v3101 = vadd.f32 %v3003, %v3099
    %v3102 = vtanh.pop %v3101
    %v3103 = vsub.f32 1.0, %v3091
    %3105 = vrot.lane.b32.xlu0 %v3102, 96
    %v3106 = vpop.permute.xlu0 %3105
    %v3108 = vmul.f32 %v3103, %v3106
    %v3109 = vmul.f32 %v3091, %v2523
    %v3110 = vadd.f32 %v3108, %v3109
    %v3111 = vld [vmem:[#allocation3 + $0xc0] sm:$0xff]
    %v3112 = vld [vmem:[#allocation3 + $0xc8] sm:$0xff]
    %v3113 = vld [vmem:[#allocation3 + $0xd0] sm:$0xff]
    %v3114 = vld [vmem:[#allocation3 + $0xd8] sm:$0xff]
    %v3115 = vld [vmem:[#allocation3 + $0x120] sm:$0x1]
    %v3116 = vlaneseq
    %v3117 = vshrl.u32 %v3116, 7
    %v3118 = vsub.s32 0, %v3117
    %v3119 = vrot.slane %v3115, %v3118
    %3121 = vrot.lane.b32.xlu0 %v3110, 96
    %v3122 = vpop.permute.xlu0 %3121
    %v3123 = vsel %vm38, %v3122, 0
    %3125 = vmatprep.subr.mxu0 0.0
    %3126 = vmatpush1.msra.mxu0 %v3111
    %3127 = vmatprep.subr.mxu0 0.0
    %3128 = vmatpush1.msra.mxu0 %v3112
    %3129 = vmatprep.subr.mxu0 0.0
    %3130 = vmatpush1.msra.mxu0 %v3113
    %3131 = vmatprep.subr.mxu0 0.0
    %3132 = vmatpush1.msra.mxu0 %v3114
    %3133 = vmatprep.subr.mxu0 0.0
    %3134 = vmatpush1.msra.mxu0 0.0
    %3135 = vmatprep.subr.mxu0 0.0
    %3136 = vmatpush1.msra.mxu0 0.0
    %3137 = vmatprep.subr.mxu0 0.0
    %3138 = vmatpush1.msra.mxu0 0.0
    %3139 = vmatprep.subr.mxu0 0.0
    %3140 = vmatpush1.msra.mxu0 0.0
    %3141 = vmatprep.subr.mxu0 0.0
    %3142 = vmatpush1.msra.mxu0 0.0
    %3143 = vmatprep.subr.mxu0 0.0
    %3144 = vmatpush1.msra.mxu0 0.0
    %3145 = vmatprep.subr.mxu0 0.0
    %3146 = vmatpush1.msra.mxu0 0.0
    %3147 = vmatprep.subr.mxu0 0.0
    %3148 = vmatpush1.msra.mxu0 0.0
    %3149 = vmatprep.subr.mxu0 0.0
    %3150 = vmatpush1.msra.mxu0 0.0
    %3151 = vmatprep.subr.mxu0 0.0
    %3152 = vmatpush1.msra.mxu0 0.0
    %3153 = vmatprep.subr.mxu0 0.0
    %3154 = vmatpush1.msra.mxu0 0.0
    %3155 = vmatprep.subr.mxu0 0.0
    %3156 = vmatpush1.msra.mxu0 0.0
    %3157 = vmatprep.subr.mxu0 0.0
    %3158 = vmatpush1.msra.mxu0 0.0
    %3159 = vmatprep.subr.mxu0 0.0
    %3160 = vmatpush1.msra.mxu0 0.0
    %3161 = vmatprep.subr.mxu0 0.0
    %3162 = vmatpush1.msra.mxu0 0.0
    %3163 = vmatprep.subr.mxu0 0.0
    %3164 = vmatpush1.msra.mxu0 0.0
    %3165 = vmatprep.subr.mxu0 0.0
    %3166 = vmatpush1.msra.mxu0 0.0
    %3167 = vmatprep.subr.mxu0 0.0
    %3168 = vmatpush1.msra.mxu0 0.0
    %3169 = vmatprep.subr.mxu0 0.0
    %3170 = vmatpush1.msra.mxu0 0.0
    %3171 = vmatprep.subr.mxu0 0.0
    %3172 = vmatpush1.msra.mxu0 0.0
    %3173 = vmatprep.subr.mxu0 0.0
    %3174 = vmatpush1.msra.mxu0 0.0
    %3175 = vmatprep.subr.mxu0 0.0
    %3176 = vmatpush1.msra.mxu0 0.0
    %3177 = vmatprep.subr.mxu0 0.0
    %3178 = vmatpush1.msra.mxu0 0.0
    %3179 = vmatprep.subr.mxu0 0.0
    %3180 = vmatpush1.msra.mxu0 0.0
    %3181 = vmatprep.subr.mxu0 0.0
    %3182 = vmatpush1.msra.mxu0 0.0
    %3183 = vmatprep.subr.mxu0 0.0
    %3184 = vmatpush1.msra.mxu0 0.0
    %3185 = vmatprep.subr.mxu0 0.0
    %3186 = vmatpush1.msra.mxu0 0.0
    %3187 = vmatprep.subr.mxu0 0.0
    %3188 = vmatpush1.msra.mxu0 0.0
    %3189 = vmatprep.mubr.f32.mxu0 0.0
    %3190 = vmatmul.mubr.f32.gmra.mrb[0].mxu0 %v3123
    %v3191 = vpop.f32.mrb[0].mxu0
    %v3192 = vadd.f32 %v3119, %v3191
    %v3193 = vpop.f32.mrb[0].mxu0
    %3194 = vdwg.mxu0
    %v3195 = vld [vmem:[#allocation3 + $0xe0] sm:$0xff]
    %v3196 = vld [vmem:[#allocation3 + $0xe8] sm:$0xff]
    %v3197 = vld [vmem:[#allocation3 + $0xf0] sm:$0xff]
    %v3198 = vld [vmem:[#allocation3 + $0xf8] sm:$0xff]
    %v3199 = vld [vmem:[#allocation3 + $0x128] sm:$0x1]
    %v3200 = vlaneseq
    %v3201 = vshrl.u32 %v3200, 7
    %v3202 = vsub.s32 0, %v3201
    %v3203 = vrot.slane %v3199, %v3202
    %3204 = vmatprep.subr.mxu0 0.0
    %3205 = vmatpush1.msra.mxu0 %v3195
    %3206 = vmatprep.subr.mxu0 0.0
    %3207 = vmatpush1.msra.mxu0 %v3196
    %3208 = vmatprep.subr.mxu0 0.0
    %3209 = vmatpush1.msra.mxu0 %v3197
    %3210 = vmatprep.subr.mxu0 0.0
    %3211 = vmatpush1.msra.mxu0 %v3198
    %3212 = vmatprep.subr.mxu0 0.0
    %3213 = vmatpush1.msra.mxu0 0.0
    %3214 = vmatprep.subr.mxu0 0.0
    %3215 = vmatpush1.msra.mxu0 0.0
    %3216 = vmatprep.subr.mxu0 0.0
    %3217 = vmatpush1.msra.mxu0 0.0
    %3218 = vmatprep.subr.mxu0 0.0
    %3219 = vmatpush1.msra.mxu0 0.0
    %3220 = vmatprep.subr.mxu0 0.0
    %3221 = vmatpush1.msra.mxu0 0.0
    %3222 = vmatprep.subr.mxu0 0.0
    %3223 = vmatpush1.msra.mxu0 0.0
    %3224 = vmatprep.subr.mxu0 0.0
    %3225 = vmatpush1.msra.mxu0 0.0
    %3226 = vmatprep.subr.mxu0 0.0
    %3227 = vmatpush1.msra.mxu0 0.0
    %3228 = vmatprep.subr.mxu0 0.0
    %3229 = vmatpush1.msra.mxu0 0.0
    %3230 = vmatprep.subr.mxu0 0.0
    %3231 = vmatpush1.msra.mxu0 0.0
    %3232 = vmatprep.subr.mxu0 0.0
    %3233 = vmatpush1.msra.mxu0 0.0
    %3234 = vmatprep.subr.mxu0 0.0
    %3235 = vmatpush1.msra.mxu0 0.0
    %3236 = vmatprep.subr.mxu0 0.0
    %3237 = vmatpush1.msra.mxu0 0.0
    %3238 = vmatprep.subr.mxu0 0.0
    %3239 = vmatpush1.msra.mxu0 0.0
    %3240 = vmatprep.subr.mxu0 0.0
    %3241 = vmatpush1.msra.mxu0 0.0
    %3242 = vmatprep.subr.mxu0 0.0
    %3243 = vmatpush1.msra.mxu0 0.0
    %3244 = vmatprep.subr.mxu0 0.0
    %3245 = vmatpush1.msra.mxu0 0.0
    %3246 = vmatprep.subr.mxu0 0.0
    %3247 = vmatpush1.msra.mxu0 0.0
    %3248 = vmatprep.subr.mxu0 0.0
    %3249 = vmatpush1.msra.mxu0 0.0
    %3250 = vmatprep.subr.mxu0 0.0
    %3251 = vmatpush1.msra.mxu0 0.0
    %3252 = vmatprep.subr.mxu0 0.0
    %3253 = vmatpush1.msra.mxu0 0.0
    %3254 = vmatprep.subr.mxu0 0.0
    %3255 = vmatpush1.msra.mxu0 0.0
    %3256 = vmatprep.subr.mxu0 0.0
    %3257 = vmatpush1.msra.mxu0 0.0
    %3258 = vmatprep.subr.mxu0 0.0
    %3259 = vmatpush1.msra.mxu0 0.0
    %3260 = vmatprep.subr.mxu0 0.0
    %3261 = vmatpush1.msra.mxu0 0.0
    %3262 = vmatprep.subr.mxu0 0.0
    %3263 = vmatpush1.msra.mxu0 0.0
    %3264 = vmatprep.subr.mxu0 0.0
    %3265 = vmatpush1.msra.mxu0 0.0
    %3266 = vmatprep.subr.mxu0 0.0
    %3267 = vmatpush1.msra.mxu0 0.0
    %3268 = vmatprep.mubr.f32.mxu0 0.0
    %3269 = vmatmul.mubr.f32.gmra.mrb[0].mxu0 %v2723
    %v3270 = vpop.f32.mrb[0].mxu0
    %v3271 = vadd.f32 %v3203, %v3270
    %v3272 = vpop.f32.mrb[0].mxu0
    %3273 = vdwg.mxu0
    %v3274 = vadd.f32 %v3192, %v3271
    %v3275 = vxor.u32 %v3274, 2147483648
    %v3276 = vmul.f32 %v3275, 1.442695
    %v3277 = vpow.pop %v3276
    %v3278 = vadd.f32 %v3277, 1.0
    %v3279 = vrcp.pop %v3278
    %v3280 = vmul.f32 1.0, %v3279
    %3282 = vrot.lane.b32.xlu0 %v3271, 64
    %v3283 = vpop.permute.xlu0 %3282
    %v3285 = vmul.f32 %v3280, %v3283
    %3287 = vrot.lane.b32.xlu0 %v3285, 64
    %v3288 = vpop.permute.xlu0 %3287
    %v3290 = vadd.f32 %v3192, %v3288
    %v3291 = vtanh.pop %v3290
    %v3292 = vsub.f32 1.0, %v3280
    %3294 = vrot.lane.b32.xlu0 %v3291, 96
    %v3295 = vpop.permute.xlu0 %3294
    %v3297 = vmul.f32 %v3292, %v3295
    %v3298 = vmul.f32 %v3280, %v2712
    %v3299 = vadd.f32 %v3297, %v3298
    %3301 = vrot.lane.b32.xlu0 %v3299, 96
    %v3302 = vpop.permute.xlu0 %3301
    %3304 = vst.msk [vmem:[#allocation2 + $0x4] sm:$0x1] %vm955, %v3302
    %3305 = vst.msk [vmem:[#allocation2 + $0xb] sm:$0x2] %vm957, %v3302
    %v3306 = vld [vmem:[#allocation3 + $0x20] sm:$0xff]
    %v3307 = vld [vmem:[#allocation3 + $0x28] sm:$0xff]
    %v3308 = vld [vmem:[#allocation3 + $0x30] sm:$0xff]
    %v3309 = vld [vmem:[#allocation3 + $0x38] sm:$0xff]
    %v3310 = vsel %vm38, %v3302, 0
    %3312 = vmatprep.subr.mxu0 0.0
    %3313 = vmatpush1.msra.mxu0 %v3306
    %3314 = vmatprep.subr.mxu0 0.0
    %3315 = vmatpush1.msra.mxu0 %v3307
    %3316 = vmatprep.subr.mxu0 0.0
    %3317 = vmatpush1.msra.mxu0 %v3308
    %3318 = vmatprep.subr.mxu0 0.0
    %3319 = vmatpush1.msra.mxu0 %v3309
    %3320 = vmatprep.subr.mxu0 0.0
    %3321 = vmatpush1.msra.mxu0 0.0
    %3322 = vmatprep.subr.mxu0 0.0
    %3323 = vmatpush1.msra.mxu0 0.0
    %3324 = vmatprep.subr.mxu0 0.0
    %3325 = vmatpush1.msra.mxu0 0.0
    %3326 = vmatprep.subr.mxu0 0.0
    %3327 = vmatpush1.msra.mxu0 0.0
    %3328 = vmatprep.subr.mxu0 0.0
    %3329 = vmatpush1.msra.mxu0 0.0
    %3330 = vmatprep.subr.mxu0 0.0
    %3331 = vmatpush1.msra.mxu0 0.0
    %3332 = vmatprep.subr.mxu0 0.0
    %3333 = vmatpush1.msra.mxu0 0.0
    %3334 = vmatprep.subr.mxu0 0.0
    %3335 = vmatpush1.msra.mxu0 0.0
    %3336 = vmatprep.subr.mxu0 0.0
    %3337 = vmatpush1.msra.mxu0 0.0
    %3338 = vmatprep.subr.mxu0 0.0
    %3339 = vmatpush1.msra.mxu0 0.0
    %3340 = vmatprep.subr.mxu0 0.0
    %3341 = vmatpush1.msra.mxu0 0.0
    %3342 = vmatprep.subr.mxu0 0.0
    %3343 = vmatpush1.msra.mxu0 0.0
    %3344 = vmatprep.subr.mxu0 0.0
    %3345 = vmatpush1.msra.mxu0 0.0
    %3346 = vmatprep.subr.mxu0 0.0
    %3347 = vmatpush1.msra.mxu0 0.0
    %3348 = vmatprep.subr.mxu0 0.0
    %3349 = vmatpush1.msra.mxu0 0.0
    %3350 = vmatprep.subr.mxu0 0.0
    %3351 = vmatpush1.msra.mxu0 0.0
    %3352 = vmatprep.subr.mxu0 0.0
    %3353 = vmatpush1.msra.mxu0 0.0
    %3354 = vmatprep.subr.mxu0 0.0
    %3355 = vmatpush1.msra.mxu0 0.0
    %3356 = vmatprep.subr.mxu0 0.0
    %3357 = vmatpush1.msra.mxu0 0.0
    %3358 = vmatprep.subr.mxu0 0.0
    %3359 = vmatpush1.msra.mxu0 0.0
    %3360 = vmatprep.subr.mxu0 0.0
    %3361 = vmatpush1.msra.mxu0 0.0
    %3362 = vmatprep.subr.mxu0 0.0
    %3363 = vmatpush1.msra.mxu0 0.0
    %3364 = vmatprep.subr.mxu0 0.0
    %3365 = vmatpush1.msra.mxu0 0.0
    %3366 = vmatprep.subr.mxu0 0.0
    %3367 = vmatpush1.msra.mxu0 0.0
    %3368 = vmatprep.subr.mxu0 0.0
    %3369 = vmatpush1.msra.mxu0 0.0
    %3370 = vmatprep.subr.mxu0 0.0
    %3371 = vmatpush1.msra.mxu0 0.0
    %3372 = vmatprep.subr.mxu0 0.0
    %3373 = vmatpush1.msra.mxu0 0.0
    %3374 = vmatprep.subr.mxu0 0.0
    %3375 = vmatpush1.msra.mxu0 0.0
    %3376 = vmatprep.mubr.f32.mxu0 0.0
    %3377 = vmatmul.mubr.f32.gmra.mrb[0].mxu0 %v3310
    %v3378 = vpop.f32.mrb[0].mxu0
    %v3379 = vadd.f32 0.0, %v3378
    %v3380 = vpop.f32.mrb[0].mxu0
    %3381 = vdwg.mxu0
    %v3384 = vunpack.c.l.s4 1966171168
    %v3385 = vunpack.c.0.s8 %v3384
    %v3386 = vlaneseq
    %v3387 = vshrl.u32 %v3386, 7
    %v3388 = vsub.s32 %v3385, %v3387
    %v3389 = vrot.slane %v3379, %v3388
    %v3390 = vcombine.high %v3389, %v3389
    %v3392 = vunpack.c.l.s4 1966171168
    %v3393 = vunpack.c.0.s8 %v3392
    %v3394 = vlaneseq
    %v3395 = vshrl.u32 %v3394, 7
    %v3396 = vsub.s32 %v3393, %v3395
    %v3397 = vrot.slane %v3389, %v3396
    %v3399 = vunpack.c.l.s4 1966171168
    %v3400 = vunpack.c.0.s8 %v3399
    %v3401 = vlaneseq
    %v3402 = vshrl.u32 %v3401, 7
    %v3403 = vsub.s32 %v3400, %v3402
    %v3404 = vrot.slane %v3390, %v3403
    %v3405 = vlaneseq
    %v3406 = vshrl.u32 %v3405, 7
    %v3407 = vsub.s32 0, %v3406
    %v3408 = vrot.slane %v3397, %v3407
    %v3409 = vlaneseq
    %v3410 = vshrl.u32 %v3409, 7
    %v3411 = vsub.s32 0, %v3410
    %v3412 = vrot.slane %v3404, %v3411
    %v3415 = vadd.f32 %v3408, %v112
    %v3416 = vadd.f32 %v3412, %v117
    %v3417 = vtanh.pop %v3415
    %v3418 = vtanh.pop %v3416
    %v3419 = vld [vmem:[#allocation3 + $0x138] sm:$0x1]
    %v3420 = vlaneseq
    %v3421 = vshrl.u32 %v3420, 7
    %v3422 = vsub.s32 0, %v3421
    %v3423 = vrot.slane %v3419, %v3422
    %v3424 = vmul.f32 %v3417, %v3423
    %v3425 = vmul.f32 %v3418, %v3423
    %v3426 = vsel %vm38, %v3424, 0.0
    %3427 = vadd.xlane.f32.xlu0 %v3426
    %v3428 = vpop.xlane.xlu0 %3427
    %v3429 = vsel %vm38, %v3425, 0.0
    %3430 = vadd.xlane.f32.xlu0 %v3429
    %v3431 = vpop.xlane.xlu0 %3430
    %v3432 = vadd.f32 %v3428, %v474
    %v3433 = vadd.f32 %v3431, %v481
    %v3434 = vmul.f32 %v3432, 1.442695
    %v3435 = vpow.pop %v3434
    %v3436 = vmul.f32 %v3433, 1.442695
    %v3437 = vpow.pop %v3436
    %3440 = vset.pattern.permute.xlu0 0
    %3441 = vperm.xlu0 %3440, %v3435
    %v3442 = vpop.permute.xlu0 %3441
    %3443 = vset.pattern.permute.xlu0 0
    %3444 = vperm.xlu0 %3443, %v3437
    %v3445 = vpop.permute.xlu0 %3444
    %v3446 = vlaneseq
    %v3447 = vshrl.u32 %v3446, 7
    %v3448 = vsub.s32 %v121, %v3447
    %v3449 = vrot.slane %v3442, %v3448
    %v3450 = vlaneseq
    %v3451 = vshrl.u32 %v3450, 7
    %v3452 = vsub.s32 %v121, %v3451
    %v3453 = vrot.slane %v3445, %v3452
    %v3454 = vsel %vm506, %v3453, %v3449
    %v3456 = vsel %vm509, %v3454, 0.0
    %3457 = vadd.xlane.f32.xlu0 %v3456
    %v3458 = vpop.xlane.xlu0 %3457
    %v3459 = vrcp.pop %v3458
    %v3461 = vlaneseq
    %v3462 = vshrl.u32 %v3461, 7
    %v3463 = vsub.s32 0, %v3462
    %v3464 = vrot.slane %v3459, %v3463
    %v3465 = vlaneseq
    %v3466 = vshrl.u32 %v3465, 7
    %v3467 = vsub.s32 1, %v3466
    %v3468 = vrot.slane %v3459, %v3467
    %v3471 = vmul.f32 %v3435, %v3464
    %v3472 = vmul.f32 %v3437, %v3468
    %3475 = vset.pattern.permute.xlu0 0
    %3476 = vperm.xlu0 %3475, %v3471
    %v3477 = vpop.permute.xlu0 %3476
    %3478 = vset.pattern.permute.xlu0 0
    %3479 = vperm.xlu0 %3478, %v3472
    %v3480 = vpop.permute.xlu0 %3479
    %v3481 = vlaneseq
    %v3482 = vshrl.u32 %v3481, 7
    %v3483 = vsub.s32 %v121, %v3482
    %v3484 = vrot.slane %v3477, %v3483
    %v3485 = vlaneseq
    %v3486 = vshrl.u32 %v3485, 7
    %v3487 = vsub.s32 %v121, %v3486
    %v3488 = vrot.slane %v3480, %v3487
    %v3489 = vsel %vm506, %v3488, %v3484
    %3491 = vst.msk [vmem:[%s4 + $0x1a] sm:$0x3] %vm509, %v3489
    %v3494 = vmul.f32 %v3477, %v32
    %v3495 = vmul.f32 %v3480, %v33
    %v3496 = vsel %vm38, %v3494, 0.0
    %v3497 = vrot.slane %v3496, 4
    %v3498 = vadd.f32 %v3496, %v3497
    %v3499 = vrot.slane %v3498, 2
    %v3500 = vadd.f32 %v3498, %v3499
    %v3501 = vrot.slane %v3500, 1
    %v3502 = vadd.f32 %v3500, %v3501
    %v3503 = vsel %vm38, %v3495, 0.0
    %v3504 = vrot.slane %v3503, 4
    %v3505 = vadd.f32 %v3503, %v3504
    %v3506 = vrot.slane %v3505, 2
    %v3507 = vadd.f32 %v3505, %v3506
    %v3508 = vrot.slane %v3507, 1
    %v3509 = vadd.f32 %v3507, %v3508
    %v3510 = vld [vmem:[#allocation3 + $0x80] sm:$0xff]
    %v3511 = vld [vmem:[#allocation3 + $0x88] sm:$0xff]
    %v3512 = vld [vmem:[#allocation3 + $0x90] sm:$0xff]
    %v3513 = vld [vmem:[#allocation3 + $0x98] sm:$0xff]
    %v3516 = vsel %vm506, %v3509, %v3502
    %v3517 = vrot.slane %v329, 5
    %v3518 = vrot.slane %v334, 4
    %v3519 = vsel %vm506, %v3518, %v3517
    %v3521 = vsel %vm38, %v3516, 0
    %3523 = vmatprep.subr.mxu0 0.0
    %3524 = vmatpush1.msra.mxu0 %v3510
    %3525 = vmatprep.subr.mxu0 0.0
    %3526 = vmatpush1.msra.mxu0 %v3511
    %3527 = vmatprep.subr.mxu0 0.0
    %3528 = vmatpush1.msra.mxu0 %v3512
    %3529 = vmatprep.subr.mxu0 0.0
    %3530 = vmatpush1.msra.mxu0 %v3513
    %3531 = vmatprep.subr.mxu0 0.0
    %3532 = vmatpush1.msra.mxu0 0.0
    %3533 = vmatprep.subr.mxu0 0.0
    %3534 = vmatpush1.msra.mxu0 0.0
    %3535 = vmatprep.subr.mxu0 0.0
    %3536 = vmatpush1.msra.mxu0 0.0
    %3537 = vmatprep.subr.mxu0 0.0
    %3538 = vmatpush1.msra.mxu0 0.0
    %3539 = vmatprep.subr.mxu0 0.0
    %3540 = vmatpush1.msra.mxu0 0.0
    %3541 = vmatprep.subr.mxu0 0.0
    %3542 = vmatpush1.msra.mxu0 0.0
    %3543 = vmatprep.subr.mxu0 0.0
    %3544 = vmatpush1.msra.mxu0 0.0
    %3545 = vmatprep.subr.mxu0 0.0
    %3546 = vmatpush1.msra.mxu0 0.0
    %3547 = vmatprep.subr.mxu0 0.0
    %3548 = vmatpush1.msra.mxu0 0.0
    %3549 = vmatprep.subr.mxu0 0.0
    %3550 = vmatpush1.msra.mxu0 0.0
    %3551 = vmatprep.subr.mxu0 0.0
    %3552 = vmatpush1.msra.mxu0 0.0
    %3553 = vmatprep.subr.mxu0 0.0
    %3554 = vmatpush1.msra.mxu0 0.0
    %3555 = vmatprep.subr.mxu0 0.0
    %3556 = vmatpush1.msra.mxu0 0.0
    %3557 = vmatprep.subr.mxu0 0.0
    %3558 = vmatpush1.msra.mxu0 0.0
    %3559 = vmatprep.subr.mxu0 0.0
    %3560 = vmatpush1.msra.mxu0 0.0
    %3561 = vmatprep.subr.mxu0 0.0
    %3562 = vmatpush1.msra.mxu0 0.0
    %3563 = vmatprep.subr.mxu0 0.0
    %3564 = vmatpush1.msra.mxu0 0.0
    %3565 = vmatprep.subr.mxu0 0.0
    %3566 = vmatpush1.msra.mxu0 0.0
    %3567 = vmatprep.subr.mxu0 0.0
    %3568 = vmatpush1.msra.mxu0 0.0
    %3569 = vmatprep.subr.mxu0 0.0
    %3570 = vmatpush1.msra.mxu0 0.0
    %3571 = vmatprep.subr.mxu0 0.0
    %3572 = vmatpush1.msra.mxu0 0.0
    %3573 = vmatprep.subr.mxu0 0.0
    %3574 = vmatpush1.msra.mxu0 0.0
    %3575 = vmatprep.subr.mxu0 0.0
    %3576 = vmatpush1.msra.mxu0 0.0
    %3577 = vmatprep.subr.mxu0 0.0
    %3578 = vmatpush1.msra.mxu0 0.0
    %3579 = vmatprep.subr.mxu0 0.0
    %3580 = vmatpush1.msra.mxu0 0.0
    %3581 = vmatprep.subr.mxu0 0.0
    %3582 = vmatpush1.msra.mxu0 0.0
    %3583 = vmatprep.subr.mxu0 0.0
    %3584 = vmatpush1.msra.mxu0 0.0
    %3585 = vmatprep.subr.mxu0 0.0
    %3586 = vmatpush1.msra.mxu0 0.0
    %3587 = vmatprep.mubr.f32.mxu0 0.0
    %3588 = vmatmul.mubr.f32.gmra.mrb[0].mxu0 %v3521
    %v3589 = vpop.f32.mrb[0].mxu0
    %v3590 = vadd.f32 %v3519, %v3589
    %v3591 = vpop.f32.mrb[0].mxu0
    %3592 = vdwg.mxu0
    %v3593 = vld [vmem:[#allocation3 + $0xa0] sm:$0xff]
    %v3594 = vld [vmem:[#allocation3 + $0xa8] sm:$0xff]
    %v3595 = vld [vmem:[#allocation3 + $0xb0] sm:$0xff]
    %v3596 = vld [vmem:[#allocation3 + $0xb8] sm:$0xff]
    %v3597 = vld [vmem:[#allocation3 + $0x118] sm:$0x1]
    %v3598 = vlaneseq
    %v3599 = vshrl.u32 %v3598, 7
    %v3600 = vsub.s32 0, %v3599
    %v3601 = vrot.slane %v3597, %v3600
    %3602 = vmatprep.subr.mxu0 0.0
    %3603 = vmatpush1.msra.mxu0 %v3593
    %3604 = vmatprep.subr.mxu0 0.0
    %3605 = vmatpush1.msra.mxu0 %v3594
    %3606 = vmatprep.subr.mxu0 0.0
    %3607 = vmatpush1.msra.mxu0 %v3595
    %3608 = vmatprep.subr.mxu0 0.0
    %3609 = vmatpush1.msra.mxu0 %v3596
    %3610 = vmatprep.subr.mxu0 0.0
    %3611 = vmatpush1.msra.mxu0 0.0
    %3612 = vmatprep.subr.mxu0 0.0
    %3613 = vmatpush1.msra.mxu0 0.0
    %3614 = vmatprep.subr.mxu0 0.0
    %3615 = vmatpush1.msra.mxu0 0.0
    %3616 = vmatprep.subr.mxu0 0.0
    %3617 = vmatpush1.msra.mxu0 0.0
    %3618 = vmatprep.subr.mxu0 0.0
    %3619 = vmatpush1.msra.mxu0 0.0
    %3620 = vmatprep.subr.mxu0 0.0
    %3621 = vmatpush1.msra.mxu0 0.0
    %3622 = vmatprep.subr.mxu0 0.0
    %3623 = vmatpush1.msra.mxu0 0.0
    %3624 = vmatprep.subr.mxu0 0.0
    %3625 = vmatpush1.msra.mxu0 0.0
    %3626 = vmatprep.subr.mxu0 0.0
    %3627 = vmatpush1.msra.mxu0 0.0
    %3628 = vmatprep.subr.mxu0 0.0
    %3629 = vmatpush1.msra.mxu0 0.0
    %3630 = vmatprep.subr.mxu0 0.0
    %3631 = vmatpush1.msra.mxu0 0.0
    %3632 = vmatprep.subr.mxu0 0.0
    %3633 = vmatpush1.msra.mxu0 0.0
    %3634 = vmatprep.subr.mxu0 0.0
    %3635 = vmatpush1.msra.mxu0 0.0
    %3636 = vmatprep.subr.mxu0 0.0
    %3637 = vmatpush1.msra.mxu0 0.0
    %3638 = vmatprep.subr.mxu0 0.0
    %3639 = vmatpush1.msra.mxu0 0.0
    %3640 = vmatprep.subr.mxu0 0.0
    %3641 = vmatpush1.msra.mxu0 0.0
    %3642 = vmatprep.subr.mxu0 0.0
    %3643 = vmatpush1.msra.mxu0 0.0
    %3644 = vmatprep.subr.mxu0 0.0
    %3645 = vmatpush1.msra.mxu0 0.0
    %3646 = vmatprep.subr.mxu0 0.0
    %3647 = vmatpush1.msra.mxu0 0.0
    %3648 = vmatprep.subr.mxu0 0.0
    %3649 = vmatpush1.msra.mxu0 0.0
    %3650 = vmatprep.subr.mxu0 0.0
    %3651 = vmatpush1.msra.mxu0 0.0
    %3652 = vmatprep.subr.mxu0 0.0
    %3653 = vmatpush1.msra.mxu0 0.0
    %3654 = vmatprep.subr.mxu0 0.0
    %3655 = vmatpush1.msra.mxu0 0.0
    %3656 = vmatprep.subr.mxu0 0.0
    %3657 = vmatpush1.msra.mxu0 0.0
    %3658 = vmatprep.subr.mxu0 0.0
    %3659 = vmatpush1.msra.mxu0 0.0
    %3660 = vmatprep.subr.mxu0 0.0
    %3661 = vmatpush1.msra.mxu0 0.0
    %3662 = vmatprep.subr.mxu0 0.0
    %3663 = vmatpush1.msra.mxu0 0.0
    %3664 = vmatprep.subr.mxu0 0.0
    %3665 = vmatpush1.msra.mxu0 0.0
    %3666 = vmatprep.mubr.f32.mxu0 0.0
    %3667 = vmatmul.mubr.f32.gmra.mrb[0].mxu0 %v3123
    %v3668 = vpop.f32.mrb[0].mxu0
    %v3669 = vadd.f32 %v3601, %v3668
    %v3670 = vpop.f32.mrb[0].mxu0
    %3671 = vdwg.mxu0
    %v3672 = vadd.f32 %v3590, %v3669
    %v3673 = vxor.u32 %v3672, 2147483648
    %v3674 = vmul.f32 %v3673, 1.442695
    %v3675 = vpow.pop %v3674
    %v3676 = vadd.f32 %v3675, 1.0
    %v3677 = vrcp.pop %v3676
    %v3678 = vmul.f32 1.0, %v3677
    %3680 = vrot.lane.b32.xlu0 %v3669, 64
    %v3681 = vpop.permute.xlu0 %3680
    %v3683 = vmul.f32 %v3678, %v3681
    %3685 = vrot.lane.b32.xlu0 %v3683, 64
    %v3686 = vpop.permute.xlu0 %3685
    %v3688 = vadd.f32 %v3590, %v3686
    %v3689 = vtanh.pop %v3688
    %v3690 = vsub.f32 1.0, %v3678
    %3692 = vrot.lane.b32.xlu0 %v3689, 96
    %v3693 = vpop.permute.xlu0 %3692
    %v3695 = vmul.f32 %v3690, %v3693
    %v3696 = vmul.f32 %v3678, %v3110
    %v3697 = vadd.f32 %v3695, %v3696
    %v3698 = vld [vmem:[#allocation3 + $0xc0] sm:$0xff]
    %v3699 = vld [vmem:[#allocation3 + $0xc8] sm:$0xff]
    %v3700 = vld [vmem:[#allocation3 + $0xd0] sm:$0xff]
    %v3701 = vld [vmem:[#allocation3 + $0xd8] sm:$0xff]
    %v3702 = vld [vmem:[#allocation3 + $0x120] sm:$0x1]
    %v3703 = vlaneseq
    %v3704 = vshrl.u32 %v3703, 7
    %v3705 = vsub.s32 0, %v3704
    %v3706 = vrot.slane %v3702, %v3705
    %3708 = vrot.lane.b32.xlu0 %v3697, 96
    %v3709 = vpop.permute.xlu0 %3708
    %v3710 = vsel %vm38, %v3709, 0
    %3712 = vmatprep.subr.mxu0 0.0
    %3713 = vmatpush1.msra.mxu0 %v3698
    %3714 = vmatprep.subr.mxu0 0.0
    %3715 = vmatpush1.msra.mxu0 %v3699
    %3716 = vmatprep.subr.mxu0 0.0
    %3717 = vmatpush1.msra.mxu0 %v3700
    %3718 = vmatprep.subr.mxu0 0.0
    %3719 = vmatpush1.msra.mxu0 %v3701
    %3720 = vmatprep.subr.mxu0 0.0
    %3721 = vmatpush1.msra.mxu0 0.0
    %3722 = vmatprep.subr.mxu0 0.0
    %3723 = vmatpush1.msra.mxu0 0.0
    %3724 = vmatprep.subr.mxu0 0.0
    %3725 = vmatpush1.msra.mxu0 0.0
    %3726 = vmatprep.subr.mxu0 0.0
    %3727 = vmatpush1.msra.mxu0 0.0
    %3728 = vmatprep.subr.mxu0 0.0
    %3729 = vmatpush1.msra.mxu0 0.0
    %3730 = vmatprep.subr.mxu0 0.0
    %3731 = vmatpush1.msra.mxu0 0.0
    %3732 = vmatprep.subr.mxu0 0.0
    %3733 = vmatpush1.msra.mxu0 0.0
    %3734 = vmatprep.subr.mxu0 0.0
    %3735 = vmatpush1.msra.mxu0 0.0
    %3736 = vmatprep.subr.mxu0 0.0
    %3737 = vmatpush1.msra.mxu0 0.0
    %3738 = vmatprep.subr.mxu0 0.0
    %3739 = vmatpush1.msra.mxu0 0.0
    %3740 = vmatprep.subr.mxu0 0.0
    %3741 = vmatpush1.msra.mxu0 0.0
    %3742 = vmatprep.subr.mxu0 0.0
    %3743 = vmatpush1.msra.mxu0 0.0
    %3744 = vmatprep.subr.mxu0 0.0
    %3745 = vmatpush1.msra.mxu0 0.0
    %3746 = vmatprep.subr.mxu0 0.0
    %3747 = vmatpush1.msra.mxu0 0.0
    %3748 = vmatprep.subr.mxu0 0.0
    %3749 = vmatpush1.msra.mxu0 0.0
    %3750 = vmatprep.subr.mxu0 0.0
    %3751 = vmatpush1.msra.mxu0 0.0
    %3752 = vmatprep.subr.mxu0 0.0
    %3753 = vmatpush1.msra.mxu0 0.0
    %3754 = vmatprep.subr.mxu0 0.0
    %3755 = vmatpush1.msra.mxu0 0.0
    %3756 = vmatprep.subr.mxu0 0.0
    %3757 = vmatpush1.msra.mxu0 0.0
    %3758 = vmatprep.subr.mxu0 0.0
    %3759 = vmatpush1.msra.mxu0 0.0
    %3760 = vmatprep.subr.mxu0 0.0
    %3761 = vmatpush1.msra.mxu0 0.0
    %3762 = vmatprep.subr.mxu0 0.0
    %3763 = vmatpush1.msra.mxu0 0.0
    %3764 = vmatprep.subr.mxu0 0.0
    %3765 = vmatpush1.msra.mxu0 0.0
    %3766 = vmatprep.subr.mxu0 0.0
    %3767 = vmatpush1.msra.mxu0 0.0
    %3768 = vmatprep.subr.mxu0 0.0
    %3769 = vmatpush1.msra.mxu0 0.0
    %3770 = vmatprep.subr.mxu0 0.0
    %3771 = vmatpush1.msra.mxu0 0.0
    %3772 = vmatprep.subr.mxu0 0.0
    %3773 = vmatpush1.msra.mxu0 0.0
    %3774 = vmatprep.subr.mxu0 0.0
    %3775 = vmatpush1.msra.mxu0 0.0
    %3776 = vmatprep.mubr.f32.mxu0 0.0
    %3777 = vmatmul.mubr.f32.gmra.mrb[0].mxu0 %v3710
    %v3778 = vpop.f32.mrb[0].mxu0
    %v3779 = vadd.f32 %v3706, %v3778
    %v3780 = vpop.f32.mrb[0].mxu0
    %3781 = vdwg.mxu0
    %v3782 = vld [vmem:[#allocation3 + $0xe0] sm:$0xff]
    %v3783 = vld [vmem:[#allocation3 + $0xe8] sm:$0xff]
    %v3784 = vld [vmem:[#allocation3 + $0xf0] sm:$0xff]
    %v3785 = vld [vmem:[#allocation3 + $0xf8] sm:$0xff]
    %v3786 = vld [vmem:[#allocation3 + $0x128] sm:$0x1]
    %v3787 = vlaneseq
    %v3788 = vshrl.u32 %v3787, 7
    %v3789 = vsub.s32 0, %v3788
    %v3790 = vrot.slane %v3786, %v3789
    %3791 = vmatprep.subr.mxu0 0.0
    %3792 = vmatpush1.msra.mxu0 %v3782
    %3793 = vmatprep.subr.mxu0 0.0
    %3794 = vmatpush1.msra.mxu0 %v3783
    %3795 = vmatprep.subr.mxu0 0.0
    %3796 = vmatpush1.msra.mxu0 %v3784
    %3797 = vmatprep.subr.mxu0 0.0
    %3798 = vmatpush1.msra.mxu0 %v3785
    %3799 = vmatprep.subr.mxu0 0.0
    %3800 = vmatpush1.msra.mxu0 0.0
    %3801 = vmatprep.subr.mxu0 0.0
    %3802 = vmatpush1.msra.mxu0 0.0
    %3803 = vmatprep.subr.mxu0 0.0
    %3804 = vmatpush1.msra.mxu0 0.0
    %3805 = vmatprep.subr.mxu0 0.0
    %3806 = vmatpush1.msra.mxu0 0.0
    %3807 = vmatprep.subr.mxu0 0.0
    %3808 = vmatpush1.msra.mxu0 0.0
    %3809 = vmatprep.subr.mxu0 0.0
    %3810 = vmatpush1.msra.mxu0 0.0
    %3811 = vmatprep.subr.mxu0 0.0
    %3812 = vmatpush1.msra.mxu0 0.0
    %3813 = vmatprep.subr.mxu0 0.0
    %3814 = vmatpush1.msra.mxu0 0.0
    %3815 = vmatprep.subr.mxu0 0.0
    %3816 = vmatpush1.msra.mxu0 0.0
    %3817 = vmatprep.subr.mxu0 0.0
    %3818 = vmatpush1.msra.mxu0 0.0
    %3819 = vmatprep.subr.mxu0 0.0
    %3820 = vmatpush1.msra.mxu0 0.0
    %3821 = vmatprep.subr.mxu0 0.0
    %3822 = vmatpush1.msra.mxu0 0.0
    %3823 = vmatprep.subr.mxu0 0.0
    %3824 = vmatpush1.msra.mxu0 0.0
    %3825 = vmatprep.subr.mxu0 0.0
    %3826 = vmatpush1.msra.mxu0 0.0
    %3827 = vmatprep.subr.mxu0 0.0
    %3828 = vmatpush1.msra.mxu0 0.0
    %3829 = vmatprep.subr.mxu0 0.0
    %3830 = vmatpush1.msra.mxu0 0.0
    %3831 = vmatprep.subr.mxu0 0.0
    %3832 = vmatpush1.msra.mxu0 0.0
    %3833 = vmatprep.subr.mxu0 0.0
    %3834 = vmatpush1.msra.mxu0 0.0
    %3835 = vmatprep.subr.mxu0 0.0
    %3836 = vmatpush1.msra.mxu0 0.0
    %3837 = vmatprep.subr.mxu0 0.0
    %3838 = vmatpush1.msra.mxu0 0.0
    %3839 = vmatprep.subr.mxu0 0.0
    %3840 = vmatpush1.msra.mxu0 0.0
    %3841 = vmatprep.subr.mxu0 0.0
    %3842 = vmatpush1.msra.mxu0 0.0
    %3843 = vmatprep.subr.mxu0 0.0
    %3844 = vmatpush1.msra.mxu0 0.0
    %3845 = vmatprep.subr.mxu0 0.0
    %3846 = vmatpush1.msra.mxu0 0.0
    %3847 = vmatprep.subr.mxu0 0.0
    %3848 = vmatpush1.msra.mxu0 0.0
    %3849 = vmatprep.subr.mxu0 0.0
    %3850 = vmatpush1.msra.mxu0 0.0
    %3851 = vmatprep.subr.mxu0 0.0
    %3852 = vmatpush1.msra.mxu0 0.0
    %3853 = vmatprep.subr.mxu0 0.0
    %3854 = vmatpush1.msra.mxu0 0.0
    %3855 = vmatprep.mubr.f32.mxu0 0.0
    %3856 = vmatmul.mubr.f32.gmra.mrb[0].mxu0 %v3310
    %v3857 = vpop.f32.mrb[0].mxu0
    %v3858 = vadd.f32 %v3790, %v3857
    %v3859 = vpop.f32.mrb[0].mxu0
    %3860 = vdwg.mxu0
    %v3861 = vadd.f32 %v3779, %v3858
    %v3862 = vxor.u32 %v3861, 2147483648
    %v3863 = vmul.f32 %v3862, 1.442695
    %v3864 = vpow.pop %v3863
    %v3865 = vadd.f32 %v3864, 1.0
    %v3866 = vrcp.pop %v3865
    %v3867 = vmul.f32 1.0, %v3866
    %3869 = vrot.lane.b32.xlu0 %v3858, 64
    %v3870 = vpop.permute.xlu0 %3869
    %v3872 = vmul.f32 %v3867, %v3870
    %3874 = vrot.lane.b32.xlu0 %v3872, 64
    %v3875 = vpop.permute.xlu0 %3874
    %v3877 = vadd.f32 %v3779, %v3875
    %v3878 = vtanh.pop %v3877
    %v3879 = vsub.f32 1.0, %v3867
    %3881 = vrot.lane.b32.xlu0 %v3878, 96
    %v3882 = vpop.permute.xlu0 %3881
    %v3884 = vmul.f32 %v3879, %v3882
    %v3885 = vmul.f32 %v3867, %v3299
    %v3886 = vadd.f32 %v3884, %v3885
    %3888 = vrot.lane.b32.xlu0 %v3886, 96
    %v3889 = vpop.permute.xlu0 %3888
    %3891 = vst.msk [vmem:[#allocation2 + $0x5] sm:$0x1] %vm955, %v3889
    %3892 = vst.msk [vmem:[#allocation2 + $0xc] sm:$0x2] %vm957, %v3889
    %v3893 = vld [vmem:[#allocation3 + $0x20] sm:$0xff]
    %v3894 = vld [vmem:[#allocation3 + $0x28] sm:$0xff]
    %v3895 = vld [vmem:[#allocation3 + $0x30] sm:$0xff]
    %v3896 = vld [vmem:[#allocation3 + $0x38] sm:$0xff]
    %v3897 = vsel %vm38, %v3889, 0
    %3899 = vmatprep.subr.mxu0 0.0
    %3900 = vmatpush1.msra.mxu0 %v3893
    %3901 = vmatprep.subr.mxu0 0.0
    %3902 = vmatpush1.msra.mxu0 %v3894
    %3903 = vmatprep.subr.mxu0 0.0
    %3904 = vmatpush1.msra.mxu0 %v3895
    %3905 = vmatprep.subr.mxu0 0.0
    %3906 = vmatpush1.msra.mxu0 %v3896
    %3907 = vmatprep.subr.mxu0 0.0
    %3908 = vmatpush1.msra.mxu0 0.0
    %3909 = vmatprep.subr.mxu0 0.0
    %3910 = vmatpush1.msra.mxu0 0.0
    %3911 = vmatprep.subr.mxu0 0.0
    %3912 = vmatpush1.msra.mxu0 0.0
    %3913 = vmatprep.subr.mxu0 0.0
    %3914 = vmatpush1.msra.mxu0 0.0
    %3915 = vmatprep.subr.mxu0 0.0
    %3916 = vmatpush1.msra.mxu0 0.0
    %3917 = vmatprep.subr.mxu0 0.0
    %3918 = vmatpush1.msra.mxu0 0.0
    %3919 = vmatprep.subr.mxu0 0.0
    %3920 = vmatpush1.msra.mxu0 0.0
    %3921 = vmatprep.subr.mxu0 0.0
    %3922 = vmatpush1.msra.mxu0 0.0
    %3923 = vmatprep.subr.mxu0 0.0
    %3924 = vmatpush1.msra.mxu0 0.0
    %3925 = vmatprep.subr.mxu0 0.0
    %3926 = vmatpush1.msra.mxu0 0.0
    %3927 = vmatprep.subr.mxu0 0.0
    %3928 = vmatpush1.msra.mxu0 0.0
    %3929 = vmatprep.subr.mxu0 0.0
    %3930 = vmatpush1.msra.mxu0 0.0
    %3931 = vmatprep.subr.mxu0 0.0
    %3932 = vmatpush1.msra.mxu0 0.0
    %3933 = vmatprep.subr.mxu0 0.0
    %3934 = vmatpush1.msra.mxu0 0.0
    %3935 = vmatprep.subr.mxu0 0.0
    %3936 = vmatpush1.msra.mxu0 0.0
    %3937 = vmatprep.subr.mxu0 0.0
    %3938 = vmatpush1.msra.mxu0 0.0
    %3939 = vmatprep.subr.mxu0 0.0
    %3940 = vmatpush1.msra.mxu0 0.0
    %3941 = vmatprep.subr.mxu0 0.0
    %3942 = vmatpush1.msra.mxu0 0.0
    %3943 = vmatprep.subr.mxu0 0.0
    %3944 = vmatpush1.msra.mxu0 0.0
    %3945 = vmatprep.subr.mxu0 0.0
    %3946 = vmatpush1.msra.mxu0 0.0
    %3947 = vmatprep.subr.mxu0 0.0
    %3948 = vmatpush1.msra.mxu0 0.0
    %3949 = vmatprep.subr.mxu0 0.0
    %3950 = vmatpush1.msra.mxu0 0.0
    %3951 = vmatprep.subr.mxu0 0.0
    %3952 = vmatpush1.msra.mxu0 0.0
    %3953 = vmatprep.subr.mxu0 0.0
    %3954 = vmatpush1.msra.mxu0 0.0
    %3955 = vmatprep.subr.mxu0 0.0
    %3956 = vmatpush1.msra.mxu0 0.0
    %3957 = vmatprep.subr.mxu0 0.0
    %3958 = vmatpush1.msra.mxu0 0.0
    %3959 = vmatprep.subr.mxu0 0.0
    %3960 = vmatpush1.msra.mxu0 0.0
    %3961 = vmatprep.subr.mxu0 0.0
    %3962 = vmatpush1.msra.mxu0 0.0
    %3963 = vmatprep.mubr.f32.mxu0 0.0
    %3964 = vmatmul.mubr.f32.gmra.mrb[0].mxu0 %v3897
    %v3965 = vpop.f32.mrb[0].mxu0
    %v3966 = vadd.f32 0.0, %v3965
    %v3967 = vpop.f32.mrb[0].mxu0
    %3968 = vdwg.mxu0
    %v3971 = vunpack.c.l.s4 1966171168
    %v3972 = vunpack.c.0.s8 %v3971
    %v3973 = vlaneseq
    %v3974 = vshrl.u32 %v3973, 7
    %v3975 = vsub.s32 %v3972, %v3974
    %v3976 = vrot.slane %v3966, %v3975
    %v3977 = vcombine.high %v3976, %v3976
    %v3979 = vunpack.c.l.s4 1966171168
    %v3980 = vunpack.c.0.s8 %v3979
    %v3981 = vlaneseq
    %v3982 = vshrl.u32 %v3981, 7
    %v3983 = vsub.s32 %v3980, %v3982
    %v3984 = vrot.slane %v3976, %v3983
    %v3986 = vunpack.c.l.s4 1966171168
    %v3987 = vunpack.c.0.s8 %v3986
    %v3988 = vlaneseq
    %v3989 = vshrl.u32 %v3988, 7
    %v3990 = vsub.s32 %v3987, %v3989
    %v3991 = vrot.slane %v3977, %v3990
    %v3992 = vlaneseq
    %v3993 = vshrl.u32 %v3992, 7
    %v3994 = vsub.s32 0, %v3993
    %v3995 = vrot.slane %v3984, %v3994
    %v3996 = vlaneseq
    %v3997 = vshrl.u32 %v3996, 7
    %v3998 = vsub.s32 0, %v3997
    %v3999 = vrot.slane %v3991, %v3998
    %v4002 = vadd.f32 %v3995, %v112
    %v4003 = vadd.f32 %v3999, %v117
    %v4004 = vtanh.pop %v4002
    %v4005 = vtanh.pop %v4003
    %v4006 = vld [vmem:[#allocation3 + $0x138] sm:$0x1]
    %v4007 = vlaneseq
    %v4008 = vshrl.u32 %v4007, 7
    %v4009 = vsub.s32 0, %v4008
    %v4010 = vrot.slane %v4006, %v4009
    %v4011 = vmul.f32 %v4004, %v4010
    %v4012 = vmul.f32 %v4005, %v4010
    %v4013 = vsel %vm38, %v4011, 0.0
    %4014 = vadd.xlane.f32.xlu0 %v4013
    %v4015 = vpop.xlane.xlu0 %4014
    %v4016 = vsel %vm38, %v4012, 0.0
    %4017 = vadd.xlane.f32.xlu0 %v4016
    %v4018 = vpop.xlane.xlu0 %4017
    %v4019 = vadd.f32 %v4015, %v474
    %v4020 = vadd.f32 %v4018, %v481
    %v4021 = vmul.f32 %v4019, 1.442695
    %v4022 = vpow.pop %v4021
    %v4023 = vmul.f32 %v4020, 1.442695
    %v4024 = vpow.pop %v4023
    %4027 = vset.pattern.permute.xlu0 0
    %4028 = vperm.xlu0 %4027, %v4022
    %v4029 = vpop.permute.xlu0 %4028
    %4030 = vset.pattern.permute.xlu0 0
    %4031 = vperm.xlu0 %4030, %v4024
    %v4032 = vpop.permute.xlu0 %4031
    %v4033 = vlaneseq
    %v4034 = vshrl.u32 %v4033, 7
    %v4035 = vsub.s32 %v121, %v4034
    %v4036 = vrot.slane %v4029, %v4035
    %v4037 = vlaneseq
    %v4038 = vshrl.u32 %v4037, 7
    %v4039 = vsub.s32 %v121, %v4038
    %v4040 = vrot.slane %v4032, %v4039
    %v4041 = vsel %vm506, %v4040, %v4036
    %v4043 = vsel %vm509, %v4041, 0.0
    %4044 = vadd.xlane.f32.xlu0 %v4043
    %v4045 = vpop.xlane.xlu0 %4044
    %v4046 = vrcp.pop %v4045
    %v4048 = vlaneseq
    %v4049 = vshrl.u32 %v4048, 7
    %v4050 = vsub.s32 0, %v4049
    %v4051 = vrot.slane %v4046, %v4050
    %v4052 = vlaneseq
    %v4053 = vshrl.u32 %v4052, 7
    %v4054 = vsub.s32 1, %v4053
    %v4055 = vrot.slane %v4046, %v4054
    %v4058 = vmul.f32 %v4022, %v4051
    %v4059 = vmul.f32 %v4024, %v4055
    %4062 = vset.pattern.permute.xlu0 0
    %4063 = vperm.xlu0 %4062, %v4058
    %v4064 = vpop.permute.xlu0 %4063
    %4065 = vset.pattern.permute.xlu0 0
    %4066 = vperm.xlu0 %4065, %v4059
    %v4067 = vpop.permute.xlu0 %4066
    %v4068 = vlaneseq
    %v4069 = vshrl.u32 %v4068, 7
    %v4070 = vsub.s32 %v121, %v4069
    %v4071 = vrot.slane %v4064, %v4070
    %v4072 = vlaneseq
    %v4073 = vshrl.u32 %v4072, 7
    %v4074 = vsub.s32 %v121, %v4073
    %v4075 = vrot.slane %v4067, %v4074
    %v4076 = vsel %vm506, %v4075, %v4071
    %4078 = vst.msk [vmem:[%s4 + $0x1c] sm:$0x3] %vm509, %v4076
    %v4081 = vmul.f32 %v4064, %v32
    %v4082 = vmul.f32 %v4067, %v33
    %v4083 = vsel %vm38, %v4081, 0.0
    %v4084 = vrot.slane %v4083, 4
    %v4085 = vadd.f32 %v4083, %v4084
    %v4086 = vrot.slane %v4085, 2
    %v4087 = vadd.f32 %v4085, %v4086
    %v4088 = vrot.slane %v4087, 1
    %v4089 = vadd.f32 %v4087, %v4088
    %v4090 = vsel %vm38, %v4082, 0.0
    %v4091 = vrot.slane %v4090, 4
    %v4092 = vadd.f32 %v4090, %v4091
    %v4093 = vrot.slane %v4092, 2
    %v4094 = vadd.f32 %v4092, %v4093
    %v4095 = vrot.slane %v4094, 1
    %v4096 = vadd.f32 %v4094, %v4095
    %v4097 = vld [vmem:[#allocation3 + $0x80] sm:$0xff]
    %v4098 = vld [vmem:[#allocation3 + $0x88] sm:$0xff]
    %v4099 = vld [vmem:[#allocation3 + $0x90] sm:$0xff]
    %v4100 = vld [vmem:[#allocation3 + $0x98] sm:$0xff]
    %v4103 = vsel %vm506, %v4096, %v4089
    %v4104 = vrot.slane %v329, 6
    %v4105 = vrot.slane %v334, 5
    %v4106 = vsel %vm506, %v4105, %v4104
    %v4108 = vsel %vm38, %v4103, 0
    %4110 = vmatprep.subr.mxu0 0.0
    %4111 = vmatpush1.msra.mxu0 %v4097
    %4112 = vmatprep.subr.mxu0 0.0
    %4113 = vmatpush1.msra.mxu0 %v4098
    %4114 = vmatprep.subr.mxu0 0.0
    %4115 = vmatpush1.msra.mxu0 %v4099
    %4116 = vmatprep.subr.mxu0 0.0
    %4117 = vmatpush1.msra.mxu0 %v4100
    %4118 = vmatprep.subr.mxu0 0.0
    %4119 = vmatpush1.msra.mxu0 0.0
    %4120 = vmatprep.subr.mxu0 0.0
    %4121 = vmatpush1.msra.mxu0 0.0
    %4122 = vmatprep.subr.mxu0 0.0
    %4123 = vmatpush1.msra.mxu0 0.0
    %4124 = vmatprep.subr.mxu0 0.0
    %4125 = vmatpush1.msra.mxu0 0.0
    %4126 = vmatprep.subr.mxu0 0.0
    %4127 = vmatpush1.msra.mxu0 0.0
    %4128 = vmatprep.subr.mxu0 0.0
    %4129 = vmatpush1.msra.mxu0 0.0
    %4130 = vmatprep.subr.mxu0 0.0
    %4131 = vmatpush1.msra.mxu0 0.0
    %4132 = vmatprep.subr.mxu0 0.0
    %4133 = vmatpush1.msra.mxu0 0.0
    %4134 = vmatprep.subr.mxu0 0.0
    %4135 = vmatpush1.msra.mxu0 0.0
    %4136 = vmatprep.subr.mxu0 0.0
    %4137 = vmatpush1.msra.mxu0 0.0
    %4138 = vmatprep.subr.mxu0 0.0
    %4139 = vmatpush1.msra.mxu0 0.0
    %4140 = vmatprep.subr.mxu0 0.0
    %4141 = vmatpush1.msra.mxu0 0.0
    %4142 = vmatprep.subr.mxu0 0.0
    %4143 = vmatpush1.msra.mxu0 0.0
    %4144 = vmatprep.subr.mxu0 0.0
    %4145 = vmatpush1.msra.mxu0 0.0
    %4146 = vmatprep.subr.mxu0 0.0
    %4147 = vmatpush1.msra.mxu0 0.0
    %4148 = vmatprep.subr.mxu0 0.0
    %4149 = vmatpush1.msra.mxu0 0.0
    %4150 = vmatprep.subr.mxu0 0.0
    %4151 = vmatpush1.msra.mxu0 0.0
    %4152 = vmatprep.subr.mxu0 0.0
    %4153 = vmatpush1.msra.mxu0 0.0
    %4154 = vmatprep.subr.mxu0 0.0
    %4155 = vmatpush1.msra.mxu0 0.0
    %4156 = vmatprep.subr.mxu0 0.0
    %4157 = vmatpush1.msra.mxu0 0.0
    %4158 = vmatprep.subr.mxu0 0.0
    %4159 = vmatpush1.msra.mxu0 0.0
    %4160 = vmatprep.subr.mxu0 0.0
    %4161 = vmatpush1.msra.mxu0 0.0
    %4162 = vmatprep.subr.mxu0 0.0
    %4163 = vmatpush1.msra.mxu0 0.0
    %4164 = vmatprep.subr.mxu0 0.0
    %4165 = vmatpush1.msra.mxu0 0.0
    %4166 = vmatprep.subr.mxu0 0.0
    %4167 = vmatpush1.msra.mxu0 0.0
    %4168 = vmatprep.subr.mxu0 0.0
    %4169 = vmatpush1.msra.mxu0 0.0
    %4170 = vmatprep.subr.mxu0 0.0
    %4171 = vmatpush1.msra.mxu0 0.0
    %4172 = vmatprep.subr.mxu0 0.0
    %4173 = vmatpush1.msra.mxu0 0.0
    %4174 = vmatprep.mubr.f32.mxu0 0.0
    %4175 = vmatmul.mubr.f32.gmra.mrb[0].mxu0 %v4108
    %v4176 = vpop.f32.mrb[0].mxu0
    %v4177 = vadd.f32 %v4106, %v4176
    %v4178 = vpop.f32.mrb[0].mxu0
    %4179 = vdwg.mxu0
    %v4180 = vld [vmem:[#allocation3 + $0xa0] sm:$0xff]
    %v4181 = vld [vmem:[#allocation3 + $0xa8] sm:$0xff]
    %v4182 = vld [vmem:[#allocation3 + $0xb0] sm:$0xff]
    %v4183 = vld [vmem:[#allocation3 + $0xb8] sm:$0xff]
    %v4184 = vld [vmem:[#allocation3 + $0x118] sm:$0x1]
    %v4185 = vlaneseq
    %v4186 = vshrl.u32 %v4185, 7
    %v4187 = vsub.s32 0, %v4186
    %v4188 = vrot.slane %v4184, %v4187
    %4189 = vmatprep.subr.mxu0 0.0
    %4190 = vmatpush1.msra.mxu0 %v4180
    %4191 = vmatprep.subr.mxu0 0.0
    %4192 = vmatpush1.msra.mxu0 %v4181
    %4193 = vmatprep.subr.mxu0 0.0
    %4194 = vmatpush1.msra.mxu0 %v4182
    %4195 = vmatprep.subr.mxu0 0.0
    %4196 = vmatpush1.msra.mxu0 %v4183
    %4197 = vmatprep.subr.mxu0 0.0
    %4198 = vmatpush1.msra.mxu0 0.0
    %4199 = vmatprep.subr.mxu0 0.0
    %4200 = vmatpush1.msra.mxu0 0.0
    %4201 = vmatprep.subr.mxu0 0.0
    %4202 = vmatpush1.msra.mxu0 0.0
    %4203 = vmatprep.subr.mxu0 0.0
    %4204 = vmatpush1.msra.mxu0 0.0
    %4205 = vmatprep.subr.mxu0 0.0
    %4206 = vmatpush1.msra.mxu0 0.0
    %4207 = vmatprep.subr.mxu0 0.0
    %4208 = vmatpush1.msra.mxu0 0.0
    %4209 = vmatprep.subr.mxu0 0.0
    %4210 = vmatpush1.msra.mxu0 0.0
    %4211 = vmatprep.subr.mxu0 0.0
    %4212 = vmatpush1.msra.mxu0 0.0
    %4213 = vmatprep.subr.mxu0 0.0
    %4214 = vmatpush1.msra.mxu0 0.0
    %4215 = vmatprep.subr.mxu0 0.0
    %4216 = vmatpush1.msra.mxu0 0.0
    %4217 = vmatprep.subr.mxu0 0.0
    %4218 = vmatpush1.msra.mxu0 0.0
    %4219 = vmatprep.subr.mxu0 0.0
    %4220 = vmatpush1.msra.mxu0 0.0
    %4221 = vmatprep.subr.mxu0 0.0
    %4222 = vmatpush1.msra.mxu0 0.0
    %4223 = vmatprep.subr.mxu0 0.0
    %4224 = vmatpush1.msra.mxu0 0.0
    %4225 = vmatprep.subr.mxu0 0.0
    %4226 = vmatpush1.msra.mxu0 0.0
    %4227 = vmatprep.subr.mxu0 0.0
    %4228 = vmatpush1.msra.mxu0 0.0
    %4229 = vmatprep.subr.mxu0 0.0
    %4230 = vmatpush1.msra.mxu0 0.0
    %4231 = vmatprep.subr.mxu0 0.0
    %4232 = vmatpush1.msra.mxu0 0.0
    %4233 = vmatprep.subr.mxu0 0.0
    %4234 = vmatpush1.msra.mxu0 0.0
    %4235 = vmatprep.subr.mxu0 0.0
    %4236 = vmatpush1.msra.mxu0 0.0
    %4237 = vmatprep.subr.mxu0 0.0
    %4238 = vmatpush1.msra.mxu0 0.0
    %4239 = vmatprep.subr.mxu0 0.0
    %4240 = vmatpush1.msra.mxu0 0.0
    %4241 = vmatprep.subr.mxu0 0.0
    %4242 = vmatpush1.msra.mxu0 0.0
    %4243 = vmatprep.subr.mxu0 0.0
    %4244 = vmatpush1.msra.mxu0 0.0
    %4245 = vmatprep.subr.mxu0 0.0
    %4246 = vmatpush1.msra.mxu0 0.0
    %4247 = vmatprep.subr.mxu0 0.0
    %4248 = vmatpush1.msra.mxu0 0.0
    %4249 = vmatprep.subr.mxu0 0.0
    %4250 = vmatpush1.msra.mxu0 0.0
    %4251 = vmatprep.subr.mxu0 0.0
    %4252 = vmatpush1.msra.mxu0 0.0
    %4253 = vmatprep.mubr.f32.mxu0 0.0
    %4254 = vmatmul.mubr.f32.gmra.mrb[0].mxu0 %v3710
    %v4255 = vpop.f32.mrb[0].mxu0
    %v4256 = vadd.f32 %v4188, %v4255
    %v4257 = vpop.f32.mrb[0].mxu0
    %4258 = vdwg.mxu0
    %v4259 = vadd.f32 %v4177, %v4256
    %v4260 = vxor.u32 %v4259, 2147483648
    %v4261 = vmul.f32 %v4260, 1.442695
    %v4262 = vpow.pop %v4261
    %v4263 = vadd.f32 %v4262, 1.0
    %v4264 = vrcp.pop %v4263
    %v4265 = vmul.f32 1.0, %v4264
    %4267 = vrot.lane.b32.xlu0 %v4256, 64
    %v4268 = vpop.permute.xlu0 %4267
    %v4270 = vmul.f32 %v4265, %v4268
    %4272 = vrot.lane.b32.xlu0 %v4270, 64
    %v4273 = vpop.permute.xlu0 %4272
    %v4275 = vadd.f32 %v4177, %v4273
    %v4276 = vtanh.pop %v4275
    %v4277 = vsub.f32 1.0, %v4265
    %4279 = vrot.lane.b32.xlu0 %v4276, 96
    %v4280 = vpop.permute.xlu0 %4279
    %v4282 = vmul.f32 %v4277, %v4280
    %v4283 = vmul.f32 %v4265, %v3697
    %v4284 = vadd.f32 %v4282, %v4283
    %v4285 = vld [vmem:[#allocation3 + $0xc0] sm:$0xff]
    %v4286 = vld [vmem:[#allocation3 + $0xc8] sm:$0xff]
    %v4287 = vld [vmem:[#allocation3 + $0xd0] sm:$0xff]
    %v4288 = vld [vmem:[#allocation3 + $0xd8] sm:$0xff]
    %v4289 = vld [vmem:[#allocation3 + $0x120] sm:$0x1]
    %v4290 = vlaneseq
    %v4291 = vshrl.u32 %v4290, 7
    %v4292 = vsub.s32 0, %v4291
    %v4293 = vrot.slane %v4289, %v4292
    %4295 = vrot.lane.b32.xlu0 %v4284, 96
    %v4296 = vpop.permute.xlu0 %4295
    %v4297 = vsel %vm38, %v4296, 0
    %4299 = vmatprep.subr.mxu0 0.0
    %4300 = vmatpush1.msra.mxu0 %v4285
    %4301 = vmatprep.subr.mxu0 0.0
    %4302 = vmatpush1.msra.mxu0 %v4286
    %4303 = vmatprep.subr.mxu0 0.0
    %4304 = vmatpush1.msra.mxu0 %v4287
    %4305 = vmatprep.subr.mxu0 0.0
    %4306 = vmatpush1.msra.mxu0 %v4288
    %4307 = vmatprep.subr.mxu0 0.0
    %4308 = vmatpush1.msra.mxu0 0.0
    %4309 = vmatprep.subr.mxu0 0.0
    %4310 = vmatpush1.msra.mxu0 0.0
    %4311 = vmatprep.subr.mxu0 0.0
    %4312 = vmatpush1.msra.mxu0 0.0
    %4313 = vmatprep.subr.mxu0 0.0
    %4314 = vmatpush1.msra.mxu0 0.0
    %4315 = vmatprep.subr.mxu0 0.0
    %4316 = vmatpush1.msra.mxu0 0.0
    %4317 = vmatprep.subr.mxu0 0.0
    %4318 = vmatpush1.msra.mxu0 0.0
    %4319 = vmatprep.subr.mxu0 0.0
    %4320 = vmatpush1.msra.mxu0 0.0
    %4321 = vmatprep.subr.mxu0 0.0
    %4322 = vmatpush1.msra.mxu0 0.0
    %4323 = vmatprep.subr.mxu0 0.0
    %4324 = vmatpush1.msra.mxu0 0.0
    %4325 = vmatprep.subr.mxu0 0.0
    %4326 = vmatpush1.msra.mxu0 0.0
    %4327 = vmatprep.subr.mxu0 0.0
    %4328 = vmatpush1.msra.mxu0 0.0
    %4329 = vmatprep.subr.mxu0 0.0
    %4330 = vmatpush1.msra.mxu0 0.0
    %4331 = vmatprep.subr.mxu0 0.0
    %4332 = vmatpush1.msra.mxu0 0.0
    %4333 = vmatprep.subr.mxu0 0.0
    %4334 = vmatpush1.msra.mxu0 0.0
    %4335 = vmatprep.subr.mxu0 0.0
    %4336 = vmatpush1.msra.mxu0 0.0
    %4337 = vmatprep.subr.mxu0 0.0
    %4338 = vmatpush1.msra.mxu0 0.0
    %4339 = vmatprep.subr.mxu0 0.0
    %4340 = vmatpush1.msra.mxu0 0.0
    %4341 = vmatprep.subr.mxu0 0.0
    %4342 = vmatpush1.msra.mxu0 0.0
    %4343 = vmatprep.subr.mxu0 0.0
    %4344 = vmatpush1.msra.mxu0 0.0
    %4345 = vmatprep.subr.mxu0 0.0
    %4346 = vmatpush1.msra.mxu0 0.0
    %4347 = vmatprep.subr.mxu0 0.0
    %4348 = vmatpush1.msra.mxu0 0.0
    %4349 = vmatprep.subr.mxu0 0.0
    %4350 = vmatpush1.msra.mxu0 0.0
    %4351 = vmatprep.subr.mxu0 0.0
    %4352 = vmatpush1.msra.mxu0 0.0
    %4353 = vmatprep.subr.mxu0 0.0
    %4354 = vmatpush1.msra.mxu0 0.0
    %4355 = vmatprep.subr.mxu0 0.0
    %4356 = vmatpush1.msra.mxu0 0.0
    %4357 = vmatprep.subr.mxu0 0.0
    %4358 = vmatpush1.msra.mxu0 0.0
    %4359 = vmatprep.subr.mxu0 0.0
    %4360 = vmatpush1.msra.mxu0 0.0
    %4361 = vmatprep.subr.mxu0 0.0
    %4362 = vmatpush1.msra.mxu0 0.0
    %4363 = vmatprep.mubr.f32.mxu0 0.0
    %4364 = vmatmul.mubr.f32.gmra.mrb[0].mxu0 %v4297
    %v4365 = vpop.f32.mrb[0].mxu0
    %v4366 = vadd.f32 %v4293, %v4365
    %v4367 = vpop.f32.mrb[0].mxu0
    %4368 = vdwg.mxu0
    %v4369 = vld [vmem:[#allocation3 + $0xe0] sm:$0xff]
    %v4370 = vld [vmem:[#allocation3 + $0xe8] sm:$0xff]
    %v4371 = vld [vmem:[#allocation3 + $0xf0] sm:$0xff]
    %v4372 = vld [vmem:[#allocation3 + $0xf8] sm:$0xff]
    %v4373 = vld [vmem:[#allocation3 + $0x128] sm:$0x1]
    %v4374 = vlaneseq
    %v4375 = vshrl.u32 %v4374, 7
    %v4376 = vsub.s32 0, %v4375
    %v4377 = vrot.slane %v4373, %v4376
    %4378 = vmatprep.subr.mxu0 0.0
    %4379 = vmatpush1.msra.mxu0 %v4369
    %4380 = vmatprep.subr.mxu0 0.0
    %4381 = vmatpush1.msra.mxu0 %v4370
    %4382 = vmatprep.subr.mxu0 0.0
    %4383 = vmatpush1.msra.mxu0 %v4371
    %4384 = vmatprep.subr.mxu0 0.0
    %4385 = vmatpush1.msra.mxu0 %v4372
    %4386 = vmatprep.subr.mxu0 0.0
    %4387 = vmatpush1.msra.mxu0 0.0
    %4388 = vmatprep.subr.mxu0 0.0
    %4389 = vmatpush1.msra.mxu0 0.0
    %4390 = vmatprep.subr.mxu0 0.0
    %4391 = vmatpush1.msra.mxu0 0.0
    %4392 = vmatprep.subr.mxu0 0.0
    %4393 = vmatpush1.msra.mxu0 0.0
    %4394 = vmatprep.subr.mxu0 0.0
    %4395 = vmatpush1.msra.mxu0 0.0
    %4396 = vmatprep.subr.mxu0 0.0
    %4397 = vmatpush1.msra.mxu0 0.0
    %4398 = vmatprep.subr.mxu0 0.0
    %4399 = vmatpush1.msra.mxu0 0.0
    %4400 = vmatprep.subr.mxu0 0.0
    %4401 = vmatpush1.msra.mxu0 0.0
    %4402 = vmatprep.subr.mxu0 0.0
    %4403 = vmatpush1.msra.mxu0 0.0
    %4404 = vmatprep.subr.mxu0 0.0
    %4405 = vmatpush1.msra.mxu0 0.0
    %4406 = vmatprep.subr.mxu0 0.0
    %4407 = vmatpush1.msra.mxu0 0.0
    %4408 = vmatprep.subr.mxu0 0.0
    %4409 = vmatpush1.msra.mxu0 0.0
    %4410 = vmatprep.subr.mxu0 0.0
    %4411 = vmatpush1.msra.mxu0 0.0
    %4412 = vmatprep.subr.mxu0 0.0
    %4413 = vmatpush1.msra.mxu0 0.0
    %4414 = vmatprep.subr.mxu0 0.0
    %4415 = vmatpush1.msra.mxu0 0.0
    %4416 = vmatprep.subr.mxu0 0.0
    %4417 = vmatpush1.msra.mxu0 0.0
    %4418 = vmatprep.subr.mxu0 0.0
    %4419 = vmatpush1.msra.mxu0 0.0
    %4420 = vmatprep.subr.mxu0 0.0
    %4421 = vmatpush1.msra.mxu0 0.0
    %4422 = vmatprep.subr.mxu0 0.0
    %4423 = vmatpush1.msra.mxu0 0.0
    %4424 = vmatprep.subr.mxu0 0.0
    %4425 = vmatpush1.msra.mxu0 0.0
    %4426 = vmatprep.subr.mxu0 0.0
    %4427 = vmatpush1.msra.mxu0 0.0
    %4428 = vmatprep.subr.mxu0 0.0
    %4429 = vmatpush1.msra.mxu0 0.0
    %4430 = vmatprep.subr.mxu0 0.0
    %4431 = vmatpush1.msra.mxu0 0.0
    %4432 = vmatprep.subr.mxu0 0.0
    %4433 = vmatpush1.msra.mxu0 0.0
    %4434 = vmatprep.subr.mxu0 0.0
    %4435 = vmatpush1.msra.mxu0 0.0
    %4436 = vmatprep.subr.mxu0 0.0
    %4437 = vmatpush1.msra.mxu0 0.0
    %4438 = vmatprep.subr.mxu0 0.0
    %4439 = vmatpush1.msra.mxu0 0.0
    %4440 = vmatprep.subr.mxu0 0.0
    %4441 = vmatpush1.msra.mxu0 0.0
    %4442 = vmatprep.mubr.f32.mxu0 0.0
    %4443 = vmatmul.mubr.f32.gmra.mrb[0].mxu0 %v3897
    %v4444 = vpop.f32.mrb[0].mxu0
    %v4445 = vadd.f32 %v4377, %v4444
    %v4446 = vpop.f32.mrb[0].mxu0
    %4447 = vdwg.mxu0
    %v4448 = vadd.f32 %v4366, %v4445
    %v4449 = vxor.u32 %v4448, 2147483648
    %v4450 = vmul.f32 %v4449, 1.442695
    %v4451 = vpow.pop %v4450
    %v4452 = vadd.f32 %v4451, 1.0
    %v4453 = vrcp.pop %v4452
    %v4454 = vmul.f32 1.0, %v4453
    %4456 = vrot.lane.b32.xlu0 %v4445, 64
    %v4457 = vpop.permute.xlu0 %4456
    %v4459 = vmul.f32 %v4454, %v4457
    %4461 = vrot.lane.b32.xlu0 %v4459, 64
    %v4462 = vpop.permute.xlu0 %4461
    %v4464 = vadd.f32 %v4366, %v4462
    %v4465 = vtanh.pop %v4464
    %v4466 = vsub.f32 1.0, %v4454
    %4468 = vrot.lane.b32.xlu0 %v4465, 96
    %v4469 = vpop.permute.xlu0 %4468
    %v4471 = vmul.f32 %v4466, %v4469
    %v4472 = vmul.f32 %v4454, %v3886
    %v4473 = vadd.f32 %v4471, %v4472
    %4475 = vrot.lane.b32.xlu0 %v4473, 96
    %v4476 = vpop.permute.xlu0 %4475
    %4478 = vst.msk [vmem:[#allocation2 + $0x6] sm:$0x1] %vm955, %v4476
    %4479 = vst.msk [vmem:[#allocation2 + $0xd] sm:$0x2] %vm957, %v4476
    %v4480 = vld [vmem:[#allocation3 + $0x20] sm:$0xff]
    %v4481 = vld [vmem:[#allocation3 + $0x28] sm:$0xff]
    %v4482 = vld [vmem:[#allocation3 + $0x30] sm:$0xff]
    %v4483 = vld [vmem:[#allocation3 + $0x38] sm:$0xff]
    %v4484 = vsel %vm38, %v4476, 0
    %4486 = vmatprep.subr.mxu0 0.0
    %4487 = vmatpush1.msra.mxu0 %v4480
    %4488 = vmatprep.subr.mxu0 0.0
    %4489 = vmatpush1.msra.mxu0 %v4481
    %4490 = vmatprep.subr.mxu0 0.0
    %4491 = vmatpush1.msra.mxu0 %v4482
    %4492 = vmatprep.subr.mxu0 0.0
    %4493 = vmatpush1.msra.mxu0 %v4483
    %4494 = vmatprep.subr.mxu0 0.0
    %4495 = vmatpush1.msra.mxu0 0.0
    %4496 = vmatprep.subr.mxu0 0.0
    %4497 = vmatpush1.msra.mxu0 0.0
    %4498 = vmatprep.subr.mxu0 0.0
    %4499 = vmatpush1.msra.mxu0 0.0
    %4500 = vmatprep.subr.mxu0 0.0
    %4501 = vmatpush1.msra.mxu0 0.0
    %4502 = vmatprep.subr.mxu0 0.0
    %4503 = vmatpush1.msra.mxu0 0.0
    %4504 = vmatprep.subr.mxu0 0.0
    %4505 = vmatpush1.msra.mxu0 0.0
    %4506 = vmatprep.subr.mxu0 0.0
    %4507 = vmatpush1.msra.mxu0 0.0
    %4508 = vmatprep.subr.mxu0 0.0
    %4509 = vmatpush1.msra.mxu0 0.0
    %4510 = vmatprep.subr.mxu0 0.0
    %4511 = vmatpush1.msra.mxu0 0.0
    %4512 = vmatprep.subr.mxu0 0.0
    %4513 = vmatpush1.msra.mxu0 0.0
    %4514 = vmatprep.subr.mxu0 0.0
    %4515 = vmatpush1.msra.mxu0 0.0
    %4516 = vmatprep.subr.mxu0 0.0
    %4517 = vmatpush1.msra.mxu0 0.0
    %4518 = vmatprep.subr.mxu0 0.0
    %4519 = vmatpush1.msra.mxu0 0.0
    %4520 = vmatprep.subr.mxu0 0.0
    %4521 = vmatpush1.msra.mxu0 0.0
    %4522 = vmatprep.subr.mxu0 0.0
    %4523 = vmatpush1.msra.mxu0 0.0
    %4524 = vmatprep.subr.mxu0 0.0
    %4525 = vmatpush1.msra.mxu0 0.0
    %4526 = vmatprep.subr.mxu0 0.0
    %4527 = vmatpush1.msra.mxu0 0.0
    %4528 = vmatprep.subr.mxu0 0.0
    %4529 = vmatpush1.msra.mxu0 0.0
    %4530 = vmatprep.subr.mxu0 0.0
    %4531 = vmatpush1.msra.mxu0 0.0
    %4532 = vmatprep.subr.mxu0 0.0
    %4533 = vmatpush1.msra.mxu0 0.0
    %4534 = vmatprep.subr.mxu0 0.0
    %4535 = vmatpush1.msra.mxu0 0.0
    %4536 = vmatprep.subr.mxu0 0.0
    %4537 = vmatpush1.msra.mxu0 0.0
    %4538 = vmatprep.subr.mxu0 0.0
    %4539 = vmatpush1.msra.mxu0 0.0
    %4540 = vmatprep.subr.mxu0 0.0
    %4541 = vmatpush1.msra.mxu0 0.0
    %4542 = vmatprep.subr.mxu0 0.0
    %4543 = vmatpush1.msra.mxu0 0.0
    %4544 = vmatprep.subr.mxu0 0.0
    %4545 = vmatpush1.msra.mxu0 0.0
    %4546 = vmatprep.subr.mxu0 0.0
    %4547 = vmatpush1.msra.mxu0 0.0
    %4548 = vmatprep.subr.mxu0 0.0
    %4549 = vmatpush1.msra.mxu0 0.0
    %4550 = vmatprep.mubr.f32.mxu0 0.0
    %4551 = vmatmul.mubr.f32.gmra.mrb[0].mxu0 %v4484
    %v4552 = vpop.f32.mrb[0].mxu0
    %v4553 = vadd.f32 0.0, %v4552
    %v4554 = vpop.f32.mrb[0].mxu0
    %4555 = vdwg.mxu0
    %v4558 = vunpack.c.l.s4 1966171168
    %v4559 = vunpack.c.0.s8 %v4558
    %v4560 = vlaneseq
    %v4561 = vshrl.u32 %v4560, 7
    %v4562 = vsub.s32 %v4559, %v4561
    %v4563 = vrot.slane %v4553, %v4562
    %v4564 = vcombine.high %v4563, %v4563
    %v4566 = vunpack.c.l.s4 1966171168
    %v4567 = vunpack.c.0.s8 %v4566
    %v4568 = vlaneseq
    %v4569 = vshrl.u32 %v4568, 7
    %v4570 = vsub.s32 %v4567, %v4569
    %v4571 = vrot.slane %v4563, %v4570
    %v4573 = vunpack.c.l.s4 1966171168
    %v4574 = vunpack.c.0.s8 %v4573
    %v4575 = vlaneseq
    %v4576 = vshrl.u32 %v4575, 7
    %v4577 = vsub.s32 %v4574, %v4576
    %v4578 = vrot.slane %v4564, %v4577
    %v4579 = vlaneseq
    %v4580 = vshrl.u32 %v4579, 7
    %v4581 = vsub.s32 0, %v4580
    %v4582 = vrot.slane %v4571, %v4581
    %v4583 = vlaneseq
    %v4584 = vshrl.u32 %v4583, 7
    %v4585 = vsub.s32 0, %v4584
    %v4586 = vrot.slane %v4578, %v4585
    %v4589 = vadd.f32 %v4582, %v112
    %v4590 = vadd.f32 %v4586, %v117
    %v4591 = vtanh.pop %v4589
    %v4592 = vtanh.pop %v4590
    %v4593 = vld [vmem:[#allocation3 + $0x138] sm:$0x1]
    %v4594 = vlaneseq
    %v4595 = vshrl.u32 %v4594, 7
    %v4596 = vsub.s32 0, %v4595
    %v4597 = vrot.slane %v4593, %v4596
    %v4598 = vmul.f32 %v4591, %v4597
    %v4599 = vmul.f32 %v4592, %v4597
    %v4600 = vsel %vm38, %v4598, 0.0
    %4601 = vadd.xlane.f32.xlu0 %v4600
    %v4602 = vpop.xlane.xlu0 %4601
    %v4603 = vsel %vm38, %v4599, 0.0
    %4604 = vadd.xlane.f32.xlu0 %v4603
    %v4605 = vpop.xlane.xlu0 %4604
    %v4606 = vadd.f32 %v4602, %v474
    %v4607 = vadd.f32 %v4605, %v481
    %v4608 = vmul.f32 %v4606, 1.442695
    %v4609 = vpow.pop %v4608
    %v4610 = vmul.f32 %v4607, 1.442695
    %v4611 = vpow.pop %v4610
    %4614 = vset.pattern.permute.xlu0 0
    %4615 = vperm.xlu0 %4614, %v4609
    %v4616 = vpop.permute.xlu0 %4615
    %4617 = vset.pattern.permute.xlu0 0
    %4618 = vperm.xlu0 %4617, %v4611
    %v4619 = vpop.permute.xlu0 %4618
    %v4620 = vlaneseq
    %v4621 = vshrl.u32 %v4620, 7
    %v4622 = vsub.s32 %v121, %v4621
    %v4623 = vrot.slane %v4616, %v4622
    %v4624 = vlaneseq
    %v4625 = vshrl.u32 %v4624, 7
    %v4626 = vsub.s32 %v121, %v4625
    %v4627 = vrot.slane %v4619, %v4626
    %v4628 = vsel %vm506, %v4627, %v4623
    %v4630 = vsel %vm509, %v4628, 0.0
    %4631 = vadd.xlane.f32.xlu0 %v4630
    %v4632 = vpop.xlane.xlu0 %4631
    %v4633 = vrcp.pop %v4632
    %v4635 = vlaneseq
    %v4636 = vshrl.u32 %v4635, 7
    %v4637 = vsub.s32 0, %v4636
    %v4638 = vrot.slane %v4633, %v4637
    %v4639 = vlaneseq
    %v4640 = vshrl.u32 %v4639, 7
    %v4641 = vsub.s32 1, %v4640
    %v4642 = vrot.slane %v4633, %v4641
    %v4645 = vmul.f32 %v4609, %v4638
    %v4646 = vmul.f32 %v4611, %v4642
    %4649 = vset.pattern.permute.xlu0 0
    %4650 = vperm.xlu0 %4649, %v4645
    %v4651 = vpop.permute.xlu0 %4650
    %4652 = vset.pattern.permute.xlu0 0
    %4653 = vperm.xlu0 %4652, %v4646
    %v4654 = vpop.permute.xlu0 %4653
    %v4655 = vlaneseq
    %v4656 = vshrl.u32 %v4655, 7
    %v4657 = vsub.s32 %v121, %v4656
    %v4658 = vrot.slane %v4651, %v4657
    %v4659 = vlaneseq
    %v4660 = vshrl.u32 %v4659, 7
    %v4661 = vsub.s32 %v121, %v4660
    %v4662 = vrot.slane %v4654, %v4661
    %v4663 = vsel %vm506, %v4662, %v4658
    %4665 = vst.msk [vmem:[%s4 + $0x1e] sm:$0x3] %vm509, %v4663
    %v4668 = vmul.f32 %v4651, %v32
    %v4669 = vmul.f32 %v4654, %v33
    %v4670 = vsel %vm38, %v4668, 0.0
    %v4671 = vrot.slane %v4670, 4
    %v4672 = vadd.f32 %v4670, %v4671
    %v4673 = vrot.slane %v4672, 2
    %v4674 = vadd.f32 %v4672, %v4673
    %v4675 = vrot.slane %v4674, 1
    %v4676 = vadd.f32 %v4674, %v4675
    %v4677 = vsel %vm38, %v4669, 0.0
    %v4678 = vrot.slane %v4677, 4
    %v4679 = vadd.f32 %v4677, %v4678
    %v4680 = vrot.slane %v4679, 2
    %v4681 = vadd.f32 %v4679, %v4680
    %v4682 = vrot.slane %v4681, 1
    %v4683 = vadd.f32 %v4681, %v4682
    %v4684 = vld [vmem:[#allocation3 + $0x80] sm:$0xff]
    %v4685 = vld [vmem:[#allocation3 + $0x88] sm:$0xff]
    %v4686 = vld [vmem:[#allocation3 + $0x90] sm:$0xff]
    %v4687 = vld [vmem:[#allocation3 + $0x98] sm:$0xff]
    %v4690 = vsel %vm506, %v4683, %v4676
    %v4691 = vrot.slane %v329, 7
    %v4692 = vrot.slane %v334, 6
    %v4693 = vsel %vm506, %v4692, %v4691
    %v4695 = vsel %vm38, %v4690, 0
    %4697 = vmatprep.subr.mxu0 0.0
    %4698 = vmatpush1.msra.mxu0 %v4684
    %4699 = vmatprep.subr.mxu0 0.0
    %4700 = vmatpush1.msra.mxu0 %v4685
    %4701 = vmatprep.subr.mxu0 0.0
    %4702 = vmatpush1.msra.mxu0 %v4686
    %4703 = vmatprep.subr.mxu0 0.0
    %4704 = vmatpush1.msra.mxu0 %v4687
    %4705 = vmatprep.subr.mxu0 0.0
    %4706 = vmatpush1.msra.mxu0 0.0
    %4707 = vmatprep.subr.mxu0 0.0
    %4708 = vmatpush1.msra.mxu0 0.0
    %4709 = vmatprep.subr.mxu0 0.0
    %4710 = vmatpush1.msra.mxu0 0.0
    %4711 = vmatprep.subr.mxu0 0.0
    %4712 = vmatpush1.msra.mxu0 0.0
    %4713 = vmatprep.subr.mxu0 0.0
    %4714 = vmatpush1.msra.mxu0 0.0
    %4715 = vmatprep.subr.mxu0 0.0
    %4716 = vmatpush1.msra.mxu0 0.0
    %4717 = vmatprep.subr.mxu0 0.0
    %4718 = vmatpush1.msra.mxu0 0.0
    %4719 = vmatprep.subr.mxu0 0.0
    %4720 = vmatpush1.msra.mxu0 0.0
    %4721 = vmatprep.subr.mxu0 0.0
    %4722 = vmatpush1.msra.mxu0 0.0
    %4723 = vmatprep.subr.mxu0 0.0
    %4724 = vmatpush1.msra.mxu0 0.0
    %4725 = vmatprep.subr.mxu0 0.0
    %4726 = vmatpush1.msra.mxu0 0.0
    %4727 = vmatprep.subr.mxu0 0.0
    %4728 = vmatpush1.msra.mxu0 0.0
    %4729 = vmatprep.subr.mxu0 0.0
    %4730 = vmatpush1.msra.mxu0 0.0
    %4731 = vmatprep.subr.mxu0 0.0
    %4732 = vmatpush1.msra.mxu0 0.0
    %4733 = vmatprep.subr.mxu0 0.0
    %4734 = vmatpush1.msra.mxu0 0.0
    %4735 = vmatprep.subr.mxu0 0.0
    %4736 = vmatpush1.msra.mxu0 0.0
    %4737 = vmatprep.subr.mxu0 0.0
    %4738 = vmatpush1.msra.mxu0 0.0
    %4739 = vmatprep.subr.mxu0 0.0
    %4740 = vmatpush1.msra.mxu0 0.0
    %4741 = vmatprep.subr.mxu0 0.0
    %4742 = vmatpush1.msra.mxu0 0.0
    %4743 = vmatprep.subr.mxu0 0.0
    %4744 = vmatpush1.msra.mxu0 0.0
    %4745 = vmatprep.subr.mxu0 0.0
    %4746 = vmatpush1.msra.mxu0 0.0
    %4747 = vmatprep.subr.mxu0 0.0
    %4748 = vmatpush1.msra.mxu0 0.0
    %4749 = vmatprep.subr.mxu0 0.0
    %4750 = vmatpush1.msra.mxu0 0.0
    %4751 = vmatprep.subr.mxu0 0.0
    %4752 = vmatpush1.msra.mxu0 0.0
    %4753 = vmatprep.subr.mxu0 0.0
    %4754 = vmatpush1.msra.mxu0 0.0
    %4755 = vmatprep.subr.mxu0 0.0
    %4756 = vmatpush1.msra.mxu0 0.0
    %4757 = vmatprep.subr.mxu0 0.0
    %4758 = vmatpush1.msra.mxu0 0.0
    %4759 = vmatprep.subr.mxu0 0.0
    %4760 = vmatpush1.msra.mxu0 0.0
    %4761 = vmatprep.mubr.f32.mxu0 0.0
    %4762 = vmatmul.mubr.f32.gmra.mrb[0].mxu0 %v4695
    %v4763 = vpop.f32.mrb[0].mxu0
    %v4764 = vadd.f32 %v4693, %v4763
    %v4765 = vpop.f32.mrb[0].mxu0
    %4766 = vdwg.mxu0
    %v4767 = vld [vmem:[#allocation3 + $0xa0] sm:$0xff]
    %v4768 = vld [vmem:[#allocation3 + $0xa8] sm:$0xff]
    %v4769 = vld [vmem:[#allocation3 + $0xb0] sm:$0xff]
    %v4770 = vld [vmem:[#allocation3 + $0xb8] sm:$0xff]
    %v4771 = vld [vmem:[#allocation3 + $0x118] sm:$0x1]
    %v4772 = vlaneseq
    %v4773 = vshrl.u32 %v4772, 7
    %v4774 = vsub.s32 0, %v4773
    %v4775 = vrot.slane %v4771, %v4774
    %4776 = vmatprep.subr.mxu0 0.0
    %4777 = vmatpush1.msra.mxu0 %v4767
    %4778 = vmatprep.subr.mxu0 0.0
    %4779 = vmatpush1.msra.mxu0 %v4768
    %4780 = vmatprep.subr.mxu0 0.0
    %4781 = vmatpush1.msra.mxu0 %v4769
    %4782 = vmatprep.subr.mxu0 0.0
    %4783 = vmatpush1.msra.mxu0 %v4770
    %4784 = vmatprep.subr.mxu0 0.0
    %4785 = vmatpush1.msra.mxu0 0.0
    %4786 = vmatprep.subr.mxu0 0.0
    %4787 = vmatpush1.msra.mxu0 0.0
    %4788 = vmatprep.subr.mxu0 0.0
    %4789 = vmatpush1.msra.mxu0 0.0
    %4790 = vmatprep.subr.mxu0 0.0
    %4791 = vmatpush1.msra.mxu0 0.0
    %4792 = vmatprep.subr.mxu0 0.0
    %4793 = vmatpush1.msra.mxu0 0.0
    %4794 = vmatprep.subr.mxu0 0.0
    %4795 = vmatpush1.msra.mxu0 0.0
    %4796 = vmatprep.subr.mxu0 0.0
    %4797 = vmatpush1.msra.mxu0 0.0
    %4798 = vmatprep.subr.mxu0 0.0
    %4799 = vmatpush1.msra.mxu0 0.0
    %4800 = vmatprep.subr.mxu0 0.0
    %4801 = vmatpush1.msra.mxu0 0.0
    %4802 = vmatprep.subr.mxu0 0.0
    %4803 = vmatpush1.msra.mxu0 0.0
    %4804 = vmatprep.subr.mxu0 0.0
    %4805 = vmatpush1.msra.mxu0 0.0
    %4806 = vmatprep.subr.mxu0 0.0
    %4807 = vmatpush1.msra.mxu0 0.0
    %4808 = vmatprep.subr.mxu0 0.0
    %4809 = vmatpush1.msra.mxu0 0.0
    %4810 = vmatprep.subr.mxu0 0.0
    %4811 = vmatpush1.msra.mxu0 0.0
    %4812 = vmatprep.subr.mxu0 0.0
    %4813 = vmatpush1.msra.mxu0 0.0
    %4814 = vmatprep.subr.mxu0 0.0
    %4815 = vmatpush1.msra.mxu0 0.0
    %4816 = vmatprep.subr.mxu0 0.0
    %4817 = vmatpush1.msra.mxu0 0.0
    %4818 = vmatprep.subr.mxu0 0.0
    %4819 = vmatpush1.msra.mxu0 0.0
    %4820 = vmatprep.subr.mxu0 0.0
    %4821 = vmatpush1.msra.mxu0 0.0
    %4822 = vmatprep.subr.mxu0 0.0
    %4823 = vmatpush1.msra.mxu0 0.0
    %4824 = vmatprep.subr.mxu0 0.0
    %4825 = vmatpush1.msra.mxu0 0.0
    %4826 = vmatprep.subr.mxu0 0.0
    %4827 = vmatpush1.msra.mxu0 0.0
    %4828 = vmatprep.subr.mxu0 0.0
    %4829 = vmatpush1.msra.mxu0 0.0
    %4830 = vmatprep.subr.mxu0 0.0
    %4831 = vmatpush1.msra.mxu0 0.0
    %4832 = vmatprep.subr.mxu0 0.0
    %4833 = vmatpush1.msra.mxu0 0.0
    %4834 = vmatprep.subr.mxu0 0.0
    %4835 = vmatpush1.msra.mxu0 0.0
    %4836 = vmatprep.subr.mxu0 0.0
    %4837 = vmatpush1.msra.mxu0 0.0
    %4838 = vmatprep.subr.mxu0 0.0
    %4839 = vmatpush1.msra.mxu0 0.0
    %4840 = vmatprep.mubr.f32.mxu0 0.0
    %4841 = vmatmul.mubr.f32.gmra.mrb[0].mxu0 %v4297
    %v4842 = vpop.f32.mrb[0].mxu0
    %v4843 = vadd.f32 %v4775, %v4842
    %v4844 = vpop.f32.mrb[0].mxu0
    %4845 = vdwg.mxu0
    %v4846 = vadd.f32 %v4764, %v4843
    %v4847 = vxor.u32 %v4846, 2147483648
    %v4848 = vmul.f32 %v4847, 1.442695
    %v4849 = vpow.pop %v4848
    %v4850 = vadd.f32 %v4849, 1.0
    %v4851 = vrcp.pop %v4850
    %v4852 = vmul.f32 1.0, %v4851
    %4854 = vrot.lane.b32.xlu0 %v4843, 64
    %v4855 = vpop.permute.xlu0 %4854
    %v4857 = vmul.f32 %v4852, %v4855
    %4859 = vrot.lane.b32.xlu0 %v4857, 64
    %v4860 = vpop.permute.xlu0 %4859
    %v4862 = vadd.f32 %v4764, %v4860
    %v4863 = vtanh.pop %v4862
    %v4864 = vsub.f32 1.0, %v4852
    %4866 = vrot.lane.b32.xlu0 %v4863, 96
    %v4867 = vpop.permute.xlu0 %4866
    %v4869 = vmul.f32 %v4864, %v4867
    %v4870 = vmul.f32 %v4852, %v4284
    %v4871 = vadd.f32 %v4869, %v4870
    %v4872 = vld [vmem:[#allocation3 + $0xc0] sm:$0xff]
    %v4873 = vld [vmem:[#allocation3 + $0xc8] sm:$0xff]
    %v4874 = vld [vmem:[#allocation3 + $0xd0] sm:$0xff]
    %v4875 = vld [vmem:[#allocation3 + $0xd8] sm:$0xff]
    %v4876 = vld [vmem:[#allocation3 + $0x120] sm:$0x1]
    %v4877 = vlaneseq
    %v4878 = vshrl.u32 %v4877, 7
    %v4879 = vsub.s32 0, %v4878
    %v4880 = vrot.slane %v4876, %v4879
    %4882 = vrot.lane.b32.xlu0 %v4871, 96
    %v4883 = vpop.permute.xlu0 %4882
    %v4884 = vsel %vm38, %v4883, 0
    %4886 = vmatprep.subr.mxu0 0.0
    %4887 = vmatpush1.msra.mxu0 %v4872
    %4888 = vmatprep.subr.mxu0 0.0
    %4889 = vmatpush1.msra.mxu0 %v4873
    %4890 = vmatprep.subr.mxu0 0.0
    %4891 = vmatpush1.msra.mxu0 %v4874
    %4892 = vmatprep.subr.mxu0 0.0
    %4893 = vmatpush1.msra.mxu0 %v4875
    %4894 = vmatprep.subr.mxu0 0.0
    %4895 = vmatpush1.msra.mxu0 0.0
    %4896 = vmatprep.subr.mxu0 0.0
    %4897 = vmatpush1.msra.mxu0 0.0
    %4898 = vmatprep.subr.mxu0 0.0
    %4899 = vmatpush1.msra.mxu0 0.0
    %4900 = vmatprep.subr.mxu0 0.0
    %4901 = vmatpush1.msra.mxu0 0.0
    %4902 = vmatprep.subr.mxu0 0.0
    %4903 = vmatpush1.msra.mxu0 0.0
    %4904 = vmatprep.subr.mxu0 0.0
    %4905 = vmatpush1.msra.mxu0 0.0
    %4906 = vmatprep.subr.mxu0 0.0
    %4907 = vmatpush1.msra.mxu0 0.0
    %4908 = vmatprep.subr.mxu0 0.0
    %4909 = vmatpush1.msra.mxu0 0.0
    %4910 = vmatprep.subr.mxu0 0.0
    %4911 = vmatpush1.msra.mxu0 0.0
    %4912 = vmatprep.subr.mxu0 0.0
    %4913 = vmatpush1.msra.mxu0 0.0
    %4914 = vmatprep.subr.mxu0 0.0
    %4915 = vmatpush1.msra.mxu0 0.0
    %4916 = vmatprep.subr.mxu0 0.0
    %4917 = vmatpush1.msra.mxu0 0.0
    %4918 = vmatprep.subr.mxu0 0.0
    %4919 = vmatpush1.msra.mxu0 0.0
    %4920 = vmatprep.subr.mxu0 0.0
    %4921 = vmatpush1.msra.mxu0 0.0
    %4922 = vmatprep.subr.mxu0 0.0
    %4923 = vmatpush1.msra.mxu0 0.0
    %4924 = vmatprep.subr.mxu0 0.0
    %4925 = vmatpush1.msra.mxu0 0.0
    %4926 = vmatprep.subr.mxu0 0.0
    %4927 = vmatpush1.msra.mxu0 0.0
    %4928 = vmatprep.subr.mxu0 0.0
    %4929 = vmatpush1.msra.mxu0 0.0
    %4930 = vmatprep.subr.mxu0 0.0
    %4931 = vmatpush1.msra.mxu0 0.0
    %4932 = vmatprep.subr.mxu0 0.0
    %4933 = vmatpush1.msra.mxu0 0.0
    %4934 = vmatprep.subr.mxu0 0.0
    %4935 = vmatpush1.msra.mxu0 0.0
    %4936 = vmatprep.subr.mxu0 0.0
    %4937 = vmatpush1.msra.mxu0 0.0
    %4938 = vmatprep.subr.mxu0 0.0
    %4939 = vmatpush1.msra.mxu0 0.0
    %4940 = vmatprep.subr.mxu0 0.0
    %4941 = vmatpush1.msra.mxu0 0.0
    %4942 = vmatprep.subr.mxu0 0.0
    %4943 = vmatpush1.msra.mxu0 0.0
    %4944 = vmatprep.subr.mxu0 0.0
    %4945 = vmatpush1.msra.mxu0 0.0
    %4946 = vmatprep.subr.mxu0 0.0
    %4947 = vmatpush1.msra.mxu0 0.0
    %4948 = vmatprep.subr.mxu0 0.0
    %4949 = vmatpush1.msra.mxu0 0.0
    %4950 = vmatprep.mubr.f32.mxu0 0.0
    %4951 = vmatmul.mubr.f32.gmra.mrb[0].mxu0 %v4884
    %v4952 = vpop.f32.mrb[0].mxu0
    %v4953 = vadd.f32 %v4880, %v4952
    %v4954 = vpop.f32.mrb[0].mxu0
    %4955 = vdwg.mxu0
    %v4956 = vld [vmem:[#allocation3 + $0xe0] sm:$0xff]
    %v4957 = vld [vmem:[#allocation3 + $0xe8] sm:$0xff]
    %v4958 = vld [vmem:[#allocation3 + $0xf0] sm:$0xff]
    %v4959 = vld [vmem:[#allocation3 + $0xf8] sm:$0xff]
    %v4960 = vld [vmem:[#allocation3 + $0x128] sm:$0x1]
    %v4961 = vlaneseq
    %v4962 = vshrl.u32 %v4961, 7
    %v4963 = vsub.s32 0, %v4962
    %v4964 = vrot.slane %v4960, %v4963
    %4965 = vmatprep.subr.mxu0 0.0
    %4966 = vmatpush1.msra.mxu0 %v4956
    %4967 = vmatprep.subr.mxu0 0.0
    %4968 = vmatpush1.msra.mxu0 %v4957
    %4969 = vmatprep.subr.mxu0 0.0
    %4970 = vmatpush1.msra.mxu0 %v4958
    %4971 = vmatprep.subr.mxu0 0.0
    %4972 = vmatpush1.msra.mxu0 %v4959
    %4973 = vmatprep.subr.mxu0 0.0
    %4974 = vmatpush1.msra.mxu0 0.0
    %4975 = vmatprep.subr.mxu0 0.0
    %4976 = vmatpush1.msra.mxu0 0.0
    %4977 = vmatprep.subr.mxu0 0.0
    %4978 = vmatpush1.msra.mxu0 0.0
    %4979 = vmatprep.subr.mxu0 0.0
    %4980 = vmatpush1.msra.mxu0 0.0
    %4981 = vmatprep.subr.mxu0 0.0
    %4982 = vmatpush1.msra.mxu0 0.0
    %4983 = vmatprep.subr.mxu0 0.0
    %4984 = vmatpush1.msra.mxu0 0.0
    %4985 = vmatprep.subr.mxu0 0.0
    %4986 = vmatpush1.msra.mxu0 0.0
    %4987 = vmatprep.subr.mxu0 0.0
    %4988 = vmatpush1.msra.mxu0 0.0
    %4989 = vmatprep.subr.mxu0 0.0
    %4990 = vmatpush1.msra.mxu0 0.0
    %4991 = vmatprep.subr.mxu0 0.0
    %4992 = vmatpush1.msra.mxu0 0.0
    %4993 = vmatprep.subr.mxu0 0.0
    %4994 = vmatpush1.msra.mxu0 0.0
    %4995 = vmatprep.subr.mxu0 0.0
    %4996 = vmatpush1.msra.mxu0 0.0
    %4997 = vmatprep.subr.mxu0 0.0
    %4998 = vmatpush1.msra.mxu0 0.0
    %4999 = vmatprep.subr.mxu0 0.0
    %5000 = vmatpush1.msra.mxu0 0.0
    %5001 = vmatprep.subr.mxu0 0.0
    %5002 = vmatpush1.msra.mxu0 0.0
    %5003 = vmatprep.subr.mxu0 0.0
    %5004 = vmatpush1.msra.mxu0 0.0
    %5005 = vmatprep.subr.mxu0 0.0
    %5006 = vmatpush1.msra.mxu0 0.0
    %5007 = vmatprep.subr.mxu0 0.0
    %5008 = vmatpush1.msra.mxu0 0.0
    %5009 = vmatprep.subr.mxu0 0.0
    %5010 = vmatpush1.msra.mxu0 0.0
    %5011 = vmatprep.subr.mxu0 0.0
    %5012 = vmatpush1.msra.mxu0 0.0
    %5013 = vmatprep.subr.mxu0 0.0
    %5014 = vmatpush1.msra.mxu0 0.0
    %5015 = vmatprep.subr.mxu0 0.0
    %5016 = vmatpush1.msra.mxu0 0.0
    %5017 = vmatprep.subr.mxu0 0.0
    %5018 = vmatpush1.msra.mxu0 0.0
    %5019 = vmatprep.subr.mxu0 0.0
    %5020 = vmatpush1.msra.mxu0 0.0
    %5021 = vmatprep.subr.mxu0 0.0
    %5022 = vmatpush1.msra.mxu0 0.0
    %5023 = vmatprep.subr.mxu0 0.0
    %5024 = vmatpush1.msra.mxu0 0.0
    %5025 = vmatprep.subr.mxu0 0.0
    %5026 = vmatpush1.msra.mxu0 0.0
    %5027 = vmatprep.subr.mxu0 0.0
    %5028 = vmatpush1.msra.mxu0 0.0
    %5029 = vmatprep.mubr.f32.mxu0 0.0
    %5030 = vmatmul.mubr.f32.gmra.mrb[0].mxu0 %v4484
    %v5031 = vpop.f32.mrb[0].mxu0
    %v5032 = vadd.f32 %v4964, %v5031
    %v5033 = vpop.f32.mrb[0].mxu0
    %5034 = vdwg.mxu0
    %v5035 = vadd.f32 %v4953, %v5032
    %v5036 = vxor.u32 %v5035, 2147483648
    %v5037 = vmul.f32 %v5036, 1.442695
    %v5038 = vpow.pop %v5037
    %v5039 = vadd.f32 %v5038, 1.0
    %v5040 = vrcp.pop %v5039
    %v5041 = vmul.f32 1.0, %v5040
    %5043 = vrot.lane.b32.xlu0 %v5032, 64
    %v5044 = vpop.permute.xlu0 %5043
    %v5046 = vmul.f32 %v5041, %v5044
    %5048 = vrot.lane.b32.xlu0 %v5046, 64
    %v5049 = vpop.permute.xlu0 %5048
    %v5051 = vadd.f32 %v4953, %v5049
    %v5052 = vtanh.pop %v5051
    %v5053 = vsub.f32 1.0, %v5041
    %5055 = vrot.lane.b32.xlu0 %v5052, 96
    %v5056 = vpop.permute.xlu0 %5055
    %v5058 = vmul.f32 %v5053, %v5056
    %v5059 = vmul.f32 %v5041, %v4473
    %v5060 = vadd.f32 %v5058, %v5059
    %5062 = vrot.lane.b32.xlu0 %v5060, 96
    %v5063 = vpop.permute.xlu0 %5062
    %5065 = vst.msk [vmem:[#allocation2 + $0x7] sm:$0x1] %vm955, %v5063
    %5066 = vst.msk [vmem:[#allocation2 + $0xe] sm:$0x2] %vm957, %v5063
    %v5067 = vld [vmem:[#allocation2] sm:$0xff]
    %v5068 = vld [vmem:[#allocation2 + $0x8] sm:$0xff]
    %v5069 = vld [vmem:[#allocation3 + $0x60] sm:$0xff]
    %v5070 = vld [vmem:[#allocation3 + $0x68] sm:$0xff]
    %v5071 = vld [vmem:[#allocation3 + $0x70] sm:$0xff]
    %v5072 = vld [vmem:[#allocation3 + $0x78] sm:$0xff]
    %v5073 = vld [vmem:[#allocation3 + $0x130] sm:$0x1]
    %v5074 = vlaneseq
    %v5075 = vshrl.u32 %v5074, 7
    %v5076 = vsub.s32 0, %v5075
    %v5077 = vrot.slane %v5073, %v5076
    %v5079 = vsel %vm38, %v5067, 0
    %v5082 = vsel %vm38, %v5068, 0
    %5084 = vmatprep.subr.mxu0 0.0
    %5085 = vmatpush1.msra.mxu0 %v5069
    %5086 = vmatprep.subr.mxu0 0.0
    %5087 = vmatpush1.msra.mxu0 %v5070
    %5088 = vmatprep.subr.mxu0 0.0
    %5089 = vmatpush1.msra.mxu0 %v5071
    %5090 = vmatprep.subr.mxu0 0.0
    %5091 = vmatpush1.msra.mxu0 %v5072
    %5092 = vmatprep.subr.mxu0 0.0
    %5093 = vmatpush1.msra.mxu0 0.0
    %5094 = vmatprep.subr.mxu0 0.0
    %5095 = vmatpush1.msra.mxu0 0.0
    %5096 = vmatprep.subr.mxu0 0.0
    %5097 = vmatpush1.msra.mxu0 0.0
    %5098 = vmatprep.subr.mxu0 0.0
    %5099 = vmatpush1.msra.mxu0 0.0
    %5100 = vmatprep.subr.mxu0 0.0
    %5101 = vmatpush1.msra.mxu0 0.0
    %5102 = vmatprep.subr.mxu0 0.0
    %5103 = vmatpush1.msra.mxu0 0.0
    %5104 = vmatprep.subr.mxu0 0.0
    %5105 = vmatpush1.msra.mxu0 0.0
    %5106 = vmatprep.subr.mxu0 0.0
    %5107 = vmatpush1.msra.mxu0 0.0
    %5108 = vmatprep.subr.mxu0 0.0
    %5109 = vmatpush1.msra.mxu0 0.0
    %5110 = vmatprep.subr.mxu0 0.0
    %5111 = vmatpush1.msra.mxu0 0.0
    %5112 = vmatprep.subr.mxu0 0.0
    %5113 = vmatpush1.msra.mxu0 0.0
    %5114 = vmatprep.subr.mxu0 0.0
    %5115 = vmatpush1.msra.mxu0 0.0
    %5116 = vmatprep.subr.mxu0 0.0
    %5117 = vmatpush1.msra.mxu0 0.0
    %5118 = vmatprep.subr.mxu0 0.0
    %5119 = vmatpush1.msra.mxu0 0.0
    %5120 = vmatprep.subr.mxu0 0.0
    %5121 = vmatpush1.msra.mxu0 0.0
    %5122 = vmatprep.subr.mxu0 0.0
    %5123 = vmatpush1.msra.mxu0 0.0
    %5124 = vmatprep.subr.mxu0 0.0
    %5125 = vmatpush1.msra.mxu0 0.0
    %5126 = vmatprep.subr.mxu0 0.0
    %5127 = vmatpush1.msra.mxu0 0.0
    %5128 = vmatprep.subr.mxu0 0.0
    %5129 = vmatpush1.msra.mxu0 0.0
    %5130 = vmatprep.subr.mxu0 0.0
    %5131 = vmatpush1.msra.mxu0 0.0
    %5132 = vmatprep.subr.mxu0 0.0
    %5133 = vmatpush1.msra.mxu0 0.0
    %5134 = vmatprep.subr.mxu0 0.0
    %5135 = vmatpush1.msra.mxu0 0.0
    %5136 = vmatprep.subr.mxu0 0.0
    %5137 = vmatpush1.msra.mxu0 0.0
    %5138 = vmatprep.subr.mxu0 0.0
    %5139 = vmatpush1.msra.mxu0 0.0
    %5140 = vmatprep.subr.mxu0 0.0
    %5141 = vmatpush1.msra.mxu0 0.0
    %5142 = vmatprep.subr.mxu0 0.0
    %5143 = vmatpush1.msra.mxu0 0.0
    %5144 = vmatprep.subr.mxu0 0.0
    %5145 = vmatpush1.msra.mxu0 0.0
    %5146 = vmatprep.subr.mxu0 0.0
    %5147 = vmatpush1.msra.mxu0 0.0
    %5148 = vmatprep.mubr.f32.mxu0 0.0
    %5149 = vmatmul.mubr.f32.gmra.mrb[0].mxu0 %v5079
    %v5150 = vpop.f32.mrb[0].mxu0
    %v5151 = vadd.f32 %v5077, %v5150
    %v5152 = vpop.f32.mrb[0].mxu0
    %5153 = vmatprep.mubr.f32.mxu0 0.0
    %5154 = vmatmul.mubr.f32.gmra.mrb[0].mxu0 %v5082
    %v5155 = vpop.f32.mrb[0].mxu0
    %v5156 = vadd.f32 %v5077, %v5155
    %v5157 = vpop.f32.mrb[0].mxu0
    %5158 = vdwg.mxu0
    %5159 = vst.msk [vmem:[%s4] sm:$0xff] %vm38, %v5151
    %5160 = vst.msk [vmem:[%s4 + $0x8] sm:$0xff] %vm38, %v5156
    %vm5162 = vcmask 254976
    %5163 = vst.msk [vmem:[%s4 + $0x20] sm:$0x3] %vm5162, %v4883
    %5164 = vst.msk [vmem:[%s4 + $0x22] sm:$0x3] %vm5162, %v5063
    // Predicated region
    $region22: #{seq2seq_attention_decoder.1} parent=1 // pred_check
      _
    $region23: #{seq2seq_attention_decoder.1} parent=1 // pred_check_branch
      %5166 = sbr.rel (0) target = $region25
    $region24: #{seq2seq_attention_decoder.1} parent=1 // pred_region
      _
    $region25: #{seq2seq_attention_decoder.1} parent=1 // pred_fallthru
      _
    // Predicated region
    $region26: #{seq2seq_attention_decoder.1} parent=1 // pred_check
      _
    $region27: #{seq2seq_attention_decoder.1} parent=1 // pred_check_branch
      %5168 = sbr.rel (0) target = $region29
    $region28: #{seq2seq_attention_decoder.1} parent=1 // pred_region
      _
    $region29: #{seq2seq_attention_decoder.1} parent=1 // pred_fallthru
      _
    %5169 = vsyncpa [#allocation4], 1

</llo_original>
